<compile_context>
chip_gen: v7x
topology: tpu7x:2x2x1
jax: 0.10.0
libtpu: 0.0.40
codegen_flags: <defaults>
</compile_context>

<pallas_src>
import math

import numpy as np
import jax
import jax.numpy as jnp
from jax.experimental import pallas as pl
from jax.experimental.pallas import tpu as pltpu


def ml_metanet_kernel(t_ref, xk0_ref, h0_ref, c0_ref,
                      wcat_ref, bcat_ref, wst_ref, bs_ref,
                      xk_seq_ref,
                      xk_acc, h_acc, c_acc):
    """Whole ML_MetaNet forward; grid axis = level (sequential carry of x_k/h/c).

    Per level, an unrolled loop over the num_layers LSTM blocks:
        g = grad(x_k); gates = g @ Wcomb + h @ WhhT + bcomb; LSTMCell update;
        delta = c_new @ WsT + bs; x_k += delta; log x_k.
    """
    lvl = pl.program_id(0)
    D = t_ref.shape[-1]
    H = h_acc.shape[-1]
    L = wcat_ref.shape[1]

    # Initialize the VMEM-resident recurrent state once, at the first level.
    @pl.when(lvl == 0)
    def _():
        xk_acc[...] = xk0_ref[...]
        h_acc[...] = h0_ref[...]
        c_acc[...] = c0_ref[...]

    t = t_ref[0]                       # (B, D) level target
    x_k = xk_acc[...]                  # (B, D)
    h = h_acc[...]                     # (B, H)
    c = c_acc[...]                     # (B, H)
    wst = wst_ref[...]                 # (H, D) bf16
    bs = bs_ref[...]                   # (1, D)

    # Unrolled static layer loop (L is small and known at trace time).
    for l in range(L):
        # TODO(synk): the external registration objective (fcn_grad /
        # tools.getMultilevel / Grid / fcn_object.reset) has no Pallas
        # equivalent; a synthetic per-level quadratic f(x)=0.5||x-T||^2 is used,
        # so grad(x_k) = x_k - T.
        g = x_k - t

        # Fused (FuseLayerAffine -> LSTM input matmul) + hidden matmul as two
        # MXU dots on static, sublane-aligned slices of the per-layer block:
        #   gates = g @ (WfT @ W_ihT)  +  h @ W_hhT  +  (bf @ W_ihT + b_ih + b_hh)
        gates = (jnp.dot(g.astype(jnp.bfloat16), wcat_ref[0, l, :D, :],
                         preferred_element_type=jnp.float32)
                 + jnp.dot(h.astype(jnp.bfloat16), wcat_ref[0, l, D:, :],
                           preferred_element_type=jnp.float32)
                 + bcat_ref[0, l])                       # (B, 4H)

        # PyTorch LSTMCell gate order [i, f, g, o]
        i_g = jax.nn.sigmoid(gates[:, 0 * H:1 * H])
        f_g = jax.nn.sigmoid(gates[:, 1 * H:2 * H])
        g_g = jnp.tanh(gates[:, 2 * H:3 * H])
        o_g = jax.nn.sigmoid(gates[:, 3 * H:4 * H])

        c = f_g * c + i_g * g_g
        h = o_g * jnp.tanh(c)

        # LSTMNetBlock returns (c_0, (h_0, c_0)) -> ScaleLayerAffine consumes c_new.
        delta = (jnp.dot(c.astype(jnp.bfloat16), wst,
                         preferred_element_type=jnp.float32) + bs)   # (B, D)
        x_k = x_k + delta

        xk_seq_ref[0, l] = x_k            # per-layer trajectory (lane-dense: D=128)

    # Carry recurrent state to the next level.
    xk_acc[...] = x_k
    h_acc[...] = h
    c_acc[...] = c


def make_metanet_call(n_levels, L, B, D, H):
    """Build the single fused pallas_call (grid over levels, layers unrolled)."""
    DH = D + H
    return pl.pallas_call(
        ml_metanet_kernel,
        out_shape=jax.ShapeDtypeStruct((n_levels, L, B, D), jnp.float32),
        grid_spec=pltpu.PrefetchScalarGridSpec(
            num_scalar_prefetch=0,
            grid=(n_levels,),
            in_specs=[
                pl.BlockSpec((1, B, D), lambda lvl: (lvl, 0, 0)),          # T (per level)
                pl.BlockSpec((B, D), lambda lvl: (0, 0)),                  # x_k init
                pl.BlockSpec((B, H), lambda lvl: (0, 0)),                  # h init
                pl.BlockSpec((B, H), lambda lvl: (0, 0)),                  # c init
                pl.BlockSpec((1, L, DH, 4 * H), lambda lvl: (lvl, 0, 0, 0)),  # [Wcomb;WhhT] bf16
                pl.BlockSpec((1, L, 1, 4 * H), lambda lvl: (lvl, 0, 0, 0)),   # folded bias
                pl.BlockSpec((H, D), lambda lvl: (0, 0)),                  # scale weight^T bf16
                pl.BlockSpec((1, D), lambda lvl: (0, 0)),                  # scale bias
            ],
            out_specs=pl.BlockSpec((1, L, B, D), lambda lvl: (lvl, 0, 0, 0)),
            scratch_shapes=[
                pltpu.VMEM((B, D), jnp.float32),   # running x_k (carried across levels)
                pltpu.VMEM((B, H), jnp.float32),   # running h
                pltpu.VMEM((B, H), jnp.float32),   # running c
            ],
        ),
        compiler_params=pltpu.CompilerParams(
            # Level axis is a sequential recurrence (state carry) -> arbitrary.
            dimension_semantics=("arbitrary",),
            # ~10.5 MB double-buffered weight block + small buffers: raise above
            # v5e's 16 MiB default scoped VMEM, stay below v7x's 64 MiB physical.
            vmem_limit_bytes=32 * 1024 * 1024,
        ),
    )


def prepare_params(fuse_w, fuse_b, scale_w, scale_b, lstm_params):
    """One-time host-side weight prep: transpose, fold fuse into LSTM input matmul,
    merge input/hidden weights, pre-sum biases, stack per (level, layer), cast bf16."""
    WfT = jnp.asarray(fuse_w, jnp.float32).T                        # (D, H)
    bf = jnp.asarray(fuse_b, jnp.float32)                           # (H,)
    WsT = jnp.asarray(scale_w, jnp.float32).T.astype(jnp.bfloat16)  # (H, D)
    bs = jnp.asarray(scale_b, jnp.float32)[None, :]                 # (1, D)

    Wcat_levels, bcat_levels = [], []
    for layers in lstm_params:
        Wc, bc = [], []
        for (W_ih, W_hh, b_ih, b_hh) in layers:
            W_ihT = jnp.asarray(W_ih, jnp.float32).T                # (H, 4H)
            W_hhT = jnp.asarray(W_hh, jnp.float32).T                # (H, 4H)
            Wcomb = WfT @ W_ihT                                     # fold fuse layer (D, 4H)
            Wcat = jnp.concatenate([Wcomb, W_hhT], axis=0)          # (D+H, 4H)
            bcomb = (bf @ W_ihT
                     + jnp.asarray(b_ih, jnp.float32)
                     + jnp.asarray(b_hh, jnp.float32))              # (4H,)
            Wc.append(Wcat.astype(jnp.bfloat16))
            bc.append(bcomb[None, :])
        Wcat_levels.append(jnp.stack(Wc))                           # (L, D+H, 4H)
        bcat_levels.append(jnp.stack(bc))                           # (L, 1, 4H)
    return jnp.stack(Wcat_levels), jnp.stack(bcat_levels), WsT, bs


@jax.jit
def ml_metanet_forward(x0, h0, c0, T_stack, Wcat_stack, bcat_stack, WsT, bs):
    n_levels, L = Wcat_stack.shape[0], Wcat_stack.shape[1]
    B, D = x0.shape
    H = h0.shape[-1]

    # TODO(synk): if several independent meta-optimizer instances exist, stack
    # them on the batch axis (B >= 8/16) and/or shard a leading parallel grid
    # axis across the two v7x TensorCores; a single B=2 recurrence leaves most
    # of the chip idle by construction.
    call = make_metanet_call(n_levels, L, B, D, H)
    xk_seq = call(T_stack, x0, h0, c0, Wcat_stack, bcat_stack, WsT, bs)

    # Trajectory lists (mirrors _eval_func + _expand_list, n_fcn = 1).
    # f and g are recomputed here exactly (same f32 math) instead of being
    # emitted from the kernel, which keeps the kernel output lane-dense.
    xk_list, fk_list, gk_list = [], [], []
    x_k = x0
    for lvl in range(n_levels):
        # TODO(synk): tools.getMultilevel / Grid / fcn_object.reset (multiresolution
        # pyramid of the external registration objective) have no Pallas equivalent;
        # a per-level synthetic quadratic target T is used instead.
        T = T_stack[lvl]
        g0 = x_k - T
        xk_list.append(x_k)
        gk_list.append(g0[:, None, :])
        fk_list.append(0.5 * jnp.sum(g0 * g0, axis=-1))
        for l in range(L):
            x_new = xk_seq[lvl, l]
            g = x_new - T
            xk_list.append(x_new)
            gk_list.append(g[:, None, :])
            fk_list.append(0.5 * jnp.sum(g * g, axis=-1))
        x_k = xk_seq[lvl, L - 1]
    return xk_list, fk_list, gk_list


if __name__ == "__main__":
    # Shapes implied by the module: imgDims = 2, imgSz = 8
    #   dimOut = imgDims * imgSz**imgDims = 128, len(fcn_grad) = 1
    #   indim  = dimOut * len(fcn) = 128, hidden_sz = indim * fac_hidden = 512
    # maxM = [32,32] -> maxLevel = 5, minLevel = 4 -> two levels (exercises the
    # fused level axis of the grid).
    B, imgDims, imgSz = 2, 2, 8
    D = imgDims * imgSz ** imgDims          # 128  (dimOut)
    n_fcn = 1
    indim = D * n_fcn                        # 128
    H = indim * 4                            # 512  (hidden_sz)
    num_layers = 2
    n_levels = 2

    # ---- deterministic parameter init (mirrors the PyTorch init_* methods) ----
    prng = np.random.RandomState(0)

    # FuseLayerAffine: kron(ones(H/indim,1), eye(indim)) + N(0, 0.01), bias 0
    fuse_w = (np.kron(np.ones((H // indim, 1)), np.eye(indim))
              + prng.normal(0.0, 0.01, size=(H, indim))).astype(np.float32)
    fuse_b = np.zeros((H,), np.float32)

    # ScaleLayerAffine: kron(eye(D), ones(1, H/D)/(H/D)), bias 0
    scale_w = np.kron(np.eye(D), np.ones((1, H // D)) / (H // D)).astype(np.float32)
    scale_b = np.zeros((D,), np.float32)

    # LSTMNetBlock per (level, layer): xavier_normal weights,
    # bias = cat(-4*ones(H), -4*ones(H), zeros(H), zeros(H)) for both b_ih, b_hh
    def xavier_normal(shape, rs):
        fan_out, fan_in = shape
        std = math.sqrt(2.0 / (fan_in + fan_out))
        return rs.normal(0.0, std, size=shape).astype(np.float32)

    lstm_params = []
    for _ in range(n_levels):
        layers = []
        for _ in range(num_layers):
            W_ih = xavier_normal((4 * H, H), prng)
            W_hh = xavier_normal((4 * H, H), prng)
            b = np.concatenate([-4.0 * np.ones(H), -4.0 * np.ones(H),
                                np.zeros(H), np.zeros(H)]).astype(np.float32)
            layers.append((W_ih, W_hh, b.copy(), b.copy()))
        lstm_params.append(layers)

    # init_hidden_state: np.random.RandomState(45).uniform(0, 1, (B, H)) twice
    hrng = np.random.RandomState(45)
    h0 = jnp.asarray(hrng.uniform(0, 1, (B, H)), dtype=jnp.float32)
    c0 = jnp.asarray(hrng.uniform(0, 1, (B, H)), dtype=jnp.float32)

    # ---- example inputs ----
    key = jax.random.PRNGKey(0)
    k_x, k_t = jax.random.split(key)
    x0 = jax.random.normal(k_x, (B, D), dtype=jnp.float32)
    T_stack = jnp.stack([jax.random.normal(jax.random.fold_in(k_t, lvl), (B, D),
                                           dtype=jnp.float32)
                         for lvl in range(n_levels)])

    # One-time weight prep (transposes, fuse-fold, stacking, bf16 cast) — done
    # once on the host, outside the jitted forward.
    Wcat_stack, bcat_stack, WsT, bs = prepare_params(
        fuse_w, fuse_b, scale_w, scale_b, lstm_params)

    xk_out, fk_out, gk_out = ml_metanet_forward(
        x0, h0, c0, T_stack, Wcat_stack, bcat_stack, WsT, bs)

    jax.block_until_ready(xk_out[-1])
    jax.block_until_ready(fk_out[-1])
    jax.block_until_ready(gk_out[-1])
    assert len(xk_out) == n_levels * (num_layers + 1)
    assert len(fk_out) == n_levels * (num_layers + 1)
    assert len(gk_out) == n_levels * (num_layers + 1)
    assert xk_out[-1].shape == (B, D)
    assert fk_out[-1].shape == (B,)
    assert gk_out[-1].shape == (B, n_fcn, D)
    print("KERNEL_OK")
</pallas_src>

<mosaic_0001>
module attributes {stable_mosaic.version = 11 : i64} {
  func.func @ml_metanet_kernel(%arg0: i32, %arg1: memref<1x2x128xf32, #tpu.memory_space<vmem>>, %arg2: memref<2x128xf32, #tpu.memory_space<vmem>>, %arg3: memref<2x512xf32, #tpu.memory_space<vmem>>, %arg4: memref<2x512xf32, #tpu.memory_space<vmem>>, %arg5: memref<1x2x640x2048xbf16, #tpu.memory_space<vmem>>, %arg6: memref<1x2x1x2048xf32, #tpu.memory_space<vmem>>, %arg7: memref<512x128xbf16, #tpu.memory_space<vmem>>, %arg8: memref<1x128xf32, #tpu.memory_space<vmem>>, %arg9: memref<1x2x2x128xf32, #tpu.memory_space<vmem>>, %arg10: memref<2x128xf32, #tpu.memory_space<vmem>>, %arg11: memref<2x512xf32, #tpu.memory_space<vmem>>, %arg12: memref<2x512xf32, #tpu.memory_space<vmem>>) attributes {dimension_semantics = [#tpu.dimension_semantics<arbitrary>], iteration_bounds = array<i64: 2>, scalar_prefetch = 0 : i64, scratch_operands = 3 : i64, tpu.core_type = #tpu.core_type<tc>, window_params = [{transform_indices = @transform_0, window_bounds = array<i64: 1, 2, 128>}, {pipeline_mode = #tpu.pipeline_mode<synchronous>, transform_indices = @transform_1, window_bounds = array<i64: 2, 128>}, {pipeline_mode = #tpu.pipeline_mode<synchronous>, transform_indices = @transform_2, window_bounds = array<i64: 2, 512>}, {pipeline_mode = #tpu.pipeline_mode<synchronous>, transform_indices = @transform_3, window_bounds = array<i64: 2, 512>}, {transform_indices = @transform_4, window_bounds = array<i64: 1, 2, 640, 2048>}, {transform_indices = @transform_5, window_bounds = array<i64: 1, 2, 1, 2048>}, {pipeline_mode = #tpu.pipeline_mode<synchronous>, transform_indices = @transform_6, window_bounds = array<i64: 512, 128>}, {pipeline_mode = #tpu.pipeline_mode<synchronous>, transform_indices = @transform_7, window_bounds = array<i64: 1, 128>}, {transform_indices = @transform_8, window_bounds = array<i64: 1, 2, 2, 128>}]} {
    %c0_i32 = arith.constant 0 : i32
    %0 = arith.cmpi eq, %arg0, %c0_i32 : i32
    %1 = arith.extui %0 : i1 to i32
    %c0_i32_0 = arith.constant 0 : i32
    %2 = arith.cmpi ne, %1, %c0_i32_0 : i32
    scf.if %2 {
      %c0_60 = arith.constant 0 : index
      %c0_61 = arith.constant 0 : index
      %107 = vector.load %arg2[%c0_60, %c0_61] : memref<2x128xf32, #tpu.memory_space<vmem>>, vector<2x128xf32>
      %c0_62 = arith.constant 0 : index
      %c0_63 = arith.constant 0 : index
      %108 = vector.load %arg10[%c0_62, %c0_63] : memref<2x128xf32, #tpu.memory_space<vmem>>, vector<2x128xf32>
      tpu.vector_store %arg10[%c0_62, %c0_63], %107 {strides = array<i32>} : memref<2x128xf32, #tpu.memory_space<vmem>>, vector<2x128xf32>,
      %c0_64 = arith.constant 0 : index
      %c0_65 = arith.constant 0 : index
      %109 = vector.load %arg3[%c0_64, %c0_65] : memref<2x512xf32, #tpu.memory_space<vmem>>, vector<2x512xf32>
      %c0_66 = arith.constant 0 : index
      %c0_67 = arith.constant 0 : index
      %110 = vector.load %arg11[%c0_66, %c0_67] : memref<2x512xf32, #tpu.memory_space<vmem>>, vector<2x512xf32>
      tpu.vector_store %arg11[%c0_66, %c0_67], %109 {strides = array<i32>} : memref<2x512xf32, #tpu.memory_space<vmem>>, vector<2x512xf32>,
      %c0_68 = arith.constant 0 : index
      %c0_69 = arith.constant 0 : index
      %111 = vector.load %arg4[%c0_68, %c0_69] : memref<2x512xf32, #tpu.memory_space<vmem>>, vector<2x512xf32>
      %c0_70 = arith.constant 0 : index
      %c0_71 = arith.constant 0 : index
      %112 = vector.load %arg12[%c0_70, %c0_71] : memref<2x512xf32, #tpu.memory_space<vmem>>, vector<2x512xf32>
      tpu.vector_store %arg12[%c0_70, %c0_71], %111 {strides = array<i32>} : memref<2x512xf32, #tpu.memory_space<vmem>>, vector<2x512xf32>,
    } else {
    }
    %c0 = arith.constant 0 : index
    %c0_1 = arith.constant 0 : index
    %c0_2 = arith.constant 0 : index
    %3 = vector.load %arg1[%c0, %c0_1, %c0_2] : memref<1x2x128xf32, #tpu.memory_space<vmem>>, vector<1x2x128xf32>
    %4 = vector.shape_cast %3 : vector<1x2x128xf32> to vector<2x128xf32>
    %c0_3 = arith.constant 0 : index
    %c0_4 = arith.constant 0 : index
    %5 = vector.load %arg10[%c0_3, %c0_4] : memref<2x128xf32, #tpu.memory_space<vmem>>, vector<2x128xf32>
    %c0_5 = arith.constant 0 : index
    %c0_6 = arith.constant 0 : index
    %6 = vector.load %arg11[%c0_5, %c0_6] : memref<2x512xf32, #tpu.memory_space<vmem>>, vector<2x512xf32>
    %c0_7 = arith.constant 0 : index
    %c0_8 = arith.constant 0 : index
    %7 = vector.load %arg12[%c0_7, %c0_8] : memref<2x512xf32, #tpu.memory_space<vmem>>, vector<2x512xf32>
    %c0_9 = arith.constant 0 : index
    %c0_10 = arith.constant 0 : index
    %8 = vector.load %arg7[%c0_9, %c0_10] : memref<512x128xbf16, #tpu.memory_space<vmem>>, vector<512x128xbf16>
    %c0_11 = arith.constant 0 : index
    %c0_12 = arith.constant 0 : index
    %9 = vector.load %arg8[%c0_11, %c0_12] : memref<1x128xf32, #tpu.memory_space<vmem>>, vector<1x128xf32>
    %10 = arith.subf %5, %4 : vector<2x128xf32>
    %11 = arith.truncf %10 : vector<2x128xf32> to vector<2x128xbf16>
    %c0_13 = arith.constant 0 : index
    %c0_14 = arith.constant 0 : index
    %c0_15 = arith.constant 0 : index
    %c0_16 = arith.constant 0 : index
    %12 = vector.load %arg5[%c0_13, %c0_14, %c0_15, %c0_16] : memref<1x2x640x2048xbf16, #tpu.memory_space<vmem>>, vector<1x1x128x2048xbf16>
    %13 = vector.shape_cast %12 : vector<1x1x128x2048xbf16> to vector<128x2048xbf16>
    %cst = arith.constant dense<0.000000e+00> : vector<2x2048xf32>
    %14 = tpu.matmul %11, %13, %cst {dimension_numbers = #tpu.dot_dimension_numbers<[1], [0], [0], [1], [0, 0, 1, 1], [], []>} : vector<2x128xbf16>, vector<128x2048xbf16>, vector<2x2048xf32> -> vector<2x2048xf32>
    %15 = arith.truncf %6 : vector<2x512xf32> to vector<2x512xbf16>
    %c0_17 = arith.constant 0 : index
    %c0_18 = arith.constant 0 : index
    %c128 = arith.constant 128 : index
    %c0_19 = arith.constant 0 : index
    %16 = vector.load %arg5[%c0_17, %c0_18, %c128, %c0_19] : memref<1x2x640x2048xbf16, #tpu.memory_space<vmem>>, vector<1x1x512x2048xbf16>
    %17 = vector.shape_cast %16 : vector<1x1x512x2048xbf16> to vector<512x2048xbf16>
    %cst_20 = arith.constant dense<0.000000e+00> : vector<2x2048xf32>
    %18 = tpu.matmul %15, %17, %cst_20 {dimension_numbers = #tpu.dot_dimension_numbers<[1], [0], [0], [1], [0, 0, 1, 1], [], []>} : vector<2x512xbf16>, vector<512x2048xbf16>, vector<2x2048xf32> -> vector<2x2048xf32>
    %19 = arith.addf %14, %18 : vector<2x2048xf32>
    %c0_21 = arith.constant 0 : index
    %c0_22 = arith.constant 0 : index
    %c0_23 = arith.constant 0 : index
    %c0_24 = arith.constant 0 : index
    %20 = vector.load %arg6[%c0_21, %c0_22, %c0_23, %c0_24] : memref<1x2x1x2048xf32, #tpu.memory_space<vmem>>, vector<1x1x1x2048xf32>
    %21 = vector.shape_cast %20 : vector<1x1x1x2048xf32> to vector<1x2048xf32>
    %22 = vector.broadcast %21 : vector<1x2048xf32> to vector<2x2048xf32>
    %23 = arith.addf %19, %22 : vector<2x2048xf32>
    %24 = vector.extract_strided_slice %23 {offsets = [0, 0], sizes = [2, 512], strides = [1, 1]} : vector<2x2048xf32> to vector<2x512xf32>
    %25 = arith.negf %24 : vector<2x512xf32>
    %26 = math.exp %25 : vector<2x512xf32>
    %cst_25 = arith.constant 1.000000e+00 : f32
    %27 = vector.broadcast %cst_25 : f32 to vector<2x512xf32>
    %28 = arith.addf %27, %26 : vector<2x512xf32>
    %29 = arith.divf %27, %28 : vector<2x512xf32>
    %30 = vector.extract_strided_slice %23 {offsets = [0, 512], sizes = [2, 512], strides = [1, 1]} : vector<2x2048xf32> to vector<2x512xf32>
    %31 = arith.negf %30 : vector<2x512xf32>
    %32 = math.exp %31 : vector<2x512xf32>
    %cst_26 = arith.constant 1.000000e+00 : f32
    %33 = vector.broadcast %cst_26 : f32 to vector<2x512xf32>
    %34 = arith.addf %33, %32 : vector<2x512xf32>
    %35 = arith.divf %33, %34 : vector<2x512xf32>
    %36 = vector.extract_strided_slice %23 {offsets = [0, 1024], sizes = [2, 512], strides = [1, 1]} : vector<2x2048xf32> to vector<2x512xf32>
    %37 = math.tanh %36 : vector<2x512xf32>
    %38 = vector.extract_strided_slice %23 {offsets = [0, 1536], sizes = [2, 512], strides = [1, 1]} : vector<2x2048xf32> to vector<2x512xf32>
    %39 = arith.negf %38 : vector<2x512xf32>
    %40 = math.exp %39 : vector<2x512xf32>
    %cst_27 = arith.constant 1.000000e+00 : f32
    %41 = vector.broadcast %cst_27 : f32 to vector<2x512xf32>
    %42 = arith.addf %41, %40 : vector<2x512xf32>
    %43 = arith.divf %41, %42 : vector<2x512xf32>
    %44 = arith.mulf %35, %7 : vector<2x512xf32>
    %45 = arith.mulf %29, %37 : vector<2x512xf32>
    %46 = arith.addf %44, %45 : vector<2x512xf32>
    %47 = math.tanh %46 : vector<2x512xf32>
    %48 = arith.mulf %43, %47 : vector<2x512xf32>
    %49 = arith.truncf %46 : vector<2x512xf32> to vector<2x512xbf16>
    %cst_28 = arith.constant dense<0.000000e+00> : vector<2x128xf32>
    %50 = tpu.matmul %49, %8, %cst_28 {dimension_numbers = #tpu.dot_dimension_numbers<[1], [0], [0], [1], [0, 0, 1, 1], [], []>} : vector<2x512xbf16>, vector<512x128xbf16>, vector<2x128xf32> -> vector<2x128xf32>
    %51 = vector.broadcast %9 : vector<1x128xf32> to vector<2x128xf32>
    %52 = arith.addf %50, %51 : vector<2x128xf32>
    %53 = arith.addf %5, %52 : vector<2x128xf32>
    %c0_29 = arith.constant 0 : index
    %c0_30 = arith.constant 0 : index
    %c0_31 = arith.constant 0 : index
    %c0_32 = arith.constant 0 : index
    %54 = vector.load %arg9[%c0_29, %c0_30, %c0_31, %c0_32] : memref<1x2x2x128xf32, #tpu.memory_space<vmem>>, vector<1x1x2x128xf32>
    %55 = vector.shape_cast %54 : vector<1x1x2x128xf32> to vector<2x128xf32>
    %56 = vector.shape_cast %53 : vector<2x128xf32> to vector<1x1x2x128xf32>
    tpu.vector_store %arg9[%c0_29, %c0_30, %c0_31, %c0_32], %56 {strides = array<i32>} : memref<1x2x2x128xf32, #tpu.memory_space<vmem>>, vector<1x1x2x128xf32>,
    %57 = arith.subf %53, %4 : vector<2x128xf32>
    %58 = arith.truncf %57 : vector<2x128xf32> to vector<2x128xbf16>
    %c0_33 = arith.constant 0 : index
    %c1 = arith.constant 1 : index
    %c0_34 = arith.constant 0 : index
    %c0_35 = arith.constant 0 : index
    %59 = vector.load %arg5[%c0_33, %c1, %c0_34, %c0_35] : memref<1x2x640x2048xbf16, #tpu.memory_space<vmem>>, vector<1x1x128x2048xbf16>
    %60 = vector.shape_cast %59 : vector<1x1x128x2048xbf16> to vector<128x2048xbf16>
    %cst_36 = arith.constant dense<0.000000e+00> : vector<2x2048xf32>
    %61 = tpu.matmul %58, %60, %cst_36 {dimension_numbers = #tpu.dot_dimension_numbers<[1], [0], [0], [1], [0, 0, 1, 1], [], []>} : vector<2x128xbf16>, vector<128x2048xbf16>, vector<2x2048xf32> -> vector<2x2048xf32>
    %62 = arith.truncf %48 : vector<2x512xf32> to vector<2x512xbf16>
    %c0_37 = arith.constant 0 : index
    %c1_38 = arith.constant 1 : index
    %c128_39 = arith.constant 128 : index
    %c0_40 = arith.constant 0 : index
    %63 = vector.load %arg5[%c0_37, %c1_38, %c128_39, %c0_40] : memref<1x2x640x2048xbf16, #tpu.memory_space<vmem>>, vector<1x1x512x2048xbf16>
    %64 = vector.shape_cast %63 : vector<1x1x512x2048xbf16> to vector<512x2048xbf16>
    %cst_41 = arith.constant dense<0.000000e+00> : vector<2x2048xf32>
    %65 = tpu.matmul %62, %64, %cst_41 {dimension_numbers = #tpu.dot_dimension_numbers<[1], [0], [0], [1], [0, 0, 1, 1], [], []>} : vector<2x512xbf16>, vector<512x2048xbf16>, vector<2x2048xf32> -> vector<2x2048xf32>
    %66 = arith.addf %61, %65 : vector<2x2048xf32>
    %c0_42 = arith.constant 0 : index
    %c1_43 = arith.constant 1 : index
    %c0_44 = arith.constant 0 : index
    %c0_45 = arith.constant 0 : index
    %67 = vector.load %arg6[%c0_42, %c1_43, %c0_44, %c0_45] : memref<1x2x1x2048xf32, #tpu.memory_space<vmem>>, vector<1x1x1x2048xf32>
    %68 = vector.shape_cast %67 : vector<1x1x1x2048xf32> to vector<1x2048xf32>
    %69 = vector.broadcast %68 : vector<1x2048xf32> to vector<2x2048xf32>
    %70 = arith.addf %66, %69 : vector<2x2048xf32>
    %71 = vector.extract_strided_slice %70 {offsets = [0, 0], sizes = [2, 512], strides = [1, 1]} : vector<2x2048xf32> to vector<2x512xf32>
    %72 = arith.negf %71 : vector<2x512xf32>
    %73 = math.exp %72 : vector<2x512xf32>
    %cst_46 = arith.constant 1.000000e+00 : f32
    %74 = vector.broadcast %cst_46 : f32 to vector<2x512xf32>
    %75 = arith.addf %74, %73 : vector<2x512xf32>
    %76 = arith.divf %74, %75 : vector<2x512xf32>
    %77 = vector.extract_strided_slice %70 {offsets = [0, 512], sizes = [2, 512], strides = [1, 1]} : vector<2x2048xf32> to vector<2x512xf32>
    %78 = arith.negf %77 : vector<2x512xf32>
    %79 = math.exp %78 : vector<2x512xf32>
    %cst_47 = arith.constant 1.000000e+00 : f32
    %80 = vector.broadcast %cst_47 : f32 to vector<2x512xf32>
    %81 = arith.addf %80, %79 : vector<2x512xf32>
    %82 = arith.divf %80, %81 : vector<2x512xf32>
    %83 = vector.extract_strided_slice %70 {offsets = [0, 1024], sizes = [2, 512], strides = [1, 1]} : vector<2x2048xf32> to vector<2x512xf32>
    %84 = math.tanh %83 : vector<2x512xf32>
    %85 = vector.extract_strided_slice %70 {offsets = [0, 1536], sizes = [2, 512], strides = [1, 1]} : vector<2x2048xf32> to vector<2x512xf32>
    %86 = arith.negf %85 : vector<2x512xf32>
    %87 = math.exp %86 : vector<2x512xf32>
    %cst_48 = arith.constant 1.000000e+00 : f32
    %88 = vector.broadcast %cst_48 : f32 to vector<2x512xf32>
    %89 = arith.addf %88, %87 : vector<2x512xf32>
    %90 = arith.divf %88, %89 : vector<2x512xf32>
    %91 = arith.mulf %82, %46 : vector<2x512xf32>
    %92 = arith.mulf %76, %84 : vector<2x512xf32>
    %93 = arith.addf %91, %92 : vector<2x512xf32>
    %94 = math.tanh %93 : vector<2x512xf32>
    %95 = arith.mulf %90, %94 : vector<2x512xf32>
    %96 = arith.truncf %93 : vector<2x512xf32> to vector<2x512xbf16>
    %cst_49 = arith.constant dense<0.000000e+00> : vector<2x128xf32>
    %97 = tpu.matmul %96, %8, %cst_49 {dimension_numbers = #tpu.dot_dimension_numbers<[1], [0], [0], [1], [0, 0, 1, 1], [], []>} : vector<2x512xbf16>, vector<512x128xbf16>, vector<2x128xf32> -> vector<2x128xf32>
    %98 = vector.broadcast %9 : vector<1x128xf32> to vector<2x128xf32>
    %99 = arith.addf %97, %98 : vector<2x128xf32>
    %100 = arith.addf %53, %99 : vector<2x128xf32>
    %c0_50 = arith.constant 0 : index
    %c1_51 = arith.constant 1 : index
    %c0_52 = arith.constant 0 : index
    %c0_53 = arith.constant 0 : index
    %101 = vector.load %arg9[%c0_50, %c1_51, %c0_52, %c0_53] : memref<1x2x2x128xf32, #tpu.memory_space<vmem>>, vector<1x1x2x128xf32>
    %102 = vector.shape_cast %101 : vector<1x1x2x128xf32> to vector<2x128xf32>
    %103 = vector.shape_cast %100 : vector<2x128xf32> to vector<1x1x2x128xf32>
    tpu.vector_store %arg9[%c0_50, %c1_51, %c0_52, %c0_53], %103 {strides = array<i32>} : memref<1x2x2x128xf32, #tpu.memory_space<vmem>>, vector<1x1x2x128xf32>,
    %c0_54 = arith.constant 0 : index
    %c0_55 = arith.constant 0 : index
    %104 = vector.load %arg10[%c0_54, %c0_55] : memref<2x128xf32, #tpu.memory_space<vmem>>, vector<2x128xf32>
    tpu.vector_store %arg10[%c0_54, %c0_55], %100 {strides = array<i32>} : memref<2x128xf32, #tpu.memory_space<vmem>>, vector<2x128xf32>,
    %c0_56 = arith.constant 0 : index
    %c0_57 = arith.constant 0 : index
    %105 = vector.load %arg11[%c0_56, %c0_57] : memref<2x512xf32, #tpu.memory_space<vmem>>, vector<2x512xf32>
    tpu.vector_store %arg11[%c0_56, %c0_57], %95 {strides = array<i32>} : memref<2x512xf32, #tpu.memory_space<vmem>>, vector<2x512xf32>,
    %c0_58 = arith.constant 0 : index
    %c0_59 = arith.constant 0 : index
    %106 = vector.load %arg12[%c0_58, %c0_59] : memref<2x512xf32, #tpu.memory_space<vmem>>, vector<2x512xf32>
    tpu.vector_store %arg12[%c0_58, %c0_59], %93 {strides = array<i32>} : memref<2x512xf32, #tpu.memory_space<vmem>>, vector<2x512xf32>,
    return
  }
  func.func @transform_0(%arg0: i32) -> (i32, i32, i32) {
    %c0_i32 = arith.constant 0 : i32
    %c0_i32_0 = arith.constant 0 : i32
    %c0_i32_1 = arith.constant 0 : i32
    return %arg0, %c0_i32, %c0_i32_0 : i32, i32, i32
  }
  func.func @transform_1(%arg0: i32) -> (i32, i32) {
    %c0_i32 = arith.constant 0 : i32
    %c0_i32_0 = arith.constant 0 : i32
    %c0_i32_1 = arith.constant 0 : i32
    return %c0_i32, %c0_i32_0 : i32, i32
  }
  func.func @transform_2(%arg0: i32) -> (i32, i32) {
    %c0_i32 = arith.constant 0 : i32
    %c0_i32_0 = arith.constant 0 : i32
    %c0_i32_1 = arith.constant 0 : i32
    return %c0_i32, %c0_i32_0 : i32, i32
  }
  func.func @transform_3(%arg0: i32) -> (i32, i32) {
    %c0_i32 = arith.constant 0 : i32
    %c0_i32_0 = arith.constant 0 : i32
    %c0_i32_1 = arith.constant 0 : i32
    return %c0_i32, %c0_i32_0 : i32, i32
  }
  func.func @transform_4(%arg0: i32) -> (i32, i32, i32, i32) {
    %c0_i32 = arith.constant 0 : i32
    %c0_i32_0 = arith.constant 0 : i32
    %c0_i32_1 = arith.constant 0 : i32
    %c0_i32_2 = arith.constant 0 : i32
    return %arg0, %c0_i32, %c0_i32_0, %c0_i32_1 : i32, i32, i32, i32
  }
  func.func @transform_5(%arg0: i32) -> (i32, i32, i32, i32) {
    %c0_i32 = arith.constant 0 : i32
    %c0_i32_0 = arith.constant 0 : i32
    %c0_i32_1 = arith.constant 0 : i32
    %c0_i32_2 = arith.constant 0 : i32
    return %arg0, %c0_i32, %c0_i32_0, %c0_i32_1 : i32, i32, i32, i32
  }
  func.func @transform_6(%arg0: i32) -> (i32, i32) {
    %c0_i32 = arith.constant 0 : i32
    %c0_i32_0 = arith.constant 0 : i32
    %c0_i32_1 = arith.constant 0 : i32
    return %c0_i32, %c0_i32_0 : i32, i32
  }
  func.func @transform_7(%arg0: i32) -> (i32, i32) {
    %c0_i32 = arith.constant 0 : i32
    %c0_i32_0 = arith.constant 0 : i32
    %c0_i32_1 = arith.constant 0 : i32
    return %c0_i32, %c0_i32_0 : i32, i32
  }
  func.func @transform_8(%arg0: i32) -> (i32, i32, i32, i32) {
    %c0_i32 = arith.constant 0 : i32
    %c0_i32_0 = arith.constant 0 : i32
    %c0_i32_1 = arith.constant 0 : i32
    %c0_i32_2 = arith.constant 0 : i32
    return %arg0, %c0_i32, %c0_i32_0, %c0_i32_1 : i32, i32, i32, i32
  }
}

</mosaic_0001>

<llo_original>
// kernel: ml_metanet_forward.1
$region0: #{ml_metanet_forward.1}
  #allocation0 [shape = 'u32[]', space=smem, size = 0x4, offset = 0x4, fixed_abs, tag = 'smem constant byte address 0x4 - core index']
  #allocation1 [shape = 'u32[144,128]{1,0:T(1,128)}', space=vmem, size = 0x12000, scoped, tag = 'internal scratch']
  #allocation2 [shape = 'f32[2,128]{1,0:T(2,128)}', space=vmem, size = 0x400, scoped, tag = 'scratch operand']
  #allocation3 [shape = 'f32[2,512]{1,0:T(2,128)}', space=vmem, size = 0x1000, scoped, tag = 'scratch operand']
  #allocation4 [shape = 'f32[2,512]{1,0:T(2,128)}', space=vmem, size = 0x1000, scoped, tag = 'scratch operand']
  %s0 = inlined_call_operand.hbm [shape: f32[2,2,128], index: 0, kind: input, shape index: {}]
  %s1 = inlined_call_operand.hbm [shape: f32[2,128], index: 1, kind: input, shape index: {}]
  %s2 = inlined_call_operand.hbm [shape: f32[2,512], index: 2, kind: input, shape index: {}]
  %s3 = inlined_call_operand.hbm [shape: f32[2,512], index: 3, kind: input, shape index: {}]
  %s4 = inlined_call_operand.hbm [shape: bf16[2,2,640,2048], index: 4, kind: input, shape index: {}]
  %s5 = inlined_call_operand.hbm [shape: f32[2,2,1,2048], index: 5, kind: input, shape index: {}]
  %s6 = inlined_call_operand.hbm [shape: bf16[512,128], index: 6, kind: input, shape index: {}]
  %s7 = inlined_call_operand.hbm [shape: f32[1,128], index: 7, kind: input, shape index: {}]
  %s8 = inlined_call_operand.vmem [shape: f32[2,2,2,128], index: 8, kind: output, shape index: {}]
  %s9 = sld [smem:[#allocation0]]
  $region101: #{ml_metanet_forward.1} parent=0
    _
  %s11 = ssub.s32 1, %s9
  %s12 = scalar_select 0, %s11, %s9
  $region1: #{ml_metanet_forward.1} parent=0
    #allocation5 [shape = 'u8[2048]{0}', space=vmem, size = 0x800, scoped, tag = 'input window, operand 0']
    #allocation6 [shape = 's32[2]{0}', space=sflag, size = 0x8, scoped, tag = 'scoped memory for ml_metanet_forward.1']
    #allocation7 [shape = 'u8[1024]{0}', space=vmem, size = 0x400, scoped, tag = 'input window, operand 1, single buffered']
    #allocation8 [shape = 's32[1]{0}', space=sflag, size = 0x4, scoped, tag = 'scoped memory for ml_metanet_forward.1']
    #allocation9 [shape = 'u8[4096]{0}', space=vmem, size = 0x1000, scoped, tag = 'input window, operand 2, single buffered']
    #allocation10 [shape = 'u8[4096]{0}', space=vmem, size = 0x1000, scoped, tag = 'input window, operand 3, single buffered']
    #allocation11 [shape = 's32[1]{0}', space=sflag, size = 0x4, scoped, tag = 'scoped memory for ml_metanet_forward.1']
    #allocation12 [shape = 'u8[10485760]{0}', space=vmem, size = 0xa00000, scoped, tag = 'input window, operand 4']
    #allocation13 [shape = 'u8[32768]{0}', space=vmem, size = 0x8000, scoped, tag = 'input window, operand 5']
    #allocation14 [shape = 'u8[131072]{0}', space=vmem, size = 0x20000, scoped, tag = 'input window, operand 6, single buffered']
    #allocation15 [shape = 'u8[512]{0}', space=vmem, size = 0x400, scoped, tag = 'input window, operand 7, single buffered']
    %13 = vsyncpa [#allocation6], 0
    %s14 = scalar_lea.sflag [#allocation6], 1
    %15 = vsyncpa %s14, 0
    %16 = vsyncpa [#allocation8], 0
    %17 = vsyncpa [#allocation11], 0
    loop: start=0, step=1, limit=4
    $region2: #{ml_metanet_forward.1} parent=1 // loop_pre_header
      _
    $region3: #{ml_metanet_forward.1} parent=1 // loop_header
      %s19 = sphi 0, %s23
      %p20 = scmp.ge.s32.totalorder %s19, 4
      %s29 = sphi 0, %s31
      %s32 = sphi 0, %s29
      %s33 = sphi 0, %s32
      %s49 = sphi 0, %s33
      %s53 = sphi 0, %s53
      %s55 = sphi 0, %s53
      %s56 = sphi 0, %s55
      %s70 = sphi 0, %s56
      %s74 = sphi 0, %s74
      %s76 = sphi 0, %s74
      %s77 = sphi 0, %s76
      %s91 = sphi 0, %s77
      %s95 = sphi 0, %s95
      %s97 = sphi 0, %s95
      %s98 = sphi 0, %s97
      %s112 = sphi 0, %s98
      %s118 = sphi 0, %s120
      %s121 = sphi 0, %s118
      %s122 = sphi 0, %s121
      %s138 = sphi 0, %s122
      %s144 = sphi 0, %s146
      %s147 = sphi 0, %s144
      %s148 = sphi 0, %s147
      %s164 = sphi 0, %s148
      %s168 = sphi 0, %s168
      %s170 = sphi 0, %s168
      %s171 = sphi 0, %s170
      %s185 = sphi 0, %s171
      %s189 = sphi 0, %s189
      %s191 = sphi 0, %s189
      %s192 = sphi 0, %s191
      %s206 = sphi 0, %s192
      %s212 = sphi 0, %s214
      %s215 = sphi 0, %s212
      %s216 = sphi 0, %s215
      %s232 = sphi 0, %s216
    $region4: #{ml_metanet_forward.1} parent=1 // loop_header_branch
      %22 = sbr.rel (%p20) target = $region8
    $region5: #{ml_metanet_forward.1} parent=1 // loop_body
      %s24 = ssub.s32 %s19, 1
      %s25 = ssub.s32 %s19, 2
      %s26 = sadd.s32 %s19, 1
      %s27 = ssub.s32 %s19, %s26
      %p28 = scmp.eq.s32.totalorder %s27, 0
      %s30 = sadd.s32 %s29, 1
      %s31 = scalar_select %p28, %s29, %s30
      %p34 = pneg %p28
      %p35 = scmp.eq.s32.totalorder %s19, 1
      %p36 = por %p34, %p35
      %p37 = scmp.ne.s32.totalorder %s29, %s32
      %p38 = scmp.eq.s32.totalorder %s19, 0
      %p39 = por %p37, %p38
      %p40 = scmp.ne.s32.totalorder %s29, %s32
      %p41 = scmp.eq.s32.totalorder %s24, 1
      %p42 = por %p40, %p41
      %p43 = scmp.ne.s32.totalorder %s32, %s33
      %p44 = scmp.eq.s32.totalorder %s24, 0
      %p45 = por %p43, %p44
      %p46 = scmp.ne.s32.totalorder %s32, %s33
      %p47 = scmp.eq.s32.totalorder %s25, 1
      %p48 = por %p46, %p47
      %p50 = scmp.ne.s32.totalorder %s33, %s49
      %p51 = scmp.eq.s32.totalorder %s25, 0
      %p52 = por %p50, %p51
      %s54 = sadd.s32 %s53, 1
      %p57 = scmp.eq.s32.totalorder %s19, 1
      %p58 = scmp.ne.s32.totalorder %s53, %s55
      %p59 = scmp.eq.s32.totalorder %s19, 0
      %p60 = por %p58, %p59
      %p61 = scmp.ne.s32.totalorder %s53, %s55
      %p62 = scmp.eq.s32.totalorder %s24, 1
      %p63 = por %p61, %p62
      %p64 = scmp.ne.s32.totalorder %s55, %s56
      %p65 = scmp.eq.s32.totalorder %s24, 0
      %p66 = por %p64, %p65
      %p67 = scmp.ne.s32.totalorder %s55, %s56
      %p68 = scmp.eq.s32.totalorder %s25, 1
      %p69 = por %p67, %p68
      %p71 = scmp.ne.s32.totalorder %s56, %s70
      %p72 = scmp.eq.s32.totalorder %s25, 0
      %p73 = por %p71, %p72
      %s75 = sadd.s32 %s74, 1
      %p78 = scmp.eq.s32.totalorder %s19, 1
      %p79 = scmp.ne.s32.totalorder %s74, %s76
      %p80 = scmp.eq.s32.totalorder %s19, 0
      %p81 = por %p79, %p80
      %p82 = scmp.ne.s32.totalorder %s74, %s76
      %p83 = scmp.eq.s32.totalorder %s24, 1
      %p84 = por %p82, %p83
      %p85 = scmp.ne.s32.totalorder %s76, %s77
      %p86 = scmp.eq.s32.totalorder %s24, 0
      %p87 = por %p85, %p86
      %p88 = scmp.ne.s32.totalorder %s76, %s77
      %p89 = scmp.eq.s32.totalorder %s25, 1
      %p90 = por %p88, %p89
      %p92 = scmp.ne.s32.totalorder %s77, %s91
      %p93 = scmp.eq.s32.totalorder %s25, 0
      %p94 = por %p92, %p93
      %s96 = sadd.s32 %s95, 1
      %p99 = scmp.eq.s32.totalorder %s19, 1
      %p100 = scmp.ne.s32.totalorder %s95, %s97
      %p101 = scmp.eq.s32.totalorder %s19, 0
      %p102 = por %p100, %p101
      %p103 = scmp.ne.s32.totalorder %s95, %s97
      %p104 = scmp.eq.s32.totalorder %s24, 1
      %p105 = por %p103, %p104
      %p106 = scmp.ne.s32.totalorder %s97, %s98
      %p107 = scmp.eq.s32.totalorder %s24, 0
      %p108 = por %p106, %p107
      %p109 = scmp.ne.s32.totalorder %s97, %s98
      %p110 = scmp.eq.s32.totalorder %s25, 1
      %p111 = por %p109, %p110
      %p113 = scmp.ne.s32.totalorder %s98, %s112
      %p114 = scmp.eq.s32.totalorder %s25, 0
      %p115 = por %p113, %p114
      %s116 = ssub.s32 %s19, %s26
      %p117 = scmp.eq.s32.totalorder %s116, 0
      %s119 = sadd.s32 %s118, 1
      %s120 = scalar_select %p117, %s118, %s119
      %p123 = pneg %p117
      %p124 = scmp.eq.s32.totalorder %s19, 1
      %p125 = por %p123, %p124
      %p126 = scmp.ne.s32.totalorder %s118, %s121
      %p127 = scmp.eq.s32.totalorder %s19, 0
      %p128 = por %p126, %p127
      %p129 = scmp.ne.s32.totalorder %s118, %s121
      %p130 = scmp.eq.s32.totalorder %s24, 1
      %p131 = por %p129, %p130
      %p132 = scmp.ne.s32.totalorder %s121, %s122
      %p133 = scmp.eq.s32.totalorder %s24, 0
      %p134 = por %p132, %p133
      %p135 = scmp.ne.s32.totalorder %s121, %s122
      %p136 = scmp.eq.s32.totalorder %s25, 1
      %p137 = por %p135, %p136
      %p139 = scmp.ne.s32.totalorder %s122, %s138
      %p140 = scmp.eq.s32.totalorder %s25, 0
      %p141 = por %p139, %p140
      %s142 = ssub.s32 %s19, %s26
      %p143 = scmp.eq.s32.totalorder %s142, 0
      %s145 = sadd.s32 %s144, 1
      %s146 = scalar_select %p143, %s144, %s145
      %p149 = pneg %p143
      %p150 = scmp.eq.s32.totalorder %s19, 1
      %p151 = por %p149, %p150
      %p152 = scmp.ne.s32.totalorder %s144, %s147
      %p153 = scmp.eq.s32.totalorder %s19, 0
      %p154 = por %p152, %p153
      %p155 = scmp.ne.s32.totalorder %s144, %s147
      %p156 = scmp.eq.s32.totalorder %s24, 1
      %p157 = por %p155, %p156
      %p158 = scmp.ne.s32.totalorder %s147, %s148
      %p159 = scmp.eq.s32.totalorder %s24, 0
      %p160 = por %p158, %p159
      %p161 = scmp.ne.s32.totalorder %s147, %s148
      %p162 = scmp.eq.s32.totalorder %s25, 1
      %p163 = por %p161, %p162
      %p165 = scmp.ne.s32.totalorder %s148, %s164
      %p166 = scmp.eq.s32.totalorder %s25, 0
      %p167 = por %p165, %p166
      %s169 = sadd.s32 %s168, 1
      %p172 = scmp.eq.s32.totalorder %s19, 1
      %p173 = scmp.ne.s32.totalorder %s168, %s170
      %p174 = scmp.eq.s32.totalorder %s19, 0
      %p175 = por %p173, %p174
      %p176 = scmp.ne.s32.totalorder %s168, %s170
      %p177 = scmp.eq.s32.totalorder %s24, 1
      %p178 = por %p176, %p177
      %p179 = scmp.ne.s32.totalorder %s170, %s171
      %p180 = scmp.eq.s32.totalorder %s24, 0
      %p181 = por %p179, %p180
      %p182 = scmp.ne.s32.totalorder %s170, %s171
      %p183 = scmp.eq.s32.totalorder %s25, 1
      %p184 = por %p182, %p183
      %p186 = scmp.ne.s32.totalorder %s171, %s185
      %p187 = scmp.eq.s32.totalorder %s25, 0
      %p188 = por %p186, %p187
      %s190 = sadd.s32 %s189, 1
      %p193 = scmp.eq.s32.totalorder %s19, 1
      %p194 = scmp.ne.s32.totalorder %s189, %s191
      %p195 = scmp.eq.s32.totalorder %s19, 0
      %p196 = por %p194, %p195
      %p197 = scmp.ne.s32.totalorder %s189, %s191
      %p198 = scmp.eq.s32.totalorder %s24, 1
      %p199 = por %p197, %p198
      %p200 = scmp.ne.s32.totalorder %s191, %s192
      %p201 = scmp.eq.s32.totalorder %s24, 0
      %p202 = por %p200, %p201
      %p203 = scmp.ne.s32.totalorder %s191, %s192
      %p204 = scmp.eq.s32.totalorder %s25, 1
      %p205 = por %p203, %p204
      %p207 = scmp.ne.s32.totalorder %s192, %s206
      %p208 = scmp.eq.s32.totalorder %s25, 0
      %p209 = por %p207, %p208
      %s210 = ssub.s32 %s19, %s26
      %p211 = scmp.eq.s32.totalorder %s210, 0
      %s213 = sadd.s32 %s212, 1
      %s214 = scalar_select %p211, %s212, %s213
      %p217 = pneg %p211
      %p218 = scmp.eq.s32.totalorder %s19, 1
      %p219 = por %p217, %p218
      %p220 = scmp.ne.s32.totalorder %s212, %s215
      %p221 = scmp.eq.s32.totalorder %s19, 0
      %p222 = por %p220, %p221
      %p223 = scmp.ne.s32.totalorder %s212, %s215
      %p224 = scmp.eq.s32.totalorder %s24, 1
      %p225 = por %p223, %p224
      %p226 = scmp.ne.s32.totalorder %s215, %s216
      %p227 = scmp.eq.s32.totalorder %s24, 0
      %p228 = por %p226, %p227
      %p229 = scmp.ne.s32.totalorder %s215, %s216
      %p230 = scmp.eq.s32.totalorder %s25, 1
      %p231 = por %p229, %p230
      %p233 = scmp.ne.s32.totalorder %s216, %s232
      %p234 = scmp.eq.s32.totalorder %s25, 0
      %p235 = por %p233, %p234
      %p236 = scmp.le.s32.totalorder 1, %s19
      %p237 = scmp.lt.s32.totalorder %s19, 3
      %p238 = pnand %p236, %p237
      %p239 = pneg %p238
      // Predicated region
      $region9: #{ml_metanet_forward.1} parent=5 // pred_check
        _
      $region10: #{ml_metanet_forward.1} parent=5 // pred_check_branch
        %241 = sbr.rel (%p238) target = $region12
      $region11: #{ml_metanet_forward.1} parent=5 // pred_region
        %s242 = ssub.s32 %s19, 1
        // Predicated region
        $region13: #{ml_metanet_forward.1} parent=11 // pred_check
          %p243 = pneg %p66
        $region14: #{ml_metanet_forward.1} parent=11 // pred_check_branch
          %245 = sbr.rel (%p243) target = $region16
        $region15: #{ml_metanet_forward.1} parent=11 // pred_region
          %s247 = ssub.s32 32, 32
          %248 = vsyncadd [#allocation8], %s247
          %s250 = sshll.u32 [#allocation7], 4
          %s251 = int_to_ptr.vmem [resolvable:$true] %s250
          %253 = dma.hbm_to_vmem [thread:$0]  %s1, 32, %s251, [#allocation8]
        $region16: #{ml_metanet_forward.1} parent=11 // pred_fallthru
          _
        // Predicated region
        $region17: #{ml_metanet_forward.1} parent=11 // pred_check
          %p254 = pneg %p87
        $region18: #{ml_metanet_forward.1} parent=11 // pred_check_branch
          %256 = sbr.rel (%p254) target = $region20
        $region19: #{ml_metanet_forward.1} parent=11 // pred_region
          %s258 = ssub.s32 128, 128
          %259 = vsyncadd [#allocation8], %s258
          %s261 = sshll.u32 [#allocation9], 4
          %s262 = int_to_ptr.vmem [resolvable:$true] %s261
          %264 = dma.hbm_to_vmem [thread:$0]  %s2, 128, %s262, [#allocation8]
        $region20: #{ml_metanet_forward.1} parent=11 // pred_fallthru
          _
        // Predicated region
        $region21: #{ml_metanet_forward.1} parent=11 // pred_check
          %p265 = pneg %p108
        $region22: #{ml_metanet_forward.1} parent=11 // pred_check_branch
          %267 = sbr.rel (%p265) target = $region24
        $region23: #{ml_metanet_forward.1} parent=11 // pred_region
          %s269 = ssub.s32 128, 128
          %270 = vsyncadd [#allocation11], %s269
          %s272 = sshll.u32 [#allocation10], 4
          %s273 = int_to_ptr.vmem [resolvable:$true] %s272
          %275 = dma.hbm_to_vmem [thread:$0]  %s3, 128, %s273, [#allocation11]
        $region24: #{ml_metanet_forward.1} parent=11 // pred_fallthru
          _
        // Predicated region
        $region25: #{ml_metanet_forward.1} parent=11 // pred_check
          %p276 = pneg %p181
        $region26: #{ml_metanet_forward.1} parent=11 // pred_check_branch
          %278 = sbr.rel (%p276) target = $region28
        $region27: #{ml_metanet_forward.1} parent=11 // pred_region
          %s280 = ssub.s32 4096, 4096
          %281 = vsyncadd [#allocation8], %s280
          %s282 = sshll.u32 [#allocation14], 4
          %s283 = int_to_ptr.vmem [resolvable:$true] %s282
          %288 = dma.hbm_to_vmem [thread:$0]  %s6, 4096, %s283, [#allocation8], 64, 64, 4
        $region28: #{ml_metanet_forward.1} parent=11 // pred_fallthru
          _
        // Predicated region
        $region29: #{ml_metanet_forward.1} parent=11 // pred_check
          %p289 = pneg %p202
        $region30: #{ml_metanet_forward.1} parent=11 // pred_check_branch
          %291 = sbr.rel (%p289) target = $region32
        $region31: #{ml_metanet_forward.1} parent=11 // pred_region
          %s293 = ssub.s32 16, 16
          %294 = vsyncadd [#allocation11], %s293
          %s296 = sshll.u32 [#allocation15], 4
          %s297 = int_to_ptr.vmem [resolvable:$true] %s296
          %299 = dma.hbm_to_vmem [thread:$0]  %s7, 16, %s297, [#allocation11]
        $region32: #{ml_metanet_forward.1} parent=11 // pred_fallthru
          _
      $region12: #{ml_metanet_forward.1} parent=5 // pred_fallthru
        _
      %p300 = scmp.lt.s32.totalorder %s19, 2
      // Predicated region
      $region33: #{ml_metanet_forward.1} parent=5 // pred_check
        %p301 = pneg %p300
      $region34: #{ml_metanet_forward.1} parent=5 // pred_check_branch
        %303 = sbr.rel (%p301) target = $region36
      $region35: #{ml_metanet_forward.1} parent=5 // pred_region
        // Predicated region
        $region37: #{ml_metanet_forward.1} parent=35 // pred_check
          %p304 = pneg %p39
        $region38: #{ml_metanet_forward.1} parent=35 // pred_check_branch
          %306 = sbr.rel (%p304) target = $region40
        $region39: #{ml_metanet_forward.1} parent=35 // pred_region
          %s307 = sand.u32 %s19, 1
          %s308 = scalar_lea.sflag [#allocation6], %s307
          %s309 = sand.u32 %s29, 1
          %s310 = smul.addr %s309, 2
          %s311 = scalar_lea.vmem [#allocation5], %s310
          %s313 = ssub.s32 32, 32
          %314 = vsyncadd %s308, %s313
          %s315 = smul.addr %s19, 32
          %s316 = scalar_lea.hbm %s0, %s315
          %s318 = sshll.u32 %s311, 4
          %s319 = int_to_ptr.vmem [resolvable:$true] %s318
          %321 = dma.hbm_to_vmem [thread:$0]  %s316, 32, %s319, %s308
        $region40: #{ml_metanet_forward.1} parent=35 // pred_fallthru
          _
        // Predicated region
        $region41: #{ml_metanet_forward.1} parent=35 // pred_check
          %p322 = pneg %p128
        $region42: #{ml_metanet_forward.1} parent=35 // pred_check_branch
          %324 = sbr.rel (%p322) target = $region44
        $region43: #{ml_metanet_forward.1} parent=35 // pred_region
          %s325 = sand.u32 %s19, 1
          %s326 = scalar_lea.sflag [#allocation6], %s325
          %s327 = sand.u32 %s118, 1
          %s328 = smul.addr %s327, 10240
          %s329 = scalar_lea.vmem [#allocation12], %s328
          %s331 = ssub.s32 163840, 163840
          %332 = vsyncadd %s326, %s331
          %s333 = smul.addr %s19, 2560
          %s334 = smul.addr %s333, 64
          %s335 = scalar_lea.hbm %s4, %s334
          %s336 = sshll.u32 %s329, 4
          %s337 = int_to_ptr.vmem [resolvable:$true] %s336
          %342 = dma.hbm_to_vmem [thread:$0]  %s335, 163840, %s337, %s326, 1024, 1024, 64
        $region44: #{ml_metanet_forward.1} parent=35 // pred_fallthru
          _
        // Predicated region
        $region45: #{ml_metanet_forward.1} parent=35 // pred_check
          %p343 = pneg %p154
        $region46: #{ml_metanet_forward.1} parent=35 // pred_check_branch
          %345 = sbr.rel (%p343) target = $region48
        $region47: #{ml_metanet_forward.1} parent=35 // pred_region
          %s346 = sand.u32 %s19, 1
          %s347 = scalar_lea.sflag [#allocation6], %s346
          %s348 = sand.u32 %s144, 1
          %s349 = smul.addr %s348, 32
          %s350 = scalar_lea.vmem [#allocation13], %s349
          %s352 = ssub.s32 512, 512
          %353 = vsyncadd %s347, %s352
          %s354 = smul.addr %s19, 32
          %s355 = smul.addr %s354, 16
          %s356 = scalar_lea.hbm %s5, %s355
          %s357 = sshll.u32 %s350, 4
          %s358 = int_to_ptr.vmem [resolvable:$true] %s357
          %363 = dma.hbm_to_vmem [thread:$0]  %s356, 512, %s358, %s347, 256, 256, 16
        $region48: #{ml_metanet_forward.1} parent=35 // pred_fallthru
          _
      $region36: #{ml_metanet_forward.1} parent=5 // pred_fallthru
        _
      %p364 = scmp.le.s32.totalorder 1, %s19
      %p365 = scmp.lt.s32.totalorder %s19, 3
      %p366 = pnand %p364, %p365
      %p367 = pneg %p366
      // Predicated region
      $region49: #{ml_metanet_forward.1} parent=5 // pred_check
        _
      $region50: #{ml_metanet_forward.1} parent=5 // pred_check_branch
        %369 = sbr.rel (%p366) target = $region52
      $region51: #{ml_metanet_forward.1} parent=5 // pred_region
        %s370 = ssub.s32 %s19, 1
        %s371 = sand.u32 %s24, 1
        %s372 = scalar_lea.sflag [#allocation6], %s371
        %s373 = sand.u32 %s32, 1
        %s374 = smul.addr %s373, 2
        %s375 = scalar_lea.vmem [#allocation5], %s374
        // Predicated region
        $region53: #{ml_metanet_forward.1} parent=51 // pred_check
          %p376 = pneg %p45
        $region54: #{ml_metanet_forward.1} parent=51 // pred_check_branch
          %378 = sbr.rel (%p376) target = $region56
        $region55: #{ml_metanet_forward.1} parent=51 // pred_region
          %379 = dma.done %s372, 32
        $region56: #{ml_metanet_forward.1} parent=51 // pred_fallthru
          _
        // Predicated region
        $region57: #{ml_metanet_forward.1} parent=51 // pred_check
          %p380 = pneg %p66
        $region58: #{ml_metanet_forward.1} parent=51 // pred_check_branch
          %382 = sbr.rel (%p380) target = $region60
        $region59: #{ml_metanet_forward.1} parent=51 // pred_region
          %383 = dma.done [#allocation8], 32
        $region60: #{ml_metanet_forward.1} parent=51 // pred_fallthru
          _
        // Predicated region
        $region61: #{ml_metanet_forward.1} parent=51 // pred_check
          %p384 = pneg %p87
        $region62: #{ml_metanet_forward.1} parent=51 // pred_check_branch
          %386 = sbr.rel (%p384) target = $region64
        $region63: #{ml_metanet_forward.1} parent=51 // pred_region
          %387 = dma.done [#allocation8], 128
        $region64: #{ml_metanet_forward.1} parent=51 // pred_fallthru
          _
        // Predicated region
        $region65: #{ml_metanet_forward.1} parent=51 // pred_check
          %p388 = pneg %p108
        $region66: #{ml_metanet_forward.1} parent=51 // pred_check_branch
          %390 = sbr.rel (%p388) target = $region68
        $region67: #{ml_metanet_forward.1} parent=51 // pred_region
          %391 = dma.done [#allocation11], 128
        $region68: #{ml_metanet_forward.1} parent=51 // pred_fallthru
          _
        %s392 = sand.u32 %s24, 1
        %s393 = scalar_lea.sflag [#allocation6], %s392
        %s394 = sand.u32 %s121, 1
        %s395 = smul.addr %s394, 10240
        %s396 = scalar_lea.vmem [#allocation12], %s395
        // Predicated region
        $region69: #{ml_metanet_forward.1} parent=51 // pred_check
          %p397 = pneg %p134
        $region70: #{ml_metanet_forward.1} parent=51 // pred_check_branch
          %399 = sbr.rel (%p397) target = $region72
        $region71: #{ml_metanet_forward.1} parent=51 // pred_region
          %400 = dma.done %s393, 163840
        $region72: #{ml_metanet_forward.1} parent=51 // pred_fallthru
          _
        %s401 = sand.u32 %s24, 1
        %s402 = scalar_lea.sflag [#allocation6], %s401
        %s403 = sand.u32 %s147, 1
        %s404 = smul.addr %s403, 32
        %s405 = scalar_lea.vmem [#allocation13], %s404
        // Predicated region
        $region73: #{ml_metanet_forward.1} parent=51 // pred_check
          %p406 = pneg %p160
        $region74: #{ml_metanet_forward.1} parent=51 // pred_check_branch
          %408 = sbr.rel (%p406) target = $region76
        $region75: #{ml_metanet_forward.1} parent=51 // pred_region
          %409 = dma.done %s402, 512
        $region76: #{ml_metanet_forward.1} parent=51 // pred_fallthru
          _
        // Predicated region
        $region77: #{ml_metanet_forward.1} parent=51 // pred_check
          %p410 = pneg %p181
        $region78: #{ml_metanet_forward.1} parent=51 // pred_check_branch
          %412 = sbr.rel (%p410) target = $region80
        $region79: #{ml_metanet_forward.1} parent=51 // pred_region
          %413 = dma.done [#allocation8], 4096
        $region80: #{ml_metanet_forward.1} parent=51 // pred_fallthru
          _
        // Predicated region
        $region81: #{ml_metanet_forward.1} parent=51 // pred_check
          %p414 = pneg %p202
        $region82: #{ml_metanet_forward.1} parent=51 // pred_check_branch
          %416 = sbr.rel (%p414) target = $region84
        $region83: #{ml_metanet_forward.1} parent=51 // pred_region
          %417 = dma.done [#allocation11], 16
        $region84: #{ml_metanet_forward.1} parent=51 // pred_fallthru
          _
        %s418 = sand.u32 %s24, 1
        %s419 = scalar_lea.sflag [#allocation6], %s418
        %s420 = sand.u32 %s32, 1
        %s421 = smul.addr %s420, 2
        %s422 = scalar_lea.vmem [#allocation5], %s421
        %p423 = pneg %p45
        %p424 = pneg %p42
        %p425 = pneg %p66
        %p426 = pneg %p63
        %p427 = pneg %p87
        %p428 = pneg %p84
        %p429 = pneg %p108
        %p430 = pneg %p105
        %s431 = sand.u32 %s24, 1
        %s432 = scalar_lea.sflag [#allocation6], %s431
        %s433 = sand.u32 %s121, 1
        %s434 = smul.addr %s433, 10240
        %s435 = scalar_lea.vmem [#allocation12], %s434
        %p436 = pneg %p134
        %p437 = pneg %p131
        %s438 = sand.u32 %s24, 1
        %s439 = scalar_lea.sflag [#allocation6], %s438
        %s440 = sand.u32 %s147, 1
        %s441 = smul.addr %s440, 32
        %s442 = scalar_lea.vmem [#allocation13], %s441
        %p443 = pneg %p160
        %p444 = pneg %p157
        %p445 = pneg %p181
        %p446 = pneg %p178
        %p447 = pneg %p202
        %p448 = pneg %p199
        %p449 = pneg %p228
        %p450 = pneg %p225
        %p451 = scmp.lt.s32.totalorder %s24, 1
        %s452 = scalar_select %p451, %s24, 1
        %s453 = smul.addr %s452, 2
        %s454 = smul.addr %s453, 2
        %s455 = scalar_lea.vmem %s8, %s454
        %p456 = scmp.lt.s32.totalorder %s24, 1
        %s457 = scalar_select %p456, %s24, 1
        %s458 = smul.addr %s457, 2
        %s459 = smul.addr %s458, 2
        %s460 = scalar_lea.vmem %s8, %s459
        %p462 = scmp.eq.s32.totalorder %s24, 0
        // Predicated region
        $region85: #{ml_metanet_forward.1} parent=51 // pred_check
          %p463 = pneg %p462
        $region86: #{ml_metanet_forward.1} parent=51 // pred_check_branch
          %465 = sbr.rel (%p463) target = $region88
        $region87: #{ml_metanet_forward.1} parent=51 // pred_region
          %v466 = vld [vmem:[#allocation7] sm:$0x3]
          %467 = vst [vmem:[#allocation2] sm:$0x3] %v466
          %v468 = vld [vmem:[#allocation9] sm:$0xff]
          %469 = vst [vmem:[#allocation3] sm:$0xff] %v468
          %v470 = vld [vmem:[#allocation10] sm:$0xff]
          %471 = vst [vmem:[#allocation4] sm:$0xff] %v470
        $region88: #{ml_metanet_forward.1} parent=51 // pred_fallthru
          _
        %v472 = vld [vmem:[%s375] sm:$0x3]
        %v473 = vld [vmem:[#allocation2] sm:$0x3]
        %v474 = vld [vmem:[#allocation3] sm:$0xff]
        %v475 = vld [vmem:[#allocation4] sm:$0xff]
        %v476 = vld [vmem:[#allocation14] sm:$0xf]
        %v477 = vld [vmem:[#allocation14 + $0x4] sm:$0xf]
        %v478 = vld [vmem:[#allocation14 + $0x8] sm:$0xf]
        %v479 = vld [vmem:[#allocation14 + $0xc] sm:$0xf]
        %v480 = vld [vmem:[#allocation14 + $0x10] sm:$0xf]
        %v481 = vld [vmem:[#allocation14 + $0x14] sm:$0xf]
        %v482 = vld [vmem:[#allocation14 + $0x18] sm:$0xf]
        %v483 = vld [vmem:[#allocation14 + $0x1c] sm:$0xf]
        %v484 = vld [vmem:[#allocation14 + $0x20] sm:$0xf]
        %v485 = vld [vmem:[#allocation14 + $0x24] sm:$0xf]
        %v486 = vld [vmem:[#allocation14 + $0x28] sm:$0xf]
        %v487 = vld [vmem:[#allocation14 + $0x2c] sm:$0xf]
        %v488 = vld [vmem:[#allocation14 + $0x30] sm:$0xf]
        %v489 = vld [vmem:[#allocation14 + $0x34] sm:$0xf]
        %v490 = vld [vmem:[#allocation14 + $0x38] sm:$0xf]
        %v491 = vld [vmem:[#allocation14 + $0x3c] sm:$0xf]
        %v492 = vld [vmem:[#allocation14 + $0x40] sm:$0xf]
        %v493 = vld [vmem:[#allocation14 + $0x44] sm:$0xf]
        %v494 = vld [vmem:[#allocation14 + $0x48] sm:$0xf]
        %v495 = vld [vmem:[#allocation14 + $0x4c] sm:$0xf]
        %v496 = vld [vmem:[#allocation14 + $0x50] sm:$0xf]
        %v497 = vld [vmem:[#allocation14 + $0x54] sm:$0xf]
        %v498 = vld [vmem:[#allocation14 + $0x58] sm:$0xf]
        %v499 = vld [vmem:[#allocation14 + $0x5c] sm:$0xf]
        %v500 = vld [vmem:[#allocation14 + $0x60] sm:$0xf]
        %v501 = vld [vmem:[#allocation14 + $0x64] sm:$0xf]
        %v502 = vld [vmem:[#allocation14 + $0x68] sm:$0xf]
        %v503 = vld [vmem:[#allocation14 + $0x6c] sm:$0xf]
        %v504 = vld [vmem:[#allocation14 + $0x70] sm:$0xf]
        %v505 = vld [vmem:[#allocation14 + $0x74] sm:$0xf]
        %v506 = vld [vmem:[#allocation14 + $0x78] sm:$0xf]
        %v507 = vld [vmem:[#allocation14 + $0x7c] sm:$0xf]
        %v508 = vld [vmem:[#allocation14 + $0x80] sm:$0xf]
        %v509 = vld [vmem:[#allocation14 + $0x84] sm:$0xf]
        %v510 = vld [vmem:[#allocation14 + $0x88] sm:$0xf]
        %v511 = vld [vmem:[#allocation14 + $0x8c] sm:$0xf]
        %v512 = vld [vmem:[#allocation14 + $0x90] sm:$0xf]
        %v513 = vld [vmem:[#allocation14 + $0x94] sm:$0xf]
        %v514 = vld [vmem:[#allocation14 + $0x98] sm:$0xf]
        %v515 = vld [vmem:[#allocation14 + $0x9c] sm:$0xf]
        %v516 = vld [vmem:[#allocation14 + $0xa0] sm:$0xf]
        %v517 = vld [vmem:[#allocation14 + $0xa4] sm:$0xf]
        %v518 = vld [vmem:[#allocation14 + $0xa8] sm:$0xf]
        %v519 = vld [vmem:[#allocation14 + $0xac] sm:$0xf]
        %v520 = vld [vmem:[#allocation14 + $0xb0] sm:$0xf]
        %v521 = vld [vmem:[#allocation14 + $0xb4] sm:$0xf]
        %v522 = vld [vmem:[#allocation14 + $0xb8] sm:$0xf]
        %v523 = vld [vmem:[#allocation14 + $0xbc] sm:$0xf]
        %v524 = vld [vmem:[#allocation14 + $0xc0] sm:$0xf]
        %v525 = vld [vmem:[#allocation14 + $0xc4] sm:$0xf]
        %v526 = vld [vmem:[#allocation14 + $0xc8] sm:$0xf]
        %v527 = vld [vmem:[#allocation14 + $0xcc] sm:$0xf]
        %v528 = vld [vmem:[#allocation14 + $0xd0] sm:$0xf]
        %v529 = vld [vmem:[#allocation14 + $0xd4] sm:$0xf]
        %v530 = vld [vmem:[#allocation14 + $0xd8] sm:$0xf]
        %v531 = vld [vmem:[#allocation14 + $0xdc] sm:$0xf]
        %v532 = vld [vmem:[#allocation14 + $0xe0] sm:$0xf]
        %v533 = vld [vmem:[#allocation14 + $0xe4] sm:$0xf]
        %v534 = vld [vmem:[#allocation14 + $0xe8] sm:$0xf]
        %v535 = vld [vmem:[#allocation14 + $0xec] sm:$0xf]
        %v536 = vld [vmem:[#allocation14 + $0xf0] sm:$0xf]
        %v537 = vld [vmem:[#allocation14 + $0xf4] sm:$0xf]
        %v538 = vld [vmem:[#allocation14 + $0xf8] sm:$0xf]
        %v539 = vld [vmem:[#allocation14 + $0xfc] sm:$0xf]
        %v540 = vld [vmem:[#allocation15] sm:$0x1]
        %v541 = vsub.f32 %v473, %v472
        %v542 = vpack.c.bf16 %v541, %v541
        %v543 = vld [vmem:[%s396] sm:$0xff]
        %v544 = vld [vmem:[%s396 + $0x8] sm:$0xff]
        %v545 = vld [vmem:[%s396 + $0x10] sm:$0xff]
        %v546 = vld [vmem:[%s396 + $0x18] sm:$0xff]
        %v547 = vld [vmem:[%s396 + $0x20] sm:$0xff]
        %v548 = vld [vmem:[%s396 + $0x28] sm:$0xff]
        %v549 = vld [vmem:[%s396 + $0x30] sm:$0xff]
        %v550 = vld [vmem:[%s396 + $0x38] sm:$0xff]
        %v551 = vld [vmem:[%s396 + $0x40] sm:$0xff]
        %v552 = vld [vmem:[%s396 + $0x48] sm:$0xff]
        %v553 = vld [vmem:[%s396 + $0x50] sm:$0xff]
        %v554 = vld [vmem:[%s396 + $0x58] sm:$0xff]
        %v555 = vld [vmem:[%s396 + $0x60] sm:$0xff]
        %v556 = vld [vmem:[%s396 + $0x68] sm:$0xff]
        %v557 = vld [vmem:[%s396 + $0x70] sm:$0xff]
        %v558 = vld [vmem:[%s396 + $0x78] sm:$0xff]
        %v559 = vld [vmem:[%s396 + $0x80] sm:$0xff]
        %v560 = vld [vmem:[%s396 + $0x88] sm:$0xff]
        %v561 = vld [vmem:[%s396 + $0x90] sm:$0xff]
        %v562 = vld [vmem:[%s396 + $0x98] sm:$0xff]
        %v563 = vld [vmem:[%s396 + $0xa0] sm:$0xff]
        %v564 = vld [vmem:[%s396 + $0xa8] sm:$0xff]
        %v565 = vld [vmem:[%s396 + $0xb0] sm:$0xff]
        %v566 = vld [vmem:[%s396 + $0xb8] sm:$0xff]
        %v567 = vld [vmem:[%s396 + $0xc0] sm:$0xff]
        %v568 = vld [vmem:[%s396 + $0xc8] sm:$0xff]
        %v569 = vld [vmem:[%s396 + $0xd0] sm:$0xff]
        %v570 = vld [vmem:[%s396 + $0xd8] sm:$0xff]
        %v571 = vld [vmem:[%s396 + $0xe0] sm:$0xff]
        %v572 = vld [vmem:[%s396 + $0xe8] sm:$0xff]
        %v573 = vld [vmem:[%s396 + $0xf0] sm:$0xff]
        %v574 = vld [vmem:[%s396 + $0xf8] sm:$0xff]
        %v575 = vld [vmem:[%s396 + $0x100] sm:$0xff]
        %v576 = vld [vmem:[%s396 + $0x108] sm:$0xff]
        %v577 = vld [vmem:[%s396 + $0x110] sm:$0xff]
        %v578 = vld [vmem:[%s396 + $0x118] sm:$0xff]
        %v579 = vld [vmem:[%s396 + $0x120] sm:$0xff]
        %v580 = vld [vmem:[%s396 + $0x128] sm:$0xff]
        %v581 = vld [vmem:[%s396 + $0x130] sm:$0xff]
        %v582 = vld [vmem:[%s396 + $0x138] sm:$0xff]
        %v583 = vld [vmem:[%s396 + $0x140] sm:$0xff]
        %v584 = vld [vmem:[%s396 + $0x148] sm:$0xff]
        %v585 = vld [vmem:[%s396 + $0x150] sm:$0xff]
        %v586 = vld [vmem:[%s396 + $0x158] sm:$0xff]
        %v587 = vld [vmem:[%s396 + $0x160] sm:$0xff]
        %v588 = vld [vmem:[%s396 + $0x168] sm:$0xff]
        %v589 = vld [vmem:[%s396 + $0x170] sm:$0xff]
        %v590 = vld [vmem:[%s396 + $0x178] sm:$0xff]
        %v591 = vld [vmem:[%s396 + $0x180] sm:$0xff]
        %v592 = vld [vmem:[%s396 + $0x188] sm:$0xff]
        %v593 = vld [vmem:[%s396 + $0x190] sm:$0xff]
        %v594 = vld [vmem:[%s396 + $0x198] sm:$0xff]
        %v595 = vld [vmem:[%s396 + $0x1a0] sm:$0xff]
        %v596 = vld [vmem:[%s396 + $0x1a8] sm:$0xff]
        %v597 = vld [vmem:[%s396 + $0x1b0] sm:$0xff]
        %v598 = vld [vmem:[%s396 + $0x1b8] sm:$0xff]
        %v599 = vld [vmem:[%s396 + $0x1c0] sm:$0xff]
        %v600 = vld [vmem:[%s396 + $0x1c8] sm:$0xff]
        %v601 = vld [vmem:[%s396 + $0x1d0] sm:$0xff]
        %v602 = vld [vmem:[%s396 + $0x1d8] sm:$0xff]
        %v603 = vld [vmem:[%s396 + $0x1e0] sm:$0xff]
        %v604 = vld [vmem:[%s396 + $0x1e8] sm:$0xff]
        %v605 = vld [vmem:[%s396 + $0x1f0] sm:$0xff]
        %v606 = vld [vmem:[%s396 + $0x1f8] sm:$0xff]
        %v607 = vld [vmem:[%s396 + $0x200] sm:$0xff]
        %v608 = vld [vmem:[%s396 + $0x208] sm:$0xff]
        %v609 = vld [vmem:[%s396 + $0x210] sm:$0xff]
        %v610 = vld [vmem:[%s396 + $0x218] sm:$0xff]
        %v611 = vld [vmem:[%s396 + $0x220] sm:$0xff]
        %v612 = vld [vmem:[%s396 + $0x228] sm:$0xff]
        %v613 = vld [vmem:[%s396 + $0x230] sm:$0xff]
        %v614 = vld [vmem:[%s396 + $0x238] sm:$0xff]
        %v615 = vld [vmem:[%s396 + $0x240] sm:$0xff]
        %v616 = vld [vmem:[%s396 + $0x248] sm:$0xff]
        %v617 = vld [vmem:[%s396 + $0x250] sm:$0xff]
        %v618 = vld [vmem:[%s396 + $0x258] sm:$0xff]
        %v619 = vld [vmem:[%s396 + $0x260] sm:$0xff]
        %v620 = vld [vmem:[%s396 + $0x268] sm:$0xff]
        %v621 = vld [vmem:[%s396 + $0x270] sm:$0xff]
        %v622 = vld [vmem:[%s396 + $0x278] sm:$0xff]
        %v623 = vld [vmem:[%s396 + $0x280] sm:$0xff]
        %v624 = vld [vmem:[%s396 + $0x288] sm:$0xff]
        %v625 = vld [vmem:[%s396 + $0x290] sm:$0xff]
        %v626 = vld [vmem:[%s396 + $0x298] sm:$0xff]
        %v627 = vld [vmem:[%s396 + $0x2a0] sm:$0xff]
        %v628 = vld [vmem:[%s396 + $0x2a8] sm:$0xff]
        %v629 = vld [vmem:[%s396 + $0x2b0] sm:$0xff]
        %v630 = vld [vmem:[%s396 + $0x2b8] sm:$0xff]
        %v631 = vld [vmem:[%s396 + $0x2c0] sm:$0xff]
        %v632 = vld [vmem:[%s396 + $0x2c8] sm:$0xff]
        %v633 = vld [vmem:[%s396 + $0x2d0] sm:$0xff]
        %v634 = vld [vmem:[%s396 + $0x2d8] sm:$0xff]
        %v635 = vld [vmem:[%s396 + $0x2e0] sm:$0xff]
        %v636 = vld [vmem:[%s396 + $0x2e8] sm:$0xff]
        %v637 = vld [vmem:[%s396 + $0x2f0] sm:$0xff]
        %v638 = vld [vmem:[%s396 + $0x2f8] sm:$0xff]
        %v639 = vld [vmem:[%s396 + $0x300] sm:$0xff]
        %v640 = vld [vmem:[%s396 + $0x308] sm:$0xff]
        %v641 = vld [vmem:[%s396 + $0x310] sm:$0xff]
        %v642 = vld [vmem:[%s396 + $0x318] sm:$0xff]
        %v643 = vld [vmem:[%s396 + $0x320] sm:$0xff]
        %v644 = vld [vmem:[%s396 + $0x328] sm:$0xff]
        %v645 = vld [vmem:[%s396 + $0x330] sm:$0xff]
        %v646 = vld [vmem:[%s396 + $0x338] sm:$0xff]
        %v647 = vld [vmem:[%s396 + $0x340] sm:$0xff]
        %v648 = vld [vmem:[%s396 + $0x348] sm:$0xff]
        %v649 = vld [vmem:[%s396 + $0x350] sm:$0xff]
        %v650 = vld [vmem:[%s396 + $0x358] sm:$0xff]
        %v651 = vld [vmem:[%s396 + $0x360] sm:$0xff]
        %v652 = vld [vmem:[%s396 + $0x368] sm:$0xff]
        %v653 = vld [vmem:[%s396 + $0x370] sm:$0xff]
        %v654 = vld [vmem:[%s396 + $0x378] sm:$0xff]
        %v655 = vld [vmem:[%s396 + $0x380] sm:$0xff]
        %v656 = vld [vmem:[%s396 + $0x388] sm:$0xff]
        %v657 = vld [vmem:[%s396 + $0x390] sm:$0xff]
        %v658 = vld [vmem:[%s396 + $0x398] sm:$0xff]
        %v659 = vld [vmem:[%s396 + $0x3a0] sm:$0xff]
        %v660 = vld [vmem:[%s396 + $0x3a8] sm:$0xff]
        %v661 = vld [vmem:[%s396 + $0x3b0] sm:$0xff]
        %v662 = vld [vmem:[%s396 + $0x3b8] sm:$0xff]
        %v663 = vld [vmem:[%s396 + $0x3c0] sm:$0xff]
        %v664 = vld [vmem:[%s396 + $0x3c8] sm:$0xff]
        %v665 = vld [vmem:[%s396 + $0x3d0] sm:$0xff]
        %v666 = vld [vmem:[%s396 + $0x3d8] sm:$0xff]
        %v667 = vld [vmem:[%s396 + $0x3e0] sm:$0xff]
        %v668 = vld [vmem:[%s396 + $0x3e8] sm:$0xff]
        %v669 = vld [vmem:[%s396 + $0x3f0] sm:$0xff]
        %v670 = vld [vmem:[%s396 + $0x3f8] sm:$0xff]
        %v672 = vcombine.high %v474, %v474
        %v674 = vunpack.c.l.s4 1983009808
        %v675 = vunpack.c.0.s8 %v674
        %v676 = vlaneseq
        %v677 = vshrl.u32 %v676, 7
        %v678 = vsub.s32 %v675, %v677
        %v679 = vrot.slane %v474, %v678
        %v681 = vunpack.c.l.s4 1983009808
        %v682 = vunpack.c.0.s8 %v681
        %v683 = vlaneseq
        %v684 = vshrl.u32 %v683, 7
        %v685 = vsub.s32 %v682, %v684
        %v686 = vrot.slane %v672, %v685
        %v687 = vcombine.high %v679, %v679
        %v688 = vcombine.high %v686, %v686
        %v693 = vpack.c.bf16 %v679, %v679
        %v694 = vpack.c.bf16 %v687, %v687
        %v695 = vpack.c.bf16 %v686, %v686
        %v696 = vpack.c.bf16 %v688, %v688
        %v697 = vld [vmem:[%s396 + $0x400] sm:$0xff]
        %v698 = vld [vmem:[%s396 + $0x408] sm:$0xff]
        %v699 = vld [vmem:[%s396 + $0x410] sm:$0xff]
        %v700 = vld [vmem:[%s396 + $0x418] sm:$0xff]
        %v701 = vld [vmem:[%s396 + $0x420] sm:$0xff]
        %v702 = vld [vmem:[%s396 + $0x428] sm:$0xff]
        %v703 = vld [vmem:[%s396 + $0x430] sm:$0xff]
        %v704 = vld [vmem:[%s396 + $0x438] sm:$0xff]
        %v705 = vld [vmem:[%s396 + $0x440] sm:$0xff]
        %v706 = vld [vmem:[%s396 + $0x448] sm:$0xff]
        %v707 = vld [vmem:[%s396 + $0x450] sm:$0xff]
        %v708 = vld [vmem:[%s396 + $0x458] sm:$0xff]
        %v709 = vld [vmem:[%s396 + $0x460] sm:$0xff]
        %v710 = vld [vmem:[%s396 + $0x468] sm:$0xff]
        %v711 = vld [vmem:[%s396 + $0x470] sm:$0xff]
        %v712 = vld [vmem:[%s396 + $0x478] sm:$0xff]
        %v713 = vld [vmem:[%s396 + $0x480] sm:$0xff]
        %v714 = vld [vmem:[%s396 + $0x488] sm:$0xff]
        %v715 = vld [vmem:[%s396 + $0x490] sm:$0xff]
        %v716 = vld [vmem:[%s396 + $0x498] sm:$0xff]
        %v717 = vld [vmem:[%s396 + $0x4a0] sm:$0xff]
        %v718 = vld [vmem:[%s396 + $0x4a8] sm:$0xff]
        %v719 = vld [vmem:[%s396 + $0x4b0] sm:$0xff]
        %v720 = vld [vmem:[%s396 + $0x4b8] sm:$0xff]
        %v721 = vld [vmem:[%s396 + $0x4c0] sm:$0xff]
        %v722 = vld [vmem:[%s396 + $0x4c8] sm:$0xff]
        %v723 = vld [vmem:[%s396 + $0x4d0] sm:$0xff]
        %v724 = vld [vmem:[%s396 + $0x4d8] sm:$0xff]
        %v725 = vld [vmem:[%s396 + $0x4e0] sm:$0xff]
        %v726 = vld [vmem:[%s396 + $0x4e8] sm:$0xff]
        %v727 = vld [vmem:[%s396 + $0x4f0] sm:$0xff]
        %v728 = vld [vmem:[%s396 + $0x4f8] sm:$0xff]
        %v729 = vld [vmem:[%s396 + $0x500] sm:$0xff]
        %v730 = vld [vmem:[%s396 + $0x508] sm:$0xff]
        %v731 = vld [vmem:[%s396 + $0x510] sm:$0xff]
        %v732 = vld [vmem:[%s396 + $0x518] sm:$0xff]
        %v733 = vld [vmem:[%s396 + $0x520] sm:$0xff]
        %v734 = vld [vmem:[%s396 + $0x528] sm:$0xff]
        %v735 = vld [vmem:[%s396 + $0x530] sm:$0xff]
        %v736 = vld [vmem:[%s396 + $0x538] sm:$0xff]
        %v737 = vld [vmem:[%s396 + $0x540] sm:$0xff]
        %v738 = vld [vmem:[%s396 + $0x548] sm:$0xff]
        %v739 = vld [vmem:[%s396 + $0x550] sm:$0xff]
        %v740 = vld [vmem:[%s396 + $0x558] sm:$0xff]
        %v741 = vld [vmem:[%s396 + $0x560] sm:$0xff]
        %v742 = vld [vmem:[%s396 + $0x568] sm:$0xff]
        %v743 = vld [vmem:[%s396 + $0x570] sm:$0xff]
        %v744 = vld [vmem:[%s396 + $0x578] sm:$0xff]
        %v745 = vld [vmem:[%s396 + $0x580] sm:$0xff]
        %v746 = vld [vmem:[%s396 + $0x588] sm:$0xff]
        %v747 = vld [vmem:[%s396 + $0x590] sm:$0xff]
        %v748 = vld [vmem:[%s396 + $0x598] sm:$0xff]
        %v749 = vld [vmem:[%s396 + $0x5a0] sm:$0xff]
        %v750 = vld [vmem:[%s396 + $0x5a8] sm:$0xff]
        %v751 = vld [vmem:[%s396 + $0x5b0] sm:$0xff]
        %v752 = vld [vmem:[%s396 + $0x5b8] sm:$0xff]
        %v753 = vld [vmem:[%s396 + $0x5c0] sm:$0xff]
        %v754 = vld [vmem:[%s396 + $0x5c8] sm:$0xff]
        %v755 = vld [vmem:[%s396 + $0x5d0] sm:$0xff]
        %v756 = vld [vmem:[%s396 + $0x5d8] sm:$0xff]
        %v757 = vld [vmem:[%s396 + $0x5e0] sm:$0xff]
        %v758 = vld [vmem:[%s396 + $0x5e8] sm:$0xff]
        %v759 = vld [vmem:[%s396 + $0x5f0] sm:$0xff]
        %v760 = vld [vmem:[%s396 + $0x5f8] sm:$0xff]
        %v761 = vld [vmem:[%s396 + $0x600] sm:$0xff]
        %v762 = vld [vmem:[%s396 + $0x608] sm:$0xff]
        %v763 = vld [vmem:[%s396 + $0x610] sm:$0xff]
        %v764 = vld [vmem:[%s396 + $0x618] sm:$0xff]
        %v765 = vld [vmem:[%s396 + $0x620] sm:$0xff]
        %v766 = vld [vmem:[%s396 + $0x628] sm:$0xff]
        %v767 = vld [vmem:[%s396 + $0x630] sm:$0xff]
        %v768 = vld [vmem:[%s396 + $0x638] sm:$0xff]
        %v769 = vld [vmem:[%s396 + $0x640] sm:$0xff]
        %v770 = vld [vmem:[%s396 + $0x648] sm:$0xff]
        %v771 = vld [vmem:[%s396 + $0x650] sm:$0xff]
        %v772 = vld [vmem:[%s396 + $0x658] sm:$0xff]
        %v773 = vld [vmem:[%s396 + $0x660] sm:$0xff]
        %v774 = vld [vmem:[%s396 + $0x668] sm:$0xff]
        %v775 = vld [vmem:[%s396 + $0x670] sm:$0xff]
        %v776 = vld [vmem:[%s396 + $0x678] sm:$0xff]
        %v777 = vld [vmem:[%s396 + $0x680] sm:$0xff]
        %v778 = vld [vmem:[%s396 + $0x688] sm:$0xff]
        %v779 = vld [vmem:[%s396 + $0x690] sm:$0xff]
        %v780 = vld [vmem:[%s396 + $0x698] sm:$0xff]
        %v781 = vld [vmem:[%s396 + $0x6a0] sm:$0xff]
        %v782 = vld [vmem:[%s396 + $0x6a8] sm:$0xff]
        %v783 = vld [vmem:[%s396 + $0x6b0] sm:$0xff]
        %v784 = vld [vmem:[%s396 + $0x6b8] sm:$0xff]
        %v785 = vld [vmem:[%s396 + $0x6c0] sm:$0xff]
        %v786 = vld [vmem:[%s396 + $0x6c8] sm:$0xff]
        %v787 = vld [vmem:[%s396 + $0x6d0] sm:$0xff]
        %v788 = vld [vmem:[%s396 + $0x6d8] sm:$0xff]
        %v789 = vld [vmem:[%s396 + $0x6e0] sm:$0xff]
        %v790 = vld [vmem:[%s396 + $0x6e8] sm:$0xff]
        %v791 = vld [vmem:[%s396 + $0x6f0] sm:$0xff]
        %v792 = vld [vmem:[%s396 + $0x6f8] sm:$0xff]
        %v793 = vld [vmem:[%s396 + $0x700] sm:$0xff]
        %v794 = vld [vmem:[%s396 + $0x708] sm:$0xff]
        %v795 = vld [vmem:[%s396 + $0x710] sm:$0xff]
        %v796 = vld [vmem:[%s396 + $0x718] sm:$0xff]
        %v797 = vld [vmem:[%s396 + $0x720] sm:$0xff]
        %v798 = vld [vmem:[%s396 + $0x728] sm:$0xff]
        %v799 = vld [vmem:[%s396 + $0x730] sm:$0xff]
        %v800 = vld [vmem:[%s396 + $0x738] sm:$0xff]
        %v801 = vld [vmem:[%s396 + $0x740] sm:$0xff]
        %v802 = vld [vmem:[%s396 + $0x748] sm:$0xff]
        %v803 = vld [vmem:[%s396 + $0x750] sm:$0xff]
        %v804 = vld [vmem:[%s396 + $0x758] sm:$0xff]
        %v805 = vld [vmem:[%s396 + $0x760] sm:$0xff]
        %v806 = vld [vmem:[%s396 + $0x768] sm:$0xff]
        %v807 = vld [vmem:[%s396 + $0x770] sm:$0xff]
        %v808 = vld [vmem:[%s396 + $0x778] sm:$0xff]
        %v809 = vld [vmem:[%s396 + $0x780] sm:$0xff]
        %v810 = vld [vmem:[%s396 + $0x788] sm:$0xff]
        %v811 = vld [vmem:[%s396 + $0x790] sm:$0xff]
        %v812 = vld [vmem:[%s396 + $0x798] sm:$0xff]
        %v813 = vld [vmem:[%s396 + $0x7a0] sm:$0xff]
        %v814 = vld [vmem:[%s396 + $0x7a8] sm:$0xff]
        %v815 = vld [vmem:[%s396 + $0x7b0] sm:$0xff]
        %v816 = vld [vmem:[%s396 + $0x7b8] sm:$0xff]
        %v817 = vld [vmem:[%s396 + $0x7c0] sm:$0xff]
        %v818 = vld [vmem:[%s396 + $0x7c8] sm:$0xff]
        %v819 = vld [vmem:[%s396 + $0x7d0] sm:$0xff]
        %v820 = vld [vmem:[%s396 + $0x7d8] sm:$0xff]
        %v821 = vld [vmem:[%s396 + $0x7e0] sm:$0xff]
        %v822 = vld [vmem:[%s396 + $0x7e8] sm:$0xff]
        %v823 = vld [vmem:[%s396 + $0x7f0] sm:$0xff]
        %v824 = vld [vmem:[%s396 + $0x7f8] sm:$0xff]
        %v825 = vld [vmem:[%s396 + $0x800] sm:$0xff]
        %v826 = vld [vmem:[%s396 + $0x808] sm:$0xff]
        %v827 = vld [vmem:[%s396 + $0x810] sm:$0xff]
        %v828 = vld [vmem:[%s396 + $0x818] sm:$0xff]
        %v829 = vld [vmem:[%s396 + $0x820] sm:$0xff]
        %v830 = vld [vmem:[%s396 + $0x828] sm:$0xff]
        %v831 = vld [vmem:[%s396 + $0x830] sm:$0xff]
        %v832 = vld [vmem:[%s396 + $0x838] sm:$0xff]
        %v833 = vld [vmem:[%s396 + $0x840] sm:$0xff]
        %v834 = vld [vmem:[%s396 + $0x848] sm:$0xff]
        %v835 = vld [vmem:[%s396 + $0x850] sm:$0xff]
        %v836 = vld [vmem:[%s396 + $0x858] sm:$0xff]
        %v837 = vld [vmem:[%s396 + $0x860] sm:$0xff]
        %v838 = vld [vmem:[%s396 + $0x868] sm:$0xff]
        %v839 = vld [vmem:[%s396 + $0x870] sm:$0xff]
        %v840 = vld [vmem:[%s396 + $0x878] sm:$0xff]
        %v841 = vld [vmem:[%s396 + $0x880] sm:$0xff]
        %v842 = vld [vmem:[%s396 + $0x888] sm:$0xff]
        %v843 = vld [vmem:[%s396 + $0x890] sm:$0xff]
        %v844 = vld [vmem:[%s396 + $0x898] sm:$0xff]
        %v845 = vld [vmem:[%s396 + $0x8a0] sm:$0xff]
        %v846 = vld [vmem:[%s396 + $0x8a8] sm:$0xff]
        %v847 = vld [vmem:[%s396 + $0x8b0] sm:$0xff]
        %v848 = vld [vmem:[%s396 + $0x8b8] sm:$0xff]
        %v849 = vld [vmem:[%s396 + $0x8c0] sm:$0xff]
        %v850 = vld [vmem:[%s396 + $0x8c8] sm:$0xff]
        %v851 = vld [vmem:[%s396 + $0x8d0] sm:$0xff]
        %v852 = vld [vmem:[%s396 + $0x8d8] sm:$0xff]
        %v853 = vld [vmem:[%s396 + $0x8e0] sm:$0xff]
        %v854 = vld [vmem:[%s396 + $0x8e8] sm:$0xff]
        %v855 = vld [vmem:[%s396 + $0x8f0] sm:$0xff]
        %v856 = vld [vmem:[%s396 + $0x8f8] sm:$0xff]
        %v857 = vld [vmem:[%s396 + $0x900] sm:$0xff]
        %v858 = vld [vmem:[%s396 + $0x908] sm:$0xff]
        %v859 = vld [vmem:[%s396 + $0x910] sm:$0xff]
        %v860 = vld [vmem:[%s396 + $0x918] sm:$0xff]
        %v861 = vld [vmem:[%s396 + $0x920] sm:$0xff]
        %v862 = vld [vmem:[%s396 + $0x928] sm:$0xff]
        %v863 = vld [vmem:[%s396 + $0x930] sm:$0xff]
        %v864 = vld [vmem:[%s396 + $0x938] sm:$0xff]
        %v865 = vld [vmem:[%s396 + $0x940] sm:$0xff]
        %v866 = vld [vmem:[%s396 + $0x948] sm:$0xff]
        %v867 = vld [vmem:[%s396 + $0x950] sm:$0xff]
        %v868 = vld [vmem:[%s396 + $0x958] sm:$0xff]
        %v869 = vld [vmem:[%s396 + $0x960] sm:$0xff]
        %v870 = vld [vmem:[%s396 + $0x968] sm:$0xff]
        %v871 = vld [vmem:[%s396 + $0x970] sm:$0xff]
        %v872 = vld [vmem:[%s396 + $0x978] sm:$0xff]
        %v873 = vld [vmem:[%s396 + $0x980] sm:$0xff]
        %v874 = vld [vmem:[%s396 + $0x988] sm:$0xff]
        %v875 = vld [vmem:[%s396 + $0x990] sm:$0xff]
        %v876 = vld [vmem:[%s396 + $0x998] sm:$0xff]
        %v877 = vld [vmem:[%s396 + $0x9a0] sm:$0xff]
        %v878 = vld [vmem:[%s396 + $0x9a8] sm:$0xff]
        %v879 = vld [vmem:[%s396 + $0x9b0] sm:$0xff]
        %v880 = vld [vmem:[%s396 + $0x9b8] sm:$0xff]
        %v881 = vld [vmem:[%s396 + $0x9c0] sm:$0xff]
        %v882 = vld [vmem:[%s396 + $0x9c8] sm:$0xff]
        %v883 = vld [vmem:[%s396 + $0x9d0] sm:$0xff]
        %v884 = vld [vmem:[%s396 + $0x9d8] sm:$0xff]
        %v885 = vld [vmem:[%s396 + $0x9e0] sm:$0xff]
        %v886 = vld [vmem:[%s396 + $0x9e8] sm:$0xff]
        %v887 = vld [vmem:[%s396 + $0x9f0] sm:$0xff]
        %v888 = vld [vmem:[%s396 + $0x9f8] sm:$0xff]
        %v889 = vld [vmem:[%s396 + $0xa00] sm:$0xff]
        %v890 = vld [vmem:[%s396 + $0xa08] sm:$0xff]
        %v891 = vld [vmem:[%s396 + $0xa10] sm:$0xff]
        %v892 = vld [vmem:[%s396 + $0xa18] sm:$0xff]
        %v893 = vld [vmem:[%s396 + $0xa20] sm:$0xff]
        %v894 = vld [vmem:[%s396 + $0xa28] sm:$0xff]
        %v895 = vld [vmem:[%s396 + $0xa30] sm:$0xff]
        %v896 = vld [vmem:[%s396 + $0xa38] sm:$0xff]
        %v897 = vld [vmem:[%s396 + $0xa40] sm:$0xff]
        %v898 = vld [vmem:[%s396 + $0xa48] sm:$0xff]
        %v899 = vld [vmem:[%s396 + $0xa50] sm:$0xff]
        %v900 = vld [vmem:[%s396 + $0xa58] sm:$0xff]
        %v901 = vld [vmem:[%s396 + $0xa60] sm:$0xff]
        %v902 = vld [vmem:[%s396 + $0xa68] sm:$0xff]
        %v903 = vld [vmem:[%s396 + $0xa70] sm:$0xff]
        %v904 = vld [vmem:[%s396 + $0xa78] sm:$0xff]
        %v905 = vld [vmem:[%s396 + $0xa80] sm:$0xff]
        %v906 = vld [vmem:[%s396 + $0xa88] sm:$0xff]
        %v907 = vld [vmem:[%s396 + $0xa90] sm:$0xff]
        %v908 = vld [vmem:[%s396 + $0xa98] sm:$0xff]
        %v909 = vld [vmem:[%s396 + $0xaa0] sm:$0xff]
        %v910 = vld [vmem:[%s396 + $0xaa8] sm:$0xff]
        %v911 = vld [vmem:[%s396 + $0xab0] sm:$0xff]
        %v912 = vld [vmem:[%s396 + $0xab8] sm:$0xff]
        %v913 = vld [vmem:[%s396 + $0xac0] sm:$0xff]
        %v914 = vld [vmem:[%s396 + $0xac8] sm:$0xff]
        %v915 = vld [vmem:[%s396 + $0xad0] sm:$0xff]
        %v916 = vld [vmem:[%s396 + $0xad8] sm:$0xff]
        %v917 = vld [vmem:[%s396 + $0xae0] sm:$0xff]
        %v918 = vld [vmem:[%s396 + $0xae8] sm:$0xff]
        %v919 = vld [vmem:[%s396 + $0xaf0] sm:$0xff]
        %v920 = vld [vmem:[%s396 + $0xaf8] sm:$0xff]
        %v921 = vld [vmem:[%s396 + $0xb00] sm:$0xff]
        %v922 = vld [vmem:[%s396 + $0xb08] sm:$0xff]
        %v923 = vld [vmem:[%s396 + $0xb10] sm:$0xff]
        %v924 = vld [vmem:[%s396 + $0xb18] sm:$0xff]
        %v925 = vld [vmem:[%s396 + $0xb20] sm:$0xff]
        %v926 = vld [vmem:[%s396 + $0xb28] sm:$0xff]
        %v927 = vld [vmem:[%s396 + $0xb30] sm:$0xff]
        %v928 = vld [vmem:[%s396 + $0xb38] sm:$0xff]
        %v929 = vld [vmem:[%s396 + $0xb40] sm:$0xff]
        %v930 = vld [vmem:[%s396 + $0xb48] sm:$0xff]
        %v931 = vld [vmem:[%s396 + $0xb50] sm:$0xff]
        %v932 = vld [vmem:[%s396 + $0xb58] sm:$0xff]
        %v933 = vld [vmem:[%s396 + $0xb60] sm:$0xff]
        %v934 = vld [vmem:[%s396 + $0xb68] sm:$0xff]
        %v935 = vld [vmem:[%s396 + $0xb70] sm:$0xff]
        %v936 = vld [vmem:[%s396 + $0xb78] sm:$0xff]
        %v937 = vld [vmem:[%s396 + $0xb80] sm:$0xff]
        %v938 = vld [vmem:[%s396 + $0xb88] sm:$0xff]
        %v939 = vld [vmem:[%s396 + $0xb90] sm:$0xff]
        %v940 = vld [vmem:[%s396 + $0xb98] sm:$0xff]
        %v941 = vld [vmem:[%s396 + $0xba0] sm:$0xff]
        %v942 = vld [vmem:[%s396 + $0xba8] sm:$0xff]
        %v943 = vld [vmem:[%s396 + $0xbb0] sm:$0xff]
        %v944 = vld [vmem:[%s396 + $0xbb8] sm:$0xff]
        %v945 = vld [vmem:[%s396 + $0xbc0] sm:$0xff]
        %v946 = vld [vmem:[%s396 + $0xbc8] sm:$0xff]
        %v947 = vld [vmem:[%s396 + $0xbd0] sm:$0xff]
        %v948 = vld [vmem:[%s396 + $0xbd8] sm:$0xff]
        %v949 = vld [vmem:[%s396 + $0xbe0] sm:$0xff]
        %v950 = vld [vmem:[%s396 + $0xbe8] sm:$0xff]
        %v951 = vld [vmem:[%s396 + $0xbf0] sm:$0xff]
        %v952 = vld [vmem:[%s396 + $0xbf8] sm:$0xff]
        %v953 = vld [vmem:[%s396 + $0xc00] sm:$0xff]
        %v954 = vld [vmem:[%s396 + $0xc08] sm:$0xff]
        %v955 = vld [vmem:[%s396 + $0xc10] sm:$0xff]
        %v956 = vld [vmem:[%s396 + $0xc18] sm:$0xff]
        %v957 = vld [vmem:[%s396 + $0xc20] sm:$0xff]
        %v958 = vld [vmem:[%s396 + $0xc28] sm:$0xff]
        %v959 = vld [vmem:[%s396 + $0xc30] sm:$0xff]
        %v960 = vld [vmem:[%s396 + $0xc38] sm:$0xff]
        %v961 = vld [vmem:[%s396 + $0xc40] sm:$0xff]
        %v962 = vld [vmem:[%s396 + $0xc48] sm:$0xff]
        %v963 = vld [vmem:[%s396 + $0xc50] sm:$0xff]
        %v964 = vld [vmem:[%s396 + $0xc58] sm:$0xff]
        %v965 = vld [vmem:[%s396 + $0xc60] sm:$0xff]
        %v966 = vld [vmem:[%s396 + $0xc68] sm:$0xff]
        %v967 = vld [vmem:[%s396 + $0xc70] sm:$0xff]
        %v968 = vld [vmem:[%s396 + $0xc78] sm:$0xff]
        %v969 = vld [vmem:[%s396 + $0xc80] sm:$0xff]
        %v970 = vld [vmem:[%s396 + $0xc88] sm:$0xff]
        %v971 = vld [vmem:[%s396 + $0xc90] sm:$0xff]
        %v972 = vld [vmem:[%s396 + $0xc98] sm:$0xff]
        %v973 = vld [vmem:[%s396 + $0xca0] sm:$0xff]
        %v974 = vld [vmem:[%s396 + $0xca8] sm:$0xff]
        %v975 = vld [vmem:[%s396 + $0xcb0] sm:$0xff]
        %v976 = vld [vmem:[%s396 + $0xcb8] sm:$0xff]
        %v977 = vld [vmem:[%s396 + $0xcc0] sm:$0xff]
        %v978 = vld [vmem:[%s396 + $0xcc8] sm:$0xff]
        %v979 = vld [vmem:[%s396 + $0xcd0] sm:$0xff]
        %v980 = vld [vmem:[%s396 + $0xcd8] sm:$0xff]
        %v981 = vld [vmem:[%s396 + $0xce0] sm:$0xff]
        %v982 = vld [vmem:[%s396 + $0xce8] sm:$0xff]
        %v983 = vld [vmem:[%s396 + $0xcf0] sm:$0xff]
        %v984 = vld [vmem:[%s396 + $0xcf8] sm:$0xff]
        %v985 = vld [vmem:[%s396 + $0xd00] sm:$0xff]
        %v986 = vld [vmem:[%s396 + $0xd08] sm:$0xff]
        %v987 = vld [vmem:[%s396 + $0xd10] sm:$0xff]
        %v988 = vld [vmem:[%s396 + $0xd18] sm:$0xff]
        %v989 = vld [vmem:[%s396 + $0xd20] sm:$0xff]
        %v990 = vld [vmem:[%s396 + $0xd28] sm:$0xff]
        %v991 = vld [vmem:[%s396 + $0xd30] sm:$0xff]
        %v992 = vld [vmem:[%s396 + $0xd38] sm:$0xff]
        %v993 = vld [vmem:[%s396 + $0xd40] sm:$0xff]
        %v994 = vld [vmem:[%s396 + $0xd48] sm:$0xff]
        %v995 = vld [vmem:[%s396 + $0xd50] sm:$0xff]
        %v996 = vld [vmem:[%s396 + $0xd58] sm:$0xff]
        %v997 = vld [vmem:[%s396 + $0xd60] sm:$0xff]
        %v998 = vld [vmem:[%s396 + $0xd68] sm:$0xff]
        %v999 = vld [vmem:[%s396 + $0xd70] sm:$0xff]
        %v1000 = vld [vmem:[%s396 + $0xd78] sm:$0xff]
        %v1001 = vld [vmem:[%s396 + $0xd80] sm:$0xff]
        %v1002 = vld [vmem:[%s396 + $0xd88] sm:$0xff]
        %v1003 = vld [vmem:[%s396 + $0xd90] sm:$0xff]
        %v1004 = vld [vmem:[%s396 + $0xd98] sm:$0xff]
        %v1005 = vld [vmem:[%s396 + $0xda0] sm:$0xff]
        %v1006 = vld [vmem:[%s396 + $0xda8] sm:$0xff]
        %v1007 = vld [vmem:[%s396 + $0xdb0] sm:$0xff]
        %v1008 = vld [vmem:[%s396 + $0xdb8] sm:$0xff]
        %v1009 = vld [vmem:[%s396 + $0xdc0] sm:$0xff]
        %v1010 = vld [vmem:[%s396 + $0xdc8] sm:$0xff]
        %v1011 = vld [vmem:[%s396 + $0xdd0] sm:$0xff]
        %v1012 = vld [vmem:[%s396 + $0xdd8] sm:$0xff]
        %v1013 = vld [vmem:[%s396 + $0xde0] sm:$0xff]
        %v1014 = vld [vmem:[%s396 + $0xde8] sm:$0xff]
        %v1015 = vld [vmem:[%s396 + $0xdf0] sm:$0xff]
        %v1016 = vld [vmem:[%s396 + $0xdf8] sm:$0xff]
        %v1017 = vld [vmem:[%s396 + $0xe00] sm:$0xff]
        %v1018 = vld [vmem:[%s396 + $0xe08] sm:$0xff]
        %v1019 = vld [vmem:[%s396 + $0xe10] sm:$0xff]
        %v1020 = vld [vmem:[%s396 + $0xe18] sm:$0xff]
        %v1021 = vld [vmem:[%s396 + $0xe20] sm:$0xff]
        %v1022 = vld [vmem:[%s396 + $0xe28] sm:$0xff]
        %v1023 = vld [vmem:[%s396 + $0xe30] sm:$0xff]
        %v1024 = vld [vmem:[%s396 + $0xe38] sm:$0xff]
        %v1025 = vld [vmem:[%s396 + $0xe40] sm:$0xff]
        %v1026 = vld [vmem:[%s396 + $0xe48] sm:$0xff]
        %v1027 = vld [vmem:[%s396 + $0xe50] sm:$0xff]
        %v1028 = vld [vmem:[%s396 + $0xe58] sm:$0xff]
        %v1029 = vld [vmem:[%s396 + $0xe60] sm:$0xff]
        %v1030 = vld [vmem:[%s396 + $0xe68] sm:$0xff]
        %v1031 = vld [vmem:[%s396 + $0xe70] sm:$0xff]
        %v1032 = vld [vmem:[%s396 + $0xe78] sm:$0xff]
        %v1033 = vld [vmem:[%s396 + $0xe80] sm:$0xff]
        %v1034 = vld [vmem:[%s396 + $0xe88] sm:$0xff]
        %v1035 = vld [vmem:[%s396 + $0xe90] sm:$0xff]
        %v1036 = vld [vmem:[%s396 + $0xe98] sm:$0xff]
        %v1037 = vld [vmem:[%s396 + $0xea0] sm:$0xff]
        %v1038 = vld [vmem:[%s396 + $0xea8] sm:$0xff]
        %v1039 = vld [vmem:[%s396 + $0xeb0] sm:$0xff]
        %v1040 = vld [vmem:[%s396 + $0xeb8] sm:$0xff]
        %v1041 = vld [vmem:[%s396 + $0xec0] sm:$0xff]
        %v1042 = vld [vmem:[%s396 + $0xec8] sm:$0xff]
        %v1043 = vld [vmem:[%s396 + $0xed0] sm:$0xff]
        %v1044 = vld [vmem:[%s396 + $0xed8] sm:$0xff]
        %v1045 = vld [vmem:[%s396 + $0xee0] sm:$0xff]
        %v1046 = vld [vmem:[%s396 + $0xee8] sm:$0xff]
        %v1047 = vld [vmem:[%s396 + $0xef0] sm:$0xff]
        %v1048 = vld [vmem:[%s396 + $0xef8] sm:$0xff]
        %v1049 = vld [vmem:[%s396 + $0xf00] sm:$0xff]
        %v1050 = vld [vmem:[%s396 + $0xf08] sm:$0xff]
        %v1051 = vld [vmem:[%s396 + $0xf10] sm:$0xff]
        %v1052 = vld [vmem:[%s396 + $0xf18] sm:$0xff]
        %v1053 = vld [vmem:[%s396 + $0xf20] sm:$0xff]
        %v1054 = vld [vmem:[%s396 + $0xf28] sm:$0xff]
        %v1055 = vld [vmem:[%s396 + $0xf30] sm:$0xff]
        %v1056 = vld [vmem:[%s396 + $0xf38] sm:$0xff]
        %v1057 = vld [vmem:[%s396 + $0xf40] sm:$0xff]
        %v1058 = vld [vmem:[%s396 + $0xf48] sm:$0xff]
        %v1059 = vld [vmem:[%s396 + $0xf50] sm:$0xff]
        %v1060 = vld [vmem:[%s396 + $0xf58] sm:$0xff]
        %v1061 = vld [vmem:[%s396 + $0xf60] sm:$0xff]
        %v1062 = vld [vmem:[%s396 + $0xf68] sm:$0xff]
        %v1063 = vld [vmem:[%s396 + $0xf70] sm:$0xff]
        %v1064 = vld [vmem:[%s396 + $0xf78] sm:$0xff]
        %v1065 = vld [vmem:[%s396 + $0xf80] sm:$0xff]
        %v1066 = vld [vmem:[%s396 + $0xf88] sm:$0xff]
        %v1067 = vld [vmem:[%s396 + $0xf90] sm:$0xff]
        %v1068 = vld [vmem:[%s396 + $0xf98] sm:$0xff]
        %v1069 = vld [vmem:[%s396 + $0xfa0] sm:$0xff]
        %v1070 = vld [vmem:[%s396 + $0xfa8] sm:$0xff]
        %v1071 = vld [vmem:[%s396 + $0xfb0] sm:$0xff]
        %v1072 = vld [vmem:[%s396 + $0xfb8] sm:$0xff]
        %v1073 = vld [vmem:[%s396 + $0xfc0] sm:$0xff]
        %v1074 = vld [vmem:[%s396 + $0xfc8] sm:$0xff]
        %v1075 = vld [vmem:[%s396 + $0xfd0] sm:$0xff]
        %v1076 = vld [vmem:[%s396 + $0xfd8] sm:$0xff]
        %v1077 = vld [vmem:[%s396 + $0xfe0] sm:$0xff]
        %v1078 = vld [vmem:[%s396 + $0xfe8] sm:$0xff]
        %v1079 = vld [vmem:[%s396 + $0xff0] sm:$0xff]
        %v1080 = vld [vmem:[%s396 + $0xff8] sm:$0xff]
        %v1081 = vld [vmem:[%s396 + $0x1000] sm:$0xff]
        %v1082 = vld [vmem:[%s396 + $0x1008] sm:$0xff]
        %v1083 = vld [vmem:[%s396 + $0x1010] sm:$0xff]
        %v1084 = vld [vmem:[%s396 + $0x1018] sm:$0xff]
        %v1085 = vld [vmem:[%s396 + $0x1020] sm:$0xff]
        %v1086 = vld [vmem:[%s396 + $0x1028] sm:$0xff]
        %v1087 = vld [vmem:[%s396 + $0x1030] sm:$0xff]
        %v1088 = vld [vmem:[%s396 + $0x1038] sm:$0xff]
        %v1089 = vld [vmem:[%s396 + $0x1040] sm:$0xff]
        %v1090 = vld [vmem:[%s396 + $0x1048] sm:$0xff]
        %v1091 = vld [vmem:[%s396 + $0x1050] sm:$0xff]
        %v1092 = vld [vmem:[%s396 + $0x1058] sm:$0xff]
        %v1093 = vld [vmem:[%s396 + $0x1060] sm:$0xff]
        %v1094 = vld [vmem:[%s396 + $0x1068] sm:$0xff]
        %v1095 = vld [vmem:[%s396 + $0x1070] sm:$0xff]
        %v1096 = vld [vmem:[%s396 + $0x1078] sm:$0xff]
        %v1097 = vld [vmem:[%s396 + $0x1080] sm:$0xff]
        %v1098 = vld [vmem:[%s396 + $0x1088] sm:$0xff]
        %v1099 = vld [vmem:[%s396 + $0x1090] sm:$0xff]
        %v1100 = vld [vmem:[%s396 + $0x1098] sm:$0xff]
        %v1101 = vld [vmem:[%s396 + $0x10a0] sm:$0xff]
        %v1102 = vld [vmem:[%s396 + $0x10a8] sm:$0xff]
        %v1103 = vld [vmem:[%s396 + $0x10b0] sm:$0xff]
        %v1104 = vld [vmem:[%s396 + $0x10b8] sm:$0xff]
        %v1105 = vld [vmem:[%s396 + $0x10c0] sm:$0xff]
        %v1106 = vld [vmem:[%s396 + $0x10c8] sm:$0xff]
        %v1107 = vld [vmem:[%s396 + $0x10d0] sm:$0xff]
        %v1108 = vld [vmem:[%s396 + $0x10d8] sm:$0xff]
        %v1109 = vld [vmem:[%s396 + $0x10e0] sm:$0xff]
        %v1110 = vld [vmem:[%s396 + $0x10e8] sm:$0xff]
        %v1111 = vld [vmem:[%s396 + $0x10f0] sm:$0xff]
        %v1112 = vld [vmem:[%s396 + $0x10f8] sm:$0xff]
        %v1113 = vld [vmem:[%s396 + $0x1100] sm:$0xff]
        %v1114 = vld [vmem:[%s396 + $0x1108] sm:$0xff]
        %v1115 = vld [vmem:[%s396 + $0x1110] sm:$0xff]
        %v1116 = vld [vmem:[%s396 + $0x1118] sm:$0xff]
        %v1117 = vld [vmem:[%s396 + $0x1120] sm:$0xff]
        %v1118 = vld [vmem:[%s396 + $0x1128] sm:$0xff]
        %v1119 = vld [vmem:[%s396 + $0x1130] sm:$0xff]
        %v1120 = vld [vmem:[%s396 + $0x1138] sm:$0xff]
        %v1121 = vld [vmem:[%s396 + $0x1140] sm:$0xff]
        %v1122 = vld [vmem:[%s396 + $0x1148] sm:$0xff]
        %v1123 = vld [vmem:[%s396 + $0x1150] sm:$0xff]
        %v1124 = vld [vmem:[%s396 + $0x1158] sm:$0xff]
        %v1125 = vld [vmem:[%s396 + $0x1160] sm:$0xff]
        %v1126 = vld [vmem:[%s396 + $0x1168] sm:$0xff]
        %v1127 = vld [vmem:[%s396 + $0x1170] sm:$0xff]
        %v1128 = vld [vmem:[%s396 + $0x1178] sm:$0xff]
        %v1129 = vld [vmem:[%s396 + $0x1180] sm:$0xff]
        %v1130 = vld [vmem:[%s396 + $0x1188] sm:$0xff]
        %v1131 = vld [vmem:[%s396 + $0x1190] sm:$0xff]
        %v1132 = vld [vmem:[%s396 + $0x1198] sm:$0xff]
        %v1133 = vld [vmem:[%s396 + $0x11a0] sm:$0xff]
        %v1134 = vld [vmem:[%s396 + $0x11a8] sm:$0xff]
        %v1135 = vld [vmem:[%s396 + $0x11b0] sm:$0xff]
        %v1136 = vld [vmem:[%s396 + $0x11b8] sm:$0xff]
        %v1137 = vld [vmem:[%s396 + $0x11c0] sm:$0xff]
        %v1138 = vld [vmem:[%s396 + $0x11c8] sm:$0xff]
        %v1139 = vld [vmem:[%s396 + $0x11d0] sm:$0xff]
        %v1140 = vld [vmem:[%s396 + $0x11d8] sm:$0xff]
        %v1141 = vld [vmem:[%s396 + $0x11e0] sm:$0xff]
        %v1142 = vld [vmem:[%s396 + $0x11e8] sm:$0xff]
        %v1143 = vld [vmem:[%s396 + $0x11f0] sm:$0xff]
        %v1144 = vld [vmem:[%s396 + $0x11f8] sm:$0xff]
        %v1145 = vld [vmem:[%s396 + $0x1200] sm:$0xff]
        %v1146 = vld [vmem:[%s396 + $0x1208] sm:$0xff]
        %v1147 = vld [vmem:[%s396 + $0x1210] sm:$0xff]
        %v1148 = vld [vmem:[%s396 + $0x1218] sm:$0xff]
        %v1149 = vld [vmem:[%s396 + $0x1220] sm:$0xff]
        %v1150 = vld [vmem:[%s396 + $0x1228] sm:$0xff]
        %v1151 = vld [vmem:[%s396 + $0x1230] sm:$0xff]
        %v1152 = vld [vmem:[%s396 + $0x1238] sm:$0xff]
        %v1153 = vld [vmem:[%s396 + $0x1240] sm:$0xff]
        %v1154 = vld [vmem:[%s396 + $0x1248] sm:$0xff]
        %v1155 = vld [vmem:[%s396 + $0x1250] sm:$0xff]
        %v1156 = vld [vmem:[%s396 + $0x1258] sm:$0xff]
        %v1157 = vld [vmem:[%s396 + $0x1260] sm:$0xff]
        %v1158 = vld [vmem:[%s396 + $0x1268] sm:$0xff]
        %v1159 = vld [vmem:[%s396 + $0x1270] sm:$0xff]
        %v1160 = vld [vmem:[%s396 + $0x1278] sm:$0xff]
        %v1161 = vld [vmem:[%s396 + $0x1280] sm:$0xff]
        %v1162 = vld [vmem:[%s396 + $0x1288] sm:$0xff]
        %v1163 = vld [vmem:[%s396 + $0x1290] sm:$0xff]
        %v1164 = vld [vmem:[%s396 + $0x1298] sm:$0xff]
        %v1165 = vld [vmem:[%s396 + $0x12a0] sm:$0xff]
        %v1166 = vld [vmem:[%s396 + $0x12a8] sm:$0xff]
        %v1167 = vld [vmem:[%s396 + $0x12b0] sm:$0xff]
        %v1168 = vld [vmem:[%s396 + $0x12b8] sm:$0xff]
        %v1169 = vld [vmem:[%s396 + $0x12c0] sm:$0xff]
        %v1170 = vld [vmem:[%s396 + $0x12c8] sm:$0xff]
        %v1171 = vld [vmem:[%s396 + $0x12d0] sm:$0xff]
        %v1172 = vld [vmem:[%s396 + $0x12d8] sm:$0xff]
        %v1173 = vld [vmem:[%s396 + $0x12e0] sm:$0xff]
        %v1174 = vld [vmem:[%s396 + $0x12e8] sm:$0xff]
        %v1175 = vld [vmem:[%s396 + $0x12f0] sm:$0xff]
        %v1176 = vld [vmem:[%s396 + $0x12f8] sm:$0xff]
        %v1177 = vld [vmem:[%s396 + $0x1300] sm:$0xff]
        %v1178 = vld [vmem:[%s396 + $0x1308] sm:$0xff]
        %v1179 = vld [vmem:[%s396 + $0x1310] sm:$0xff]
        %v1180 = vld [vmem:[%s396 + $0x1318] sm:$0xff]
        %v1181 = vld [vmem:[%s396 + $0x1320] sm:$0xff]
        %v1182 = vld [vmem:[%s396 + $0x1328] sm:$0xff]
        %v1183 = vld [vmem:[%s396 + $0x1330] sm:$0xff]
        %v1184 = vld [vmem:[%s396 + $0x1338] sm:$0xff]
        %v1185 = vld [vmem:[%s396 + $0x1340] sm:$0xff]
        %v1186 = vld [vmem:[%s396 + $0x1348] sm:$0xff]
        %v1187 = vld [vmem:[%s396 + $0x1350] sm:$0xff]
        %v1188 = vld [vmem:[%s396 + $0x1358] sm:$0xff]
        %v1189 = vld [vmem:[%s396 + $0x1360] sm:$0xff]
        %v1190 = vld [vmem:[%s396 + $0x1368] sm:$0xff]
        %v1191 = vld [vmem:[%s396 + $0x1370] sm:$0xff]
        %v1192 = vld [vmem:[%s396 + $0x1378] sm:$0xff]
        %v1193 = vld [vmem:[%s396 + $0x1380] sm:$0xff]
        %v1194 = vld [vmem:[%s396 + $0x1388] sm:$0xff]
        %v1195 = vld [vmem:[%s396 + $0x1390] sm:$0xff]
        %v1196 = vld [vmem:[%s396 + $0x1398] sm:$0xff]
        %v1197 = vld [vmem:[%s396 + $0x13a0] sm:$0xff]
        %v1198 = vld [vmem:[%s396 + $0x13a8] sm:$0xff]
        %v1199 = vld [vmem:[%s396 + $0x13b0] sm:$0xff]
        %v1200 = vld [vmem:[%s396 + $0x13b8] sm:$0xff]
        %v1201 = vld [vmem:[%s396 + $0x13c0] sm:$0xff]
        %v1202 = vld [vmem:[%s396 + $0x13c8] sm:$0xff]
        %v1203 = vld [vmem:[%s396 + $0x13d0] sm:$0xff]
        %v1204 = vld [vmem:[%s396 + $0x13d8] sm:$0xff]
        %v1205 = vld [vmem:[%s396 + $0x13e0] sm:$0xff]
        %v1206 = vld [vmem:[%s396 + $0x13e8] sm:$0xff]
        %v1207 = vld [vmem:[%s396 + $0x13f0] sm:$0xff]
        %v1208 = vld [vmem:[%s396 + $0x13f8] sm:$0xff]
        %v1721 = vunpack.c.l.b16 %v697
        %v1722 = vunpack.c.h.b16 %v697
        %v1723 = vunpack.c.l.b16 %v698
        %v1724 = vunpack.c.h.b16 %v698
        %v1725 = vunpack.c.l.b16 %v699
        %v1726 = vunpack.c.h.b16 %v699
        %v1727 = vunpack.c.l.b16 %v700
        %v1728 = vunpack.c.h.b16 %v700
        %v1729 = vunpack.c.l.b16 %v701
        %v1730 = vunpack.c.h.b16 %v701
        %v1731 = vunpack.c.l.b16 %v702
        %v1732 = vunpack.c.h.b16 %v702
        %v1733 = vunpack.c.l.b16 %v703
        %v1734 = vunpack.c.h.b16 %v703
        %v1735 = vunpack.c.l.b16 %v704
        %v1736 = vunpack.c.h.b16 %v704
        %v1737 = vunpack.c.l.b16 %v705
        %v1738 = vunpack.c.h.b16 %v705
        %v1739 = vunpack.c.l.b16 %v706
        %v1740 = vunpack.c.h.b16 %v706
        %v1741 = vunpack.c.l.b16 %v707
        %v1742 = vunpack.c.h.b16 %v707
        %v1743 = vunpack.c.l.b16 %v708
        %v1744 = vunpack.c.h.b16 %v708
        %v1745 = vunpack.c.l.b16 %v709
        %v1746 = vunpack.c.h.b16 %v709
        %v1747 = vunpack.c.l.b16 %v710
        %v1748 = vunpack.c.h.b16 %v710
        %v1749 = vunpack.c.l.b16 %v711
        %v1750 = vunpack.c.h.b16 %v711
        %v1751 = vunpack.c.l.b16 %v712
        %v1752 = vunpack.c.h.b16 %v712
        %v1753 = vunpack.c.l.b16 %v713
        %v1754 = vunpack.c.h.b16 %v713
        %v1755 = vunpack.c.l.b16 %v714
        %v1756 = vunpack.c.h.b16 %v714
        %v1757 = vunpack.c.l.b16 %v715
        %v1758 = vunpack.c.h.b16 %v715
        %v1759 = vunpack.c.l.b16 %v716
        %v1760 = vunpack.c.h.b16 %v716
        %v1761 = vunpack.c.l.b16 %v717
        %v1762 = vunpack.c.h.b16 %v717
        %v1763 = vunpack.c.l.b16 %v718
        %v1764 = vunpack.c.h.b16 %v718
        %v1765 = vunpack.c.l.b16 %v719
        %v1766 = vunpack.c.h.b16 %v719
        %v1767 = vunpack.c.l.b16 %v720
        %v1768 = vunpack.c.h.b16 %v720
        %v1769 = vunpack.c.l.b16 %v721
        %v1770 = vunpack.c.h.b16 %v721
        %v1771 = vunpack.c.l.b16 %v722
        %v1772 = vunpack.c.h.b16 %v722
        %v1773 = vunpack.c.l.b16 %v723
        %v1774 = vunpack.c.h.b16 %v723
        %v1775 = vunpack.c.l.b16 %v724
        %v1776 = vunpack.c.h.b16 %v724
        %v1777 = vunpack.c.l.b16 %v725
        %v1778 = vunpack.c.h.b16 %v725
        %v1779 = vunpack.c.l.b16 %v726
        %v1780 = vunpack.c.h.b16 %v726
        %v1781 = vunpack.c.l.b16 %v727
        %v1782 = vunpack.c.h.b16 %v727
        %v1783 = vunpack.c.l.b16 %v728
        %v1784 = vunpack.c.h.b16 %v728
        %v1785 = vunpack.c.l.b16 %v729
        %v1786 = vunpack.c.h.b16 %v729
        %v1787 = vunpack.c.l.b16 %v730
        %v1788 = vunpack.c.h.b16 %v730
        %v1789 = vunpack.c.l.b16 %v731
        %v1790 = vunpack.c.h.b16 %v731
        %v1791 = vunpack.c.l.b16 %v732
        %v1792 = vunpack.c.h.b16 %v732
        %v1793 = vunpack.c.l.b16 %v733
        %v1794 = vunpack.c.h.b16 %v733
        %v1795 = vunpack.c.l.b16 %v734
        %v1796 = vunpack.c.h.b16 %v734
        %v1797 = vunpack.c.l.b16 %v735
        %v1798 = vunpack.c.h.b16 %v735
        %v1799 = vunpack.c.l.b16 %v736
        %v1800 = vunpack.c.h.b16 %v736
        %v1801 = vunpack.c.l.b16 %v737
        %v1802 = vunpack.c.h.b16 %v737
        %v1803 = vunpack.c.l.b16 %v738
        %v1804 = vunpack.c.h.b16 %v738
        %v1805 = vunpack.c.l.b16 %v739
        %v1806 = vunpack.c.h.b16 %v739
        %v1807 = vunpack.c.l.b16 %v740
        %v1808 = vunpack.c.h.b16 %v740
        %v1809 = vunpack.c.l.b16 %v741
        %v1810 = vunpack.c.h.b16 %v741
        %v1811 = vunpack.c.l.b16 %v742
        %v1812 = vunpack.c.h.b16 %v742
        %v1813 = vunpack.c.l.b16 %v743
        %v1814 = vunpack.c.h.b16 %v743
        %v1815 = vunpack.c.l.b16 %v744
        %v1816 = vunpack.c.h.b16 %v744
        %v1817 = vunpack.c.l.b16 %v745
        %v1818 = vunpack.c.h.b16 %v745
        %v1819 = vunpack.c.l.b16 %v746
        %v1820 = vunpack.c.h.b16 %v746
        %v1821 = vunpack.c.l.b16 %v747
        %v1822 = vunpack.c.h.b16 %v747
        %v1823 = vunpack.c.l.b16 %v748
        %v1824 = vunpack.c.h.b16 %v748
        %v1825 = vunpack.c.l.b16 %v749
        %v1826 = vunpack.c.h.b16 %v749
        %v1827 = vunpack.c.l.b16 %v750
        %v1828 = vunpack.c.h.b16 %v750
        %v1829 = vunpack.c.l.b16 %v751
        %v1830 = vunpack.c.h.b16 %v751
        %v1831 = vunpack.c.l.b16 %v752
        %v1832 = vunpack.c.h.b16 %v752
        %v1833 = vunpack.c.l.b16 %v753
        %v1834 = vunpack.c.h.b16 %v753
        %v1835 = vunpack.c.l.b16 %v754
        %v1836 = vunpack.c.h.b16 %v754
        %v1837 = vunpack.c.l.b16 %v755
        %v1838 = vunpack.c.h.b16 %v755
        %v1839 = vunpack.c.l.b16 %v756
        %v1840 = vunpack.c.h.b16 %v756
        %v1841 = vunpack.c.l.b16 %v757
        %v1842 = vunpack.c.h.b16 %v757
        %v1843 = vunpack.c.l.b16 %v758
        %v1844 = vunpack.c.h.b16 %v758
        %v1845 = vunpack.c.l.b16 %v759
        %v1846 = vunpack.c.h.b16 %v759
        %v1847 = vunpack.c.l.b16 %v760
        %v1848 = vunpack.c.h.b16 %v760
        %v1849 = vunpack.c.l.b16 %v761
        %v1850 = vunpack.c.h.b16 %v761
        %v1851 = vunpack.c.l.b16 %v762
        %v1852 = vunpack.c.h.b16 %v762
        %v1853 = vunpack.c.l.b16 %v763
        %v1854 = vunpack.c.h.b16 %v763
        %v1855 = vunpack.c.l.b16 %v764
        %v1856 = vunpack.c.h.b16 %v764
        %v1857 = vunpack.c.l.b16 %v765
        %v1858 = vunpack.c.h.b16 %v765
        %v1859 = vunpack.c.l.b16 %v766
        %v1860 = vunpack.c.h.b16 %v766
        %v1861 = vunpack.c.l.b16 %v767
        %v1862 = vunpack.c.h.b16 %v767
        %v1863 = vunpack.c.l.b16 %v768
        %v1864 = vunpack.c.h.b16 %v768
        %v1865 = vunpack.c.l.b16 %v769
        %v1866 = vunpack.c.h.b16 %v769
        %v1867 = vunpack.c.l.b16 %v770
        %v1868 = vunpack.c.h.b16 %v770
        %v1869 = vunpack.c.l.b16 %v771
        %v1870 = vunpack.c.h.b16 %v771
        %v1871 = vunpack.c.l.b16 %v772
        %v1872 = vunpack.c.h.b16 %v772
        %v1873 = vunpack.c.l.b16 %v773
        %v1874 = vunpack.c.h.b16 %v773
        %v1875 = vunpack.c.l.b16 %v774
        %v1876 = vunpack.c.h.b16 %v774
        %v1877 = vunpack.c.l.b16 %v775
        %v1878 = vunpack.c.h.b16 %v775
        %v1879 = vunpack.c.l.b16 %v776
        %v1880 = vunpack.c.h.b16 %v776
        %v1881 = vunpack.c.l.b16 %v777
        %v1882 = vunpack.c.h.b16 %v777
        %v1883 = vunpack.c.l.b16 %v778
        %v1884 = vunpack.c.h.b16 %v778
        %v1885 = vunpack.c.l.b16 %v779
        %v1886 = vunpack.c.h.b16 %v779
        %v1887 = vunpack.c.l.b16 %v780
        %v1888 = vunpack.c.h.b16 %v780
        %v1889 = vunpack.c.l.b16 %v781
        %v1890 = vunpack.c.h.b16 %v781
        %v1891 = vunpack.c.l.b16 %v782
        %v1892 = vunpack.c.h.b16 %v782
        %v1893 = vunpack.c.l.b16 %v783
        %v1894 = vunpack.c.h.b16 %v783
        %v1895 = vunpack.c.l.b16 %v784
        %v1896 = vunpack.c.h.b16 %v784
        %v1897 = vunpack.c.l.b16 %v785
        %v1898 = vunpack.c.h.b16 %v785
        %v1899 = vunpack.c.l.b16 %v786
        %v1900 = vunpack.c.h.b16 %v786
        %v1901 = vunpack.c.l.b16 %v787
        %v1902 = vunpack.c.h.b16 %v787
        %v1903 = vunpack.c.l.b16 %v788
        %v1904 = vunpack.c.h.b16 %v788
        %v1905 = vunpack.c.l.b16 %v789
        %v1906 = vunpack.c.h.b16 %v789
        %v1907 = vunpack.c.l.b16 %v790
        %v1908 = vunpack.c.h.b16 %v790
        %v1909 = vunpack.c.l.b16 %v791
        %v1910 = vunpack.c.h.b16 %v791
        %v1911 = vunpack.c.l.b16 %v792
        %v1912 = vunpack.c.h.b16 %v792
        %v1913 = vunpack.c.l.b16 %v793
        %v1914 = vunpack.c.h.b16 %v793
        %v1915 = vunpack.c.l.b16 %v794
        %v1916 = vunpack.c.h.b16 %v794
        %v1917 = vunpack.c.l.b16 %v795
        %v1918 = vunpack.c.h.b16 %v795
        %v1919 = vunpack.c.l.b16 %v796
        %v1920 = vunpack.c.h.b16 %v796
        %v1921 = vunpack.c.l.b16 %v797
        %v1922 = vunpack.c.h.b16 %v797
        %v1923 = vunpack.c.l.b16 %v798
        %v1924 = vunpack.c.h.b16 %v798
        %v1925 = vunpack.c.l.b16 %v799
        %v1926 = vunpack.c.h.b16 %v799
        %v1927 = vunpack.c.l.b16 %v800
        %v1928 = vunpack.c.h.b16 %v800
        %v1929 = vunpack.c.l.b16 %v801
        %v1930 = vunpack.c.h.b16 %v801
        %v1931 = vunpack.c.l.b16 %v802
        %v1932 = vunpack.c.h.b16 %v802
        %v1933 = vunpack.c.l.b16 %v803
        %v1934 = vunpack.c.h.b16 %v803
        %v1935 = vunpack.c.l.b16 %v804
        %v1936 = vunpack.c.h.b16 %v804
        %v1937 = vunpack.c.l.b16 %v805
        %v1938 = vunpack.c.h.b16 %v805
        %v1939 = vunpack.c.l.b16 %v806
        %v1940 = vunpack.c.h.b16 %v806
        %v1941 = vunpack.c.l.b16 %v807
        %v1942 = vunpack.c.h.b16 %v807
        %v1943 = vunpack.c.l.b16 %v808
        %v1944 = vunpack.c.h.b16 %v808
        %v1945 = vunpack.c.l.b16 %v809
        %v1946 = vunpack.c.h.b16 %v809
        %v1947 = vunpack.c.l.b16 %v810
        %v1948 = vunpack.c.h.b16 %v810
        %v1949 = vunpack.c.l.b16 %v811
        %v1950 = vunpack.c.h.b16 %v811
        %v1951 = vunpack.c.l.b16 %v812
        %v1952 = vunpack.c.h.b16 %v812
        %v1953 = vunpack.c.l.b16 %v813
        %v1954 = vunpack.c.h.b16 %v813
        %v1955 = vunpack.c.l.b16 %v814
        %v1956 = vunpack.c.h.b16 %v814
        %v1957 = vunpack.c.l.b16 %v815
        %v1958 = vunpack.c.h.b16 %v815
        %v1959 = vunpack.c.l.b16 %v816
        %v1960 = vunpack.c.h.b16 %v816
        %v1961 = vunpack.c.l.b16 %v817
        %v1962 = vunpack.c.h.b16 %v817
        %v1963 = vunpack.c.l.b16 %v818
        %v1964 = vunpack.c.h.b16 %v818
        %v1965 = vunpack.c.l.b16 %v819
        %v1966 = vunpack.c.h.b16 %v819
        %v1967 = vunpack.c.l.b16 %v820
        %v1968 = vunpack.c.h.b16 %v820
        %v1969 = vunpack.c.l.b16 %v821
        %v1970 = vunpack.c.h.b16 %v821
        %v1971 = vunpack.c.l.b16 %v822
        %v1972 = vunpack.c.h.b16 %v822
        %v1973 = vunpack.c.l.b16 %v823
        %v1974 = vunpack.c.h.b16 %v823
        %v1975 = vunpack.c.l.b16 %v824
        %v1976 = vunpack.c.h.b16 %v824
        %v1977 = vunpack.c.l.b16 %v825
        %v1978 = vunpack.c.h.b16 %v825
        %v1979 = vunpack.c.l.b16 %v826
        %v1980 = vunpack.c.h.b16 %v826
        %v1981 = vunpack.c.l.b16 %v827
        %v1982 = vunpack.c.h.b16 %v827
        %v1983 = vunpack.c.l.b16 %v828
        %v1984 = vunpack.c.h.b16 %v828
        %v1985 = vunpack.c.l.b16 %v829
        %v1986 = vunpack.c.h.b16 %v829
        %v1987 = vunpack.c.l.b16 %v830
        %v1988 = vunpack.c.h.b16 %v830
        %v1989 = vunpack.c.l.b16 %v831
        %v1990 = vunpack.c.h.b16 %v831
        %v1991 = vunpack.c.l.b16 %v832
        %v1992 = vunpack.c.h.b16 %v832
        %v1993 = vunpack.c.l.b16 %v833
        %v1994 = vunpack.c.h.b16 %v833
        %v1995 = vunpack.c.l.b16 %v834
        %v1996 = vunpack.c.h.b16 %v834
        %v1997 = vunpack.c.l.b16 %v835
        %v1998 = vunpack.c.h.b16 %v835
        %v1999 = vunpack.c.l.b16 %v836
        %v2000 = vunpack.c.h.b16 %v836
        %v2001 = vunpack.c.l.b16 %v837
        %v2002 = vunpack.c.h.b16 %v837
        %v2003 = vunpack.c.l.b16 %v838
        %v2004 = vunpack.c.h.b16 %v838
        %v2005 = vunpack.c.l.b16 %v839
        %v2006 = vunpack.c.h.b16 %v839
        %v2007 = vunpack.c.l.b16 %v840
        %v2008 = vunpack.c.h.b16 %v840
        %v2009 = vunpack.c.l.b16 %v841
        %v2010 = vunpack.c.h.b16 %v841
        %v2011 = vunpack.c.l.b16 %v842
        %v2012 = vunpack.c.h.b16 %v842
        %v2013 = vunpack.c.l.b16 %v843
        %v2014 = vunpack.c.h.b16 %v843
        %v2015 = vunpack.c.l.b16 %v844
        %v2016 = vunpack.c.h.b16 %v844
        %v2017 = vunpack.c.l.b16 %v845
        %v2018 = vunpack.c.h.b16 %v845
        %v2019 = vunpack.c.l.b16 %v846
        %v2020 = vunpack.c.h.b16 %v846
        %v2021 = vunpack.c.l.b16 %v847
        %v2022 = vunpack.c.h.b16 %v847
        %v2023 = vunpack.c.l.b16 %v848
        %v2024 = vunpack.c.h.b16 %v848
        %v2025 = vunpack.c.l.b16 %v849
        %v2026 = vunpack.c.h.b16 %v849
        %v2027 = vunpack.c.l.b16 %v850
        %v2028 = vunpack.c.h.b16 %v850
        %v2029 = vunpack.c.l.b16 %v851
        %v2030 = vunpack.c.h.b16 %v851
        %v2031 = vunpack.c.l.b16 %v852
        %v2032 = vunpack.c.h.b16 %v852
        %v2033 = vunpack.c.l.b16 %v853
        %v2034 = vunpack.c.h.b16 %v853
        %v2035 = vunpack.c.l.b16 %v854
        %v2036 = vunpack.c.h.b16 %v854
        %v2037 = vunpack.c.l.b16 %v855
        %v2038 = vunpack.c.h.b16 %v855
        %v2039 = vunpack.c.l.b16 %v856
        %v2040 = vunpack.c.h.b16 %v856
        %v2041 = vunpack.c.l.b16 %v857
        %v2042 = vunpack.c.h.b16 %v857
        %v2043 = vunpack.c.l.b16 %v858
        %v2044 = vunpack.c.h.b16 %v858
        %v2045 = vunpack.c.l.b16 %v859
        %v2046 = vunpack.c.h.b16 %v859
        %v2047 = vunpack.c.l.b16 %v860
        %v2048 = vunpack.c.h.b16 %v860
        %v2049 = vunpack.c.l.b16 %v861
        %v2050 = vunpack.c.h.b16 %v861
        %v2051 = vunpack.c.l.b16 %v862
        %v2052 = vunpack.c.h.b16 %v862
        %v2053 = vunpack.c.l.b16 %v863
        %v2054 = vunpack.c.h.b16 %v863
        %v2055 = vunpack.c.l.b16 %v864
        %v2056 = vunpack.c.h.b16 %v864
        %v2057 = vunpack.c.l.b16 %v865
        %v2058 = vunpack.c.h.b16 %v865
        %v2059 = vunpack.c.l.b16 %v866
        %v2060 = vunpack.c.h.b16 %v866
        %v2061 = vunpack.c.l.b16 %v867
        %v2062 = vunpack.c.h.b16 %v867
        %v2063 = vunpack.c.l.b16 %v868
        %v2064 = vunpack.c.h.b16 %v868
        %v2065 = vunpack.c.l.b16 %v869
        %v2066 = vunpack.c.h.b16 %v869
        %v2067 = vunpack.c.l.b16 %v870
        %v2068 = vunpack.c.h.b16 %v870
        %v2069 = vunpack.c.l.b16 %v871
        %v2070 = vunpack.c.h.b16 %v871
        %v2071 = vunpack.c.l.b16 %v872
        %v2072 = vunpack.c.h.b16 %v872
        %v2073 = vunpack.c.l.b16 %v873
        %v2074 = vunpack.c.h.b16 %v873
        %v2075 = vunpack.c.l.b16 %v874
        %v2076 = vunpack.c.h.b16 %v874
        %v2077 = vunpack.c.l.b16 %v875
        %v2078 = vunpack.c.h.b16 %v875
        %v2079 = vunpack.c.l.b16 %v876
        %v2080 = vunpack.c.h.b16 %v876
        %v2081 = vunpack.c.l.b16 %v877
        %v2082 = vunpack.c.h.b16 %v877
        %v2083 = vunpack.c.l.b16 %v878
        %v2084 = vunpack.c.h.b16 %v878
        %v2085 = vunpack.c.l.b16 %v879
        %v2086 = vunpack.c.h.b16 %v879
        %v2087 = vunpack.c.l.b16 %v880
        %v2088 = vunpack.c.h.b16 %v880
        %v2089 = vunpack.c.l.b16 %v881
        %v2090 = vunpack.c.h.b16 %v881
        %v2091 = vunpack.c.l.b16 %v882
        %v2092 = vunpack.c.h.b16 %v882
        %v2093 = vunpack.c.l.b16 %v883
        %v2094 = vunpack.c.h.b16 %v883
        %v2095 = vunpack.c.l.b16 %v884
        %v2096 = vunpack.c.h.b16 %v884
        %v2097 = vunpack.c.l.b16 %v885
        %v2098 = vunpack.c.h.b16 %v885
        %v2099 = vunpack.c.l.b16 %v886
        %v2100 = vunpack.c.h.b16 %v886
        %v2101 = vunpack.c.l.b16 %v887
        %v2102 = vunpack.c.h.b16 %v887
        %v2103 = vunpack.c.l.b16 %v888
        %v2104 = vunpack.c.h.b16 %v888
        %v2105 = vunpack.c.l.b16 %v889
        %v2106 = vunpack.c.h.b16 %v889
        %v2107 = vunpack.c.l.b16 %v890
        %v2108 = vunpack.c.h.b16 %v890
        %v2109 = vunpack.c.l.b16 %v891
        %v2110 = vunpack.c.h.b16 %v891
        %v2111 = vunpack.c.l.b16 %v892
        %v2112 = vunpack.c.h.b16 %v892
        %v2113 = vunpack.c.l.b16 %v893
        %v2114 = vunpack.c.h.b16 %v893
        %v2115 = vunpack.c.l.b16 %v894
        %v2116 = vunpack.c.h.b16 %v894
        %v2117 = vunpack.c.l.b16 %v895
        %v2118 = vunpack.c.h.b16 %v895
        %v2119 = vunpack.c.l.b16 %v896
        %v2120 = vunpack.c.h.b16 %v896
        %v2121 = vunpack.c.l.b16 %v897
        %v2122 = vunpack.c.h.b16 %v897
        %v2123 = vunpack.c.l.b16 %v898
        %v2124 = vunpack.c.h.b16 %v898
        %v2125 = vunpack.c.l.b16 %v899
        %v2126 = vunpack.c.h.b16 %v899
        %v2127 = vunpack.c.l.b16 %v900
        %v2128 = vunpack.c.h.b16 %v900
        %v2129 = vunpack.c.l.b16 %v901
        %v2130 = vunpack.c.h.b16 %v901
        %v2131 = vunpack.c.l.b16 %v902
        %v2132 = vunpack.c.h.b16 %v902
        %v2133 = vunpack.c.l.b16 %v903
        %v2134 = vunpack.c.h.b16 %v903
        %v2135 = vunpack.c.l.b16 %v904
        %v2136 = vunpack.c.h.b16 %v904
        %v2137 = vunpack.c.l.b16 %v905
        %v2138 = vunpack.c.h.b16 %v905
        %v2139 = vunpack.c.l.b16 %v906
        %v2140 = vunpack.c.h.b16 %v906
        %v2141 = vunpack.c.l.b16 %v907
        %v2142 = vunpack.c.h.b16 %v907
        %v2143 = vunpack.c.l.b16 %v908
        %v2144 = vunpack.c.h.b16 %v908
        %v2145 = vunpack.c.l.b16 %v909
        %v2146 = vunpack.c.h.b16 %v909
        %v2147 = vunpack.c.l.b16 %v910
        %v2148 = vunpack.c.h.b16 %v910
        %v2149 = vunpack.c.l.b16 %v911
        %v2150 = vunpack.c.h.b16 %v911
        %v2151 = vunpack.c.l.b16 %v912
        %v2152 = vunpack.c.h.b16 %v912
        %v2153 = vunpack.c.l.b16 %v913
        %v2154 = vunpack.c.h.b16 %v913
        %v2155 = vunpack.c.l.b16 %v914
        %v2156 = vunpack.c.h.b16 %v914
        %v2157 = vunpack.c.l.b16 %v915
        %v2158 = vunpack.c.h.b16 %v915
        %v2159 = vunpack.c.l.b16 %v916
        %v2160 = vunpack.c.h.b16 %v916
        %v2161 = vunpack.c.l.b16 %v917
        %v2162 = vunpack.c.h.b16 %v917
        %v2163 = vunpack.c.l.b16 %v918
        %v2164 = vunpack.c.h.b16 %v918
        %v2165 = vunpack.c.l.b16 %v919
        %v2166 = vunpack.c.h.b16 %v919
        %v2167 = vunpack.c.l.b16 %v920
        %v2168 = vunpack.c.h.b16 %v920
        %v2169 = vunpack.c.l.b16 %v921
        %v2170 = vunpack.c.h.b16 %v921
        %v2171 = vunpack.c.l.b16 %v922
        %v2172 = vunpack.c.h.b16 %v922
        %v2173 = vunpack.c.l.b16 %v923
        %v2174 = vunpack.c.h.b16 %v923
        %v2175 = vunpack.c.l.b16 %v924
        %v2176 = vunpack.c.h.b16 %v924
        %v2177 = vunpack.c.l.b16 %v925
        %v2178 = vunpack.c.h.b16 %v925
        %v2179 = vunpack.c.l.b16 %v926
        %v2180 = vunpack.c.h.b16 %v926
        %v2181 = vunpack.c.l.b16 %v927
        %v2182 = vunpack.c.h.b16 %v927
        %v2183 = vunpack.c.l.b16 %v928
        %v2184 = vunpack.c.h.b16 %v928
        %v2185 = vunpack.c.l.b16 %v929
        %v2186 = vunpack.c.h.b16 %v929
        %v2187 = vunpack.c.l.b16 %v930
        %v2188 = vunpack.c.h.b16 %v930
        %v2189 = vunpack.c.l.b16 %v931
        %v2190 = vunpack.c.h.b16 %v931
        %v2191 = vunpack.c.l.b16 %v932
        %v2192 = vunpack.c.h.b16 %v932
        %v2193 = vunpack.c.l.b16 %v933
        %v2194 = vunpack.c.h.b16 %v933
        %v2195 = vunpack.c.l.b16 %v934
        %v2196 = vunpack.c.h.b16 %v934
        %v2197 = vunpack.c.l.b16 %v935
        %v2198 = vunpack.c.h.b16 %v935
        %v2199 = vunpack.c.l.b16 %v936
        %v2200 = vunpack.c.h.b16 %v936
        %v2201 = vunpack.c.l.b16 %v937
        %v2202 = vunpack.c.h.b16 %v937
        %v2203 = vunpack.c.l.b16 %v938
        %v2204 = vunpack.c.h.b16 %v938
        %v2205 = vunpack.c.l.b16 %v939
        %v2206 = vunpack.c.h.b16 %v939
        %v2207 = vunpack.c.l.b16 %v940
        %v2208 = vunpack.c.h.b16 %v940
        %v2209 = vunpack.c.l.b16 %v941
        %v2210 = vunpack.c.h.b16 %v941
        %v2211 = vunpack.c.l.b16 %v942
        %v2212 = vunpack.c.h.b16 %v942
        %v2213 = vunpack.c.l.b16 %v943
        %v2214 = vunpack.c.h.b16 %v943
        %v2215 = vunpack.c.l.b16 %v944
        %v2216 = vunpack.c.h.b16 %v944
        %v2217 = vunpack.c.l.b16 %v945
        %v2218 = vunpack.c.h.b16 %v945
        %v2219 = vunpack.c.l.b16 %v946
        %v2220 = vunpack.c.h.b16 %v946
        %v2221 = vunpack.c.l.b16 %v947
        %v2222 = vunpack.c.h.b16 %v947
        %v2223 = vunpack.c.l.b16 %v948
        %v2224 = vunpack.c.h.b16 %v948
        %v2225 = vunpack.c.l.b16 %v949
        %v2226 = vunpack.c.h.b16 %v949
        %v2227 = vunpack.c.l.b16 %v950
        %v2228 = vunpack.c.h.b16 %v950
        %v2229 = vunpack.c.l.b16 %v951
        %v2230 = vunpack.c.h.b16 %v951
        %v2231 = vunpack.c.l.b16 %v952
        %v2232 = vunpack.c.h.b16 %v952
        %v2233 = vunpack.c.l.b16 %v953
        %v2234 = vunpack.c.h.b16 %v953
        %v2235 = vunpack.c.l.b16 %v954
        %v2236 = vunpack.c.h.b16 %v954
        %v2237 = vunpack.c.l.b16 %v955
        %v2238 = vunpack.c.h.b16 %v955
        %v2239 = vunpack.c.l.b16 %v956
        %v2240 = vunpack.c.h.b16 %v956
        %v2241 = vunpack.c.l.b16 %v957
        %v2242 = vunpack.c.h.b16 %v957
        %v2243 = vunpack.c.l.b16 %v958
        %v2244 = vunpack.c.h.b16 %v958
        %v2245 = vunpack.c.l.b16 %v959
        %v2246 = vunpack.c.h.b16 %v959
        %v2247 = vunpack.c.l.b16 %v960
        %v2248 = vunpack.c.h.b16 %v960
        %v2249 = vunpack.c.l.b16 %v961
        %v2250 = vunpack.c.h.b16 %v961
        %v2251 = vunpack.c.l.b16 %v962
        %v2252 = vunpack.c.h.b16 %v962
        %v2253 = vunpack.c.l.b16 %v963
        %v2254 = vunpack.c.h.b16 %v963
        %v2255 = vunpack.c.l.b16 %v964
        %v2256 = vunpack.c.h.b16 %v964
        %v2257 = vunpack.c.l.b16 %v965
        %v2258 = vunpack.c.h.b16 %v965
        %v2259 = vunpack.c.l.b16 %v966
        %v2260 = vunpack.c.h.b16 %v966
        %v2261 = vunpack.c.l.b16 %v967
        %v2262 = vunpack.c.h.b16 %v967
        %v2263 = vunpack.c.l.b16 %v968
        %v2264 = vunpack.c.h.b16 %v968
        %v2265 = vunpack.c.l.b16 %v969
        %v2266 = vunpack.c.h.b16 %v969
        %v2267 = vunpack.c.l.b16 %v970
        %v2268 = vunpack.c.h.b16 %v970
        %v2269 = vunpack.c.l.b16 %v971
        %v2270 = vunpack.c.h.b16 %v971
        %v2271 = vunpack.c.l.b16 %v972
        %v2272 = vunpack.c.h.b16 %v972
        %v2273 = vunpack.c.l.b16 %v973
        %v2274 = vunpack.c.h.b16 %v973
        %v2275 = vunpack.c.l.b16 %v974
        %v2276 = vunpack.c.h.b16 %v974
        %v2277 = vunpack.c.l.b16 %v975
        %v2278 = vunpack.c.h.b16 %v975
        %v2279 = vunpack.c.l.b16 %v976
        %v2280 = vunpack.c.h.b16 %v976
        %v2281 = vunpack.c.l.b16 %v977
        %v2282 = vunpack.c.h.b16 %v977
        %v2283 = vunpack.c.l.b16 %v978
        %v2284 = vunpack.c.h.b16 %v978
        %v2285 = vunpack.c.l.b16 %v979
        %v2286 = vunpack.c.h.b16 %v979
        %v2287 = vunpack.c.l.b16 %v980
        %v2288 = vunpack.c.h.b16 %v980
        %v2289 = vunpack.c.l.b16 %v981
        %v2290 = vunpack.c.h.b16 %v981
        %v2291 = vunpack.c.l.b16 %v982
        %v2292 = vunpack.c.h.b16 %v982
        %v2293 = vunpack.c.l.b16 %v983
        %v2294 = vunpack.c.h.b16 %v983
        %v2295 = vunpack.c.l.b16 %v984
        %v2296 = vunpack.c.h.b16 %v984
        %v2297 = vunpack.c.l.b16 %v985
        %v2298 = vunpack.c.h.b16 %v985
        %v2299 = vunpack.c.l.b16 %v986
        %v2300 = vunpack.c.h.b16 %v986
        %v2301 = vunpack.c.l.b16 %v987
        %v2302 = vunpack.c.h.b16 %v987
        %v2303 = vunpack.c.l.b16 %v988
        %v2304 = vunpack.c.h.b16 %v988
        %v2305 = vunpack.c.l.b16 %v989
        %v2306 = vunpack.c.h.b16 %v989
        %v2307 = vunpack.c.l.b16 %v990
        %v2308 = vunpack.c.h.b16 %v990
        %v2309 = vunpack.c.l.b16 %v991
        %v2310 = vunpack.c.h.b16 %v991
        %v2311 = vunpack.c.l.b16 %v992
        %v2312 = vunpack.c.h.b16 %v992
        %v2313 = vunpack.c.l.b16 %v993
        %v2314 = vunpack.c.h.b16 %v993
        %v2315 = vunpack.c.l.b16 %v994
        %v2316 = vunpack.c.h.b16 %v994
        %v2317 = vunpack.c.l.b16 %v995
        %v2318 = vunpack.c.h.b16 %v995
        %v2319 = vunpack.c.l.b16 %v996
        %v2320 = vunpack.c.h.b16 %v996
        %v2321 = vunpack.c.l.b16 %v997
        %v2322 = vunpack.c.h.b16 %v997
        %v2323 = vunpack.c.l.b16 %v998
        %v2324 = vunpack.c.h.b16 %v998
        %v2325 = vunpack.c.l.b16 %v999
        %v2326 = vunpack.c.h.b16 %v999
        %v2327 = vunpack.c.l.b16 %v1000
        %v2328 = vunpack.c.h.b16 %v1000
        %v2329 = vunpack.c.l.b16 %v1001
        %v2330 = vunpack.c.h.b16 %v1001
        %v2331 = vunpack.c.l.b16 %v1002
        %v2332 = vunpack.c.h.b16 %v1002
        %v2333 = vunpack.c.l.b16 %v1003
        %v2334 = vunpack.c.h.b16 %v1003
        %v2335 = vunpack.c.l.b16 %v1004
        %v2336 = vunpack.c.h.b16 %v1004
        %v2337 = vunpack.c.l.b16 %v1005
        %v2338 = vunpack.c.h.b16 %v1005
        %v2339 = vunpack.c.l.b16 %v1006
        %v2340 = vunpack.c.h.b16 %v1006
        %v2341 = vunpack.c.l.b16 %v1007
        %v2342 = vunpack.c.h.b16 %v1007
        %v2343 = vunpack.c.l.b16 %v1008
        %v2344 = vunpack.c.h.b16 %v1008
        %v2345 = vunpack.c.l.b16 %v1009
        %v2346 = vunpack.c.h.b16 %v1009
        %v2347 = vunpack.c.l.b16 %v1010
        %v2348 = vunpack.c.h.b16 %v1010
        %v2349 = vunpack.c.l.b16 %v1011
        %v2350 = vunpack.c.h.b16 %v1011
        %v2351 = vunpack.c.l.b16 %v1012
        %v2352 = vunpack.c.h.b16 %v1012
        %v2353 = vunpack.c.l.b16 %v1013
        %v2354 = vunpack.c.h.b16 %v1013
        %v2355 = vunpack.c.l.b16 %v1014
        %v2356 = vunpack.c.h.b16 %v1014
        %v2357 = vunpack.c.l.b16 %v1015
        %v2358 = vunpack.c.h.b16 %v1015
        %v2359 = vunpack.c.l.b16 %v1016
        %v2360 = vunpack.c.h.b16 %v1016
        %v2361 = vunpack.c.l.b16 %v1017
        %v2362 = vunpack.c.h.b16 %v1017
        %v2363 = vunpack.c.l.b16 %v1018
        %v2364 = vunpack.c.h.b16 %v1018
        %v2365 = vunpack.c.l.b16 %v1019
        %v2366 = vunpack.c.h.b16 %v1019
        %v2367 = vunpack.c.l.b16 %v1020
        %v2368 = vunpack.c.h.b16 %v1020
        %v2369 = vunpack.c.l.b16 %v1021
        %v2370 = vunpack.c.h.b16 %v1021
        %v2371 = vunpack.c.l.b16 %v1022
        %v2372 = vunpack.c.h.b16 %v1022
        %v2373 = vunpack.c.l.b16 %v1023
        %v2374 = vunpack.c.h.b16 %v1023
        %v2375 = vunpack.c.l.b16 %v1024
        %v2376 = vunpack.c.h.b16 %v1024
        %v2377 = vunpack.c.l.b16 %v1025
        %v2378 = vunpack.c.h.b16 %v1025
        %v2379 = vunpack.c.l.b16 %v1026
        %v2380 = vunpack.c.h.b16 %v1026
        %v2381 = vunpack.c.l.b16 %v1027
        %v2382 = vunpack.c.h.b16 %v1027
        %v2383 = vunpack.c.l.b16 %v1028
        %v2384 = vunpack.c.h.b16 %v1028
        %v2385 = vunpack.c.l.b16 %v1029
        %v2386 = vunpack.c.h.b16 %v1029
        %v2387 = vunpack.c.l.b16 %v1030
        %v2388 = vunpack.c.h.b16 %v1030
        %v2389 = vunpack.c.l.b16 %v1031
        %v2390 = vunpack.c.h.b16 %v1031
        %v2391 = vunpack.c.l.b16 %v1032
        %v2392 = vunpack.c.h.b16 %v1032
        %v2393 = vunpack.c.l.b16 %v1033
        %v2394 = vunpack.c.h.b16 %v1033
        %v2395 = vunpack.c.l.b16 %v1034
        %v2396 = vunpack.c.h.b16 %v1034
        %v2397 = vunpack.c.l.b16 %v1035
        %v2398 = vunpack.c.h.b16 %v1035
        %v2399 = vunpack.c.l.b16 %v1036
        %v2400 = vunpack.c.h.b16 %v1036
        %v2401 = vunpack.c.l.b16 %v1037
        %v2402 = vunpack.c.h.b16 %v1037
        %v2403 = vunpack.c.l.b16 %v1038
        %v2404 = vunpack.c.h.b16 %v1038
        %v2405 = vunpack.c.l.b16 %v1039
        %v2406 = vunpack.c.h.b16 %v1039
        %v2407 = vunpack.c.l.b16 %v1040
        %v2408 = vunpack.c.h.b16 %v1040
        %v2409 = vunpack.c.l.b16 %v1041
        %v2410 = vunpack.c.h.b16 %v1041
        %v2411 = vunpack.c.l.b16 %v1042
        %v2412 = vunpack.c.h.b16 %v1042
        %v2413 = vunpack.c.l.b16 %v1043
        %v2414 = vunpack.c.h.b16 %v1043
        %v2415 = vunpack.c.l.b16 %v1044
        %v2416 = vunpack.c.h.b16 %v1044
        %v2417 = vunpack.c.l.b16 %v1045
        %v2418 = vunpack.c.h.b16 %v1045
        %v2419 = vunpack.c.l.b16 %v1046
        %v2420 = vunpack.c.h.b16 %v1046
        %v2421 = vunpack.c.l.b16 %v1047
        %v2422 = vunpack.c.h.b16 %v1047
        %v2423 = vunpack.c.l.b16 %v1048
        %v2424 = vunpack.c.h.b16 %v1048
        %v2425 = vunpack.c.l.b16 %v1049
        %v2426 = vunpack.c.h.b16 %v1049
        %v2427 = vunpack.c.l.b16 %v1050
        %v2428 = vunpack.c.h.b16 %v1050
        %v2429 = vunpack.c.l.b16 %v1051
        %v2430 = vunpack.c.h.b16 %v1051
        %v2431 = vunpack.c.l.b16 %v1052
        %v2432 = vunpack.c.h.b16 %v1052
        %v2433 = vunpack.c.l.b16 %v1053
        %v2434 = vunpack.c.h.b16 %v1053
        %v2435 = vunpack.c.l.b16 %v1054
        %v2436 = vunpack.c.h.b16 %v1054
        %v2437 = vunpack.c.l.b16 %v1055
        %v2438 = vunpack.c.h.b16 %v1055
        %v2439 = vunpack.c.l.b16 %v1056
        %v2440 = vunpack.c.h.b16 %v1056
        %v2441 = vunpack.c.l.b16 %v1057
        %v2442 = vunpack.c.h.b16 %v1057
        %v2443 = vunpack.c.l.b16 %v1058
        %v2444 = vunpack.c.h.b16 %v1058
        %v2445 = vunpack.c.l.b16 %v1059
        %v2446 = vunpack.c.h.b16 %v1059
        %v2447 = vunpack.c.l.b16 %v1060
        %v2448 = vunpack.c.h.b16 %v1060
        %v2449 = vunpack.c.l.b16 %v1061
        %v2450 = vunpack.c.h.b16 %v1061
        %v2451 = vunpack.c.l.b16 %v1062
        %v2452 = vunpack.c.h.b16 %v1062
        %v2453 = vunpack.c.l.b16 %v1063
        %v2454 = vunpack.c.h.b16 %v1063
        %v2455 = vunpack.c.l.b16 %v1064
        %v2456 = vunpack.c.h.b16 %v1064
        %v2457 = vunpack.c.l.b16 %v1065
        %v2458 = vunpack.c.h.b16 %v1065
        %v2459 = vunpack.c.l.b16 %v1066
        %v2460 = vunpack.c.h.b16 %v1066
        %v2461 = vunpack.c.l.b16 %v1067
        %v2462 = vunpack.c.h.b16 %v1067
        %v2463 = vunpack.c.l.b16 %v1068
        %v2464 = vunpack.c.h.b16 %v1068
        %v2465 = vunpack.c.l.b16 %v1069
        %v2466 = vunpack.c.h.b16 %v1069
        %v2467 = vunpack.c.l.b16 %v1070
        %v2468 = vunpack.c.h.b16 %v1070
        %v2469 = vunpack.c.l.b16 %v1071
        %v2470 = vunpack.c.h.b16 %v1071
        %v2471 = vunpack.c.l.b16 %v1072
        %v2472 = vunpack.c.h.b16 %v1072
        %v2473 = vunpack.c.l.b16 %v1073
        %v2474 = vunpack.c.h.b16 %v1073
        %v2475 = vunpack.c.l.b16 %v1074
        %v2476 = vunpack.c.h.b16 %v1074
        %v2477 = vunpack.c.l.b16 %v1075
        %v2478 = vunpack.c.h.b16 %v1075
        %v2479 = vunpack.c.l.b16 %v1076
        %v2480 = vunpack.c.h.b16 %v1076
        %v2481 = vunpack.c.l.b16 %v1077
        %v2482 = vunpack.c.h.b16 %v1077
        %v2483 = vunpack.c.l.b16 %v1078
        %v2484 = vunpack.c.h.b16 %v1078
        %v2485 = vunpack.c.l.b16 %v1079
        %v2486 = vunpack.c.h.b16 %v1079
        %v2487 = vunpack.c.l.b16 %v1080
        %v2488 = vunpack.c.h.b16 %v1080
        %v2489 = vunpack.c.l.b16 %v1081
        %v2490 = vunpack.c.h.b16 %v1081
        %v2491 = vunpack.c.l.b16 %v1082
        %v2492 = vunpack.c.h.b16 %v1082
        %v2493 = vunpack.c.l.b16 %v1083
        %v2494 = vunpack.c.h.b16 %v1083
        %v2495 = vunpack.c.l.b16 %v1084
        %v2496 = vunpack.c.h.b16 %v1084
        %v2497 = vunpack.c.l.b16 %v1085
        %v2498 = vunpack.c.h.b16 %v1085
        %v2499 = vunpack.c.l.b16 %v1086
        %v2500 = vunpack.c.h.b16 %v1086
        %v2501 = vunpack.c.l.b16 %v1087
        %v2502 = vunpack.c.h.b16 %v1087
        %v2503 = vunpack.c.l.b16 %v1088
        %v2504 = vunpack.c.h.b16 %v1088
        %v2505 = vunpack.c.l.b16 %v1089
        %v2506 = vunpack.c.h.b16 %v1089
        %v2507 = vunpack.c.l.b16 %v1090
        %v2508 = vunpack.c.h.b16 %v1090
        %v2509 = vunpack.c.l.b16 %v1091
        %v2510 = vunpack.c.h.b16 %v1091
        %v2511 = vunpack.c.l.b16 %v1092
        %v2512 = vunpack.c.h.b16 %v1092
        %v2513 = vunpack.c.l.b16 %v1093
        %v2514 = vunpack.c.h.b16 %v1093
        %v2515 = vunpack.c.l.b16 %v1094
        %v2516 = vunpack.c.h.b16 %v1094
        %v2517 = vunpack.c.l.b16 %v1095
        %v2518 = vunpack.c.h.b16 %v1095
        %v2519 = vunpack.c.l.b16 %v1096
        %v2520 = vunpack.c.h.b16 %v1096
        %v2521 = vunpack.c.l.b16 %v1097
        %v2522 = vunpack.c.h.b16 %v1097
        %v2523 = vunpack.c.l.b16 %v1098
        %v2524 = vunpack.c.h.b16 %v1098
        %v2525 = vunpack.c.l.b16 %v1099
        %v2526 = vunpack.c.h.b16 %v1099
        %v2527 = vunpack.c.l.b16 %v1100
        %v2528 = vunpack.c.h.b16 %v1100
        %v2529 = vunpack.c.l.b16 %v1101
        %v2530 = vunpack.c.h.b16 %v1101
        %v2531 = vunpack.c.l.b16 %v1102
        %v2532 = vunpack.c.h.b16 %v1102
        %v2533 = vunpack.c.l.b16 %v1103
        %v2534 = vunpack.c.h.b16 %v1103
        %v2535 = vunpack.c.l.b16 %v1104
        %v2536 = vunpack.c.h.b16 %v1104
        %v2537 = vunpack.c.l.b16 %v1105
        %v2538 = vunpack.c.h.b16 %v1105
        %v2539 = vunpack.c.l.b16 %v1106
        %v2540 = vunpack.c.h.b16 %v1106
        %v2541 = vunpack.c.l.b16 %v1107
        %v2542 = vunpack.c.h.b16 %v1107
        %v2543 = vunpack.c.l.b16 %v1108
        %v2544 = vunpack.c.h.b16 %v1108
        %v2545 = vunpack.c.l.b16 %v1109
        %v2546 = vunpack.c.h.b16 %v1109
        %v2547 = vunpack.c.l.b16 %v1110
        %v2548 = vunpack.c.h.b16 %v1110
        %v2549 = vunpack.c.l.b16 %v1111
        %v2550 = vunpack.c.h.b16 %v1111
        %v2551 = vunpack.c.l.b16 %v1112
        %v2552 = vunpack.c.h.b16 %v1112
        %v2553 = vunpack.c.l.b16 %v1113
        %v2554 = vunpack.c.h.b16 %v1113
        %v2555 = vunpack.c.l.b16 %v1114
        %v2556 = vunpack.c.h.b16 %v1114
        %v2557 = vunpack.c.l.b16 %v1115
        %v2558 = vunpack.c.h.b16 %v1115
        %v2559 = vunpack.c.l.b16 %v1116
        %v2560 = vunpack.c.h.b16 %v1116
        %v2561 = vunpack.c.l.b16 %v1117
        %v2562 = vunpack.c.h.b16 %v1117
        %v2563 = vunpack.c.l.b16 %v1118
        %v2564 = vunpack.c.h.b16 %v1118
        %v2565 = vunpack.c.l.b16 %v1119
        %v2566 = vunpack.c.h.b16 %v1119
        %v2567 = vunpack.c.l.b16 %v1120
        %v2568 = vunpack.c.h.b16 %v1120
        %v2569 = vunpack.c.l.b16 %v1121
        %v2570 = vunpack.c.h.b16 %v1121
        %v2571 = vunpack.c.l.b16 %v1122
        %v2572 = vunpack.c.h.b16 %v1122
        %v2573 = vunpack.c.l.b16 %v1123
        %v2574 = vunpack.c.h.b16 %v1123
        %v2575 = vunpack.c.l.b16 %v1124
        %v2576 = vunpack.c.h.b16 %v1124
        %v2577 = vunpack.c.l.b16 %v1125
        %v2578 = vunpack.c.h.b16 %v1125
        %v2579 = vunpack.c.l.b16 %v1126
        %v2580 = vunpack.c.h.b16 %v1126
        %v2581 = vunpack.c.l.b16 %v1127
        %v2582 = vunpack.c.h.b16 %v1127
        %v2583 = vunpack.c.l.b16 %v1128
        %v2584 = vunpack.c.h.b16 %v1128
        %v2585 = vunpack.c.l.b16 %v1129
        %v2586 = vunpack.c.h.b16 %v1129
        %v2587 = vunpack.c.l.b16 %v1130
        %v2588 = vunpack.c.h.b16 %v1130
        %v2589 = vunpack.c.l.b16 %v1131
        %v2590 = vunpack.c.h.b16 %v1131
        %v2591 = vunpack.c.l.b16 %v1132
        %v2592 = vunpack.c.h.b16 %v1132
        %v2593 = vunpack.c.l.b16 %v1133
        %v2594 = vunpack.c.h.b16 %v1133
        %v2595 = vunpack.c.l.b16 %v1134
        %v2596 = vunpack.c.h.b16 %v1134
        %v2597 = vunpack.c.l.b16 %v1135
        %v2598 = vunpack.c.h.b16 %v1135
        %v2599 = vunpack.c.l.b16 %v1136
        %v2600 = vunpack.c.h.b16 %v1136
        %v2601 = vunpack.c.l.b16 %v1137
        %v2602 = vunpack.c.h.b16 %v1137
        %v2603 = vunpack.c.l.b16 %v1138
        %v2604 = vunpack.c.h.b16 %v1138
        %v2605 = vunpack.c.l.b16 %v1139
        %v2606 = vunpack.c.h.b16 %v1139
        %v2607 = vunpack.c.l.b16 %v1140
        %v2608 = vunpack.c.h.b16 %v1140
        %v2609 = vunpack.c.l.b16 %v1141
        %v2610 = vunpack.c.h.b16 %v1141
        %v2611 = vunpack.c.l.b16 %v1142
        %v2612 = vunpack.c.h.b16 %v1142
        %v2613 = vunpack.c.l.b16 %v1143
        %v2614 = vunpack.c.h.b16 %v1143
        %v2615 = vunpack.c.l.b16 %v1144
        %v2616 = vunpack.c.h.b16 %v1144
        %v2617 = vunpack.c.l.b16 %v1145
        %v2618 = vunpack.c.h.b16 %v1145
        %v2619 = vunpack.c.l.b16 %v1146
        %v2620 = vunpack.c.h.b16 %v1146
        %v2621 = vunpack.c.l.b16 %v1147
        %v2622 = vunpack.c.h.b16 %v1147
        %v2623 = vunpack.c.l.b16 %v1148
        %v2624 = vunpack.c.h.b16 %v1148
        %v2625 = vunpack.c.l.b16 %v1149
        %v2626 = vunpack.c.h.b16 %v1149
        %v2627 = vunpack.c.l.b16 %v1150
        %v2628 = vunpack.c.h.b16 %v1150
        %v2629 = vunpack.c.l.b16 %v1151
        %v2630 = vunpack.c.h.b16 %v1151
        %v2631 = vunpack.c.l.b16 %v1152
        %v2632 = vunpack.c.h.b16 %v1152
        %v2633 = vunpack.c.l.b16 %v1153
        %v2634 = vunpack.c.h.b16 %v1153
        %v2635 = vunpack.c.l.b16 %v1154
        %v2636 = vunpack.c.h.b16 %v1154
        %v2637 = vunpack.c.l.b16 %v1155
        %v2638 = vunpack.c.h.b16 %v1155
        %v2639 = vunpack.c.l.b16 %v1156
        %v2640 = vunpack.c.h.b16 %v1156
        %v2641 = vunpack.c.l.b16 %v1157
        %v2642 = vunpack.c.h.b16 %v1157
        %v2643 = vunpack.c.l.b16 %v1158
        %v2644 = vunpack.c.h.b16 %v1158
        %v2645 = vunpack.c.l.b16 %v1159
        %v2646 = vunpack.c.h.b16 %v1159
        %v2647 = vunpack.c.l.b16 %v1160
        %v2648 = vunpack.c.h.b16 %v1160
        %v2649 = vunpack.c.l.b16 %v1161
        %v2650 = vunpack.c.h.b16 %v1161
        %v2651 = vunpack.c.l.b16 %v1162
        %v2652 = vunpack.c.h.b16 %v1162
        %v2653 = vunpack.c.l.b16 %v1163
        %v2654 = vunpack.c.h.b16 %v1163
        %v2655 = vunpack.c.l.b16 %v1164
        %v2656 = vunpack.c.h.b16 %v1164
        %v2657 = vunpack.c.l.b16 %v1165
        %v2658 = vunpack.c.h.b16 %v1165
        %v2659 = vunpack.c.l.b16 %v1166
        %v2660 = vunpack.c.h.b16 %v1166
        %v2661 = vunpack.c.l.b16 %v1167
        %v2662 = vunpack.c.h.b16 %v1167
        %v2663 = vunpack.c.l.b16 %v1168
        %v2664 = vunpack.c.h.b16 %v1168
        %v2665 = vunpack.c.l.b16 %v1169
        %v2666 = vunpack.c.h.b16 %v1169
        %v2667 = vunpack.c.l.b16 %v1170
        %v2668 = vunpack.c.h.b16 %v1170
        %v2669 = vunpack.c.l.b16 %v1171
        %v2670 = vunpack.c.h.b16 %v1171
        %v2671 = vunpack.c.l.b16 %v1172
        %v2672 = vunpack.c.h.b16 %v1172
        %v2673 = vunpack.c.l.b16 %v1173
        %v2674 = vunpack.c.h.b16 %v1173
        %v2675 = vunpack.c.l.b16 %v1174
        %v2676 = vunpack.c.h.b16 %v1174
        %v2677 = vunpack.c.l.b16 %v1175
        %v2678 = vunpack.c.h.b16 %v1175
        %v2679 = vunpack.c.l.b16 %v1176
        %v2680 = vunpack.c.h.b16 %v1176
        %v2681 = vunpack.c.l.b16 %v1177
        %v2682 = vunpack.c.h.b16 %v1177
        %v2683 = vunpack.c.l.b16 %v1178
        %v2684 = vunpack.c.h.b16 %v1178
        %v2685 = vunpack.c.l.b16 %v1179
        %v2686 = vunpack.c.h.b16 %v1179
        %v2687 = vunpack.c.l.b16 %v1180
        %v2688 = vunpack.c.h.b16 %v1180
        %v2689 = vunpack.c.l.b16 %v1181
        %v2690 = vunpack.c.h.b16 %v1181
        %v2691 = vunpack.c.l.b16 %v1182
        %v2692 = vunpack.c.h.b16 %v1182
        %v2693 = vunpack.c.l.b16 %v1183
        %v2694 = vunpack.c.h.b16 %v1183
        %v2695 = vunpack.c.l.b16 %v1184
        %v2696 = vunpack.c.h.b16 %v1184
        %v2697 = vunpack.c.l.b16 %v1185
        %v2698 = vunpack.c.h.b16 %v1185
        %v2699 = vunpack.c.l.b16 %v1186
        %v2700 = vunpack.c.h.b16 %v1186
        %v2701 = vunpack.c.l.b16 %v1187
        %v2702 = vunpack.c.h.b16 %v1187
        %v2703 = vunpack.c.l.b16 %v1188
        %v2704 = vunpack.c.h.b16 %v1188
        %v2705 = vunpack.c.l.b16 %v1189
        %v2706 = vunpack.c.h.b16 %v1189
        %v2707 = vunpack.c.l.b16 %v1190
        %v2708 = vunpack.c.h.b16 %v1190
        %v2709 = vunpack.c.l.b16 %v1191
        %v2710 = vunpack.c.h.b16 %v1191
        %v2711 = vunpack.c.l.b16 %v1192
        %v2712 = vunpack.c.h.b16 %v1192
        %v2713 = vunpack.c.l.b16 %v1193
        %v2714 = vunpack.c.h.b16 %v1193
        %v2715 = vunpack.c.l.b16 %v1194
        %v2716 = vunpack.c.h.b16 %v1194
        %v2717 = vunpack.c.l.b16 %v1195
        %v2718 = vunpack.c.h.b16 %v1195
        %v2719 = vunpack.c.l.b16 %v1196
        %v2720 = vunpack.c.h.b16 %v1196
        %v2721 = vunpack.c.l.b16 %v1197
        %v2722 = vunpack.c.h.b16 %v1197
        %v2723 = vunpack.c.l.b16 %v1198
        %v2724 = vunpack.c.h.b16 %v1198
        %v2725 = vunpack.c.l.b16 %v1199
        %v2726 = vunpack.c.h.b16 %v1199
        %v2727 = vunpack.c.l.b16 %v1200
        %v2728 = vunpack.c.h.b16 %v1200
        %v2729 = vunpack.c.l.b16 %v1201
        %v2730 = vunpack.c.h.b16 %v1201
        %v2731 = vunpack.c.l.b16 %v1202
        %v2732 = vunpack.c.h.b16 %v1202
        %v2733 = vunpack.c.l.b16 %v1203
        %v2734 = vunpack.c.h.b16 %v1203
        %v2735 = vunpack.c.l.b16 %v1204
        %v2736 = vunpack.c.h.b16 %v1204
        %v2737 = vunpack.c.l.b16 %v1205
        %v2738 = vunpack.c.h.b16 %v1205
        %v2739 = vunpack.c.l.b16 %v1206
        %v2740 = vunpack.c.h.b16 %v1206
        %v2741 = vunpack.c.l.b16 %v1207
        %v2742 = vunpack.c.h.b16 %v1207
        %v2743 = vunpack.c.l.b16 %v1208
        %v2744 = vunpack.c.h.b16 %v1208
        %v2745 = vpack.c.b16 %v1737, %v1721
        %v2746 = vpack.c.b16 %v1738, %v1722
        %v2747 = vpack.c.b16 %v1739, %v1723
        %v2748 = vpack.c.b16 %v1740, %v1724
        %v2749 = vpack.c.b16 %v1741, %v1725
        %v2750 = vpack.c.b16 %v1742, %v1726
        %v2751 = vpack.c.b16 %v1743, %v1727
        %v2752 = vpack.c.b16 %v1744, %v1728
        %v2753 = vpack.c.b16 %v1745, %v1729
        %v2754 = vpack.c.b16 %v1746, %v1730
        %v2755 = vpack.c.b16 %v1747, %v1731
        %v2756 = vpack.c.b16 %v1748, %v1732
        %v2757 = vpack.c.b16 %v1749, %v1733
        %v2758 = vpack.c.b16 %v1750, %v1734
        %v2759 = vpack.c.b16 %v1751, %v1735
        %v2760 = vpack.c.b16 %v1752, %v1736
        %v2761 = vpack.c.b16 %v1769, %v1753
        %v2762 = vpack.c.b16 %v1770, %v1754
        %v2763 = vpack.c.b16 %v1771, %v1755
        %v2764 = vpack.c.b16 %v1772, %v1756
        %v2765 = vpack.c.b16 %v1773, %v1757
        %v2766 = vpack.c.b16 %v1774, %v1758
        %v2767 = vpack.c.b16 %v1775, %v1759
        %v2768 = vpack.c.b16 %v1776, %v1760
        %v2769 = vpack.c.b16 %v1777, %v1761
        %v2770 = vpack.c.b16 %v1778, %v1762
        %v2771 = vpack.c.b16 %v1779, %v1763
        %v2772 = vpack.c.b16 %v1780, %v1764
        %v2773 = vpack.c.b16 %v1781, %v1765
        %v2774 = vpack.c.b16 %v1782, %v1766
        %v2775 = vpack.c.b16 %v1783, %v1767
        %v2776 = vpack.c.b16 %v1784, %v1768
        %v2777 = vpack.c.b16 %v1801, %v1785
        %v2778 = vpack.c.b16 %v1802, %v1786
        %v2779 = vpack.c.b16 %v1803, %v1787
        %v2780 = vpack.c.b16 %v1804, %v1788
        %v2781 = vpack.c.b16 %v1805, %v1789
        %v2782 = vpack.c.b16 %v1806, %v1790
        %v2783 = vpack.c.b16 %v1807, %v1791
        %v2784 = vpack.c.b16 %v1808, %v1792
        %v2785 = vpack.c.b16 %v1809, %v1793
        %v2786 = vpack.c.b16 %v1810, %v1794
        %v2787 = vpack.c.b16 %v1811, %v1795
        %v2788 = vpack.c.b16 %v1812, %v1796
        %v2789 = vpack.c.b16 %v1813, %v1797
        %v2790 = vpack.c.b16 %v1814, %v1798
        %v2791 = vpack.c.b16 %v1815, %v1799
        %v2792 = vpack.c.b16 %v1816, %v1800
        %v2793 = vpack.c.b16 %v1833, %v1817
        %v2794 = vpack.c.b16 %v1834, %v1818
        %v2795 = vpack.c.b16 %v1835, %v1819
        %v2796 = vpack.c.b16 %v1836, %v1820
        %v2797 = vpack.c.b16 %v1837, %v1821
        %v2798 = vpack.c.b16 %v1838, %v1822
        %v2799 = vpack.c.b16 %v1839, %v1823
        %v2800 = vpack.c.b16 %v1840, %v1824
        %v2801 = vpack.c.b16 %v1841, %v1825
        %v2802 = vpack.c.b16 %v1842, %v1826
        %v2803 = vpack.c.b16 %v1843, %v1827
        %v2804 = vpack.c.b16 %v1844, %v1828
        %v2805 = vpack.c.b16 %v1845, %v1829
        %v2806 = vpack.c.b16 %v1846, %v1830
        %v2807 = vpack.c.b16 %v1847, %v1831
        %v2808 = vpack.c.b16 %v1848, %v1832
        %v2809 = vpack.c.b16 %v1865, %v1849
        %v2810 = vpack.c.b16 %v1866, %v1850
        %v2811 = vpack.c.b16 %v1867, %v1851
        %v2812 = vpack.c.b16 %v1868, %v1852
        %v2813 = vpack.c.b16 %v1869, %v1853
        %v2814 = vpack.c.b16 %v1870, %v1854
        %v2815 = vpack.c.b16 %v1871, %v1855
        %v2816 = vpack.c.b16 %v1872, %v1856
        %v2817 = vpack.c.b16 %v1873, %v1857
        %v2818 = vpack.c.b16 %v1874, %v1858
        %v2819 = vpack.c.b16 %v1875, %v1859
        %v2820 = vpack.c.b16 %v1876, %v1860
        %v2821 = vpack.c.b16 %v1877, %v1861
        %v2822 = vpack.c.b16 %v1878, %v1862
        %v2823 = vpack.c.b16 %v1879, %v1863
        %v2824 = vpack.c.b16 %v1880, %v1864
        %v2825 = vpack.c.b16 %v1897, %v1881
        %v2826 = vpack.c.b16 %v1898, %v1882
        %v2827 = vpack.c.b16 %v1899, %v1883
        %v2828 = vpack.c.b16 %v1900, %v1884
        %v2829 = vpack.c.b16 %v1901, %v1885
        %v2830 = vpack.c.b16 %v1902, %v1886
        %v2831 = vpack.c.b16 %v1903, %v1887
        %v2832 = vpack.c.b16 %v1904, %v1888
        %v2833 = vpack.c.b16 %v1905, %v1889
        %v2834 = vpack.c.b16 %v1906, %v1890
        %v2835 = vpack.c.b16 %v1907, %v1891
        %v2836 = vpack.c.b16 %v1908, %v1892
        %v2837 = vpack.c.b16 %v1909, %v1893
        %v2838 = vpack.c.b16 %v1910, %v1894
        %v2839 = vpack.c.b16 %v1911, %v1895
        %v2840 = vpack.c.b16 %v1912, %v1896
        %v2841 = vpack.c.b16 %v1929, %v1913
        %v2842 = vpack.c.b16 %v1930, %v1914
        %v2843 = vpack.c.b16 %v1931, %v1915
        %v2844 = vpack.c.b16 %v1932, %v1916
        %v2845 = vpack.c.b16 %v1933, %v1917
        %v2846 = vpack.c.b16 %v1934, %v1918
        %v2847 = vpack.c.b16 %v1935, %v1919
        %v2848 = vpack.c.b16 %v1936, %v1920
        %v2849 = vpack.c.b16 %v1937, %v1921
        %v2850 = vpack.c.b16 %v1938, %v1922
        %v2851 = vpack.c.b16 %v1939, %v1923
        %v2852 = vpack.c.b16 %v1940, %v1924
        %v2853 = vpack.c.b16 %v1941, %v1925
        %v2854 = vpack.c.b16 %v1942, %v1926
        %v2855 = vpack.c.b16 %v1943, %v1927
        %v2856 = vpack.c.b16 %v1944, %v1928
        %v2857 = vpack.c.b16 %v1961, %v1945
        %v2858 = vpack.c.b16 %v1962, %v1946
        %v2859 = vpack.c.b16 %v1963, %v1947
        %v2860 = vpack.c.b16 %v1964, %v1948
        %v2861 = vpack.c.b16 %v1965, %v1949
        %v2862 = vpack.c.b16 %v1966, %v1950
        %v2863 = vpack.c.b16 %v1967, %v1951
        %v2864 = vpack.c.b16 %v1968, %v1952
        %v2865 = vpack.c.b16 %v1969, %v1953
        %v2866 = vpack.c.b16 %v1970, %v1954
        %v2867 = vpack.c.b16 %v1971, %v1955
        %v2868 = vpack.c.b16 %v1972, %v1956
        %v2869 = vpack.c.b16 %v1973, %v1957
        %v2870 = vpack.c.b16 %v1974, %v1958
        %v2871 = vpack.c.b16 %v1975, %v1959
        %v2872 = vpack.c.b16 %v1976, %v1960
        %v2873 = vpack.c.b16 %v1993, %v1977
        %v2874 = vpack.c.b16 %v1994, %v1978
        %v2875 = vpack.c.b16 %v1995, %v1979
        %v2876 = vpack.c.b16 %v1996, %v1980
        %v2877 = vpack.c.b16 %v1997, %v1981
        %v2878 = vpack.c.b16 %v1998, %v1982
        %v2879 = vpack.c.b16 %v1999, %v1983
        %v2880 = vpack.c.b16 %v2000, %v1984
        %v2881 = vpack.c.b16 %v2001, %v1985
        %v2882 = vpack.c.b16 %v2002, %v1986
        %v2883 = vpack.c.b16 %v2003, %v1987
        %v2884 = vpack.c.b16 %v2004, %v1988
        %v2885 = vpack.c.b16 %v2005, %v1989
        %v2886 = vpack.c.b16 %v2006, %v1990
        %v2887 = vpack.c.b16 %v2007, %v1991
        %v2888 = vpack.c.b16 %v2008, %v1992
        %v2889 = vpack.c.b16 %v2025, %v2009
        %v2890 = vpack.c.b16 %v2026, %v2010
        %v2891 = vpack.c.b16 %v2027, %v2011
        %v2892 = vpack.c.b16 %v2028, %v2012
        %v2893 = vpack.c.b16 %v2029, %v2013
        %v2894 = vpack.c.b16 %v2030, %v2014
        %v2895 = vpack.c.b16 %v2031, %v2015
        %v2896 = vpack.c.b16 %v2032, %v2016
        %v2897 = vpack.c.b16 %v2033, %v2017
        %v2898 = vpack.c.b16 %v2034, %v2018
        %v2899 = vpack.c.b16 %v2035, %v2019
        %v2900 = vpack.c.b16 %v2036, %v2020
        %v2901 = vpack.c.b16 %v2037, %v2021
        %v2902 = vpack.c.b16 %v2038, %v2022
        %v2903 = vpack.c.b16 %v2039, %v2023
        %v2904 = vpack.c.b16 %v2040, %v2024
        %v2905 = vpack.c.b16 %v2057, %v2041
        %v2906 = vpack.c.b16 %v2058, %v2042
        %v2907 = vpack.c.b16 %v2059, %v2043
        %v2908 = vpack.c.b16 %v2060, %v2044
        %v2909 = vpack.c.b16 %v2061, %v2045
        %v2910 = vpack.c.b16 %v2062, %v2046
        %v2911 = vpack.c.b16 %v2063, %v2047
        %v2912 = vpack.c.b16 %v2064, %v2048
        %v2913 = vpack.c.b16 %v2065, %v2049
        %v2914 = vpack.c.b16 %v2066, %v2050
        %v2915 = vpack.c.b16 %v2067, %v2051
        %v2916 = vpack.c.b16 %v2068, %v2052
        %v2917 = vpack.c.b16 %v2069, %v2053
        %v2918 = vpack.c.b16 %v2070, %v2054
        %v2919 = vpack.c.b16 %v2071, %v2055
        %v2920 = vpack.c.b16 %v2072, %v2056
        %v2921 = vpack.c.b16 %v2089, %v2073
        %v2922 = vpack.c.b16 %v2090, %v2074
        %v2923 = vpack.c.b16 %v2091, %v2075
        %v2924 = vpack.c.b16 %v2092, %v2076
        %v2925 = vpack.c.b16 %v2093, %v2077
        %v2926 = vpack.c.b16 %v2094, %v2078
        %v2927 = vpack.c.b16 %v2095, %v2079
        %v2928 = vpack.c.b16 %v2096, %v2080
        %v2929 = vpack.c.b16 %v2097, %v2081
        %v2930 = vpack.c.b16 %v2098, %v2082
        %v2931 = vpack.c.b16 %v2099, %v2083
        %v2932 = vpack.c.b16 %v2100, %v2084
        %v2933 = vpack.c.b16 %v2101, %v2085
        %v2934 = vpack.c.b16 %v2102, %v2086
        %v2935 = vpack.c.b16 %v2103, %v2087
        %v2936 = vpack.c.b16 %v2104, %v2088
        %v2937 = vpack.c.b16 %v2121, %v2105
        %v2938 = vpack.c.b16 %v2122, %v2106
        %v2939 = vpack.c.b16 %v2123, %v2107
        %v2940 = vpack.c.b16 %v2124, %v2108
        %v2941 = vpack.c.b16 %v2125, %v2109
        %v2942 = vpack.c.b16 %v2126, %v2110
        %v2943 = vpack.c.b16 %v2127, %v2111
        %v2944 = vpack.c.b16 %v2128, %v2112
        %v2945 = vpack.c.b16 %v2129, %v2113
        %v2946 = vpack.c.b16 %v2130, %v2114
        %v2947 = vpack.c.b16 %v2131, %v2115
        %v2948 = vpack.c.b16 %v2132, %v2116
        %v2949 = vpack.c.b16 %v2133, %v2117
        %v2950 = vpack.c.b16 %v2134, %v2118
        %v2951 = vpack.c.b16 %v2135, %v2119
        %v2952 = vpack.c.b16 %v2136, %v2120
        %v2953 = vpack.c.b16 %v2153, %v2137
        %v2954 = vpack.c.b16 %v2154, %v2138
        %v2955 = vpack.c.b16 %v2155, %v2139
        %v2956 = vpack.c.b16 %v2156, %v2140
        %v2957 = vpack.c.b16 %v2157, %v2141
        %v2958 = vpack.c.b16 %v2158, %v2142
        %v2959 = vpack.c.b16 %v2159, %v2143
        %v2960 = vpack.c.b16 %v2160, %v2144
        %v2961 = vpack.c.b16 %v2161, %v2145
        %v2962 = vpack.c.b16 %v2162, %v2146
        %v2963 = vpack.c.b16 %v2163, %v2147
        %v2964 = vpack.c.b16 %v2164, %v2148
        %v2965 = vpack.c.b16 %v2165, %v2149
        %v2966 = vpack.c.b16 %v2166, %v2150
        %v2967 = vpack.c.b16 %v2167, %v2151
        %v2968 = vpack.c.b16 %v2168, %v2152
        %v2969 = vpack.c.b16 %v2185, %v2169
        %v2970 = vpack.c.b16 %v2186, %v2170
        %v2971 = vpack.c.b16 %v2187, %v2171
        %v2972 = vpack.c.b16 %v2188, %v2172
        %v2973 = vpack.c.b16 %v2189, %v2173
        %v2974 = vpack.c.b16 %v2190, %v2174
        %v2975 = vpack.c.b16 %v2191, %v2175
        %v2976 = vpack.c.b16 %v2192, %v2176
        %v2977 = vpack.c.b16 %v2193, %v2177
        %v2978 = vpack.c.b16 %v2194, %v2178
        %v2979 = vpack.c.b16 %v2195, %v2179
        %v2980 = vpack.c.b16 %v2196, %v2180
        %v2981 = vpack.c.b16 %v2197, %v2181
        %v2982 = vpack.c.b16 %v2198, %v2182
        %v2983 = vpack.c.b16 %v2199, %v2183
        %v2984 = vpack.c.b16 %v2200, %v2184
        %v2985 = vpack.c.b16 %v2217, %v2201
        %v2986 = vpack.c.b16 %v2218, %v2202
        %v2987 = vpack.c.b16 %v2219, %v2203
        %v2988 = vpack.c.b16 %v2220, %v2204
        %v2989 = vpack.c.b16 %v2221, %v2205
        %v2990 = vpack.c.b16 %v2222, %v2206
        %v2991 = vpack.c.b16 %v2223, %v2207
        %v2992 = vpack.c.b16 %v2224, %v2208
        %v2993 = vpack.c.b16 %v2225, %v2209
        %v2994 = vpack.c.b16 %v2226, %v2210
        %v2995 = vpack.c.b16 %v2227, %v2211
        %v2996 = vpack.c.b16 %v2228, %v2212
        %v2997 = vpack.c.b16 %v2229, %v2213
        %v2998 = vpack.c.b16 %v2230, %v2214
        %v2999 = vpack.c.b16 %v2231, %v2215
        %v3000 = vpack.c.b16 %v2232, %v2216
        %v3001 = vpack.c.b16 %v2249, %v2233
        %v3002 = vpack.c.b16 %v2250, %v2234
        %v3003 = vpack.c.b16 %v2251, %v2235
        %v3004 = vpack.c.b16 %v2252, %v2236
        %v3005 = vpack.c.b16 %v2253, %v2237
        %v3006 = vpack.c.b16 %v2254, %v2238
        %v3007 = vpack.c.b16 %v2255, %v2239
        %v3008 = vpack.c.b16 %v2256, %v2240
        %v3009 = vpack.c.b16 %v2257, %v2241
        %v3010 = vpack.c.b16 %v2258, %v2242
        %v3011 = vpack.c.b16 %v2259, %v2243
        %v3012 = vpack.c.b16 %v2260, %v2244
        %v3013 = vpack.c.b16 %v2261, %v2245
        %v3014 = vpack.c.b16 %v2262, %v2246
        %v3015 = vpack.c.b16 %v2263, %v2247
        %v3016 = vpack.c.b16 %v2264, %v2248
        %v3017 = vpack.c.b16 %v2281, %v2265
        %v3018 = vpack.c.b16 %v2282, %v2266
        %v3019 = vpack.c.b16 %v2283, %v2267
        %v3020 = vpack.c.b16 %v2284, %v2268
        %v3021 = vpack.c.b16 %v2285, %v2269
        %v3022 = vpack.c.b16 %v2286, %v2270
        %v3023 = vpack.c.b16 %v2287, %v2271
        %v3024 = vpack.c.b16 %v2288, %v2272
        %v3025 = vpack.c.b16 %v2289, %v2273
        %v3026 = vpack.c.b16 %v2290, %v2274
        %v3027 = vpack.c.b16 %v2291, %v2275
        %v3028 = vpack.c.b16 %v2292, %v2276
        %v3029 = vpack.c.b16 %v2293, %v2277
        %v3030 = vpack.c.b16 %v2294, %v2278
        %v3031 = vpack.c.b16 %v2295, %v2279
        %v3032 = vpack.c.b16 %v2296, %v2280
        %v3033 = vpack.c.b16 %v2313, %v2297
        %v3034 = vpack.c.b16 %v2314, %v2298
        %v3035 = vpack.c.b16 %v2315, %v2299
        %v3036 = vpack.c.b16 %v2316, %v2300
        %v3037 = vpack.c.b16 %v2317, %v2301
        %v3038 = vpack.c.b16 %v2318, %v2302
        %v3039 = vpack.c.b16 %v2319, %v2303
        %v3040 = vpack.c.b16 %v2320, %v2304
        %v3041 = vpack.c.b16 %v2321, %v2305
        %v3042 = vpack.c.b16 %v2322, %v2306
        %v3043 = vpack.c.b16 %v2323, %v2307
        %v3044 = vpack.c.b16 %v2324, %v2308
        %v3045 = vpack.c.b16 %v2325, %v2309
        %v3046 = vpack.c.b16 %v2326, %v2310
        %v3047 = vpack.c.b16 %v2327, %v2311
        %v3048 = vpack.c.b16 %v2328, %v2312
        %v3049 = vpack.c.b16 %v2345, %v2329
        %v3050 = vpack.c.b16 %v2346, %v2330
        %v3051 = vpack.c.b16 %v2347, %v2331
        %v3052 = vpack.c.b16 %v2348, %v2332
        %v3053 = vpack.c.b16 %v2349, %v2333
        %v3054 = vpack.c.b16 %v2350, %v2334
        %v3055 = vpack.c.b16 %v2351, %v2335
        %v3056 = vpack.c.b16 %v2352, %v2336
        %v3057 = vpack.c.b16 %v2353, %v2337
        %v3058 = vpack.c.b16 %v2354, %v2338
        %v3059 = vpack.c.b16 %v2355, %v2339
        %v3060 = vpack.c.b16 %v2356, %v2340
        %v3061 = vpack.c.b16 %v2357, %v2341
        %v3062 = vpack.c.b16 %v2358, %v2342
        %v3063 = vpack.c.b16 %v2359, %v2343
        %v3064 = vpack.c.b16 %v2360, %v2344
        %v3065 = vpack.c.b16 %v2377, %v2361
        %v3066 = vpack.c.b16 %v2378, %v2362
        %v3067 = vpack.c.b16 %v2379, %v2363
        %v3068 = vpack.c.b16 %v2380, %v2364
        %v3069 = vpack.c.b16 %v2381, %v2365
        %v3070 = vpack.c.b16 %v2382, %v2366
        %v3071 = vpack.c.b16 %v2383, %v2367
        %v3072 = vpack.c.b16 %v2384, %v2368
        %v3073 = vpack.c.b16 %v2385, %v2369
        %v3074 = vpack.c.b16 %v2386, %v2370
        %v3075 = vpack.c.b16 %v2387, %v2371
        %v3076 = vpack.c.b16 %v2388, %v2372
        %v3077 = vpack.c.b16 %v2389, %v2373
        %v3078 = vpack.c.b16 %v2390, %v2374
        %v3079 = vpack.c.b16 %v2391, %v2375
        %v3080 = vpack.c.b16 %v2392, %v2376
        %v3081 = vpack.c.b16 %v2409, %v2393
        %v3082 = vpack.c.b16 %v2410, %v2394
        %v3083 = vpack.c.b16 %v2411, %v2395
        %v3084 = vpack.c.b16 %v2412, %v2396
        %v3085 = vpack.c.b16 %v2413, %v2397
        %v3086 = vpack.c.b16 %v2414, %v2398
        %v3087 = vpack.c.b16 %v2415, %v2399
        %v3088 = vpack.c.b16 %v2416, %v2400
        %v3089 = vpack.c.b16 %v2417, %v2401
        %v3090 = vpack.c.b16 %v2418, %v2402
        %v3091 = vpack.c.b16 %v2419, %v2403
        %v3092 = vpack.c.b16 %v2420, %v2404
        %v3093 = vpack.c.b16 %v2421, %v2405
        %v3094 = vpack.c.b16 %v2422, %v2406
        %v3095 = vpack.c.b16 %v2423, %v2407
        %v3096 = vpack.c.b16 %v2424, %v2408
        %v3097 = vpack.c.b16 %v2441, %v2425
        %v3098 = vpack.c.b16 %v2442, %v2426
        %v3099 = vpack.c.b16 %v2443, %v2427
        %v3100 = vpack.c.b16 %v2444, %v2428
        %v3101 = vpack.c.b16 %v2445, %v2429
        %v3102 = vpack.c.b16 %v2446, %v2430
        %v3103 = vpack.c.b16 %v2447, %v2431
        %v3104 = vpack.c.b16 %v2448, %v2432
        %v3105 = vpack.c.b16 %v2449, %v2433
        %v3106 = vpack.c.b16 %v2450, %v2434
        %v3107 = vpack.c.b16 %v2451, %v2435
        %v3108 = vpack.c.b16 %v2452, %v2436
        %v3109 = vpack.c.b16 %v2453, %v2437
        %v3110 = vpack.c.b16 %v2454, %v2438
        %v3111 = vpack.c.b16 %v2455, %v2439
        %v3112 = vpack.c.b16 %v2456, %v2440
        %v3113 = vpack.c.b16 %v2473, %v2457
        %v3114 = vpack.c.b16 %v2474, %v2458
        %v3115 = vpack.c.b16 %v2475, %v2459
        %v3116 = vpack.c.b16 %v2476, %v2460
        %v3117 = vpack.c.b16 %v2477, %v2461
        %v3118 = vpack.c.b16 %v2478, %v2462
        %v3119 = vpack.c.b16 %v2479, %v2463
        %v3120 = vpack.c.b16 %v2480, %v2464
        %v3121 = vpack.c.b16 %v2481, %v2465
        %v3122 = vpack.c.b16 %v2482, %v2466
        %v3123 = vpack.c.b16 %v2483, %v2467
        %v3124 = vpack.c.b16 %v2484, %v2468
        %v3125 = vpack.c.b16 %v2485, %v2469
        %v3126 = vpack.c.b16 %v2486, %v2470
        %v3127 = vpack.c.b16 %v2487, %v2471
        %v3128 = vpack.c.b16 %v2488, %v2472
        %v3129 = vpack.c.b16 %v2505, %v2489
        %v3130 = vpack.c.b16 %v2506, %v2490
        %v3131 = vpack.c.b16 %v2507, %v2491
        %v3132 = vpack.c.b16 %v2508, %v2492
        %v3133 = vpack.c.b16 %v2509, %v2493
        %v3134 = vpack.c.b16 %v2510, %v2494
        %v3135 = vpack.c.b16 %v2511, %v2495
        %v3136 = vpack.c.b16 %v2512, %v2496
        %v3137 = vpack.c.b16 %v2513, %v2497
        %v3138 = vpack.c.b16 %v2514, %v2498
        %v3139 = vpack.c.b16 %v2515, %v2499
        %v3140 = vpack.c.b16 %v2516, %v2500
        %v3141 = vpack.c.b16 %v2517, %v2501
        %v3142 = vpack.c.b16 %v2518, %v2502
        %v3143 = vpack.c.b16 %v2519, %v2503
        %v3144 = vpack.c.b16 %v2520, %v2504
        %v3145 = vpack.c.b16 %v2537, %v2521
        %v3146 = vpack.c.b16 %v2538, %v2522
        %v3147 = vpack.c.b16 %v2539, %v2523
        %v3148 = vpack.c.b16 %v2540, %v2524
        %v3149 = vpack.c.b16 %v2541, %v2525
        %v3150 = vpack.c.b16 %v2542, %v2526
        %v3151 = vpack.c.b16 %v2543, %v2527
        %v3152 = vpack.c.b16 %v2544, %v2528
        %v3153 = vpack.c.b16 %v2545, %v2529
        %v3154 = vpack.c.b16 %v2546, %v2530
        %v3155 = vpack.c.b16 %v2547, %v2531
        %v3156 = vpack.c.b16 %v2548, %v2532
        %v3157 = vpack.c.b16 %v2549, %v2533
        %v3158 = vpack.c.b16 %v2550, %v2534
        %v3159 = vpack.c.b16 %v2551, %v2535
        %v3160 = vpack.c.b16 %v2552, %v2536
        %v3161 = vpack.c.b16 %v2569, %v2553
        %v3162 = vpack.c.b16 %v2570, %v2554
        %v3163 = vpack.c.b16 %v2571, %v2555
        %v3164 = vpack.c.b16 %v2572, %v2556
        %v3165 = vpack.c.b16 %v2573, %v2557
        %v3166 = vpack.c.b16 %v2574, %v2558
        %v3167 = vpack.c.b16 %v2575, %v2559
        %v3168 = vpack.c.b16 %v2576, %v2560
        %v3169 = vpack.c.b16 %v2577, %v2561
        %v3170 = vpack.c.b16 %v2578, %v2562
        %v3171 = vpack.c.b16 %v2579, %v2563
        %v3172 = vpack.c.b16 %v2580, %v2564
        %v3173 = vpack.c.b16 %v2581, %v2565
        %v3174 = vpack.c.b16 %v2582, %v2566
        %v3175 = vpack.c.b16 %v2583, %v2567
        %v3176 = vpack.c.b16 %v2584, %v2568
        %v3177 = vpack.c.b16 %v2601, %v2585
        %v3178 = vpack.c.b16 %v2602, %v2586
        %v3179 = vpack.c.b16 %v2603, %v2587
        %v3180 = vpack.c.b16 %v2604, %v2588
        %v3181 = vpack.c.b16 %v2605, %v2589
        %v3182 = vpack.c.b16 %v2606, %v2590
        %v3183 = vpack.c.b16 %v2607, %v2591
        %v3184 = vpack.c.b16 %v2608, %v2592
        %v3185 = vpack.c.b16 %v2609, %v2593
        %v3186 = vpack.c.b16 %v2610, %v2594
        %v3187 = vpack.c.b16 %v2611, %v2595
        %v3188 = vpack.c.b16 %v2612, %v2596
        %v3189 = vpack.c.b16 %v2613, %v2597
        %v3190 = vpack.c.b16 %v2614, %v2598
        %v3191 = vpack.c.b16 %v2615, %v2599
        %v3192 = vpack.c.b16 %v2616, %v2600
        %v3193 = vpack.c.b16 %v2633, %v2617
        %v3194 = vpack.c.b16 %v2634, %v2618
        %v3195 = vpack.c.b16 %v2635, %v2619
        %v3196 = vpack.c.b16 %v2636, %v2620
        %v3197 = vpack.c.b16 %v2637, %v2621
        %v3198 = vpack.c.b16 %v2638, %v2622
        %v3199 = vpack.c.b16 %v2639, %v2623
        %v3200 = vpack.c.b16 %v2640, %v2624
        %v3201 = vpack.c.b16 %v2641, %v2625
        %v3202 = vpack.c.b16 %v2642, %v2626
        %v3203 = vpack.c.b16 %v2643, %v2627
        %v3204 = vpack.c.b16 %v2644, %v2628
        %v3205 = vpack.c.b16 %v2645, %v2629
        %v3206 = vpack.c.b16 %v2646, %v2630
        %v3207 = vpack.c.b16 %v2647, %v2631
        %v3208 = vpack.c.b16 %v2648, %v2632
        %v3209 = vpack.c.b16 %v2665, %v2649
        %v3210 = vpack.c.b16 %v2666, %v2650
        %v3211 = vpack.c.b16 %v2667, %v2651
        %v3212 = vpack.c.b16 %v2668, %v2652
        %v3213 = vpack.c.b16 %v2669, %v2653
        %v3214 = vpack.c.b16 %v2670, %v2654
        %v3215 = vpack.c.b16 %v2671, %v2655
        %v3216 = vpack.c.b16 %v2672, %v2656
        %v3217 = vpack.c.b16 %v2673, %v2657
        %v3218 = vpack.c.b16 %v2674, %v2658
        %v3219 = vpack.c.b16 %v2675, %v2659
        %v3220 = vpack.c.b16 %v2676, %v2660
        %v3221 = vpack.c.b16 %v2677, %v2661
        %v3222 = vpack.c.b16 %v2678, %v2662
        %v3223 = vpack.c.b16 %v2679, %v2663
        %v3224 = vpack.c.b16 %v2680, %v2664
        %v3225 = vpack.c.b16 %v2697, %v2681
        %v3226 = vpack.c.b16 %v2698, %v2682
        %v3227 = vpack.c.b16 %v2699, %v2683
        %v3228 = vpack.c.b16 %v2700, %v2684
        %v3229 = vpack.c.b16 %v2701, %v2685
        %v3230 = vpack.c.b16 %v2702, %v2686
        %v3231 = vpack.c.b16 %v2703, %v2687
        %v3232 = vpack.c.b16 %v2704, %v2688
        %v3233 = vpack.c.b16 %v2705, %v2689
        %v3234 = vpack.c.b16 %v2706, %v2690
        %v3235 = vpack.c.b16 %v2707, %v2691
        %v3236 = vpack.c.b16 %v2708, %v2692
        %v3237 = vpack.c.b16 %v2709, %v2693
        %v3238 = vpack.c.b16 %v2710, %v2694
        %v3239 = vpack.c.b16 %v2711, %v2695
        %v3240 = vpack.c.b16 %v2712, %v2696
        %v3241 = vpack.c.b16 %v2729, %v2713
        %v3242 = vpack.c.b16 %v2730, %v2714
        %v3243 = vpack.c.b16 %v2731, %v2715
        %v3244 = vpack.c.b16 %v2732, %v2716
        %v3245 = vpack.c.b16 %v2733, %v2717
        %v3246 = vpack.c.b16 %v2734, %v2718
        %v3247 = vpack.c.b16 %v2735, %v2719
        %v3248 = vpack.c.b16 %v2736, %v2720
        %v3249 = vpack.c.b16 %v2737, %v2721
        %v3250 = vpack.c.b16 %v2738, %v2722
        %v3251 = vpack.c.b16 %v2739, %v2723
        %v3252 = vpack.c.b16 %v2740, %v2724
        %v3253 = vpack.c.b16 %v2741, %v2725
        %v3254 = vpack.c.b16 %v2742, %v2726
        %v3255 = vpack.c.b16 %v2743, %v2727
        %v3256 = vpack.c.b16 %v2744, %v2728
        %3769 = vmatprep.subr.bf16.mxu0 %v2746
        %3770 = vmatpush1.bf16.msra.mxu0 %v2745
        %3771 = vmatprep.subr.bf16.mxu0 %v2762
        %3772 = vmatpush1.bf16.msra.mxu0 %v2761
        %3773 = vmatprep.subr.bf16.mxu0 %v2778
        %3774 = vmatpush1.bf16.msra.mxu0 %v2777
        %3775 = vmatprep.subr.bf16.mxu0 %v2794
        %3776 = vmatpush1.bf16.msra.mxu0 %v2793
        %3777 = vmatprep.subr.bf16.mxu0 %v2810
        %3778 = vmatpush1.bf16.msra.mxu0 %v2809
        %3779 = vmatprep.subr.bf16.mxu0 %v2826
        %3780 = vmatpush1.bf16.msra.mxu0 %v2825
        %3781 = vmatprep.subr.bf16.mxu0 %v2842
        %3782 = vmatpush1.bf16.msra.mxu0 %v2841
        %3783 = vmatprep.subr.bf16.mxu0 %v2858
        %3784 = vmatpush1.bf16.msra.mxu0 %v2857
        %3785 = vmatprep.subr.bf16.mxu0 %v2874
        %3786 = vmatpush1.bf16.msra.mxu0 %v2873
        %3787 = vmatprep.subr.bf16.mxu0 %v2890
        %3788 = vmatpush1.bf16.msra.mxu0 %v2889
        %3789 = vmatprep.subr.bf16.mxu0 %v2906
        %3790 = vmatpush1.bf16.msra.mxu0 %v2905
        %3791 = vmatprep.subr.bf16.mxu0 %v2922
        %3792 = vmatpush1.bf16.msra.mxu0 %v2921
        %3793 = vmatprep.subr.bf16.mxu0 %v2938
        %3794 = vmatpush1.bf16.msra.mxu0 %v2937
        %3795 = vmatprep.subr.bf16.mxu0 %v2954
        %3796 = vmatpush1.bf16.msra.mxu0 %v2953
        %3797 = vmatprep.subr.bf16.mxu0 %v2970
        %3798 = vmatpush1.bf16.msra.mxu0 %v2969
        %3799 = vmatprep.subr.bf16.mxu0 %v2986
        %3800 = vmatpush1.bf16.msra.mxu0 %v2985
        %3801 = vmatprep.mubr.bf16.mxu0 %v694
        %3802 = vmatmul.mubr.bf16.gmra.mrb[0].mxu0 %v693
        %v3803 = vpop.f32.mrb[0].mxu0
        %v3804 = vadd.f32 0.0, %v3803
        %v3805 = vpop.f32.mrb[0].mxu0
        %v3806 = vadd.f32 0.0, %v3805
        %v3807 = vpop.f32.mrb[0].mxu0
        %v3808 = vpop.f32.mrb[0].mxu0
        %3809 = vdwg.mxu0
        %3810 = vmatprep.subr.bf16.mxu0 %v3002
        %3811 = vmatpush1.bf16.msra.mxu0 %v3001
        %3812 = vmatprep.subr.bf16.mxu0 %v3018
        %3813 = vmatpush1.bf16.msra.mxu0 %v3017
        %3814 = vmatprep.subr.bf16.mxu0 %v3034
        %3815 = vmatpush1.bf16.msra.mxu0 %v3033
        %3816 = vmatprep.subr.bf16.mxu0 %v3050
        %3817 = vmatpush1.bf16.msra.mxu0 %v3049
        %3818 = vmatprep.subr.bf16.mxu0 %v3066
        %3819 = vmatpush1.bf16.msra.mxu0 %v3065
        %3820 = vmatprep.subr.bf16.mxu0 %v3082
        %3821 = vmatpush1.bf16.msra.mxu0 %v3081
        %3822 = vmatprep.subr.bf16.mxu0 %v3098
        %3823 = vmatpush1.bf16.msra.mxu0 %v3097
        %3824 = vmatprep.subr.bf16.mxu0 %v3114
        %3825 = vmatpush1.bf16.msra.mxu0 %v3113
        %3826 = vmatprep.subr.bf16.mxu0 %v3130
        %3827 = vmatpush1.bf16.msra.mxu0 %v3129
        %3828 = vmatprep.subr.bf16.mxu0 %v3146
        %3829 = vmatpush1.bf16.msra.mxu0 %v3145
        %3830 = vmatprep.subr.bf16.mxu0 %v3162
        %3831 = vmatpush1.bf16.msra.mxu0 %v3161
        %3832 = vmatprep.subr.bf16.mxu0 %v3178
        %3833 = vmatpush1.bf16.msra.mxu0 %v3177
        %3834 = vmatprep.subr.bf16.mxu0 %v3194
        %3835 = vmatpush1.bf16.msra.mxu0 %v3193
        %3836 = vmatprep.subr.bf16.mxu0 %v3210
        %3837 = vmatpush1.bf16.msra.mxu0 %v3209
        %3838 = vmatprep.subr.bf16.mxu0 %v3226
        %3839 = vmatpush1.bf16.msra.mxu0 %v3225
        %3840 = vmatprep.subr.bf16.mxu0 %v3242
        %3841 = vmatpush1.bf16.msra.mxu0 %v3241
        %3842 = vmatprep.mubr.bf16.mxu0 %v696
        %3843 = vmatmul.mubr.bf16.gmra.mrb[0].mxu0 %v695
        %v3844 = vpop.f32.mrb[0].mxu0
        %v3845 = vadd.f32 %v3804, %v3844
        %v3846 = vpop.f32.mrb[0].mxu0
        %v3847 = vadd.f32 %v3806, %v3846
        %v3848 = vpop.f32.mrb[0].mxu0
        %v3849 = vpop.f32.mrb[0].mxu0
        %3850 = vdwg.mxu0
        %3851 = vmatprep.subr.bf16.mxu0 %v2748
        %3852 = vmatpush1.bf16.msra.mxu0 %v2747
        %3853 = vmatprep.subr.bf16.mxu0 %v2764
        %3854 = vmatpush1.bf16.msra.mxu0 %v2763
        %3855 = vmatprep.subr.bf16.mxu0 %v2780
        %3856 = vmatpush1.bf16.msra.mxu0 %v2779
        %3857 = vmatprep.subr.bf16.mxu0 %v2796
        %3858 = vmatpush1.bf16.msra.mxu0 %v2795
        %3859 = vmatprep.subr.bf16.mxu0 %v2812
        %3860 = vmatpush1.bf16.msra.mxu0 %v2811
        %3861 = vmatprep.subr.bf16.mxu0 %v2828
        %3862 = vmatpush1.bf16.msra.mxu0 %v2827
        %3863 = vmatprep.subr.bf16.mxu0 %v2844
        %3864 = vmatpush1.bf16.msra.mxu0 %v2843
        %3865 = vmatprep.subr.bf16.mxu0 %v2860
        %3866 = vmatpush1.bf16.msra.mxu0 %v2859
        %3867 = vmatprep.subr.bf16.mxu0 %v2876
        %3868 = vmatpush1.bf16.msra.mxu0 %v2875
        %3869 = vmatprep.subr.bf16.mxu0 %v2892
        %3870 = vmatpush1.bf16.msra.mxu0 %v2891
        %3871 = vmatprep.subr.bf16.mxu0 %v2908
        %3872 = vmatpush1.bf16.msra.mxu0 %v2907
        %3873 = vmatprep.subr.bf16.mxu0 %v2924
        %3874 = vmatpush1.bf16.msra.mxu0 %v2923
        %3875 = vmatprep.subr.bf16.mxu0 %v2940
        %3876 = vmatpush1.bf16.msra.mxu0 %v2939
        %3877 = vmatprep.subr.bf16.mxu0 %v2956
        %3878 = vmatpush1.bf16.msra.mxu0 %v2955
        %3879 = vmatprep.subr.bf16.mxu0 %v2972
        %3880 = vmatpush1.bf16.msra.mxu0 %v2971
        %3881 = vmatprep.subr.bf16.mxu0 %v2988
        %3882 = vmatpush1.bf16.msra.mxu0 %v2987
        %3883 = vmatprep.mubr.bf16.mxu0 %v694
        %3884 = vmatmul.mubr.bf16.gmra.mrb[0].mxu0 %v693
        %v3885 = vpop.f32.mrb[0].mxu0
        %v3886 = vadd.f32 0.0, %v3885
        %v3887 = vpop.f32.mrb[0].mxu0
        %v3888 = vadd.f32 0.0, %v3887
        %v3889 = vpop.f32.mrb[0].mxu0
        %v3890 = vpop.f32.mrb[0].mxu0
        %3891 = vdwg.mxu0
        %3892 = vmatprep.subr.bf16.mxu0 %v3004
        %3893 = vmatpush1.bf16.msra.mxu0 %v3003
        %3894 = vmatprep.subr.bf16.mxu0 %v3020
        %3895 = vmatpush1.bf16.msra.mxu0 %v3019
        %3896 = vmatprep.subr.bf16.mxu0 %v3036
        %3897 = vmatpush1.bf16.msra.mxu0 %v3035
        %3898 = vmatprep.subr.bf16.mxu0 %v3052
        %3899 = vmatpush1.bf16.msra.mxu0 %v3051
        %3900 = vmatprep.subr.bf16.mxu0 %v3068
        %3901 = vmatpush1.bf16.msra.mxu0 %v3067
        %3902 = vmatprep.subr.bf16.mxu0 %v3084
        %3903 = vmatpush1.bf16.msra.mxu0 %v3083
        %3904 = vmatprep.subr.bf16.mxu0 %v3100
        %3905 = vmatpush1.bf16.msra.mxu0 %v3099
        %3906 = vmatprep.subr.bf16.mxu0 %v3116
        %3907 = vmatpush1.bf16.msra.mxu0 %v3115
        %3908 = vmatprep.subr.bf16.mxu0 %v3132
        %3909 = vmatpush1.bf16.msra.mxu0 %v3131
        %3910 = vmatprep.subr.bf16.mxu0 %v3148
        %3911 = vmatpush1.bf16.msra.mxu0 %v3147
        %3912 = vmatprep.subr.bf16.mxu0 %v3164
        %3913 = vmatpush1.bf16.msra.mxu0 %v3163
        %3914 = vmatprep.subr.bf16.mxu0 %v3180
        %3915 = vmatpush1.bf16.msra.mxu0 %v3179
        %3916 = vmatprep.subr.bf16.mxu0 %v3196
        %3917 = vmatpush1.bf16.msra.mxu0 %v3195
        %3918 = vmatprep.subr.bf16.mxu0 %v3212
        %3919 = vmatpush1.bf16.msra.mxu0 %v3211
        %3920 = vmatprep.subr.bf16.mxu0 %v3228
        %3921 = vmatpush1.bf16.msra.mxu0 %v3227
        %3922 = vmatprep.subr.bf16.mxu0 %v3244
        %3923 = vmatpush1.bf16.msra.mxu0 %v3243
        %3924 = vmatprep.mubr.bf16.mxu0 %v696
        %3925 = vmatmul.mubr.bf16.gmra.mrb[0].mxu0 %v695
        %v3926 = vpop.f32.mrb[0].mxu0
        %v3927 = vadd.f32 %v3886, %v3926
        %v3928 = vpop.f32.mrb[0].mxu0
        %v3929 = vadd.f32 %v3888, %v3928
        %v3930 = vpop.f32.mrb[0].mxu0
        %v3931 = vpop.f32.mrb[0].mxu0
        %3932 = vdwg.mxu0
        %3933 = vmatprep.subr.bf16.mxu0 %v2750
        %3934 = vmatpush1.bf16.msra.mxu0 %v2749
        %3935 = vmatprep.subr.bf16.mxu0 %v2766
        %3936 = vmatpush1.bf16.msra.mxu0 %v2765
        %3937 = vmatprep.subr.bf16.mxu0 %v2782
        %3938 = vmatpush1.bf16.msra.mxu0 %v2781
        %3939 = vmatprep.subr.bf16.mxu0 %v2798
        %3940 = vmatpush1.bf16.msra.mxu0 %v2797
        %3941 = vmatprep.subr.bf16.mxu0 %v2814
        %3942 = vmatpush1.bf16.msra.mxu0 %v2813
        %3943 = vmatprep.subr.bf16.mxu0 %v2830
        %3944 = vmatpush1.bf16.msra.mxu0 %v2829
        %3945 = vmatprep.subr.bf16.mxu0 %v2846
        %3946 = vmatpush1.bf16.msra.mxu0 %v2845
        %3947 = vmatprep.subr.bf16.mxu0 %v2862
        %3948 = vmatpush1.bf16.msra.mxu0 %v2861
        %3949 = vmatprep.subr.bf16.mxu0 %v2878
        %3950 = vmatpush1.bf16.msra.mxu0 %v2877
        %3951 = vmatprep.subr.bf16.mxu0 %v2894
        %3952 = vmatpush1.bf16.msra.mxu0 %v2893
        %3953 = vmatprep.subr.bf16.mxu0 %v2910
        %3954 = vmatpush1.bf16.msra.mxu0 %v2909
        %3955 = vmatprep.subr.bf16.mxu0 %v2926
        %3956 = vmatpush1.bf16.msra.mxu0 %v2925
        %3957 = vmatprep.subr.bf16.mxu0 %v2942
        %3958 = vmatpush1.bf16.msra.mxu0 %v2941
        %3959 = vmatprep.subr.bf16.mxu0 %v2958
        %3960 = vmatpush1.bf16.msra.mxu0 %v2957
        %3961 = vmatprep.subr.bf16.mxu0 %v2974
        %3962 = vmatpush1.bf16.msra.mxu0 %v2973
        %3963 = vmatprep.subr.bf16.mxu0 %v2990
        %3964 = vmatpush1.bf16.msra.mxu0 %v2989
        %3965 = vmatprep.mubr.bf16.mxu0 %v694
        %3966 = vmatmul.mubr.bf16.gmra.mrb[0].mxu0 %v693
        %v3967 = vpop.f32.mrb[0].mxu0
        %v3968 = vadd.f32 0.0, %v3967
        %v3969 = vpop.f32.mrb[0].mxu0
        %v3970 = vadd.f32 0.0, %v3969
        %v3971 = vpop.f32.mrb[0].mxu0
        %v3972 = vpop.f32.mrb[0].mxu0
        %3973 = vdwg.mxu0
        %3974 = vmatprep.subr.bf16.mxu0 %v3006
        %3975 = vmatpush1.bf16.msra.mxu0 %v3005
        %3976 = vmatprep.subr.bf16.mxu0 %v3022
        %3977 = vmatpush1.bf16.msra.mxu0 %v3021
        %3978 = vmatprep.subr.bf16.mxu0 %v3038
        %3979 = vmatpush1.bf16.msra.mxu0 %v3037
        %3980 = vmatprep.subr.bf16.mxu0 %v3054
        %3981 = vmatpush1.bf16.msra.mxu0 %v3053
        %3982 = vmatprep.subr.bf16.mxu0 %v3070
        %3983 = vmatpush1.bf16.msra.mxu0 %v3069
        %3984 = vmatprep.subr.bf16.mxu0 %v3086
        %3985 = vmatpush1.bf16.msra.mxu0 %v3085
        %3986 = vmatprep.subr.bf16.mxu0 %v3102
        %3987 = vmatpush1.bf16.msra.mxu0 %v3101
        %3988 = vmatprep.subr.bf16.mxu0 %v3118
        %3989 = vmatpush1.bf16.msra.mxu0 %v3117
        %3990 = vmatprep.subr.bf16.mxu0 %v3134
        %3991 = vmatpush1.bf16.msra.mxu0 %v3133
        %3992 = vmatprep.subr.bf16.mxu0 %v3150
        %3993 = vmatpush1.bf16.msra.mxu0 %v3149
        %3994 = vmatprep.subr.bf16.mxu0 %v3166
        %3995 = vmatpush1.bf16.msra.mxu0 %v3165
        %3996 = vmatprep.subr.bf16.mxu0 %v3182
        %3997 = vmatpush1.bf16.msra.mxu0 %v3181
        %3998 = vmatprep.subr.bf16.mxu0 %v3198
        %3999 = vmatpush1.bf16.msra.mxu0 %v3197
        %4000 = vmatprep.subr.bf16.mxu0 %v3214
        %4001 = vmatpush1.bf16.msra.mxu0 %v3213
        %4002 = vmatprep.subr.bf16.mxu0 %v3230
        %4003 = vmatpush1.bf16.msra.mxu0 %v3229
        %4004 = vmatprep.subr.bf16.mxu0 %v3246
        %4005 = vmatpush1.bf16.msra.mxu0 %v3245
        %4006 = vmatprep.mubr.bf16.mxu0 %v696
        %4007 = vmatmul.mubr.bf16.gmra.mrb[0].mxu0 %v695
        %v4008 = vpop.f32.mrb[0].mxu0
        %v4009 = vadd.f32 %v3968, %v4008
        %v4010 = vpop.f32.mrb[0].mxu0
        %v4011 = vadd.f32 %v3970, %v4010
        %v4012 = vpop.f32.mrb[0].mxu0
        %v4013 = vpop.f32.mrb[0].mxu0
        %4014 = vdwg.mxu0
        %4015 = vmatprep.subr.bf16.mxu0 %v2752
        %4016 = vmatpush1.bf16.msra.mxu0 %v2751
        %4017 = vmatprep.subr.bf16.mxu0 %v2768
        %4018 = vmatpush1.bf16.msra.mxu0 %v2767
        %4019 = vmatprep.subr.bf16.mxu0 %v2784
        %4020 = vmatpush1.bf16.msra.mxu0 %v2783
        %4021 = vmatprep.subr.bf16.mxu0 %v2800
        %4022 = vmatpush1.bf16.msra.mxu0 %v2799
        %4023 = vmatprep.subr.bf16.mxu0 %v2816
        %4024 = vmatpush1.bf16.msra.mxu0 %v2815
        %4025 = vmatprep.subr.bf16.mxu0 %v2832
        %4026 = vmatpush1.bf16.msra.mxu0 %v2831
        %4027 = vmatprep.subr.bf16.mxu0 %v2848
        %4028 = vmatpush1.bf16.msra.mxu0 %v2847
        %4029 = vmatprep.subr.bf16.mxu0 %v2864
        %4030 = vmatpush1.bf16.msra.mxu0 %v2863
        %4031 = vmatprep.subr.bf16.mxu0 %v2880
        %4032 = vmatpush1.bf16.msra.mxu0 %v2879
        %4033 = vmatprep.subr.bf16.mxu0 %v2896
        %4034 = vmatpush1.bf16.msra.mxu0 %v2895
        %4035 = vmatprep.subr.bf16.mxu0 %v2912
        %4036 = vmatpush1.bf16.msra.mxu0 %v2911
        %4037 = vmatprep.subr.bf16.mxu0 %v2928
        %4038 = vmatpush1.bf16.msra.mxu0 %v2927
        %4039 = vmatprep.subr.bf16.mxu0 %v2944
        %4040 = vmatpush1.bf16.msra.mxu0 %v2943
        %4041 = vmatprep.subr.bf16.mxu0 %v2960
        %4042 = vmatpush1.bf16.msra.mxu0 %v2959
        %4043 = vmatprep.subr.bf16.mxu0 %v2976
        %4044 = vmatpush1.bf16.msra.mxu0 %v2975
        %4045 = vmatprep.subr.bf16.mxu0 %v2992
        %4046 = vmatpush1.bf16.msra.mxu0 %v2991
        %4047 = vmatprep.mubr.bf16.mxu0 %v694
        %4048 = vmatmul.mubr.bf16.gmra.mrb[0].mxu0 %v693
        %v4049 = vpop.f32.mrb[0].mxu0
        %v4050 = vadd.f32 0.0, %v4049
        %v4051 = vpop.f32.mrb[0].mxu0
        %v4052 = vadd.f32 0.0, %v4051
        %v4053 = vpop.f32.mrb[0].mxu0
        %v4054 = vpop.f32.mrb[0].mxu0
        %4055 = vdwg.mxu0
        %4056 = vmatprep.subr.bf16.mxu0 %v3008
        %4057 = vmatpush1.bf16.msra.mxu0 %v3007
        %4058 = vmatprep.subr.bf16.mxu0 %v3024
        %4059 = vmatpush1.bf16.msra.mxu0 %v3023
        %4060 = vmatprep.subr.bf16.mxu0 %v3040
        %4061 = vmatpush1.bf16.msra.mxu0 %v3039
        %4062 = vmatprep.subr.bf16.mxu0 %v3056
        %4063 = vmatpush1.bf16.msra.mxu0 %v3055
        %4064 = vmatprep.subr.bf16.mxu0 %v3072
        %4065 = vmatpush1.bf16.msra.mxu0 %v3071
        %4066 = vmatprep.subr.bf16.mxu0 %v3088
        %4067 = vmatpush1.bf16.msra.mxu0 %v3087
        %4068 = vmatprep.subr.bf16.mxu0 %v3104
        %4069 = vmatpush1.bf16.msra.mxu0 %v3103
        %4070 = vmatprep.subr.bf16.mxu0 %v3120
        %4071 = vmatpush1.bf16.msra.mxu0 %v3119
        %4072 = vmatprep.subr.bf16.mxu0 %v3136
        %4073 = vmatpush1.bf16.msra.mxu0 %v3135
        %4074 = vmatprep.subr.bf16.mxu0 %v3152
        %4075 = vmatpush1.bf16.msra.mxu0 %v3151
        %4076 = vmatprep.subr.bf16.mxu0 %v3168
        %4077 = vmatpush1.bf16.msra.mxu0 %v3167
        %4078 = vmatprep.subr.bf16.mxu0 %v3184
        %4079 = vmatpush1.bf16.msra.mxu0 %v3183
        %4080 = vmatprep.subr.bf16.mxu0 %v3200
        %4081 = vmatpush1.bf16.msra.mxu0 %v3199
        %4082 = vmatprep.subr.bf16.mxu0 %v3216
        %4083 = vmatpush1.bf16.msra.mxu0 %v3215
        %4084 = vmatprep.subr.bf16.mxu0 %v3232
        %4085 = vmatpush1.bf16.msra.mxu0 %v3231
        %4086 = vmatprep.subr.bf16.mxu0 %v3248
        %4087 = vmatpush1.bf16.msra.mxu0 %v3247
        %4088 = vmatprep.mubr.bf16.mxu0 %v696
        %4089 = vmatmul.mubr.bf16.gmra.mrb[0].mxu0 %v695
        %v4090 = vpop.f32.mrb[0].mxu0
        %v4091 = vadd.f32 %v4050, %v4090
        %v4092 = vpop.f32.mrb[0].mxu0
        %v4093 = vadd.f32 %v4052, %v4092
        %v4094 = vpop.f32.mrb[0].mxu0
        %v4095 = vpop.f32.mrb[0].mxu0
        %4096 = vdwg.mxu0
        %4097 = vmatprep.subr.bf16.mxu0 %v2754
        %4098 = vmatpush1.bf16.msra.mxu0 %v2753
        %4099 = vmatprep.subr.bf16.mxu0 %v2770
        %4100 = vmatpush1.bf16.msra.mxu0 %v2769
        %4101 = vmatprep.subr.bf16.mxu0 %v2786
        %4102 = vmatpush1.bf16.msra.mxu0 %v2785
        %4103 = vmatprep.subr.bf16.mxu0 %v2802
        %4104 = vmatpush1.bf16.msra.mxu0 %v2801
        %4105 = vmatprep.subr.bf16.mxu0 %v2818
        %4106 = vmatpush1.bf16.msra.mxu0 %v2817
        %4107 = vmatprep.subr.bf16.mxu0 %v2834
        %4108 = vmatpush1.bf16.msra.mxu0 %v2833
        %4109 = vmatprep.subr.bf16.mxu0 %v2850
        %4110 = vmatpush1.bf16.msra.mxu0 %v2849
        %4111 = vmatprep.subr.bf16.mxu0 %v2866
        %4112 = vmatpush1.bf16.msra.mxu0 %v2865
        %4113 = vmatprep.subr.bf16.mxu0 %v2882
        %4114 = vmatpush1.bf16.msra.mxu0 %v2881
        %4115 = vmatprep.subr.bf16.mxu0 %v2898
        %4116 = vmatpush1.bf16.msra.mxu0 %v2897
        %4117 = vmatprep.subr.bf16.mxu0 %v2914
        %4118 = vmatpush1.bf16.msra.mxu0 %v2913
        %4119 = vmatprep.subr.bf16.mxu0 %v2930
        %4120 = vmatpush1.bf16.msra.mxu0 %v2929
        %4121 = vmatprep.subr.bf16.mxu0 %v2946
        %4122 = vmatpush1.bf16.msra.mxu0 %v2945
        %4123 = vmatprep.subr.bf16.mxu0 %v2962
        %4124 = vmatpush1.bf16.msra.mxu0 %v2961
        %4125 = vmatprep.subr.bf16.mxu0 %v2978
        %4126 = vmatpush1.bf16.msra.mxu0 %v2977
        %4127 = vmatprep.subr.bf16.mxu0 %v2994
        %4128 = vmatpush1.bf16.msra.mxu0 %v2993
        %4129 = vmatprep.mubr.bf16.mxu0 %v694
        %4130 = vmatmul.mubr.bf16.gmra.mrb[0].mxu0 %v693
        %v4131 = vpop.f32.mrb[0].mxu0
        %v4132 = vadd.f32 0.0, %v4131
        %v4133 = vpop.f32.mrb[0].mxu0
        %v4134 = vadd.f32 0.0, %v4133
        %v4135 = vpop.f32.mrb[0].mxu0
        %v4136 = vpop.f32.mrb[0].mxu0
        %4137 = vdwg.mxu0
        %4138 = vmatprep.subr.bf16.mxu0 %v3010
        %4139 = vmatpush1.bf16.msra.mxu0 %v3009
        %4140 = vmatprep.subr.bf16.mxu0 %v3026
        %4141 = vmatpush1.bf16.msra.mxu0 %v3025
        %4142 = vmatprep.subr.bf16.mxu0 %v3042
        %4143 = vmatpush1.bf16.msra.mxu0 %v3041
        %4144 = vmatprep.subr.bf16.mxu0 %v3058
        %4145 = vmatpush1.bf16.msra.mxu0 %v3057
        %4146 = vmatprep.subr.bf16.mxu0 %v3074
        %4147 = vmatpush1.bf16.msra.mxu0 %v3073
        %4148 = vmatprep.subr.bf16.mxu0 %v3090
        %4149 = vmatpush1.bf16.msra.mxu0 %v3089
        %4150 = vmatprep.subr.bf16.mxu0 %v3106
        %4151 = vmatpush1.bf16.msra.mxu0 %v3105
        %4152 = vmatprep.subr.bf16.mxu0 %v3122
        %4153 = vmatpush1.bf16.msra.mxu0 %v3121
        %4154 = vmatprep.subr.bf16.mxu0 %v3138
        %4155 = vmatpush1.bf16.msra.mxu0 %v3137
        %4156 = vmatprep.subr.bf16.mxu0 %v3154
        %4157 = vmatpush1.bf16.msra.mxu0 %v3153
        %4158 = vmatprep.subr.bf16.mxu0 %v3170
        %4159 = vmatpush1.bf16.msra.mxu0 %v3169
        %4160 = vmatprep.subr.bf16.mxu0 %v3186
        %4161 = vmatpush1.bf16.msra.mxu0 %v3185
        %4162 = vmatprep.subr.bf16.mxu0 %v3202
        %4163 = vmatpush1.bf16.msra.mxu0 %v3201
        %4164 = vmatprep.subr.bf16.mxu0 %v3218
        %4165 = vmatpush1.bf16.msra.mxu0 %v3217
        %4166 = vmatprep.subr.bf16.mxu0 %v3234
        %4167 = vmatpush1.bf16.msra.mxu0 %v3233
        %4168 = vmatprep.subr.bf16.mxu0 %v3250
        %4169 = vmatpush1.bf16.msra.mxu0 %v3249
        %4170 = vmatprep.mubr.bf16.mxu0 %v696
        %4171 = vmatmul.mubr.bf16.gmra.mrb[0].mxu0 %v695
        %v4172 = vpop.f32.mrb[0].mxu0
        %v4173 = vadd.f32 %v4132, %v4172
        %v4174 = vpop.f32.mrb[0].mxu0
        %v4175 = vadd.f32 %v4134, %v4174
        %v4176 = vpop.f32.mrb[0].mxu0
        %v4177 = vpop.f32.mrb[0].mxu0
        %4178 = vdwg.mxu0
        %4179 = vmatprep.subr.bf16.mxu0 %v2756
        %4180 = vmatpush1.bf16.msra.mxu0 %v2755
        %4181 = vmatprep.subr.bf16.mxu0 %v2772
        %4182 = vmatpush1.bf16.msra.mxu0 %v2771
        %4183 = vmatprep.subr.bf16.mxu0 %v2788
        %4184 = vmatpush1.bf16.msra.mxu0 %v2787
        %4185 = vmatprep.subr.bf16.mxu0 %v2804
        %4186 = vmatpush1.bf16.msra.mxu0 %v2803
        %4187 = vmatprep.subr.bf16.mxu0 %v2820
        %4188 = vmatpush1.bf16.msra.mxu0 %v2819
        %4189 = vmatprep.subr.bf16.mxu0 %v2836
        %4190 = vmatpush1.bf16.msra.mxu0 %v2835
        %4191 = vmatprep.subr.bf16.mxu0 %v2852
        %4192 = vmatpush1.bf16.msra.mxu0 %v2851
        %4193 = vmatprep.subr.bf16.mxu0 %v2868
        %4194 = vmatpush1.bf16.msra.mxu0 %v2867
        %4195 = vmatprep.subr.bf16.mxu0 %v2884
        %4196 = vmatpush1.bf16.msra.mxu0 %v2883
        %4197 = vmatprep.subr.bf16.mxu0 %v2900
        %4198 = vmatpush1.bf16.msra.mxu0 %v2899
        %4199 = vmatprep.subr.bf16.mxu0 %v2916
        %4200 = vmatpush1.bf16.msra.mxu0 %v2915
        %4201 = vmatprep.subr.bf16.mxu0 %v2932
        %4202 = vmatpush1.bf16.msra.mxu0 %v2931
        %4203 = vmatprep.subr.bf16.mxu0 %v2948
        %4204 = vmatpush1.bf16.msra.mxu0 %v2947
        %4205 = vmatprep.subr.bf16.mxu0 %v2964
        %4206 = vmatpush1.bf16.msra.mxu0 %v2963
        %4207 = vmatprep.subr.bf16.mxu0 %v2980
        %4208 = vmatpush1.bf16.msra.mxu0 %v2979
        %4209 = vmatprep.subr.bf16.mxu0 %v2996
        %4210 = vmatpush1.bf16.msra.mxu0 %v2995
        %4211 = vmatprep.mubr.bf16.mxu0 %v694
        %4212 = vmatmul.mubr.bf16.gmra.mrb[0].mxu0 %v693
        %v4213 = vpop.f32.mrb[0].mxu0
        %v4214 = vadd.f32 0.0, %v4213
        %v4215 = vpop.f32.mrb[0].mxu0
        %v4216 = vadd.f32 0.0, %v4215
        %v4217 = vpop.f32.mrb[0].mxu0
        %v4218 = vpop.f32.mrb[0].mxu0
        %4219 = vdwg.mxu0
        %4220 = vmatprep.subr.bf16.mxu0 %v3012
        %4221 = vmatpush1.bf16.msra.mxu0 %v3011
        %4222 = vmatprep.subr.bf16.mxu0 %v3028
        %4223 = vmatpush1.bf16.msra.mxu0 %v3027
        %4224 = vmatprep.subr.bf16.mxu0 %v3044
        %4225 = vmatpush1.bf16.msra.mxu0 %v3043
        %4226 = vmatprep.subr.bf16.mxu0 %v3060
        %4227 = vmatpush1.bf16.msra.mxu0 %v3059
        %4228 = vmatprep.subr.bf16.mxu0 %v3076
        %4229 = vmatpush1.bf16.msra.mxu0 %v3075
        %4230 = vmatprep.subr.bf16.mxu0 %v3092
        %4231 = vmatpush1.bf16.msra.mxu0 %v3091
        %4232 = vmatprep.subr.bf16.mxu0 %v3108
        %4233 = vmatpush1.bf16.msra.mxu0 %v3107
        %4234 = vmatprep.subr.bf16.mxu0 %v3124
        %4235 = vmatpush1.bf16.msra.mxu0 %v3123
        %4236 = vmatprep.subr.bf16.mxu0 %v3140
        %4237 = vmatpush1.bf16.msra.mxu0 %v3139
        %4238 = vmatprep.subr.bf16.mxu0 %v3156
        %4239 = vmatpush1.bf16.msra.mxu0 %v3155
        %4240 = vmatprep.subr.bf16.mxu0 %v3172
        %4241 = vmatpush1.bf16.msra.mxu0 %v3171
        %4242 = vmatprep.subr.bf16.mxu0 %v3188
        %4243 = vmatpush1.bf16.msra.mxu0 %v3187
        %4244 = vmatprep.subr.bf16.mxu0 %v3204
        %4245 = vmatpush1.bf16.msra.mxu0 %v3203
        %4246 = vmatprep.subr.bf16.mxu0 %v3220
        %4247 = vmatpush1.bf16.msra.mxu0 %v3219
        %4248 = vmatprep.subr.bf16.mxu0 %v3236
        %4249 = vmatpush1.bf16.msra.mxu0 %v3235
        %4250 = vmatprep.subr.bf16.mxu0 %v3252
        %4251 = vmatpush1.bf16.msra.mxu0 %v3251
        %4252 = vmatprep.mubr.bf16.mxu0 %v696
        %4253 = vmatmul.mubr.bf16.gmra.mrb[0].mxu0 %v695
        %v4254 = vpop.f32.mrb[0].mxu0
        %v4255 = vadd.f32 %v4214, %v4254
        %v4256 = vpop.f32.mrb[0].mxu0
        %v4257 = vadd.f32 %v4216, %v4256
        %v4258 = vpop.f32.mrb[0].mxu0
        %v4259 = vpop.f32.mrb[0].mxu0
        %4260 = vdwg.mxu0
        %4261 = vmatprep.subr.bf16.mxu0 %v2758
        %4262 = vmatpush1.bf16.msra.mxu0 %v2757
        %4263 = vmatprep.subr.bf16.mxu0 %v2774
        %4264 = vmatpush1.bf16.msra.mxu0 %v2773
        %4265 = vmatprep.subr.bf16.mxu0 %v2790
        %4266 = vmatpush1.bf16.msra.mxu0 %v2789
        %4267 = vmatprep.subr.bf16.mxu0 %v2806
        %4268 = vmatpush1.bf16.msra.mxu0 %v2805
        %4269 = vmatprep.subr.bf16.mxu0 %v2822
        %4270 = vmatpush1.bf16.msra.mxu0 %v2821
        %4271 = vmatprep.subr.bf16.mxu0 %v2838
        %4272 = vmatpush1.bf16.msra.mxu0 %v2837
        %4273 = vmatprep.subr.bf16.mxu0 %v2854
        %4274 = vmatpush1.bf16.msra.mxu0 %v2853
        %4275 = vmatprep.subr.bf16.mxu0 %v2870
        %4276 = vmatpush1.bf16.msra.mxu0 %v2869
        %4277 = vmatprep.subr.bf16.mxu0 %v2886
        %4278 = vmatpush1.bf16.msra.mxu0 %v2885
        %4279 = vmatprep.subr.bf16.mxu0 %v2902
        %4280 = vmatpush1.bf16.msra.mxu0 %v2901
        %4281 = vmatprep.subr.bf16.mxu0 %v2918
        %4282 = vmatpush1.bf16.msra.mxu0 %v2917
        %4283 = vmatprep.subr.bf16.mxu0 %v2934
        %4284 = vmatpush1.bf16.msra.mxu0 %v2933
        %4285 = vmatprep.subr.bf16.mxu0 %v2950
        %4286 = vmatpush1.bf16.msra.mxu0 %v2949
        %4287 = vmatprep.subr.bf16.mxu0 %v2966
        %4288 = vmatpush1.bf16.msra.mxu0 %v2965
        %4289 = vmatprep.subr.bf16.mxu0 %v2982
        %4290 = vmatpush1.bf16.msra.mxu0 %v2981
        %4291 = vmatprep.subr.bf16.mxu0 %v2998
        %4292 = vmatpush1.bf16.msra.mxu0 %v2997
        %4293 = vmatprep.mubr.bf16.mxu0 %v694
        %4294 = vmatmul.mubr.bf16.gmra.mrb[0].mxu0 %v693
        %v4295 = vpop.f32.mrb[0].mxu0
        %v4296 = vadd.f32 0.0, %v4295
        %v4297 = vpop.f32.mrb[0].mxu0
        %v4298 = vadd.f32 0.0, %v4297
        %v4299 = vpop.f32.mrb[0].mxu0
        %v4300 = vpop.f32.mrb[0].mxu0
        %4301 = vdwg.mxu0
        %4302 = vmatprep.subr.bf16.mxu0 %v3014
        %4303 = vmatpush1.bf16.msra.mxu0 %v3013
        %4304 = vmatprep.subr.bf16.mxu0 %v3030
        %4305 = vmatpush1.bf16.msra.mxu0 %v3029
        %4306 = vmatprep.subr.bf16.mxu0 %v3046
        %4307 = vmatpush1.bf16.msra.mxu0 %v3045
        %4308 = vmatprep.subr.bf16.mxu0 %v3062
        %4309 = vmatpush1.bf16.msra.mxu0 %v3061
        %4310 = vmatprep.subr.bf16.mxu0 %v3078
        %4311 = vmatpush1.bf16.msra.mxu0 %v3077
        %4312 = vmatprep.subr.bf16.mxu0 %v3094
        %4313 = vmatpush1.bf16.msra.mxu0 %v3093
        %4314 = vmatprep.subr.bf16.mxu0 %v3110
        %4315 = vmatpush1.bf16.msra.mxu0 %v3109
        %4316 = vmatprep.subr.bf16.mxu0 %v3126
        %4317 = vmatpush1.bf16.msra.mxu0 %v3125
        %4318 = vmatprep.subr.bf16.mxu0 %v3142
        %4319 = vmatpush1.bf16.msra.mxu0 %v3141
        %4320 = vmatprep.subr.bf16.mxu0 %v3158
        %4321 = vmatpush1.bf16.msra.mxu0 %v3157
        %4322 = vmatprep.subr.bf16.mxu0 %v3174
        %4323 = vmatpush1.bf16.msra.mxu0 %v3173
        %4324 = vmatprep.subr.bf16.mxu0 %v3190
        %4325 = vmatpush1.bf16.msra.mxu0 %v3189
        %4326 = vmatprep.subr.bf16.mxu0 %v3206
        %4327 = vmatpush1.bf16.msra.mxu0 %v3205
        %4328 = vmatprep.subr.bf16.mxu0 %v3222
        %4329 = vmatpush1.bf16.msra.mxu0 %v3221
        %4330 = vmatprep.subr.bf16.mxu0 %v3238
        %4331 = vmatpush1.bf16.msra.mxu0 %v3237
        %4332 = vmatprep.subr.bf16.mxu0 %v3254
        %4333 = vmatpush1.bf16.msra.mxu0 %v3253
        %4334 = vmatprep.mubr.bf16.mxu0 %v696
        %4335 = vmatmul.mubr.bf16.gmra.mrb[0].mxu0 %v695
        %v4336 = vpop.f32.mrb[0].mxu0
        %v4337 = vadd.f32 %v4296, %v4336
        %v4338 = vpop.f32.mrb[0].mxu0
        %v4339 = vadd.f32 %v4298, %v4338
        %v4340 = vpop.f32.mrb[0].mxu0
        %v4341 = vpop.f32.mrb[0].mxu0
        %4342 = vdwg.mxu0
        %4343 = vmatprep.subr.bf16.mxu0 %v2760
        %4344 = vmatpush1.bf16.msra.mxu0 %v2759
        %4345 = vmatprep.subr.bf16.mxu0 %v2776
        %4346 = vmatpush1.bf16.msra.mxu0 %v2775
        %4347 = vmatprep.subr.bf16.mxu0 %v2792
        %4348 = vmatpush1.bf16.msra.mxu0 %v2791
        %4349 = vmatprep.subr.bf16.mxu0 %v2808
        %4350 = vmatpush1.bf16.msra.mxu0 %v2807
        %4351 = vmatprep.subr.bf16.mxu0 %v2824
        %4352 = vmatpush1.bf16.msra.mxu0 %v2823
        %4353 = vmatprep.subr.bf16.mxu0 %v2840
        %4354 = vmatpush1.bf16.msra.mxu0 %v2839
        %4355 = vmatprep.subr.bf16.mxu0 %v2856
        %4356 = vmatpush1.bf16.msra.mxu0 %v2855
        %4357 = vmatprep.subr.bf16.mxu0 %v2872
        %4358 = vmatpush1.bf16.msra.mxu0 %v2871
        %4359 = vmatprep.subr.bf16.mxu0 %v2888
        %4360 = vmatpush1.bf16.msra.mxu0 %v2887
        %4361 = vmatprep.subr.bf16.mxu0 %v2904
        %4362 = vmatpush1.bf16.msra.mxu0 %v2903
        %4363 = vmatprep.subr.bf16.mxu0 %v2920
        %4364 = vmatpush1.bf16.msra.mxu0 %v2919
        %4365 = vmatprep.subr.bf16.mxu0 %v2936
        %4366 = vmatpush1.bf16.msra.mxu0 %v2935
        %4367 = vmatprep.subr.bf16.mxu0 %v2952
        %4368 = vmatpush1.bf16.msra.mxu0 %v2951
        %4369 = vmatprep.subr.bf16.mxu0 %v2968
        %4370 = vmatpush1.bf16.msra.mxu0 %v2967
        %4371 = vmatprep.subr.bf16.mxu0 %v2984
        %4372 = vmatpush1.bf16.msra.mxu0 %v2983
        %4373 = vmatprep.subr.bf16.mxu0 %v3000
        %4374 = vmatpush1.bf16.msra.mxu0 %v2999
        %4375 = vmatprep.mubr.bf16.mxu0 %v694
        %4376 = vmatmul.mubr.bf16.gmra.mrb[0].mxu0 %v693
        %v4377 = vpop.f32.mrb[0].mxu0
        %v4378 = vadd.f32 0.0, %v4377
        %v4379 = vpop.f32.mrb[0].mxu0
        %v4380 = vadd.f32 0.0, %v4379
        %v4381 = vpop.f32.mrb[0].mxu0
        %v4382 = vpop.f32.mrb[0].mxu0
        %4383 = vdwg.mxu0
        %4384 = vmatprep.subr.bf16.mxu0 %v3016
        %4385 = vmatpush1.bf16.msra.mxu0 %v3015
        %4386 = vmatprep.subr.bf16.mxu0 %v3032
        %4387 = vmatpush1.bf16.msra.mxu0 %v3031
        %4388 = vmatprep.subr.bf16.mxu0 %v3048
        %4389 = vmatpush1.bf16.msra.mxu0 %v3047
        %4390 = vmatprep.subr.bf16.mxu0 %v3064
        %4391 = vmatpush1.bf16.msra.mxu0 %v3063
        %4392 = vmatprep.subr.bf16.mxu0 %v3080
        %4393 = vmatpush1.bf16.msra.mxu0 %v3079
        %4394 = vmatprep.subr.bf16.mxu0 %v3096
        %4395 = vmatpush1.bf16.msra.mxu0 %v3095
        %4396 = vmatprep.subr.bf16.mxu0 %v3112
        %4397 = vmatpush1.bf16.msra.mxu0 %v3111
        %4398 = vmatprep.subr.bf16.mxu0 %v3128
        %4399 = vmatpush1.bf16.msra.mxu0 %v3127
        %4400 = vmatprep.subr.bf16.mxu0 %v3144
        %4401 = vmatpush1.bf16.msra.mxu0 %v3143
        %4402 = vmatprep.subr.bf16.mxu0 %v3160
        %4403 = vmatpush1.bf16.msra.mxu0 %v3159
        %4404 = vmatprep.subr.bf16.mxu0 %v3176
        %4405 = vmatpush1.bf16.msra.mxu0 %v3175
        %4406 = vmatprep.subr.bf16.mxu0 %v3192
        %4407 = vmatpush1.bf16.msra.mxu0 %v3191
        %4408 = vmatprep.subr.bf16.mxu0 %v3208
        %4409 = vmatpush1.bf16.msra.mxu0 %v3207
        %4410 = vmatprep.subr.bf16.mxu0 %v3224
        %4411 = vmatpush1.bf16.msra.mxu0 %v3223
        %4412 = vmatprep.subr.bf16.mxu0 %v3240
        %4413 = vmatpush1.bf16.msra.mxu0 %v3239
        %4414 = vmatprep.subr.bf16.mxu0 %v3256
        %4415 = vmatpush1.bf16.msra.mxu0 %v3255
        %4416 = vmatprep.mubr.bf16.mxu0 %v696
        %4417 = vmatmul.mubr.bf16.gmra.mrb[0].mxu0 %v695
        %v4418 = vpop.f32.mrb[0].mxu0
        %v4419 = vadd.f32 %v4378, %v4418
        %v4420 = vpop.f32.mrb[0].mxu0
        %v4421 = vadd.f32 %v4380, %v4420
        %v4422 = vpop.f32.mrb[0].mxu0
        %v4423 = vpop.f32.mrb[0].mxu0
        %4424 = vdwg.mxu0
        %v4553 = vunpack.c.l.b16 %v543
        %v4554 = vunpack.c.h.b16 %v543
        %v4555 = vunpack.c.l.b16 %v544
        %v4556 = vunpack.c.h.b16 %v544
        %v4557 = vunpack.c.l.b16 %v545
        %v4558 = vunpack.c.h.b16 %v545
        %v4559 = vunpack.c.l.b16 %v546
        %v4560 = vunpack.c.h.b16 %v546
        %v4561 = vunpack.c.l.b16 %v547
        %v4562 = vunpack.c.h.b16 %v547
        %v4563 = vunpack.c.l.b16 %v548
        %v4564 = vunpack.c.h.b16 %v548
        %v4565 = vunpack.c.l.b16 %v549
        %v4566 = vunpack.c.h.b16 %v549
        %v4567 = vunpack.c.l.b16 %v550
        %v4568 = vunpack.c.h.b16 %v550
        %v4569 = vunpack.c.l.b16 %v551
        %v4570 = vunpack.c.h.b16 %v551
        %v4571 = vunpack.c.l.b16 %v552
        %v4572 = vunpack.c.h.b16 %v552
        %v4573 = vunpack.c.l.b16 %v553
        %v4574 = vunpack.c.h.b16 %v553
        %v4575 = vunpack.c.l.b16 %v554
        %v4576 = vunpack.c.h.b16 %v554
        %v4577 = vunpack.c.l.b16 %v555
        %v4578 = vunpack.c.h.b16 %v555
        %v4579 = vunpack.c.l.b16 %v556
        %v4580 = vunpack.c.h.b16 %v556
        %v4581 = vunpack.c.l.b16 %v557
        %v4582 = vunpack.c.h.b16 %v557
        %v4583 = vunpack.c.l.b16 %v558
        %v4584 = vunpack.c.h.b16 %v558
        %v4585 = vunpack.c.l.b16 %v559
        %v4586 = vunpack.c.h.b16 %v559
        %v4587 = vunpack.c.l.b16 %v560
        %v4588 = vunpack.c.h.b16 %v560
        %v4589 = vunpack.c.l.b16 %v561
        %v4590 = vunpack.c.h.b16 %v561
        %v4591 = vunpack.c.l.b16 %v562
        %v4592 = vunpack.c.h.b16 %v562
        %v4593 = vunpack.c.l.b16 %v563
        %v4594 = vunpack.c.h.b16 %v563
        %v4595 = vunpack.c.l.b16 %v564
        %v4596 = vunpack.c.h.b16 %v564
        %v4597 = vunpack.c.l.b16 %v565
        %v4598 = vunpack.c.h.b16 %v565
        %v4599 = vunpack.c.l.b16 %v566
        %v4600 = vunpack.c.h.b16 %v566
        %v4601 = vunpack.c.l.b16 %v567
        %v4602 = vunpack.c.h.b16 %v567
        %v4603 = vunpack.c.l.b16 %v568
        %v4604 = vunpack.c.h.b16 %v568
        %v4605 = vunpack.c.l.b16 %v569
        %v4606 = vunpack.c.h.b16 %v569
        %v4607 = vunpack.c.l.b16 %v570
        %v4608 = vunpack.c.h.b16 %v570
        %v4609 = vunpack.c.l.b16 %v571
        %v4610 = vunpack.c.h.b16 %v571
        %v4611 = vunpack.c.l.b16 %v572
        %v4612 = vunpack.c.h.b16 %v572
        %v4613 = vunpack.c.l.b16 %v573
        %v4614 = vunpack.c.h.b16 %v573
        %v4615 = vunpack.c.l.b16 %v574
        %v4616 = vunpack.c.h.b16 %v574
        %v4617 = vunpack.c.l.b16 %v575
        %v4618 = vunpack.c.h.b16 %v575
        %v4619 = vunpack.c.l.b16 %v576
        %v4620 = vunpack.c.h.b16 %v576
        %v4621 = vunpack.c.l.b16 %v577
        %v4622 = vunpack.c.h.b16 %v577
        %v4623 = vunpack.c.l.b16 %v578
        %v4624 = vunpack.c.h.b16 %v578
        %v4625 = vunpack.c.l.b16 %v579
        %v4626 = vunpack.c.h.b16 %v579
        %v4627 = vunpack.c.l.b16 %v580
        %v4628 = vunpack.c.h.b16 %v580
        %v4629 = vunpack.c.l.b16 %v581
        %v4630 = vunpack.c.h.b16 %v581
        %v4631 = vunpack.c.l.b16 %v582
        %v4632 = vunpack.c.h.b16 %v582
        %v4633 = vunpack.c.l.b16 %v583
        %v4634 = vunpack.c.h.b16 %v583
        %v4635 = vunpack.c.l.b16 %v584
        %v4636 = vunpack.c.h.b16 %v584
        %v4637 = vunpack.c.l.b16 %v585
        %v4638 = vunpack.c.h.b16 %v585
        %v4639 = vunpack.c.l.b16 %v586
        %v4640 = vunpack.c.h.b16 %v586
        %v4641 = vunpack.c.l.b16 %v587
        %v4642 = vunpack.c.h.b16 %v587
        %v4643 = vunpack.c.l.b16 %v588
        %v4644 = vunpack.c.h.b16 %v588
        %v4645 = vunpack.c.l.b16 %v589
        %v4646 = vunpack.c.h.b16 %v589
        %v4647 = vunpack.c.l.b16 %v590
        %v4648 = vunpack.c.h.b16 %v590
        %v4649 = vunpack.c.l.b16 %v591
        %v4650 = vunpack.c.h.b16 %v591
        %v4651 = vunpack.c.l.b16 %v592
        %v4652 = vunpack.c.h.b16 %v592
        %v4653 = vunpack.c.l.b16 %v593
        %v4654 = vunpack.c.h.b16 %v593
        %v4655 = vunpack.c.l.b16 %v594
        %v4656 = vunpack.c.h.b16 %v594
        %v4657 = vunpack.c.l.b16 %v595
        %v4658 = vunpack.c.h.b16 %v595
        %v4659 = vunpack.c.l.b16 %v596
        %v4660 = vunpack.c.h.b16 %v596
        %v4661 = vunpack.c.l.b16 %v597
        %v4662 = vunpack.c.h.b16 %v597
        %v4663 = vunpack.c.l.b16 %v598
        %v4664 = vunpack.c.h.b16 %v598
        %v4665 = vunpack.c.l.b16 %v599
        %v4666 = vunpack.c.h.b16 %v599
        %v4667 = vunpack.c.l.b16 %v600
        %v4668 = vunpack.c.h.b16 %v600
        %v4669 = vunpack.c.l.b16 %v601
        %v4670 = vunpack.c.h.b16 %v601
        %v4671 = vunpack.c.l.b16 %v602
        %v4672 = vunpack.c.h.b16 %v602
        %v4673 = vunpack.c.l.b16 %v603
        %v4674 = vunpack.c.h.b16 %v603
        %v4675 = vunpack.c.l.b16 %v604
        %v4676 = vunpack.c.h.b16 %v604
        %v4677 = vunpack.c.l.b16 %v605
        %v4678 = vunpack.c.h.b16 %v605
        %v4679 = vunpack.c.l.b16 %v606
        %v4680 = vunpack.c.h.b16 %v606
        %v4681 = vunpack.c.l.b16 %v607
        %v4682 = vunpack.c.h.b16 %v607
        %v4683 = vunpack.c.l.b16 %v608
        %v4684 = vunpack.c.h.b16 %v608
        %v4685 = vunpack.c.l.b16 %v609
        %v4686 = vunpack.c.h.b16 %v609
        %v4687 = vunpack.c.l.b16 %v610
        %v4688 = vunpack.c.h.b16 %v610
        %v4689 = vunpack.c.l.b16 %v611
        %v4690 = vunpack.c.h.b16 %v611
        %v4691 = vunpack.c.l.b16 %v612
        %v4692 = vunpack.c.h.b16 %v612
        %v4693 = vunpack.c.l.b16 %v613
        %v4694 = vunpack.c.h.b16 %v613
        %v4695 = vunpack.c.l.b16 %v614
        %v4696 = vunpack.c.h.b16 %v614
        %v4697 = vunpack.c.l.b16 %v615
        %v4698 = vunpack.c.h.b16 %v615
        %v4699 = vunpack.c.l.b16 %v616
        %v4700 = vunpack.c.h.b16 %v616
        %v4701 = vunpack.c.l.b16 %v617
        %v4702 = vunpack.c.h.b16 %v617
        %v4703 = vunpack.c.l.b16 %v618
        %v4704 = vunpack.c.h.b16 %v618
        %v4705 = vunpack.c.l.b16 %v619
        %v4706 = vunpack.c.h.b16 %v619
        %v4707 = vunpack.c.l.b16 %v620
        %v4708 = vunpack.c.h.b16 %v620
        %v4709 = vunpack.c.l.b16 %v621
        %v4710 = vunpack.c.h.b16 %v621
        %v4711 = vunpack.c.l.b16 %v622
        %v4712 = vunpack.c.h.b16 %v622
        %v4713 = vunpack.c.l.b16 %v623
        %v4714 = vunpack.c.h.b16 %v623
        %v4715 = vunpack.c.l.b16 %v624
        %v4716 = vunpack.c.h.b16 %v624
        %v4717 = vunpack.c.l.b16 %v625
        %v4718 = vunpack.c.h.b16 %v625
        %v4719 = vunpack.c.l.b16 %v626
        %v4720 = vunpack.c.h.b16 %v626
        %v4721 = vunpack.c.l.b16 %v627
        %v4722 = vunpack.c.h.b16 %v627
        %v4723 = vunpack.c.l.b16 %v628
        %v4724 = vunpack.c.h.b16 %v628
        %v4725 = vunpack.c.l.b16 %v629
        %v4726 = vunpack.c.h.b16 %v629
        %v4727 = vunpack.c.l.b16 %v630
        %v4728 = vunpack.c.h.b16 %v630
        %v4729 = vunpack.c.l.b16 %v631
        %v4730 = vunpack.c.h.b16 %v631
        %v4731 = vunpack.c.l.b16 %v632
        %v4732 = vunpack.c.h.b16 %v632
        %v4733 = vunpack.c.l.b16 %v633
        %v4734 = vunpack.c.h.b16 %v633
        %v4735 = vunpack.c.l.b16 %v634
        %v4736 = vunpack.c.h.b16 %v634
        %v4737 = vunpack.c.l.b16 %v635
        %v4738 = vunpack.c.h.b16 %v635
        %v4739 = vunpack.c.l.b16 %v636
        %v4740 = vunpack.c.h.b16 %v636
        %v4741 = vunpack.c.l.b16 %v637
        %v4742 = vunpack.c.h.b16 %v637
        %v4743 = vunpack.c.l.b16 %v638
        %v4744 = vunpack.c.h.b16 %v638
        %v4745 = vunpack.c.l.b16 %v639
        %v4746 = vunpack.c.h.b16 %v639
        %v4747 = vunpack.c.l.b16 %v640
        %v4748 = vunpack.c.h.b16 %v640
        %v4749 = vunpack.c.l.b16 %v641
        %v4750 = vunpack.c.h.b16 %v641
        %v4751 = vunpack.c.l.b16 %v642
        %v4752 = vunpack.c.h.b16 %v642
        %v4753 = vunpack.c.l.b16 %v643
        %v4754 = vunpack.c.h.b16 %v643
        %v4755 = vunpack.c.l.b16 %v644
        %v4756 = vunpack.c.h.b16 %v644
        %v4757 = vunpack.c.l.b16 %v645
        %v4758 = vunpack.c.h.b16 %v645
        %v4759 = vunpack.c.l.b16 %v646
        %v4760 = vunpack.c.h.b16 %v646
        %v4761 = vunpack.c.l.b16 %v647
        %v4762 = vunpack.c.h.b16 %v647
        %v4763 = vunpack.c.l.b16 %v648
        %v4764 = vunpack.c.h.b16 %v648
        %v4765 = vunpack.c.l.b16 %v649
        %v4766 = vunpack.c.h.b16 %v649
        %v4767 = vunpack.c.l.b16 %v650
        %v4768 = vunpack.c.h.b16 %v650
        %v4769 = vunpack.c.l.b16 %v651
        %v4770 = vunpack.c.h.b16 %v651
        %v4771 = vunpack.c.l.b16 %v652
        %v4772 = vunpack.c.h.b16 %v652
        %v4773 = vunpack.c.l.b16 %v653
        %v4774 = vunpack.c.h.b16 %v653
        %v4775 = vunpack.c.l.b16 %v654
        %v4776 = vunpack.c.h.b16 %v654
        %v4777 = vunpack.c.l.b16 %v655
        %v4778 = vunpack.c.h.b16 %v655
        %v4779 = vunpack.c.l.b16 %v656
        %v4780 = vunpack.c.h.b16 %v656
        %v4781 = vunpack.c.l.b16 %v657
        %v4782 = vunpack.c.h.b16 %v657
        %v4783 = vunpack.c.l.b16 %v658
        %v4784 = vunpack.c.h.b16 %v658
        %v4785 = vunpack.c.l.b16 %v659
        %v4786 = vunpack.c.h.b16 %v659
        %v4787 = vunpack.c.l.b16 %v660
        %v4788 = vunpack.c.h.b16 %v660
        %v4789 = vunpack.c.l.b16 %v661
        %v4790 = vunpack.c.h.b16 %v661
        %v4791 = vunpack.c.l.b16 %v662
        %v4792 = vunpack.c.h.b16 %v662
        %v4793 = vunpack.c.l.b16 %v663
        %v4794 = vunpack.c.h.b16 %v663
        %v4795 = vunpack.c.l.b16 %v664
        %v4796 = vunpack.c.h.b16 %v664
        %v4797 = vunpack.c.l.b16 %v665
        %v4798 = vunpack.c.h.b16 %v665
        %v4799 = vunpack.c.l.b16 %v666
        %v4800 = vunpack.c.h.b16 %v666
        %v4801 = vunpack.c.l.b16 %v667
        %v4802 = vunpack.c.h.b16 %v667
        %v4803 = vunpack.c.l.b16 %v668
        %v4804 = vunpack.c.h.b16 %v668
        %v4805 = vunpack.c.l.b16 %v669
        %v4806 = vunpack.c.h.b16 %v669
        %v4807 = vunpack.c.l.b16 %v670
        %v4808 = vunpack.c.h.b16 %v670
        %v4809 = vpack.c.b16 %v4569, %v4553
        %v4810 = vpack.c.b16 %v4570, %v4554
        %v4811 = vpack.c.b16 %v4571, %v4555
        %v4812 = vpack.c.b16 %v4572, %v4556
        %v4813 = vpack.c.b16 %v4573, %v4557
        %v4814 = vpack.c.b16 %v4574, %v4558
        %v4815 = vpack.c.b16 %v4575, %v4559
        %v4816 = vpack.c.b16 %v4576, %v4560
        %v4817 = vpack.c.b16 %v4577, %v4561
        %v4818 = vpack.c.b16 %v4578, %v4562
        %v4819 = vpack.c.b16 %v4579, %v4563
        %v4820 = vpack.c.b16 %v4580, %v4564
        %v4821 = vpack.c.b16 %v4581, %v4565
        %v4822 = vpack.c.b16 %v4582, %v4566
        %v4823 = vpack.c.b16 %v4583, %v4567
        %v4824 = vpack.c.b16 %v4584, %v4568
        %v4825 = vpack.c.b16 %v4601, %v4585
        %v4826 = vpack.c.b16 %v4602, %v4586
        %v4827 = vpack.c.b16 %v4603, %v4587
        %v4828 = vpack.c.b16 %v4604, %v4588
        %v4829 = vpack.c.b16 %v4605, %v4589
        %v4830 = vpack.c.b16 %v4606, %v4590
        %v4831 = vpack.c.b16 %v4607, %v4591
        %v4832 = vpack.c.b16 %v4608, %v4592
        %v4833 = vpack.c.b16 %v4609, %v4593
        %v4834 = vpack.c.b16 %v4610, %v4594
        %v4835 = vpack.c.b16 %v4611, %v4595
        %v4836 = vpack.c.b16 %v4612, %v4596
        %v4837 = vpack.c.b16 %v4613, %v4597
        %v4838 = vpack.c.b16 %v4614, %v4598
        %v4839 = vpack.c.b16 %v4615, %v4599
        %v4840 = vpack.c.b16 %v4616, %v4600
        %v4841 = vpack.c.b16 %v4633, %v4617
        %v4842 = vpack.c.b16 %v4634, %v4618
        %v4843 = vpack.c.b16 %v4635, %v4619
        %v4844 = vpack.c.b16 %v4636, %v4620
        %v4845 = vpack.c.b16 %v4637, %v4621
        %v4846 = vpack.c.b16 %v4638, %v4622
        %v4847 = vpack.c.b16 %v4639, %v4623
        %v4848 = vpack.c.b16 %v4640, %v4624
        %v4849 = vpack.c.b16 %v4641, %v4625
        %v4850 = vpack.c.b16 %v4642, %v4626
        %v4851 = vpack.c.b16 %v4643, %v4627
        %v4852 = vpack.c.b16 %v4644, %v4628
        %v4853 = vpack.c.b16 %v4645, %v4629
        %v4854 = vpack.c.b16 %v4646, %v4630
        %v4855 = vpack.c.b16 %v4647, %v4631
        %v4856 = vpack.c.b16 %v4648, %v4632
        %v4857 = vpack.c.b16 %v4665, %v4649
        %v4858 = vpack.c.b16 %v4666, %v4650
        %v4859 = vpack.c.b16 %v4667, %v4651
        %v4860 = vpack.c.b16 %v4668, %v4652
        %v4861 = vpack.c.b16 %v4669, %v4653
        %v4862 = vpack.c.b16 %v4670, %v4654
        %v4863 = vpack.c.b16 %v4671, %v4655
        %v4864 = vpack.c.b16 %v4672, %v4656
        %v4865 = vpack.c.b16 %v4673, %v4657
        %v4866 = vpack.c.b16 %v4674, %v4658
        %v4867 = vpack.c.b16 %v4675, %v4659
        %v4868 = vpack.c.b16 %v4676, %v4660
        %v4869 = vpack.c.b16 %v4677, %v4661
        %v4870 = vpack.c.b16 %v4678, %v4662
        %v4871 = vpack.c.b16 %v4679, %v4663
        %v4872 = vpack.c.b16 %v4680, %v4664
        %v4873 = vpack.c.b16 %v4697, %v4681
        %v4874 = vpack.c.b16 %v4698, %v4682
        %v4875 = vpack.c.b16 %v4699, %v4683
        %v4876 = vpack.c.b16 %v4700, %v4684
        %v4877 = vpack.c.b16 %v4701, %v4685
        %v4878 = vpack.c.b16 %v4702, %v4686
        %v4879 = vpack.c.b16 %v4703, %v4687
        %v4880 = vpack.c.b16 %v4704, %v4688
        %v4881 = vpack.c.b16 %v4705, %v4689
        %v4882 = vpack.c.b16 %v4706, %v4690
        %v4883 = vpack.c.b16 %v4707, %v4691
        %v4884 = vpack.c.b16 %v4708, %v4692
        %v4885 = vpack.c.b16 %v4709, %v4693
        %v4886 = vpack.c.b16 %v4710, %v4694
        %v4887 = vpack.c.b16 %v4711, %v4695
        %v4888 = vpack.c.b16 %v4712, %v4696
        %v4889 = vpack.c.b16 %v4729, %v4713
        %v4890 = vpack.c.b16 %v4730, %v4714
        %v4891 = vpack.c.b16 %v4731, %v4715
        %v4892 = vpack.c.b16 %v4732, %v4716
        %v4893 = vpack.c.b16 %v4733, %v4717
        %v4894 = vpack.c.b16 %v4734, %v4718
        %v4895 = vpack.c.b16 %v4735, %v4719
        %v4896 = vpack.c.b16 %v4736, %v4720
        %v4897 = vpack.c.b16 %v4737, %v4721
        %v4898 = vpack.c.b16 %v4738, %v4722
        %v4899 = vpack.c.b16 %v4739, %v4723
        %v4900 = vpack.c.b16 %v4740, %v4724
        %v4901 = vpack.c.b16 %v4741, %v4725
        %v4902 = vpack.c.b16 %v4742, %v4726
        %v4903 = vpack.c.b16 %v4743, %v4727
        %v4904 = vpack.c.b16 %v4744, %v4728
        %v4905 = vpack.c.b16 %v4761, %v4745
        %v4906 = vpack.c.b16 %v4762, %v4746
        %v4907 = vpack.c.b16 %v4763, %v4747
        %v4908 = vpack.c.b16 %v4764, %v4748
        %v4909 = vpack.c.b16 %v4765, %v4749
        %v4910 = vpack.c.b16 %v4766, %v4750
        %v4911 = vpack.c.b16 %v4767, %v4751
        %v4912 = vpack.c.b16 %v4768, %v4752
        %v4913 = vpack.c.b16 %v4769, %v4753
        %v4914 = vpack.c.b16 %v4770, %v4754
        %v4915 = vpack.c.b16 %v4771, %v4755
        %v4916 = vpack.c.b16 %v4772, %v4756
        %v4917 = vpack.c.b16 %v4773, %v4757
        %v4918 = vpack.c.b16 %v4774, %v4758
        %v4919 = vpack.c.b16 %v4775, %v4759
        %v4920 = vpack.c.b16 %v4776, %v4760
        %v4921 = vpack.c.b16 %v4793, %v4777
        %v4922 = vpack.c.b16 %v4794, %v4778
        %v4923 = vpack.c.b16 %v4795, %v4779
        %v4924 = vpack.c.b16 %v4796, %v4780
        %v4925 = vpack.c.b16 %v4797, %v4781
        %v4926 = vpack.c.b16 %v4798, %v4782
        %v4927 = vpack.c.b16 %v4799, %v4783
        %v4928 = vpack.c.b16 %v4800, %v4784
        %v4929 = vpack.c.b16 %v4801, %v4785
        %v4930 = vpack.c.b16 %v4802, %v4786
        %v4931 = vpack.c.b16 %v4803, %v4787
        %v4932 = vpack.c.b16 %v4804, %v4788
        %v4933 = vpack.c.b16 %v4805, %v4789
        %v4934 = vpack.c.b16 %v4806, %v4790
        %v4935 = vpack.c.b16 %v4807, %v4791
        %v4936 = vpack.c.b16 %v4808, %v4792
        %5065 = vmatprep.subr.bf16.mxu0 %v4810
        %5066 = vmatpush1.bf16.msra.mxu0 %v4809
        %5067 = vmatprep.subr.bf16.mxu0 %v4826
        %5068 = vmatpush1.bf16.msra.mxu0 %v4825
        %5069 = vmatprep.subr.bf16.mxu0 %v4842
        %5070 = vmatpush1.bf16.msra.mxu0 %v4841
        %5071 = vmatprep.subr.bf16.mxu0 %v4858
        %5072 = vmatpush1.bf16.msra.mxu0 %v4857
        %5073 = vmatprep.subr.bf16.mxu0 %v4874
        %5074 = vmatpush1.bf16.msra.mxu0 %v4873
        %5075 = vmatprep.subr.bf16.mxu0 %v4890
        %5076 = vmatpush1.bf16.msra.mxu0 %v4889
        %5077 = vmatprep.subr.bf16.mxu0 %v4906
        %5078 = vmatpush1.bf16.msra.mxu0 %v4905
        %5079 = vmatprep.subr.bf16.mxu0 %v4922
        %5080 = vmatpush1.bf16.msra.mxu0 %v4921
        %5081 = vmatprep.subr.bf16.mxu0 0
        %5082 = vmatpush1.bf16.msra.mxu0 0
        %5083 = vmatprep.subr.bf16.mxu0 0
        %5084 = vmatpush1.bf16.msra.mxu0 0
        %5085 = vmatprep.subr.bf16.mxu0 0
        %5086 = vmatpush1.bf16.msra.mxu0 0
        %5087 = vmatprep.subr.bf16.mxu0 0
        %5088 = vmatpush1.bf16.msra.mxu0 0
        %5089 = vmatprep.subr.bf16.mxu0 0
        %5090 = vmatpush1.bf16.msra.mxu0 0
        %5091 = vmatprep.subr.bf16.mxu0 0
        %5092 = vmatpush1.bf16.msra.mxu0 0
        %5093 = vmatprep.subr.bf16.mxu0 0
        %5094 = vmatpush1.bf16.msra.mxu0 0
        %5095 = vmatprep.subr.bf16.mxu0 0
        %5096 = vmatpush1.bf16.msra.mxu0 0
        %5097 = vmatprep.mubr.bf16.mxu0 0
        %5098 = vmatmul.mubr.bf16.gmra.mrb[0].mxu0 %v542
        %v5099 = vpop.f32.mrb[0].mxu0
        %v5100 = vadd.f32 %v3845, %v5099
        %v5101 = vpop.f32.mrb[0].mxu0
        %v5102 = vadd.f32 %v3847, %v5101
        %v5103 = vpop.f32.mrb[0].mxu0
        %v5104 = vpop.f32.mrb[0].mxu0
        %5105 = vdwg.mxu0
        %5106 = vmatprep.subr.bf16.mxu0 %v4812
        %5107 = vmatpush1.bf16.msra.mxu0 %v4811
        %5108 = vmatprep.subr.bf16.mxu0 %v4828
        %5109 = vmatpush1.bf16.msra.mxu0 %v4827
        %5110 = vmatprep.subr.bf16.mxu0 %v4844
        %5111 = vmatpush1.bf16.msra.mxu0 %v4843
        %5112 = vmatprep.subr.bf16.mxu0 %v4860
        %5113 = vmatpush1.bf16.msra.mxu0 %v4859
        %5114 = vmatprep.subr.bf16.mxu0 %v4876
        %5115 = vmatpush1.bf16.msra.mxu0 %v4875
        %5116 = vmatprep.subr.bf16.mxu0 %v4892
        %5117 = vmatpush1.bf16.msra.mxu0 %v4891
        %5118 = vmatprep.subr.bf16.mxu0 %v4908
        %5119 = vmatpush1.bf16.msra.mxu0 %v4907
        %5120 = vmatprep.subr.bf16.mxu0 %v4924
        %5121 = vmatpush1.bf16.msra.mxu0 %v4923
        %5122 = vmatprep.subr.bf16.mxu0 0
        %5123 = vmatpush1.bf16.msra.mxu0 0
        %5124 = vmatprep.subr.bf16.mxu0 0
        %5125 = vmatpush1.bf16.msra.mxu0 0
        %5126 = vmatprep.subr.bf16.mxu0 0
        %5127 = vmatpush1.bf16.msra.mxu0 0
        %5128 = vmatprep.subr.bf16.mxu0 0
        %5129 = vmatpush1.bf16.msra.mxu0 0
        %5130 = vmatprep.subr.bf16.mxu0 0
        %5131 = vmatpush1.bf16.msra.mxu0 0
        %5132 = vmatprep.subr.bf16.mxu0 0
        %5133 = vmatpush1.bf16.msra.mxu0 0
        %5134 = vmatprep.subr.bf16.mxu0 0
        %5135 = vmatpush1.bf16.msra.mxu0 0
        %5136 = vmatprep.subr.bf16.mxu0 0
        %5137 = vmatpush1.bf16.msra.mxu0 0
        %5138 = vmatprep.mubr.bf16.mxu0 0
        %5139 = vmatmul.mubr.bf16.gmra.mrb[0].mxu0 %v542
        %v5140 = vpop.f32.mrb[0].mxu0
        %v5141 = vadd.f32 %v3927, %v5140
        %v5142 = vpop.f32.mrb[0].mxu0
        %v5143 = vadd.f32 %v3929, %v5142
        %v5144 = vpop.f32.mrb[0].mxu0
        %v5145 = vpop.f32.mrb[0].mxu0
        %5146 = vdwg.mxu0
        %5147 = vmatprep.subr.bf16.mxu0 %v4814
        %5148 = vmatpush1.bf16.msra.mxu0 %v4813
        %5149 = vmatprep.subr.bf16.mxu0 %v4830
        %5150 = vmatpush1.bf16.msra.mxu0 %v4829
        %5151 = vmatprep.subr.bf16.mxu0 %v4846
        %5152 = vmatpush1.bf16.msra.mxu0 %v4845
        %5153 = vmatprep.subr.bf16.mxu0 %v4862
        %5154 = vmatpush1.bf16.msra.mxu0 %v4861
        %5155 = vmatprep.subr.bf16.mxu0 %v4878
        %5156 = vmatpush1.bf16.msra.mxu0 %v4877
        %5157 = vmatprep.subr.bf16.mxu0 %v4894
        %5158 = vmatpush1.bf16.msra.mxu0 %v4893
        %5159 = vmatprep.subr.bf16.mxu0 %v4910
        %5160 = vmatpush1.bf16.msra.mxu0 %v4909
        %5161 = vmatprep.subr.bf16.mxu0 %v4926
        %5162 = vmatpush1.bf16.msra.mxu0 %v4925
        %5163 = vmatprep.subr.bf16.mxu0 0
        %5164 = vmatpush1.bf16.msra.mxu0 0
        %5165 = vmatprep.subr.bf16.mxu0 0
        %5166 = vmatpush1.bf16.msra.mxu0 0
        %5167 = vmatprep.subr.bf16.mxu0 0
        %5168 = vmatpush1.bf16.msra.mxu0 0
        %5169 = vmatprep.subr.bf16.mxu0 0
        %5170 = vmatpush1.bf16.msra.mxu0 0
        %5171 = vmatprep.subr.bf16.mxu0 0
        %5172 = vmatpush1.bf16.msra.mxu0 0
        %5173 = vmatprep.subr.bf16.mxu0 0
        %5174 = vmatpush1.bf16.msra.mxu0 0
        %5175 = vmatprep.subr.bf16.mxu0 0
        %5176 = vmatpush1.bf16.msra.mxu0 0
        %5177 = vmatprep.subr.bf16.mxu0 0
        %5178 = vmatpush1.bf16.msra.mxu0 0
        %5179 = vmatprep.mubr.bf16.mxu0 0
        %5180 = vmatmul.mubr.bf16.gmra.mrb[0].mxu0 %v542
        %v5181 = vpop.f32.mrb[0].mxu0
        %v5182 = vadd.f32 %v4009, %v5181
        %v5183 = vpop.f32.mrb[0].mxu0
        %v5184 = vadd.f32 %v4011, %v5183
        %v5185 = vpop.f32.mrb[0].mxu0
        %v5186 = vpop.f32.mrb[0].mxu0
        %5187 = vdwg.mxu0
        %5188 = vmatprep.subr.bf16.mxu0 %v4816
        %5189 = vmatpush1.bf16.msra.mxu0 %v4815
        %5190 = vmatprep.subr.bf16.mxu0 %v4832
        %5191 = vmatpush1.bf16.msra.mxu0 %v4831
        %5192 = vmatprep.subr.bf16.mxu0 %v4848
        %5193 = vmatpush1.bf16.msra.mxu0 %v4847
        %5194 = vmatprep.subr.bf16.mxu0 %v4864
        %5195 = vmatpush1.bf16.msra.mxu0 %v4863
        %5196 = vmatprep.subr.bf16.mxu0 %v4880
        %5197 = vmatpush1.bf16.msra.mxu0 %v4879
        %5198 = vmatprep.subr.bf16.mxu0 %v4896
        %5199 = vmatpush1.bf16.msra.mxu0 %v4895
        %5200 = vmatprep.subr.bf16.mxu0 %v4912
        %5201 = vmatpush1.bf16.msra.mxu0 %v4911
        %5202 = vmatprep.subr.bf16.mxu0 %v4928
        %5203 = vmatpush1.bf16.msra.mxu0 %v4927
        %5204 = vmatprep.subr.bf16.mxu0 0
        %5205 = vmatpush1.bf16.msra.mxu0 0
        %5206 = vmatprep.subr.bf16.mxu0 0
        %5207 = vmatpush1.bf16.msra.mxu0 0
        %5208 = vmatprep.subr.bf16.mxu0 0
        %5209 = vmatpush1.bf16.msra.mxu0 0
        %5210 = vmatprep.subr.bf16.mxu0 0
        %5211 = vmatpush1.bf16.msra.mxu0 0
        %5212 = vmatprep.subr.bf16.mxu0 0
        %5213 = vmatpush1.bf16.msra.mxu0 0
        %5214 = vmatprep.subr.bf16.mxu0 0
        %5215 = vmatpush1.bf16.msra.mxu0 0
        %5216 = vmatprep.subr.bf16.mxu0 0
        %5217 = vmatpush1.bf16.msra.mxu0 0
        %5218 = vmatprep.subr.bf16.mxu0 0
        %5219 = vmatpush1.bf16.msra.mxu0 0
        %5220 = vmatprep.mubr.bf16.mxu0 0
        %5221 = vmatmul.mubr.bf16.gmra.mrb[0].mxu0 %v542
        %v5222 = vpop.f32.mrb[0].mxu0
        %v5223 = vadd.f32 %v4091, %v5222
        %v5224 = vpop.f32.mrb[0].mxu0
        %v5225 = vadd.f32 %v4093, %v5224
        %v5226 = vpop.f32.mrb[0].mxu0
        %v5227 = vpop.f32.mrb[0].mxu0
        %5228 = vdwg.mxu0
        %5229 = vmatprep.subr.bf16.mxu0 %v4818
        %5230 = vmatpush1.bf16.msra.mxu0 %v4817
        %5231 = vmatprep.subr.bf16.mxu0 %v4834
        %5232 = vmatpush1.bf16.msra.mxu0 %v4833
        %5233 = vmatprep.subr.bf16.mxu0 %v4850
        %5234 = vmatpush1.bf16.msra.mxu0 %v4849
        %5235 = vmatprep.subr.bf16.mxu0 %v4866
        %5236 = vmatpush1.bf16.msra.mxu0 %v4865
        %5237 = vmatprep.subr.bf16.mxu0 %v4882
        %5238 = vmatpush1.bf16.msra.mxu0 %v4881
        %5239 = vmatprep.subr.bf16.mxu0 %v4898
        %5240 = vmatpush1.bf16.msra.mxu0 %v4897
        %5241 = vmatprep.subr.bf16.mxu0 %v4914
        %5242 = vmatpush1.bf16.msra.mxu0 %v4913
        %5243 = vmatprep.subr.bf16.mxu0 %v4930
        %5244 = vmatpush1.bf16.msra.mxu0 %v4929
        %5245 = vmatprep.subr.bf16.mxu0 0
        %5246 = vmatpush1.bf16.msra.mxu0 0
        %5247 = vmatprep.subr.bf16.mxu0 0
        %5248 = vmatpush1.bf16.msra.mxu0 0
        %5249 = vmatprep.subr.bf16.mxu0 0
        %5250 = vmatpush1.bf16.msra.mxu0 0
        %5251 = vmatprep.subr.bf16.mxu0 0
        %5252 = vmatpush1.bf16.msra.mxu0 0
        %5253 = vmatprep.subr.bf16.mxu0 0
        %5254 = vmatpush1.bf16.msra.mxu0 0
        %5255 = vmatprep.subr.bf16.mxu0 0
        %5256 = vmatpush1.bf16.msra.mxu0 0
        %5257 = vmatprep.subr.bf16.mxu0 0
        %5258 = vmatpush1.bf16.msra.mxu0 0
        %5259 = vmatprep.subr.bf16.mxu0 0
        %5260 = vmatpush1.bf16.msra.mxu0 0
        %5261 = vmatprep.mubr.bf16.mxu0 0
        %5262 = vmatmul.mubr.bf16.gmra.mrb[0].mxu0 %v542
        %v5263 = vpop.f32.mrb[0].mxu0
        %v5264 = vadd.f32 %v4173, %v5263
        %v5265 = vpop.f32.mrb[0].mxu0
        %v5266 = vadd.f32 %v4175, %v5265
        %v5267 = vpop.f32.mrb[0].mxu0
        %v5268 = vpop.f32.mrb[0].mxu0
        %5269 = vdwg.mxu0
        %5270 = vmatprep.subr.bf16.mxu0 %v4820
        %5271 = vmatpush1.bf16.msra.mxu0 %v4819
        %5272 = vmatprep.subr.bf16.mxu0 %v4836
        %5273 = vmatpush1.bf16.msra.mxu0 %v4835
        %5274 = vmatprep.subr.bf16.mxu0 %v4852
        %5275 = vmatpush1.bf16.msra.mxu0 %v4851
        %5276 = vmatprep.subr.bf16.mxu0 %v4868
        %5277 = vmatpush1.bf16.msra.mxu0 %v4867
        %5278 = vmatprep.subr.bf16.mxu0 %v4884
        %5279 = vmatpush1.bf16.msra.mxu0 %v4883
        %5280 = vmatprep.subr.bf16.mxu0 %v4900
        %5281 = vmatpush1.bf16.msra.mxu0 %v4899
        %5282 = vmatprep.subr.bf16.mxu0 %v4916
        %5283 = vmatpush1.bf16.msra.mxu0 %v4915
        %5284 = vmatprep.subr.bf16.mxu0 %v4932
        %5285 = vmatpush1.bf16.msra.mxu0 %v4931
        %5286 = vmatprep.subr.bf16.mxu0 0
        %5287 = vmatpush1.bf16.msra.mxu0 0
        %5288 = vmatprep.subr.bf16.mxu0 0
        %5289 = vmatpush1.bf16.msra.mxu0 0
        %5290 = vmatprep.subr.bf16.mxu0 0
        %5291 = vmatpush1.bf16.msra.mxu0 0
        %5292 = vmatprep.subr.bf16.mxu0 0
        %5293 = vmatpush1.bf16.msra.mxu0 0
        %5294 = vmatprep.subr.bf16.mxu0 0
        %5295 = vmatpush1.bf16.msra.mxu0 0
        %5296 = vmatprep.subr.bf16.mxu0 0
        %5297 = vmatpush1.bf16.msra.mxu0 0
        %5298 = vmatprep.subr.bf16.mxu0 0
        %5299 = vmatpush1.bf16.msra.mxu0 0
        %5300 = vmatprep.subr.bf16.mxu0 0
        %5301 = vmatpush1.bf16.msra.mxu0 0
        %5302 = vmatprep.mubr.bf16.mxu0 0
        %5303 = vmatmul.mubr.bf16.gmra.mrb[0].mxu0 %v542
        %v5304 = vpop.f32.mrb[0].mxu0
        %v5305 = vadd.f32 %v4255, %v5304
        %v5306 = vpop.f32.mrb[0].mxu0
        %v5307 = vadd.f32 %v4257, %v5306
        %v5308 = vpop.f32.mrb[0].mxu0
        %v5309 = vpop.f32.mrb[0].mxu0
        %5310 = vdwg.mxu0
        %5311 = vmatprep.subr.bf16.mxu0 %v4822
        %5312 = vmatpush1.bf16.msra.mxu0 %v4821
        %5313 = vmatprep.subr.bf16.mxu0 %v4838
        %5314 = vmatpush1.bf16.msra.mxu0 %v4837
        %5315 = vmatprep.subr.bf16.mxu0 %v4854
        %5316 = vmatpush1.bf16.msra.mxu0 %v4853
        %5317 = vmatprep.subr.bf16.mxu0 %v4870
        %5318 = vmatpush1.bf16.msra.mxu0 %v4869
        %5319 = vmatprep.subr.bf16.mxu0 %v4886
        %5320 = vmatpush1.bf16.msra.mxu0 %v4885
        %5321 = vmatprep.subr.bf16.mxu0 %v4902
        %5322 = vmatpush1.bf16.msra.mxu0 %v4901
        %5323 = vmatprep.subr.bf16.mxu0 %v4918
        %5324 = vmatpush1.bf16.msra.mxu0 %v4917
        %5325 = vmatprep.subr.bf16.mxu0 %v4934
        %5326 = vmatpush1.bf16.msra.mxu0 %v4933
        %5327 = vmatprep.subr.bf16.mxu0 0
        %5328 = vmatpush1.bf16.msra.mxu0 0
        %5329 = vmatprep.subr.bf16.mxu0 0
        %5330 = vmatpush1.bf16.msra.mxu0 0
        %5331 = vmatprep.subr.bf16.mxu0 0
        %5332 = vmatpush1.bf16.msra.mxu0 0
        %5333 = vmatprep.subr.bf16.mxu0 0
        %5334 = vmatpush1.bf16.msra.mxu0 0
        %5335 = vmatprep.subr.bf16.mxu0 0
        %5336 = vmatpush1.bf16.msra.mxu0 0
        %5337 = vmatprep.subr.bf16.mxu0 0
        %5338 = vmatpush1.bf16.msra.mxu0 0
        %5339 = vmatprep.subr.bf16.mxu0 0
        %5340 = vmatpush1.bf16.msra.mxu0 0
        %5341 = vmatprep.subr.bf16.mxu0 0
        %5342 = vmatpush1.bf16.msra.mxu0 0
        %5343 = vmatprep.mubr.bf16.mxu0 0
        %5344 = vmatmul.mubr.bf16.gmra.mrb[0].mxu0 %v542
        %v5345 = vpop.f32.mrb[0].mxu0
        %v5346 = vadd.f32 %v4337, %v5345
        %v5347 = vpop.f32.mrb[0].mxu0
        %v5348 = vadd.f32 %v4339, %v5347
        %v5349 = vpop.f32.mrb[0].mxu0
        %v5350 = vpop.f32.mrb[0].mxu0
        %5351 = vdwg.mxu0
        %5352 = vmatprep.subr.bf16.mxu0 %v4824
        %5353 = vmatpush1.bf16.msra.mxu0 %v4823
        %5354 = vmatprep.subr.bf16.mxu0 %v4840
        %5355 = vmatpush1.bf16.msra.mxu0 %v4839
        %5356 = vmatprep.subr.bf16.mxu0 %v4856
        %5357 = vmatpush1.bf16.msra.mxu0 %v4855
        %5358 = vmatprep.subr.bf16.mxu0 %v4872
        %5359 = vmatpush1.bf16.msra.mxu0 %v4871
        %5360 = vmatprep.subr.bf16.mxu0 %v4888
        %5361 = vmatpush1.bf16.msra.mxu0 %v4887
        %5362 = vmatprep.subr.bf16.mxu0 %v4904
        %5363 = vmatpush1.bf16.msra.mxu0 %v4903
        %5364 = vmatprep.subr.bf16.mxu0 %v4920
        %5365 = vmatpush1.bf16.msra.mxu0 %v4919
        %5366 = vmatprep.subr.bf16.mxu0 %v4936
        %5367 = vmatpush1.bf16.msra.mxu0 %v4935
        %5368 = vmatprep.subr.bf16.mxu0 0
        %5369 = vmatpush1.bf16.msra.mxu0 0
        %5370 = vmatprep.subr.bf16.mxu0 0
        %5371 = vmatpush1.bf16.msra.mxu0 0
        %5372 = vmatprep.subr.bf16.mxu0 0
        %5373 = vmatpush1.bf16.msra.mxu0 0
        %5374 = vmatprep.subr.bf16.mxu0 0
        %5375 = vmatpush1.bf16.msra.mxu0 0
        %5376 = vmatprep.subr.bf16.mxu0 0
        %5377 = vmatpush1.bf16.msra.mxu0 0
        %5378 = vmatprep.subr.bf16.mxu0 0
        %5379 = vmatpush1.bf16.msra.mxu0 0
        %5380 = vmatprep.subr.bf16.mxu0 0
        %5381 = vmatpush1.bf16.msra.mxu0 0
        %5382 = vmatprep.subr.bf16.mxu0 0
        %5383 = vmatpush1.bf16.msra.mxu0 0
        %5384 = vmatprep.mubr.bf16.mxu0 0
        %5385 = vmatmul.mubr.bf16.gmra.mrb[0].mxu0 %v542
        %v5386 = vpop.f32.mrb[0].mxu0
        %v5387 = vadd.f32 %v4419, %v5386
        %v5388 = vpop.f32.mrb[0].mxu0
        %v5389 = vadd.f32 %v4421, %v5388
        %v5390 = vpop.f32.mrb[0].mxu0
        %v5391 = vpop.f32.mrb[0].mxu0
        %5392 = vdwg.mxu0
        %v5393 = vld [vmem:[%s405] sm:$0xff]
        %v5394 = vld [vmem:[%s405 + $0x8] sm:$0xff]
        %v5397 = vlaneseq
        %v5398 = vshrl.u32 %v5397, 7
        %v5399 = vsub.s32 0, %v5398
        %v5400 = vrot.slane %v5393, %v5399
        %v5401 = vlaneseq
        %v5402 = vshrl.u32 %v5401, 7
        %v5403 = vsub.s32 1, %v5402
        %v5404 = vrot.slane %v5393, %v5403
        %v5405 = vlaneseq
        %v5406 = vshrl.u32 %v5405, 7
        %v5407 = vsub.s32 2, %v5406
        %v5408 = vrot.slane %v5393, %v5407
        %v5409 = vlaneseq
        %v5410 = vshrl.u32 %v5409, 7
        %v5411 = vsub.s32 3, %v5410
        %v5412 = vrot.slane %v5393, %v5411
        %v5413 = vlaneseq
        %v5414 = vshrl.u32 %v5413, 7
        %v5415 = vsub.s32 4, %v5414
        %v5416 = vrot.slane %v5393, %v5415
        %v5417 = vlaneseq
        %v5418 = vshrl.u32 %v5417, 7
        %v5419 = vsub.s32 5, %v5418
        %v5420 = vrot.slane %v5393, %v5419
        %v5421 = vlaneseq
        %v5422 = vshrl.u32 %v5421, 7
        %v5423 = vsub.s32 6, %v5422
        %v5424 = vrot.slane %v5393, %v5423
        %v5425 = vlaneseq
        %v5426 = vshrl.u32 %v5425, 7
        %v5427 = vsub.s32 7, %v5426
        %v5428 = vrot.slane %v5393, %v5427
        %v5429 = vlaneseq
        %v5430 = vshrl.u32 %v5429, 7
        %v5431 = vsub.s32 0, %v5430
        %v5432 = vrot.slane %v5394, %v5431
        %v5433 = vlaneseq
        %v5434 = vshrl.u32 %v5433, 7
        %v5435 = vsub.s32 1, %v5434
        %v5436 = vrot.slane %v5394, %v5435
        %v5437 = vlaneseq
        %v5438 = vshrl.u32 %v5437, 7
        %v5439 = vsub.s32 2, %v5438
        %v5440 = vrot.slane %v5394, %v5439
        %v5441 = vlaneseq
        %v5442 = vshrl.u32 %v5441, 7
        %v5443 = vsub.s32 3, %v5442
        %v5444 = vrot.slane %v5394, %v5443
        %v5445 = vlaneseq
        %v5446 = vshrl.u32 %v5445, 7
        %v5447 = vsub.s32 4, %v5446
        %v5448 = vrot.slane %v5394, %v5447
        %v5449 = vlaneseq
        %v5450 = vshrl.u32 %v5449, 7
        %v5451 = vsub.s32 5, %v5450
        %v5452 = vrot.slane %v5394, %v5451
        %v5453 = vlaneseq
        %v5454 = vshrl.u32 %v5453, 7
        %v5455 = vsub.s32 6, %v5454
        %v5456 = vrot.slane %v5394, %v5455
        %v5457 = vlaneseq
        %v5458 = vshrl.u32 %v5457, 7
        %v5459 = vsub.s32 7, %v5458
        %v5460 = vrot.slane %v5394, %v5459
        %v5477 = vadd.f32 %v5100, %v5400
        %v5478 = vadd.f32 %v5102, %v5404
        %v5479 = vadd.f32 %v5141, %v5408
        %v5480 = vadd.f32 %v5143, %v5412
        %v5481 = vadd.f32 %v5182, %v5416
        %v5482 = vadd.f32 %v5184, %v5420
        %v5483 = vadd.f32 %v5223, %v5424
        %v5484 = vadd.f32 %v5225, %v5428
        %v5485 = vadd.f32 %v5264, %v5432
        %v5486 = vadd.f32 %v5266, %v5436
        %v5487 = vadd.f32 %v5305, %v5440
        %v5488 = vadd.f32 %v5307, %v5444
        %v5489 = vadd.f32 %v5346, %v5448
        %v5490 = vadd.f32 %v5348, %v5452
        %v5491 = vadd.f32 %v5387, %v5456
        %v5492 = vadd.f32 %v5389, %v5460
        %v5493 = vxor.u32 %v5477, 2147483648
        %v5494 = vxor.u32 %v5478, 2147483648
        %v5495 = vxor.u32 %v5479, 2147483648
        %v5496 = vxor.u32 %v5480, 2147483648
        %v5497 = vmul.f32 %v5493, 1.442695
        %v5498 = vpow.pop %v5497
        %v5499 = vmul.f32 %v5494, 1.442695
        %v5500 = vpow.pop %v5499
        %v5501 = vmul.f32 %v5495, 1.442695
        %v5502 = vpow.pop %v5501
        %v5503 = vmul.f32 %v5496, 1.442695
        %v5504 = vpow.pop %v5503
        %v5505 = vadd.f32 %v5498, 1.0
        %v5506 = vadd.f32 %v5500, 1.0
        %v5507 = vadd.f32 %v5502, 1.0
        %v5508 = vadd.f32 %v5504, 1.0
        %v5509 = vrcp.pop %v5505
        %v5510 = vmul.f32 1.0, %v5509
        %v5511 = vrcp.pop %v5506
        %v5512 = vmul.f32 1.0, %v5511
        %v5513 = vrcp.pop %v5507
        %v5514 = vmul.f32 1.0, %v5513
        %v5515 = vrcp.pop %v5508
        %v5516 = vmul.f32 1.0, %v5515
        %v5517 = vxor.u32 %v5481, 2147483648
        %v5518 = vxor.u32 %v5482, 2147483648
        %v5519 = vxor.u32 %v5483, 2147483648
        %v5520 = vxor.u32 %v5484, 2147483648
        %v5521 = vmul.f32 %v5517, 1.442695
        %v5522 = vpow.pop %v5521
        %v5523 = vmul.f32 %v5518, 1.442695
        %v5524 = vpow.pop %v5523
        %v5525 = vmul.f32 %v5519, 1.442695
        %v5526 = vpow.pop %v5525
        %v5527 = vmul.f32 %v5520, 1.442695
        %v5528 = vpow.pop %v5527
        %v5529 = vadd.f32 %v5522, 1.0
        %v5530 = vadd.f32 %v5524, 1.0
        %v5531 = vadd.f32 %v5526, 1.0
        %v5532 = vadd.f32 %v5528, 1.0
        %v5533 = vrcp.pop %v5529
        %v5534 = vmul.f32 1.0, %v5533
        %v5535 = vrcp.pop %v5530
        %v5536 = vmul.f32 1.0, %v5535
        %v5537 = vrcp.pop %v5531
        %v5538 = vmul.f32 1.0, %v5537
        %v5539 = vrcp.pop %v5532
        %v5540 = vmul.f32 1.0, %v5539
        %v5541 = vtanh.pop %v5485
        %v5542 = vtanh.pop %v5486
        %v5543 = vtanh.pop %v5487
        %v5544 = vtanh.pop %v5488
        %v5545 = vxor.u32 %v5489, 2147483648
        %v5546 = vxor.u32 %v5490, 2147483648
        %v5547 = vxor.u32 %v5491, 2147483648
        %v5548 = vxor.u32 %v5492, 2147483648
        %v5549 = vmul.f32 %v5545, 1.442695
        %v5550 = vpow.pop %v5549
        %v5551 = vmul.f32 %v5546, 1.442695
        %v5552 = vpow.pop %v5551
        %v5553 = vmul.f32 %v5547, 1.442695
        %v5554 = vpow.pop %v5553
        %v5555 = vmul.f32 %v5548, 1.442695
        %v5556 = vpow.pop %v5555
        %v5557 = vadd.f32 %v5550, 1.0
        %v5558 = vadd.f32 %v5552, 1.0
        %v5559 = vadd.f32 %v5554, 1.0
        %v5560 = vadd.f32 %v5556, 1.0
        %v5561 = vrcp.pop %v5557
        %v5562 = vmul.f32 1.0, %v5561
        %v5563 = vrcp.pop %v5558
        %v5564 = vmul.f32 1.0, %v5563
        %v5565 = vrcp.pop %v5559
        %v5566 = vmul.f32 1.0, %v5565
        %v5567 = vrcp.pop %v5560
        %v5568 = vmul.f32 1.0, %v5567
        %v5570 = vcombine.high %v475, %v475
        %v5572 = vunpack.c.l.s4 1983009808
        %v5573 = vunpack.c.0.s8 %v5572
        %v5574 = vlaneseq
        %v5575 = vshrl.u32 %v5574, 7
        %v5576 = vsub.s32 %v5573, %v5575
        %v5577 = vrot.slane %v475, %v5576
        %v5579 = vunpack.c.l.s4 1983009808
        %v5580 = vunpack.c.0.s8 %v5579
        %v5581 = vlaneseq
        %v5582 = vshrl.u32 %v5581, 7
        %v5583 = vsub.s32 %v5580, %v5582
        %v5584 = vrot.slane %v5570, %v5583
        %v5585 = vcombine.high %v5577, %v5577
        %v5586 = vcombine.high %v5584, %v5584
        %v5591 = vmul.f32 %v5534, %v5577
        %v5592 = vmul.f32 %v5536, %v5585
        %v5593 = vmul.f32 %v5538, %v5584
        %v5594 = vmul.f32 %v5540, %v5586
        %v5595 = vmul.f32 %v5510, %v5541
        %v5596 = vmul.f32 %v5512, %v5542
        %v5597 = vmul.f32 %v5514, %v5543
        %v5598 = vmul.f32 %v5516, %v5544
        %v5599 = vadd.f32 %v5591, %v5595
        %v5600 = vadd.f32 %v5592, %v5596
        %v5601 = vadd.f32 %v5593, %v5597
        %v5602 = vadd.f32 %v5594, %v5598
        %v5603 = vtanh.pop %v5599
        %v5604 = vtanh.pop %v5600
        %v5605 = vtanh.pop %v5601
        %v5606 = vtanh.pop %v5602
        %v5607 = vmul.f32 %v5562, %v5603
        %v5608 = vmul.f32 %v5564, %v5604
        %v5609 = vmul.f32 %v5566, %v5605
        %v5610 = vmul.f32 %v5568, %v5606
        %v5611 = vpack.c.bf16 %v5599, %v5599
        %v5612 = vpack.c.bf16 %v5600, %v5600
        %v5613 = vpack.c.bf16 %v5601, %v5601
        %v5614 = vpack.c.bf16 %v5602, %v5602
        %v5616 = vlaneseq
        %v5617 = vshrl.u32 %v5616, 7
        %v5618 = vsub.s32 0, %v5617
        %v5619 = vrot.slane %v540, %v5618
        %v5685 = vunpack.c.l.b16 %v476
        %v5686 = vunpack.c.l.b16 %v477
        %v5687 = vunpack.c.l.b16 %v478
        %v5688 = vunpack.c.l.b16 %v479
        %v5689 = vunpack.c.l.b16 %v480
        %v5690 = vunpack.c.l.b16 %v481
        %v5691 = vunpack.c.l.b16 %v482
        %v5692 = vunpack.c.l.b16 %v483
        %v5693 = vunpack.c.l.b16 %v484
        %v5694 = vunpack.c.l.b16 %v485
        %v5695 = vunpack.c.l.b16 %v486
        %v5696 = vunpack.c.l.b16 %v487
        %v5697 = vunpack.c.l.b16 %v488
        %v5698 = vunpack.c.l.b16 %v489
        %v5699 = vunpack.c.l.b16 %v490
        %v5700 = vunpack.c.l.b16 %v491
        %v5701 = vunpack.c.l.b16 %v492
        %v5702 = vunpack.c.l.b16 %v493
        %v5703 = vunpack.c.l.b16 %v494
        %v5704 = vunpack.c.l.b16 %v495
        %v5705 = vunpack.c.l.b16 %v496
        %v5706 = vunpack.c.l.b16 %v497
        %v5707 = vunpack.c.l.b16 %v498
        %v5708 = vunpack.c.l.b16 %v499
        %v5709 = vunpack.c.l.b16 %v500
        %v5710 = vunpack.c.l.b16 %v501
        %v5711 = vunpack.c.l.b16 %v502
        %v5712 = vunpack.c.l.b16 %v503
        %v5713 = vunpack.c.l.b16 %v504
        %v5714 = vunpack.c.l.b16 %v505
        %v5715 = vunpack.c.l.b16 %v506
        %v5716 = vunpack.c.l.b16 %v507
        %v5717 = vunpack.c.l.b16 %v508
        %v5718 = vunpack.c.l.b16 %v509
        %v5719 = vunpack.c.l.b16 %v510
        %v5720 = vunpack.c.l.b16 %v511
        %v5721 = vunpack.c.l.b16 %v512
        %v5722 = vunpack.c.l.b16 %v513
        %v5723 = vunpack.c.l.b16 %v514
        %v5724 = vunpack.c.l.b16 %v515
        %v5725 = vunpack.c.l.b16 %v516
        %v5726 = vunpack.c.l.b16 %v517
        %v5727 = vunpack.c.l.b16 %v518
        %v5728 = vunpack.c.l.b16 %v519
        %v5729 = vunpack.c.l.b16 %v520
        %v5730 = vunpack.c.l.b16 %v521
        %v5731 = vunpack.c.l.b16 %v522
        %v5732 = vunpack.c.l.b16 %v523
        %v5733 = vunpack.c.l.b16 %v524
        %v5734 = vunpack.c.l.b16 %v525
        %v5735 = vunpack.c.l.b16 %v526
        %v5736 = vunpack.c.l.b16 %v527
        %v5737 = vunpack.c.l.b16 %v528
        %v5738 = vunpack.c.l.b16 %v529
        %v5739 = vunpack.c.l.b16 %v530
        %v5740 = vunpack.c.l.b16 %v531
        %v5741 = vunpack.c.l.b16 %v532
        %v5742 = vunpack.c.l.b16 %v533
        %v5743 = vunpack.c.l.b16 %v534
        %v5744 = vunpack.c.l.b16 %v535
        %v5745 = vunpack.c.l.b16 %v536
        %v5746 = vunpack.c.l.b16 %v537
        %v5747 = vunpack.c.l.b16 %v538
        %v5748 = vunpack.c.l.b16 %v539
        %v5749 = vpack.c.b16 %v5686, %v5685
        %v5750 = vpack.c.b16 %v5688, %v5687
        %v5751 = vpack.c.b16 %v5690, %v5689
        %v5752 = vpack.c.b16 %v5692, %v5691
        %v5753 = vpack.c.b16 %v5694, %v5693
        %v5754 = vpack.c.b16 %v5696, %v5695
        %v5755 = vpack.c.b16 %v5698, %v5697
        %v5756 = vpack.c.b16 %v5700, %v5699
        %v5757 = vpack.c.b16 %v5702, %v5701
        %v5758 = vpack.c.b16 %v5704, %v5703
        %v5759 = vpack.c.b16 %v5706, %v5705
        %v5760 = vpack.c.b16 %v5708, %v5707
        %v5761 = vpack.c.b16 %v5710, %v5709
        %v5762 = vpack.c.b16 %v5712, %v5711
        %v5763 = vpack.c.b16 %v5714, %v5713
        %v5764 = vpack.c.b16 %v5716, %v5715
        %v5765 = vpack.c.b16 %v5718, %v5717
        %v5766 = vpack.c.b16 %v5720, %v5719
        %v5767 = vpack.c.b16 %v5722, %v5721
        %v5768 = vpack.c.b16 %v5724, %v5723
        %v5769 = vpack.c.b16 %v5726, %v5725
        %v5770 = vpack.c.b16 %v5728, %v5727
        %v5771 = vpack.c.b16 %v5730, %v5729
        %v5772 = vpack.c.b16 %v5732, %v5731
        %v5773 = vpack.c.b16 %v5734, %v5733
        %v5774 = vpack.c.b16 %v5736, %v5735
        %v5775 = vpack.c.b16 %v5738, %v5737
        %v5776 = vpack.c.b16 %v5740, %v5739
        %v5777 = vpack.c.b16 %v5742, %v5741
        %v5778 = vpack.c.b16 %v5744, %v5743
        %v5779 = vpack.c.b16 %v5746, %v5745
        %v5780 = vpack.c.b16 %v5748, %v5747
        %5813 = vmatprep.subr.bf16.mxu0 0
        %5814 = vmatpush1.bf16.msra.mxu0 %v5749
        %5815 = vmatprep.subr.bf16.mxu0 0
        %5816 = vmatpush1.bf16.msra.mxu0 %v5750
        %5817 = vmatprep.subr.bf16.mxu0 0
        %5818 = vmatpush1.bf16.msra.mxu0 %v5751
        %5819 = vmatprep.subr.bf16.mxu0 0
        %5820 = vmatpush1.bf16.msra.mxu0 %v5752
        %5821 = vmatprep.subr.bf16.mxu0 0
        %5822 = vmatpush1.bf16.msra.mxu0 %v5753
        %5823 = vmatprep.subr.bf16.mxu0 0
        %5824 = vmatpush1.bf16.msra.mxu0 %v5754
        %5825 = vmatprep.subr.bf16.mxu0 0
        %5826 = vmatpush1.bf16.msra.mxu0 %v5755
        %5827 = vmatprep.subr.bf16.mxu0 0
        %5828 = vmatpush1.bf16.msra.mxu0 %v5756
        %5829 = vmatprep.subr.bf16.mxu0 0
        %5830 = vmatpush1.bf16.msra.mxu0 %v5757
        %5831 = vmatprep.subr.bf16.mxu0 0
        %5832 = vmatpush1.bf16.msra.mxu0 %v5758
        %5833 = vmatprep.subr.bf16.mxu0 0
        %5834 = vmatpush1.bf16.msra.mxu0 %v5759
        %5835 = vmatprep.subr.bf16.mxu0 0
        %5836 = vmatpush1.bf16.msra.mxu0 %v5760
        %5837 = vmatprep.subr.bf16.mxu0 0
        %5838 = vmatpush1.bf16.msra.mxu0 %v5761
        %5839 = vmatprep.subr.bf16.mxu0 0
        %5840 = vmatpush1.bf16.msra.mxu0 %v5762
        %5841 = vmatprep.subr.bf16.mxu0 0
        %5842 = vmatpush1.bf16.msra.mxu0 %v5763
        %5843 = vmatprep.subr.bf16.mxu0 0
        %5844 = vmatpush1.bf16.msra.mxu0 %v5764
        %5845 = vmatprep.mubr.bf16.mxu0 %v5612
        %5846 = vmatmul.mubr.bf16.gmra.mrb[0].mxu0 %v5611
        %v5847 = vpop.f32.mrb[0].mxu0
        %v5848 = vadd.f32 %v5619, %v5847
        %v5849 = vpop.f32.mrb[0].mxu0
        %v5850 = vpop.f32.mrb[0].mxu0
        %v5851 = vpop.f32.mrb[0].mxu0
        %5852 = vdwg.mxu0
        %5853 = vmatprep.subr.bf16.mxu0 0
        %5854 = vmatpush1.bf16.msra.mxu0 %v5765
        %5855 = vmatprep.subr.bf16.mxu0 0
        %5856 = vmatpush1.bf16.msra.mxu0 %v5766
        %5857 = vmatprep.subr.bf16.mxu0 0
        %5858 = vmatpush1.bf16.msra.mxu0 %v5767
        %5859 = vmatprep.subr.bf16.mxu0 0
        %5860 = vmatpush1.bf16.msra.mxu0 %v5768
        %5861 = vmatprep.subr.bf16.mxu0 0
        %5862 = vmatpush1.bf16.msra.mxu0 %v5769
        %5863 = vmatprep.subr.bf16.mxu0 0
        %5864 = vmatpush1.bf16.msra.mxu0 %v5770
        %5865 = vmatprep.subr.bf16.mxu0 0
        %5866 = vmatpush1.bf16.msra.mxu0 %v5771
        %5867 = vmatprep.subr.bf16.mxu0 0
        %5868 = vmatpush1.bf16.msra.mxu0 %v5772
        %5869 = vmatprep.subr.bf16.mxu0 0
        %5870 = vmatpush1.bf16.msra.mxu0 %v5773
        %5871 = vmatprep.subr.bf16.mxu0 0
        %5872 = vmatpush1.bf16.msra.mxu0 %v5774
        %5873 = vmatprep.subr.bf16.mxu0 0
        %5874 = vmatpush1.bf16.msra.mxu0 %v5775
        %5875 = vmatprep.subr.bf16.mxu0 0
        %5876 = vmatpush1.bf16.msra.mxu0 %v5776
        %5877 = vmatprep.subr.bf16.mxu0 0
        %5878 = vmatpush1.bf16.msra.mxu0 %v5777
        %5879 = vmatprep.subr.bf16.mxu0 0
        %5880 = vmatpush1.bf16.msra.mxu0 %v5778
        %5881 = vmatprep.subr.bf16.mxu0 0
        %5882 = vmatpush1.bf16.msra.mxu0 %v5779
        %5883 = vmatprep.subr.bf16.mxu0 0
        %5884 = vmatpush1.bf16.msra.mxu0 %v5780
        %5885 = vmatprep.mubr.bf16.mxu0 %v5614
        %5886 = vmatmul.mubr.bf16.gmra.mrb[0].mxu0 %v5613
        %v5887 = vpop.f32.mrb[0].mxu0
        %v5888 = vadd.f32 %v5848, %v5887
        %v5889 = vpop.f32.mrb[0].mxu0
        %v5890 = vpop.f32.mrb[0].mxu0
        %v5891 = vpop.f32.mrb[0].mxu0
        %5892 = vdwg.mxu0
        %v5893 = vadd.f32 %v473, %v5888
        %5894 = vst [vmem:[%s460] sm:$0x3] %v5893
        %v5895 = vsub.f32 %v5893, %v472
        %v5896 = vpack.c.bf16 %v5895, %v5895
        %s5897 = scalar_lea.vmem %s396, 5120 [#allocation12]
        %v5898 = vld [vmem:[%s5897] sm:$0xff]
        %v5899 = vld [vmem:[%s5897 + $0x8] sm:$0xff]
        %v5900 = vld [vmem:[%s5897 + $0x10] sm:$0xff]
        %v5901 = vld [vmem:[%s5897 + $0x18] sm:$0xff]
        %v5902 = vld [vmem:[%s5897 + $0x20] sm:$0xff]
        %v5903 = vld [vmem:[%s5897 + $0x28] sm:$0xff]
        %v5904 = vld [vmem:[%s5897 + $0x30] sm:$0xff]
        %v5905 = vld [vmem:[%s5897 + $0x38] sm:$0xff]
        %v5906 = vld [vmem:[%s5897 + $0x40] sm:$0xff]
        %v5907 = vld [vmem:[%s5897 + $0x48] sm:$0xff]
        %v5908 = vld [vmem:[%s5897 + $0x50] sm:$0xff]
        %v5909 = vld [vmem:[%s5897 + $0x58] sm:$0xff]
        %v5910 = vld [vmem:[%s5897 + $0x60] sm:$0xff]
        %v5911 = vld [vmem:[%s5897 + $0x68] sm:$0xff]
        %v5912 = vld [vmem:[%s5897 + $0x70] sm:$0xff]
        %v5913 = vld [vmem:[%s5897 + $0x78] sm:$0xff]
        %v5914 = vld [vmem:[%s5897 + $0x80] sm:$0xff]
        %v5915 = vld [vmem:[%s5897 + $0x88] sm:$0xff]
        %v5916 = vld [vmem:[%s5897 + $0x90] sm:$0xff]
        %v5917 = vld [vmem:[%s5897 + $0x98] sm:$0xff]
        %v5918 = vld [vmem:[%s5897 + $0xa0] sm:$0xff]
        %v5919 = vld [vmem:[%s5897 + $0xa8] sm:$0xff]
        %v5920 = vld [vmem:[%s5897 + $0xb0] sm:$0xff]
        %v5921 = vld [vmem:[%s5897 + $0xb8] sm:$0xff]
        %v5922 = vld [vmem:[%s5897 + $0xc0] sm:$0xff]
        %v5923 = vld [vmem:[%s5897 + $0xc8] sm:$0xff]
        %v5924 = vld [vmem:[%s5897 + $0xd0] sm:$0xff]
        %v5925 = vld [vmem:[%s5897 + $0xd8] sm:$0xff]
        %v5926 = vld [vmem:[%s5897 + $0xe0] sm:$0xff]
        %v5927 = vld [vmem:[%s5897 + $0xe8] sm:$0xff]
        %v5928 = vld [vmem:[%s5897 + $0xf0] sm:$0xff]
        %v5929 = vld [vmem:[%s5897 + $0xf8] sm:$0xff]
        %v5930 = vld [vmem:[%s5897 + $0x100] sm:$0xff]
        %v5931 = vld [vmem:[%s5897 + $0x108] sm:$0xff]
        %v5932 = vld [vmem:[%s5897 + $0x110] sm:$0xff]
        %v5933 = vld [vmem:[%s5897 + $0x118] sm:$0xff]
        %v5934 = vld [vmem:[%s5897 + $0x120] sm:$0xff]
        %v5935 = vld [vmem:[%s5897 + $0x128] sm:$0xff]
        %v5936 = vld [vmem:[%s5897 + $0x130] sm:$0xff]
        %v5937 = vld [vmem:[%s5897 + $0x138] sm:$0xff]
        %v5938 = vld [vmem:[%s5897 + $0x140] sm:$0xff]
        %v5939 = vld [vmem:[%s5897 + $0x148] sm:$0xff]
        %v5940 = vld [vmem:[%s5897 + $0x150] sm:$0xff]
        %v5941 = vld [vmem:[%s5897 + $0x158] sm:$0xff]
        %v5942 = vld [vmem:[%s5897 + $0x160] sm:$0xff]
        %v5943 = vld [vmem:[%s5897 + $0x168] sm:$0xff]
        %v5944 = vld [vmem:[%s5897 + $0x170] sm:$0xff]
        %v5945 = vld [vmem:[%s5897 + $0x178] sm:$0xff]
        %v5946 = vld [vmem:[%s5897 + $0x180] sm:$0xff]
        %v5947 = vld [vmem:[%s5897 + $0x188] sm:$0xff]
        %v5948 = vld [vmem:[%s5897 + $0x190] sm:$0xff]
        %v5949 = vld [vmem:[%s5897 + $0x198] sm:$0xff]
        %v5950 = vld [vmem:[%s5897 + $0x1a0] sm:$0xff]
        %v5951 = vld [vmem:[%s5897 + $0x1a8] sm:$0xff]
        %v5952 = vld [vmem:[%s5897 + $0x1b0] sm:$0xff]
        %v5953 = vld [vmem:[%s5897 + $0x1b8] sm:$0xff]
        %v5954 = vld [vmem:[%s5897 + $0x1c0] sm:$0xff]
        %v5955 = vld [vmem:[%s5897 + $0x1c8] sm:$0xff]
        %v5956 = vld [vmem:[%s5897 + $0x1d0] sm:$0xff]
        %v5957 = vld [vmem:[%s5897 + $0x1d8] sm:$0xff]
        %v5958 = vld [vmem:[%s5897 + $0x1e0] sm:$0xff]
        %v5959 = vld [vmem:[%s5897 + $0x1e8] sm:$0xff]
        %v5960 = vld [vmem:[%s5897 + $0x1f0] sm:$0xff]
        %v5961 = vld [vmem:[%s5897 + $0x1f8] sm:$0xff]
        %v5962 = vld [vmem:[%s5897 + $0x200] sm:$0xff]
        %v5963 = vld [vmem:[%s5897 + $0x208] sm:$0xff]
        %v5964 = vld [vmem:[%s5897 + $0x210] sm:$0xff]
        %v5965 = vld [vmem:[%s5897 + $0x218] sm:$0xff]
        %v5966 = vld [vmem:[%s5897 + $0x220] sm:$0xff]
        %v5967 = vld [vmem:[%s5897 + $0x228] sm:$0xff]
        %v5968 = vld [vmem:[%s5897 + $0x230] sm:$0xff]
        %v5969 = vld [vmem:[%s5897 + $0x238] sm:$0xff]
        %v5970 = vld [vmem:[%s5897 + $0x240] sm:$0xff]
        %v5971 = vld [vmem:[%s5897 + $0x248] sm:$0xff]
        %v5972 = vld [vmem:[%s5897 + $0x250] sm:$0xff]
        %v5973 = vld [vmem:[%s5897 + $0x258] sm:$0xff]
        %v5974 = vld [vmem:[%s5897 + $0x260] sm:$0xff]
        %v5975 = vld [vmem:[%s5897 + $0x268] sm:$0xff]
        %v5976 = vld [vmem:[%s5897 + $0x270] sm:$0xff]
        %v5977 = vld [vmem:[%s5897 + $0x278] sm:$0xff]
        %v5978 = vld [vmem:[%s5897 + $0x280] sm:$0xff]
        %v5979 = vld [vmem:[%s5897 + $0x288] sm:$0xff]
        %v5980 = vld [vmem:[%s5897 + $0x290] sm:$0xff]
        %v5981 = vld [vmem:[%s5897 + $0x298] sm:$0xff]
        %v5982 = vld [vmem:[%s5897 + $0x2a0] sm:$0xff]
        %v5983 = vld [vmem:[%s5897 + $0x2a8] sm:$0xff]
        %v5984 = vld [vmem:[%s5897 + $0x2b0] sm:$0xff]
        %v5985 = vld [vmem:[%s5897 + $0x2b8] sm:$0xff]
        %v5986 = vld [vmem:[%s5897 + $0x2c0] sm:$0xff]
        %v5987 = vld [vmem:[%s5897 + $0x2c8] sm:$0xff]
        %v5988 = vld [vmem:[%s5897 + $0x2d0] sm:$0xff]
        %v5989 = vld [vmem:[%s5897 + $0x2d8] sm:$0xff]
        %v5990 = vld [vmem:[%s5897 + $0x2e0] sm:$0xff]
        %v5991 = vld [vmem:[%s5897 + $0x2e8] sm:$0xff]
        %v5992 = vld [vmem:[%s5897 + $0x2f0] sm:$0xff]
        %v5993 = vld [vmem:[%s5897 + $0x2f8] sm:$0xff]
        %v5994 = vld [vmem:[%s5897 + $0x300] sm:$0xff]
        %v5995 = vld [vmem:[%s5897 + $0x308] sm:$0xff]
        %v5996 = vld [vmem:[%s5897 + $0x310] sm:$0xff]
        %v5997 = vld [vmem:[%s5897 + $0x318] sm:$0xff]
        %v5998 = vld [vmem:[%s5897 + $0x320] sm:$0xff]
        %v5999 = vld [vmem:[%s5897 + $0x328] sm:$0xff]
        %v6000 = vld [vmem:[%s5897 + $0x330] sm:$0xff]
        %v6001 = vld [vmem:[%s5897 + $0x338] sm:$0xff]
        %v6002 = vld [vmem:[%s5897 + $0x340] sm:$0xff]
        %v6003 = vld [vmem:[%s5897 + $0x348] sm:$0xff]
        %v6004 = vld [vmem:[%s5897 + $0x350] sm:$0xff]
        %v6005 = vld [vmem:[%s5897 + $0x358] sm:$0xff]
        %v6006 = vld [vmem:[%s5897 + $0x360] sm:$0xff]
        %v6007 = vld [vmem:[%s5897 + $0x368] sm:$0xff]
        %v6008 = vld [vmem:[%s5897 + $0x370] sm:$0xff]
        %v6009 = vld [vmem:[%s5897 + $0x378] sm:$0xff]
        %v6010 = vld [vmem:[%s5897 + $0x380] sm:$0xff]
        %v6011 = vld [vmem:[%s5897 + $0x388] sm:$0xff]
        %v6012 = vld [vmem:[%s5897 + $0x390] sm:$0xff]
        %v6013 = vld [vmem:[%s5897 + $0x398] sm:$0xff]
        %v6014 = vld [vmem:[%s5897 + $0x3a0] sm:$0xff]
        %v6015 = vld [vmem:[%s5897 + $0x3a8] sm:$0xff]
        %v6016 = vld [vmem:[%s5897 + $0x3b0] sm:$0xff]
        %v6017 = vld [vmem:[%s5897 + $0x3b8] sm:$0xff]
        %v6018 = vld [vmem:[%s5897 + $0x3c0] sm:$0xff]
        %v6019 = vld [vmem:[%s5897 + $0x3c8] sm:$0xff]
        %v6020 = vld [vmem:[%s5897 + $0x3d0] sm:$0xff]
        %v6021 = vld [vmem:[%s5897 + $0x3d8] sm:$0xff]
        %v6022 = vld [vmem:[%s5897 + $0x3e0] sm:$0xff]
        %v6023 = vld [vmem:[%s5897 + $0x3e8] sm:$0xff]
        %v6024 = vld [vmem:[%s5897 + $0x3f0] sm:$0xff]
        %v6025 = vld [vmem:[%s5897 + $0x3f8] sm:$0xff]
        %v6026 = vpack.c.bf16 %v5607, %v5607
        %v6027 = vpack.c.bf16 %v5608, %v5608
        %v6028 = vpack.c.bf16 %v5609, %v5609
        %v6029 = vpack.c.bf16 %v5610, %v5610
        %v6030 = vld [vmem:[%s5897 + $0x400] sm:$0xff]
        %v6031 = vld [vmem:[%s5897 + $0x408] sm:$0xff]
        %v6032 = vld [vmem:[%s5897 + $0x410] sm:$0xff]
        %v6033 = vld [vmem:[%s5897 + $0x418] sm:$0xff]
        %v6034 = vld [vmem:[%s5897 + $0x420] sm:$0xff]
        %v6035 = vld [vmem:[%s5897 + $0x428] sm:$0xff]
        %v6036 = vld [vmem:[%s5897 + $0x430] sm:$0xff]
        %v6037 = vld [vmem:[%s5897 + $0x438] sm:$0xff]
        %v6038 = vld [vmem:[%s5897 + $0x440] sm:$0xff]
        %v6039 = vld [vmem:[%s5897 + $0x448] sm:$0xff]
        %v6040 = vld [vmem:[%s5897 + $0x450] sm:$0xff]
        %v6041 = vld [vmem:[%s5897 + $0x458] sm:$0xff]
        %v6042 = vld [vmem:[%s5897 + $0x460] sm:$0xff]
        %v6043 = vld [vmem:[%s5897 + $0x468] sm:$0xff]
        %v6044 = vld [vmem:[%s5897 + $0x470] sm:$0xff]
        %v6045 = vld [vmem:[%s5897 + $0x478] sm:$0xff]
        %v6046 = vld [vmem:[%s5897 + $0x480] sm:$0xff]
        %v6047 = vld [vmem:[%s5897 + $0x488] sm:$0xff]
        %v6048 = vld [vmem:[%s5897 + $0x490] sm:$0xff]
        %v6049 = vld [vmem:[%s5897 + $0x498] sm:$0xff]
        %v6050 = vld [vmem:[%s5897 + $0x4a0] sm:$0xff]
        %v6051 = vld [vmem:[%s5897 + $0x4a8] sm:$0xff]
        %v6052 = vld [vmem:[%s5897 + $0x4b0] sm:$0xff]
        %v6053 = vld [vmem:[%s5897 + $0x4b8] sm:$0xff]
        %v6054 = vld [vmem:[%s5897 + $0x4c0] sm:$0xff]
        %v6055 = vld [vmem:[%s5897 + $0x4c8] sm:$0xff]
        %v6056 = vld [vmem:[%s5897 + $0x4d0] sm:$0xff]
        %v6057 = vld [vmem:[%s5897 + $0x4d8] sm:$0xff]
        %v6058 = vld [vmem:[%s5897 + $0x4e0] sm:$0xff]
        %v6059 = vld [vmem:[%s5897 + $0x4e8] sm:$0xff]
        %v6060 = vld [vmem:[%s5897 + $0x4f0] sm:$0xff]
        %v6061 = vld [vmem:[%s5897 + $0x4f8] sm:$0xff]
        %v6062 = vld [vmem:[%s5897 + $0x500] sm:$0xff]
        %v6063 = vld [vmem:[%s5897 + $0x508] sm:$0xff]
        %v6064 = vld [vmem:[%s5897 + $0x510] sm:$0xff]
        %v6065 = vld [vmem:[%s5897 + $0x518] sm:$0xff]
        %v6066 = vld [vmem:[%s5897 + $0x520] sm:$0xff]
        %v6067 = vld [vmem:[%s5897 + $0x528] sm:$0xff]
        %v6068 = vld [vmem:[%s5897 + $0x530] sm:$0xff]
        %v6069 = vld [vmem:[%s5897 + $0x538] sm:$0xff]
        %v6070 = vld [vmem:[%s5897 + $0x540] sm:$0xff]
        %v6071 = vld [vmem:[%s5897 + $0x548] sm:$0xff]
        %v6072 = vld [vmem:[%s5897 + $0x550] sm:$0xff]
        %v6073 = vld [vmem:[%s5897 + $0x558] sm:$0xff]
        %v6074 = vld [vmem:[%s5897 + $0x560] sm:$0xff]
        %v6075 = vld [vmem:[%s5897 + $0x568] sm:$0xff]
        %v6076 = vld [vmem:[%s5897 + $0x570] sm:$0xff]
        %v6077 = vld [vmem:[%s5897 + $0x578] sm:$0xff]
        %v6078 = vld [vmem:[%s5897 + $0x580] sm:$0xff]
        %v6079 = vld [vmem:[%s5897 + $0x588] sm:$0xff]
        %v6080 = vld [vmem:[%s5897 + $0x590] sm:$0xff]
        %v6081 = vld [vmem:[%s5897 + $0x598] sm:$0xff]
        %v6082 = vld [vmem:[%s5897 + $0x5a0] sm:$0xff]
        %v6083 = vld [vmem:[%s5897 + $0x5a8] sm:$0xff]
        %v6084 = vld [vmem:[%s5897 + $0x5b0] sm:$0xff]
        %v6085 = vld [vmem:[%s5897 + $0x5b8] sm:$0xff]
        %v6086 = vld [vmem:[%s5897 + $0x5c0] sm:$0xff]
        %v6087 = vld [vmem:[%s5897 + $0x5c8] sm:$0xff]
        %v6088 = vld [vmem:[%s5897 + $0x5d0] sm:$0xff]
        %v6089 = vld [vmem:[%s5897 + $0x5d8] sm:$0xff]
        %v6090 = vld [vmem:[%s5897 + $0x5e0] sm:$0xff]
        %v6091 = vld [vmem:[%s5897 + $0x5e8] sm:$0xff]
        %v6092 = vld [vmem:[%s5897 + $0x5f0] sm:$0xff]
        %v6093 = vld [vmem:[%s5897 + $0x5f8] sm:$0xff]
        %v6094 = vld [vmem:[%s5897 + $0x600] sm:$0xff]
        %v6095 = vld [vmem:[%s5897 + $0x608] sm:$0xff]
        %v6096 = vld [vmem:[%s5897 + $0x610] sm:$0xff]
        %v6097 = vld [vmem:[%s5897 + $0x618] sm:$0xff]
        %v6098 = vld [vmem:[%s5897 + $0x620] sm:$0xff]
        %v6099 = vld [vmem:[%s5897 + $0x628] sm:$0xff]
        %v6100 = vld [vmem:[%s5897 + $0x630] sm:$0xff]
        %v6101 = vld [vmem:[%s5897 + $0x638] sm:$0xff]
        %v6102 = vld [vmem:[%s5897 + $0x640] sm:$0xff]
        %v6103 = vld [vmem:[%s5897 + $0x648] sm:$0xff]
        %v6104 = vld [vmem:[%s5897 + $0x650] sm:$0xff]
        %v6105 = vld [vmem:[%s5897 + $0x658] sm:$0xff]
        %v6106 = vld [vmem:[%s5897 + $0x660] sm:$0xff]
        %v6107 = vld [vmem:[%s5897 + $0x668] sm:$0xff]
        %v6108 = vld [vmem:[%s5897 + $0x670] sm:$0xff]
        %v6109 = vld [vmem:[%s5897 + $0x678] sm:$0xff]
        %v6110 = vld [vmem:[%s5897 + $0x680] sm:$0xff]
        %v6111 = vld [vmem:[%s5897 + $0x688] sm:$0xff]
        %v6112 = vld [vmem:[%s5897 + $0x690] sm:$0xff]
        %v6113 = vld [vmem:[%s5897 + $0x698] sm:$0xff]
        %v6114 = vld [vmem:[%s5897 + $0x6a0] sm:$0xff]
        %v6115 = vld [vmem:[%s5897 + $0x6a8] sm:$0xff]
        %v6116 = vld [vmem:[%s5897 + $0x6b0] sm:$0xff]
        %v6117 = vld [vmem:[%s5897 + $0x6b8] sm:$0xff]
        %v6118 = vld [vmem:[%s5897 + $0x6c0] sm:$0xff]
        %v6119 = vld [vmem:[%s5897 + $0x6c8] sm:$0xff]
        %v6120 = vld [vmem:[%s5897 + $0x6d0] sm:$0xff]
        %v6121 = vld [vmem:[%s5897 + $0x6d8] sm:$0xff]
        %v6122 = vld [vmem:[%s5897 + $0x6e0] sm:$0xff]
        %v6123 = vld [vmem:[%s5897 + $0x6e8] sm:$0xff]
        %v6124 = vld [vmem:[%s5897 + $0x6f0] sm:$0xff]
        %v6125 = vld [vmem:[%s5897 + $0x6f8] sm:$0xff]
        %v6126 = vld [vmem:[%s5897 + $0x700] sm:$0xff]
        %v6127 = vld [vmem:[%s5897 + $0x708] sm:$0xff]
        %v6128 = vld [vmem:[%s5897 + $0x710] sm:$0xff]
        %v6129 = vld [vmem:[%s5897 + $0x718] sm:$0xff]
        %v6130 = vld [vmem:[%s5897 + $0x720] sm:$0xff]
        %v6131 = vld [vmem:[%s5897 + $0x728] sm:$0xff]
        %v6132 = vld [vmem:[%s5897 + $0x730] sm:$0xff]
        %v6133 = vld [vmem:[%s5897 + $0x738] sm:$0xff]
        %v6134 = vld [vmem:[%s5897 + $0x740] sm:$0xff]
        %v6135 = vld [vmem:[%s5897 + $0x748] sm:$0xff]
        %v6136 = vld [vmem:[%s5897 + $0x750] sm:$0xff]
        %v6137 = vld [vmem:[%s5897 + $0x758] sm:$0xff]
        %v6138 = vld [vmem:[%s5897 + $0x760] sm:$0xff]
        %v6139 = vld [vmem:[%s5897 + $0x768] sm:$0xff]
        %v6140 = vld [vmem:[%s5897 + $0x770] sm:$0xff]
        %v6141 = vld [vmem:[%s5897 + $0x778] sm:$0xff]
        %v6142 = vld [vmem:[%s5897 + $0x780] sm:$0xff]
        %v6143 = vld [vmem:[%s5897 + $0x788] sm:$0xff]
        %v6144 = vld [vmem:[%s5897 + $0x790] sm:$0xff]
        %v6145 = vld [vmem:[%s5897 + $0x798] sm:$0xff]
        %v6146 = vld [vmem:[%s5897 + $0x7a0] sm:$0xff]
        %v6147 = vld [vmem:[%s5897 + $0x7a8] sm:$0xff]
        %v6148 = vld [vmem:[%s5897 + $0x7b0] sm:$0xff]
        %v6149 = vld [vmem:[%s5897 + $0x7b8] sm:$0xff]
        %v6150 = vld [vmem:[%s5897 + $0x7c0] sm:$0xff]
        %v6151 = vld [vmem:[%s5897 + $0x7c8] sm:$0xff]
        %v6152 = vld [vmem:[%s5897 + $0x7d0] sm:$0xff]
        %v6153 = vld [vmem:[%s5897 + $0x7d8] sm:$0xff]
        %v6154 = vld [vmem:[%s5897 + $0x7e0] sm:$0xff]
        %v6155 = vld [vmem:[%s5897 + $0x7e8] sm:$0xff]
        %v6156 = vld [vmem:[%s5897 + $0x7f0] sm:$0xff]
        %v6157 = vld [vmem:[%s5897 + $0x7f8] sm:$0xff]
        %v6158 = vld [vmem:[%s5897 + $0x800] sm:$0xff]
        %v6159 = vld [vmem:[%s5897 + $0x808] sm:$0xff]
        %v6160 = vld [vmem:[%s5897 + $0x810] sm:$0xff]
        %v6161 = vld [vmem:[%s5897 + $0x818] sm:$0xff]
        %v6162 = vld [vmem:[%s5897 + $0x820] sm:$0xff]
        %v6163 = vld [vmem:[%s5897 + $0x828] sm:$0xff]
        %v6164 = vld [vmem:[%s5897 + $0x830] sm:$0xff]
        %v6165 = vld [vmem:[%s5897 + $0x838] sm:$0xff]
        %v6166 = vld [vmem:[%s5897 + $0x840] sm:$0xff]
        %v6167 = vld [vmem:[%s5897 + $0x848] sm:$0xff]
        %v6168 = vld [vmem:[%s5897 + $0x850] sm:$0xff]
        %v6169 = vld [vmem:[%s5897 + $0x858] sm:$0xff]
        %v6170 = vld [vmem:[%s5897 + $0x860] sm:$0xff]
        %v6171 = vld [vmem:[%s5897 + $0x868] sm:$0xff]
        %v6172 = vld [vmem:[%s5897 + $0x870] sm:$0xff]
        %v6173 = vld [vmem:[%s5897 + $0x878] sm:$0xff]
        %v6174 = vld [vmem:[%s5897 + $0x880] sm:$0xff]
        %v6175 = vld [vmem:[%s5897 + $0x888] sm:$0xff]
        %v6176 = vld [vmem:[%s5897 + $0x890] sm:$0xff]
        %v6177 = vld [vmem:[%s5897 + $0x898] sm:$0xff]
        %v6178 = vld [vmem:[%s5897 + $0x8a0] sm:$0xff]
        %v6179 = vld [vmem:[%s5897 + $0x8a8] sm:$0xff]
        %v6180 = vld [vmem:[%s5897 + $0x8b0] sm:$0xff]
        %v6181 = vld [vmem:[%s5897 + $0x8b8] sm:$0xff]
        %v6182 = vld [vmem:[%s5897 + $0x8c0] sm:$0xff]
        %v6183 = vld [vmem:[%s5897 + $0x8c8] sm:$0xff]
        %v6184 = vld [vmem:[%s5897 + $0x8d0] sm:$0xff]
        %v6185 = vld [vmem:[%s5897 + $0x8d8] sm:$0xff]
        %v6186 = vld [vmem:[%s5897 + $0x8e0] sm:$0xff]
        %v6187 = vld [vmem:[%s5897 + $0x8e8] sm:$0xff]
        %v6188 = vld [vmem:[%s5897 + $0x8f0] sm:$0xff]
        %v6189 = vld [vmem:[%s5897 + $0x8f8] sm:$0xff]
        %v6190 = vld [vmem:[%s5897 + $0x900] sm:$0xff]
        %v6191 = vld [vmem:[%s5897 + $0x908] sm:$0xff]
        %v6192 = vld [vmem:[%s5897 + $0x910] sm:$0xff]
        %v6193 = vld [vmem:[%s5897 + $0x918] sm:$0xff]
        %v6194 = vld [vmem:[%s5897 + $0x920] sm:$0xff]
        %v6195 = vld [vmem:[%s5897 + $0x928] sm:$0xff]
        %v6196 = vld [vmem:[%s5897 + $0x930] sm:$0xff]
        %v6197 = vld [vmem:[%s5897 + $0x938] sm:$0xff]
        %v6198 = vld [vmem:[%s5897 + $0x940] sm:$0xff]
        %v6199 = vld [vmem:[%s5897 + $0x948] sm:$0xff]
        %v6200 = vld [vmem:[%s5897 + $0x950] sm:$0xff]
        %v6201 = vld [vmem:[%s5897 + $0x958] sm:$0xff]
        %v6202 = vld [vmem:[%s5897 + $0x960] sm:$0xff]
        %v6203 = vld [vmem:[%s5897 + $0x968] sm:$0xff]
        %v6204 = vld [vmem:[%s5897 + $0x970] sm:$0xff]
        %v6205 = vld [vmem:[%s5897 + $0x978] sm:$0xff]
        %v6206 = vld [vmem:[%s5897 + $0x980] sm:$0xff]
        %v6207 = vld [vmem:[%s5897 + $0x988] sm:$0xff]
        %v6208 = vld [vmem:[%s5897 + $0x990] sm:$0xff]
        %v6209 = vld [vmem:[%s5897 + $0x998] sm:$0xff]
        %v6210 = vld [vmem:[%s5897 + $0x9a0] sm:$0xff]
        %v6211 = vld [vmem:[%s5897 + $0x9a8] sm:$0xff]
        %v6212 = vld [vmem:[%s5897 + $0x9b0] sm:$0xff]
        %v6213 = vld [vmem:[%s5897 + $0x9b8] sm:$0xff]
        %v6214 = vld [vmem:[%s5897 + $0x9c0] sm:$0xff]
        %v6215 = vld [vmem:[%s5897 + $0x9c8] sm:$0xff]
        %v6216 = vld [vmem:[%s5897 + $0x9d0] sm:$0xff]
        %v6217 = vld [vmem:[%s5897 + $0x9d8] sm:$0xff]
        %v6218 = vld [vmem:[%s5897 + $0x9e0] sm:$0xff]
        %v6219 = vld [vmem:[%s5897 + $0x9e8] sm:$0xff]
        %v6220 = vld [vmem:[%s5897 + $0x9f0] sm:$0xff]
        %v6221 = vld [vmem:[%s5897 + $0x9f8] sm:$0xff]
        %v6222 = vld [vmem:[%s5897 + $0xa00] sm:$0xff]
        %v6223 = vld [vmem:[%s5897 + $0xa08] sm:$0xff]
        %v6224 = vld [vmem:[%s5897 + $0xa10] sm:$0xff]
        %v6225 = vld [vmem:[%s5897 + $0xa18] sm:$0xff]
        %v6226 = vld [vmem:[%s5897 + $0xa20] sm:$0xff]
        %v6227 = vld [vmem:[%s5897 + $0xa28] sm:$0xff]
        %v6228 = vld [vmem:[%s5897 + $0xa30] sm:$0xff]
        %v6229 = vld [vmem:[%s5897 + $0xa38] sm:$0xff]
        %v6230 = vld [vmem:[%s5897 + $0xa40] sm:$0xff]
        %v6231 = vld [vmem:[%s5897 + $0xa48] sm:$0xff]
        %v6232 = vld [vmem:[%s5897 + $0xa50] sm:$0xff]
        %v6233 = vld [vmem:[%s5897 + $0xa58] sm:$0xff]
        %v6234 = vld [vmem:[%s5897 + $0xa60] sm:$0xff]
        %v6235 = vld [vmem:[%s5897 + $0xa68] sm:$0xff]
        %v6236 = vld [vmem:[%s5897 + $0xa70] sm:$0xff]
        %v6237 = vld [vmem:[%s5897 + $0xa78] sm:$0xff]
        %v6238 = vld [vmem:[%s5897 + $0xa80] sm:$0xff]
        %v6239 = vld [vmem:[%s5897 + $0xa88] sm:$0xff]
        %v6240 = vld [vmem:[%s5897 + $0xa90] sm:$0xff]
        %v6241 = vld [vmem:[%s5897 + $0xa98] sm:$0xff]
        %v6242 = vld [vmem:[%s5897 + $0xaa0] sm:$0xff]
        %v6243 = vld [vmem:[%s5897 + $0xaa8] sm:$0xff]
        %v6244 = vld [vmem:[%s5897 + $0xab0] sm:$0xff]
        %v6245 = vld [vmem:[%s5897 + $0xab8] sm:$0xff]
        %v6246 = vld [vmem:[%s5897 + $0xac0] sm:$0xff]
        %v6247 = vld [vmem:[%s5897 + $0xac8] sm:$0xff]
        %v6248 = vld [vmem:[%s5897 + $0xad0] sm:$0xff]
        %v6249 = vld [vmem:[%s5897 + $0xad8] sm:$0xff]
        %v6250 = vld [vmem:[%s5897 + $0xae0] sm:$0xff]
        %v6251 = vld [vmem:[%s5897 + $0xae8] sm:$0xff]
        %v6252 = vld [vmem:[%s5897 + $0xaf0] sm:$0xff]
        %v6253 = vld [vmem:[%s5897 + $0xaf8] sm:$0xff]
        %v6254 = vld [vmem:[%s5897 + $0xb00] sm:$0xff]
        %v6255 = vld [vmem:[%s5897 + $0xb08] sm:$0xff]
        %v6256 = vld [vmem:[%s5897 + $0xb10] sm:$0xff]
        %v6257 = vld [vmem:[%s5897 + $0xb18] sm:$0xff]
        %v6258 = vld [vmem:[%s5897 + $0xb20] sm:$0xff]
        %v6259 = vld [vmem:[%s5897 + $0xb28] sm:$0xff]
        %v6260 = vld [vmem:[%s5897 + $0xb30] sm:$0xff]
        %v6261 = vld [vmem:[%s5897 + $0xb38] sm:$0xff]
        %v6262 = vld [vmem:[%s5897 + $0xb40] sm:$0xff]
        %v6263 = vld [vmem:[%s5897 + $0xb48] sm:$0xff]
        %v6264 = vld [vmem:[%s5897 + $0xb50] sm:$0xff]
        %v6265 = vld [vmem:[%s5897 + $0xb58] sm:$0xff]
        %v6266 = vld [vmem:[%s5897 + $0xb60] sm:$0xff]
        %v6267 = vld [vmem:[%s5897 + $0xb68] sm:$0xff]
        %v6268 = vld [vmem:[%s5897 + $0xb70] sm:$0xff]
        %v6269 = vld [vmem:[%s5897 + $0xb78] sm:$0xff]
        %v6270 = vld [vmem:[%s5897 + $0xb80] sm:$0xff]
        %v6271 = vld [vmem:[%s5897 + $0xb88] sm:$0xff]
        %v6272 = vld [vmem:[%s5897 + $0xb90] sm:$0xff]
        %v6273 = vld [vmem:[%s5897 + $0xb98] sm:$0xff]
        %v6274 = vld [vmem:[%s5897 + $0xba0] sm:$0xff]
        %v6275 = vld [vmem:[%s5897 + $0xba8] sm:$0xff]
        %v6276 = vld [vmem:[%s5897 + $0xbb0] sm:$0xff]
        %v6277 = vld [vmem:[%s5897 + $0xbb8] sm:$0xff]
        %v6278 = vld [vmem:[%s5897 + $0xbc0] sm:$0xff]
        %v6279 = vld [vmem:[%s5897 + $0xbc8] sm:$0xff]
        %v6280 = vld [vmem:[%s5897 + $0xbd0] sm:$0xff]
        %v6281 = vld [vmem:[%s5897 + $0xbd8] sm:$0xff]
        %v6282 = vld [vmem:[%s5897 + $0xbe0] sm:$0xff]
        %v6283 = vld [vmem:[%s5897 + $0xbe8] sm:$0xff]
        %v6284 = vld [vmem:[%s5897 + $0xbf0] sm:$0xff]
        %v6285 = vld [vmem:[%s5897 + $0xbf8] sm:$0xff]
        %v6286 = vld [vmem:[%s5897 + $0xc00] sm:$0xff]
        %v6287 = vld [vmem:[%s5897 + $0xc08] sm:$0xff]
        %v6288 = vld [vmem:[%s5897 + $0xc10] sm:$0xff]
        %v6289 = vld [vmem:[%s5897 + $0xc18] sm:$0xff]
        %v6290 = vld [vmem:[%s5897 + $0xc20] sm:$0xff]
        %v6291 = vld [vmem:[%s5897 + $0xc28] sm:$0xff]
        %v6292 = vld [vmem:[%s5897 + $0xc30] sm:$0xff]
        %v6293 = vld [vmem:[%s5897 + $0xc38] sm:$0xff]
        %v6294 = vld [vmem:[%s5897 + $0xc40] sm:$0xff]
        %v6295 = vld [vmem:[%s5897 + $0xc48] sm:$0xff]
        %v6296 = vld [vmem:[%s5897 + $0xc50] sm:$0xff]
        %v6297 = vld [vmem:[%s5897 + $0xc58] sm:$0xff]
        %v6298 = vld [vmem:[%s5897 + $0xc60] sm:$0xff]
        %v6299 = vld [vmem:[%s5897 + $0xc68] sm:$0xff]
        %v6300 = vld [vmem:[%s5897 + $0xc70] sm:$0xff]
        %v6301 = vld [vmem:[%s5897 + $0xc78] sm:$0xff]
        %v6302 = vld [vmem:[%s5897 + $0xc80] sm:$0xff]
        %v6303 = vld [vmem:[%s5897 + $0xc88] sm:$0xff]
        %v6304 = vld [vmem:[%s5897 + $0xc90] sm:$0xff]
        %v6305 = vld [vmem:[%s5897 + $0xc98] sm:$0xff]
        %v6306 = vld [vmem:[%s5897 + $0xca0] sm:$0xff]
        %v6307 = vld [vmem:[%s5897 + $0xca8] sm:$0xff]
        %v6308 = vld [vmem:[%s5897 + $0xcb0] sm:$0xff]
        %v6309 = vld [vmem:[%s5897 + $0xcb8] sm:$0xff]
        %v6310 = vld [vmem:[%s5897 + $0xcc0] sm:$0xff]
        %v6311 = vld [vmem:[%s5897 + $0xcc8] sm:$0xff]
        %v6312 = vld [vmem:[%s5897 + $0xcd0] sm:$0xff]
        %v6313 = vld [vmem:[%s5897 + $0xcd8] sm:$0xff]
        %v6314 = vld [vmem:[%s5897 + $0xce0] sm:$0xff]
        %v6315 = vld [vmem:[%s5897 + $0xce8] sm:$0xff]
        %v6316 = vld [vmem:[%s5897 + $0xcf0] sm:$0xff]
        %v6317 = vld [vmem:[%s5897 + $0xcf8] sm:$0xff]
        %v6318 = vld [vmem:[%s5897 + $0xd00] sm:$0xff]
        %v6319 = vld [vmem:[%s5897 + $0xd08] sm:$0xff]
        %v6320 = vld [vmem:[%s5897 + $0xd10] sm:$0xff]
        %v6321 = vld [vmem:[%s5897 + $0xd18] sm:$0xff]
        %v6322 = vld [vmem:[%s5897 + $0xd20] sm:$0xff]
        %v6323 = vld [vmem:[%s5897 + $0xd28] sm:$0xff]
        %v6324 = vld [vmem:[%s5897 + $0xd30] sm:$0xff]
        %v6325 = vld [vmem:[%s5897 + $0xd38] sm:$0xff]
        %v6326 = vld [vmem:[%s5897 + $0xd40] sm:$0xff]
        %v6327 = vld [vmem:[%s5897 + $0xd48] sm:$0xff]
        %v6328 = vld [vmem:[%s5897 + $0xd50] sm:$0xff]
        %v6329 = vld [vmem:[%s5897 + $0xd58] sm:$0xff]
        %v6330 = vld [vmem:[%s5897 + $0xd60] sm:$0xff]
        %v6331 = vld [vmem:[%s5897 + $0xd68] sm:$0xff]
        %v6332 = vld [vmem:[%s5897 + $0xd70] sm:$0xff]
        %v6333 = vld [vmem:[%s5897 + $0xd78] sm:$0xff]
        %v6334 = vld [vmem:[%s5897 + $0xd80] sm:$0xff]
        %v6335 = vld [vmem:[%s5897 + $0xd88] sm:$0xff]
        %v6336 = vld [vmem:[%s5897 + $0xd90] sm:$0xff]
        %v6337 = vld [vmem:[%s5897 + $0xd98] sm:$0xff]
        %v6338 = vld [vmem:[%s5897 + $0xda0] sm:$0xff]
        %v6339 = vld [vmem:[%s5897 + $0xda8] sm:$0xff]
        %v6340 = vld [vmem:[%s5897 + $0xdb0] sm:$0xff]
        %v6341 = vld [vmem:[%s5897 + $0xdb8] sm:$0xff]
        %v6342 = vld [vmem:[%s5897 + $0xdc0] sm:$0xff]
        %v6343 = vld [vmem:[%s5897 + $0xdc8] sm:$0xff]
        %v6344 = vld [vmem:[%s5897 + $0xdd0] sm:$0xff]
        %v6345 = vld [vmem:[%s5897 + $0xdd8] sm:$0xff]
        %v6346 = vld [vmem:[%s5897 + $0xde0] sm:$0xff]
        %v6347 = vld [vmem:[%s5897 + $0xde8] sm:$0xff]
        %v6348 = vld [vmem:[%s5897 + $0xdf0] sm:$0xff]
        %v6349 = vld [vmem:[%s5897 + $0xdf8] sm:$0xff]
        %v6350 = vld [vmem:[%s5897 + $0xe00] sm:$0xff]
        %v6351 = vld [vmem:[%s5897 + $0xe08] sm:$0xff]
        %v6352 = vld [vmem:[%s5897 + $0xe10] sm:$0xff]
        %v6353 = vld [vmem:[%s5897 + $0xe18] sm:$0xff]
        %v6354 = vld [vmem:[%s5897 + $0xe20] sm:$0xff]
        %v6355 = vld [vmem:[%s5897 + $0xe28] sm:$0xff]
        %v6356 = vld [vmem:[%s5897 + $0xe30] sm:$0xff]
        %v6357 = vld [vmem:[%s5897 + $0xe38] sm:$0xff]
        %v6358 = vld [vmem:[%s5897 + $0xe40] sm:$0xff]
        %v6359 = vld [vmem:[%s5897 + $0xe48] sm:$0xff]
        %v6360 = vld [vmem:[%s5897 + $0xe50] sm:$0xff]
        %v6361 = vld [vmem:[%s5897 + $0xe58] sm:$0xff]
        %v6362 = vld [vmem:[%s5897 + $0xe60] sm:$0xff]
        %v6363 = vld [vmem:[%s5897 + $0xe68] sm:$0xff]
        %v6364 = vld [vmem:[%s5897 + $0xe70] sm:$0xff]
        %v6365 = vld [vmem:[%s5897 + $0xe78] sm:$0xff]
        %v6366 = vld [vmem:[%s5897 + $0xe80] sm:$0xff]
        %v6367 = vld [vmem:[%s5897 + $0xe88] sm:$0xff]
        %v6368 = vld [vmem:[%s5897 + $0xe90] sm:$0xff]
        %v6369 = vld [vmem:[%s5897 + $0xe98] sm:$0xff]
        %v6370 = vld [vmem:[%s5897 + $0xea0] sm:$0xff]
        %v6371 = vld [vmem:[%s5897 + $0xea8] sm:$0xff]
        %v6372 = vld [vmem:[%s5897 + $0xeb0] sm:$0xff]
        %v6373 = vld [vmem:[%s5897 + $0xeb8] sm:$0xff]
        %v6374 = vld [vmem:[%s5897 + $0xec0] sm:$0xff]
        %v6375 = vld [vmem:[%s5897 + $0xec8] sm:$0xff]
        %v6376 = vld [vmem:[%s5897 + $0xed0] sm:$0xff]
        %v6377 = vld [vmem:[%s5897 + $0xed8] sm:$0xff]
        %v6378 = vld [vmem:[%s5897 + $0xee0] sm:$0xff]
        %v6379 = vld [vmem:[%s5897 + $0xee8] sm:$0xff]
        %v6380 = vld [vmem:[%s5897 + $0xef0] sm:$0xff]
        %v6381 = vld [vmem:[%s5897 + $0xef8] sm:$0xff]
        %v6382 = vld [vmem:[%s5897 + $0xf00] sm:$0xff]
        %v6383 = vld [vmem:[%s5897 + $0xf08] sm:$0xff]
        %v6384 = vld [vmem:[%s5897 + $0xf10] sm:$0xff]
        %v6385 = vld [vmem:[%s5897 + $0xf18] sm:$0xff]
        %v6386 = vld [vmem:[%s5897 + $0xf20] sm:$0xff]
        %v6387 = vld [vmem:[%s5897 + $0xf28] sm:$0xff]
        %v6388 = vld [vmem:[%s5897 + $0xf30] sm:$0xff]
        %v6389 = vld [vmem:[%s5897 + $0xf38] sm:$0xff]
        %v6390 = vld [vmem:[%s5897 + $0xf40] sm:$0xff]
        %v6391 = vld [vmem:[%s5897 + $0xf48] sm:$0xff]
        %v6392 = vld [vmem:[%s5897 + $0xf50] sm:$0xff]
        %v6393 = vld [vmem:[%s5897 + $0xf58] sm:$0xff]
        %v6394 = vld [vmem:[%s5897 + $0xf60] sm:$0xff]
        %v6395 = vld [vmem:[%s5897 + $0xf68] sm:$0xff]
        %v6396 = vld [vmem:[%s5897 + $0xf70] sm:$0xff]
        %v6397 = vld [vmem:[%s5897 + $0xf78] sm:$0xff]
        %v6398 = vld [vmem:[%s5897 + $0xf80] sm:$0xff]
        %v6399 = vld [vmem:[%s5897 + $0xf88] sm:$0xff]
        %v6400 = vld [vmem:[%s5897 + $0xf90] sm:$0xff]
        %v6401 = vld [vmem:[%s5897 + $0xf98] sm:$0xff]
        %v6402 = vld [vmem:[%s5897 + $0xfa0] sm:$0xff]
        %v6403 = vld [vmem:[%s5897 + $0xfa8] sm:$0xff]
        %v6404 = vld [vmem:[%s5897 + $0xfb0] sm:$0xff]
        %v6405 = vld [vmem:[%s5897 + $0xfb8] sm:$0xff]
        %v6406 = vld [vmem:[%s5897 + $0xfc0] sm:$0xff]
        %v6407 = vld [vmem:[%s5897 + $0xfc8] sm:$0xff]
        %v6408 = vld [vmem:[%s5897 + $0xfd0] sm:$0xff]
        %v6409 = vld [vmem:[%s5897 + $0xfd8] sm:$0xff]
        %v6410 = vld [vmem:[%s5897 + $0xfe0] sm:$0xff]
        %v6411 = vld [vmem:[%s5897 + $0xfe8] sm:$0xff]
        %v6412 = vld [vmem:[%s5897 + $0xff0] sm:$0xff]
        %v6413 = vld [vmem:[%s5897 + $0xff8] sm:$0xff]
        %v6414 = vld [vmem:[%s5897 + $0x1000] sm:$0xff]
        %v6415 = vld [vmem:[%s5897 + $0x1008] sm:$0xff]
        %v6416 = vld [vmem:[%s5897 + $0x1010] sm:$0xff]
        %v6417 = vld [vmem:[%s5897 + $0x1018] sm:$0xff]
        %v6418 = vld [vmem:[%s5897 + $0x1020] sm:$0xff]
        %v6419 = vld [vmem:[%s5897 + $0x1028] sm:$0xff]
        %v6420 = vld [vmem:[%s5897 + $0x1030] sm:$0xff]
        %v6421 = vld [vmem:[%s5897 + $0x1038] sm:$0xff]
        %v6422 = vld [vmem:[%s5897 + $0x1040] sm:$0xff]
        %v6423 = vld [vmem:[%s5897 + $0x1048] sm:$0xff]
        %v6424 = vld [vmem:[%s5897 + $0x1050] sm:$0xff]
        %v6425 = vld [vmem:[%s5897 + $0x1058] sm:$0xff]
        %v6426 = vld [vmem:[%s5897 + $0x1060] sm:$0xff]
        %v6427 = vld [vmem:[%s5897 + $0x1068] sm:$0xff]
        %v6428 = vld [vmem:[%s5897 + $0x1070] sm:$0xff]
        %v6429 = vld [vmem:[%s5897 + $0x1078] sm:$0xff]
        %v6430 = vld [vmem:[%s5897 + $0x1080] sm:$0xff]
        %v6431 = vld [vmem:[%s5897 + $0x1088] sm:$0xff]
        %v6432 = vld [vmem:[%s5897 + $0x1090] sm:$0xff]
        %v6433 = vld [vmem:[%s5897 + $0x1098] sm:$0xff]
        %v6434 = vld [vmem:[%s5897 + $0x10a0] sm:$0xff]
        %v6435 = vld [vmem:[%s5897 + $0x10a8] sm:$0xff]
        %v6436 = vld [vmem:[%s5897 + $0x10b0] sm:$0xff]
        %v6437 = vld [vmem:[%s5897 + $0x10b8] sm:$0xff]
        %v6438 = vld [vmem:[%s5897 + $0x10c0] sm:$0xff]
        %v6439 = vld [vmem:[%s5897 + $0x10c8] sm:$0xff]
        %v6440 = vld [vmem:[%s5897 + $0x10d0] sm:$0xff]
        %v6441 = vld [vmem:[%s5897 + $0x10d8] sm:$0xff]
        %v6442 = vld [vmem:[%s5897 + $0x10e0] sm:$0xff]
        %v6443 = vld [vmem:[%s5897 + $0x10e8] sm:$0xff]
        %v6444 = vld [vmem:[%s5897 + $0x10f0] sm:$0xff]
        %v6445 = vld [vmem:[%s5897 + $0x10f8] sm:$0xff]
        %v6446 = vld [vmem:[%s5897 + $0x1100] sm:$0xff]
        %v6447 = vld [vmem:[%s5897 + $0x1108] sm:$0xff]
        %v6448 = vld [vmem:[%s5897 + $0x1110] sm:$0xff]
        %v6449 = vld [vmem:[%s5897 + $0x1118] sm:$0xff]
        %v6450 = vld [vmem:[%s5897 + $0x1120] sm:$0xff]
        %v6451 = vld [vmem:[%s5897 + $0x1128] sm:$0xff]
        %v6452 = vld [vmem:[%s5897 + $0x1130] sm:$0xff]
        %v6453 = vld [vmem:[%s5897 + $0x1138] sm:$0xff]
        %v6454 = vld [vmem:[%s5897 + $0x1140] sm:$0xff]
        %v6455 = vld [vmem:[%s5897 + $0x1148] sm:$0xff]
        %v6456 = vld [vmem:[%s5897 + $0x1150] sm:$0xff]
        %v6457 = vld [vmem:[%s5897 + $0x1158] sm:$0xff]
        %v6458 = vld [vmem:[%s5897 + $0x1160] sm:$0xff]
        %v6459 = vld [vmem:[%s5897 + $0x1168] sm:$0xff]
        %v6460 = vld [vmem:[%s5897 + $0x1170] sm:$0xff]
        %v6461 = vld [vmem:[%s5897 + $0x1178] sm:$0xff]
        %v6462 = vld [vmem:[%s5897 + $0x1180] sm:$0xff]
        %v6463 = vld [vmem:[%s5897 + $0x1188] sm:$0xff]
        %v6464 = vld [vmem:[%s5897 + $0x1190] sm:$0xff]
        %v6465 = vld [vmem:[%s5897 + $0x1198] sm:$0xff]
        %v6466 = vld [vmem:[%s5897 + $0x11a0] sm:$0xff]
        %v6467 = vld [vmem:[%s5897 + $0x11a8] sm:$0xff]
        %v6468 = vld [vmem:[%s5897 + $0x11b0] sm:$0xff]
        %v6469 = vld [vmem:[%s5897 + $0x11b8] sm:$0xff]
        %v6470 = vld [vmem:[%s5897 + $0x11c0] sm:$0xff]
        %v6471 = vld [vmem:[%s5897 + $0x11c8] sm:$0xff]
        %v6472 = vld [vmem:[%s5897 + $0x11d0] sm:$0xff]
        %v6473 = vld [vmem:[%s5897 + $0x11d8] sm:$0xff]
        %v6474 = vld [vmem:[%s5897 + $0x11e0] sm:$0xff]
        %v6475 = vld [vmem:[%s5897 + $0x11e8] sm:$0xff]
        %v6476 = vld [vmem:[%s5897 + $0x11f0] sm:$0xff]
        %v6477 = vld [vmem:[%s5897 + $0x11f8] sm:$0xff]
        %v6478 = vld [vmem:[%s5897 + $0x1200] sm:$0xff]
        %v6479 = vld [vmem:[%s5897 + $0x1208] sm:$0xff]
        %v6480 = vld [vmem:[%s5897 + $0x1210] sm:$0xff]
        %v6481 = vld [vmem:[%s5897 + $0x1218] sm:$0xff]
        %v6482 = vld [vmem:[%s5897 + $0x1220] sm:$0xff]
        %v6483 = vld [vmem:[%s5897 + $0x1228] sm:$0xff]
        %v6484 = vld [vmem:[%s5897 + $0x1230] sm:$0xff]
        %v6485 = vld [vmem:[%s5897 + $0x1238] sm:$0xff]
        %v6486 = vld [vmem:[%s5897 + $0x1240] sm:$0xff]
        %v6487 = vld [vmem:[%s5897 + $0x1248] sm:$0xff]
        %v6488 = vld [vmem:[%s5897 + $0x1250] sm:$0xff]
        %v6489 = vld [vmem:[%s5897 + $0x1258] sm:$0xff]
        %v6490 = vld [vmem:[%s5897 + $0x1260] sm:$0xff]
        %v6491 = vld [vmem:[%s5897 + $0x1268] sm:$0xff]
        %v6492 = vld [vmem:[%s5897 + $0x1270] sm:$0xff]
        %v6493 = vld [vmem:[%s5897 + $0x1278] sm:$0xff]
        %v6494 = vld [vmem:[%s5897 + $0x1280] sm:$0xff]
        %v6495 = vld [vmem:[%s5897 + $0x1288] sm:$0xff]
        %v6496 = vld [vmem:[%s5897 + $0x1290] sm:$0xff]
        %v6497 = vld [vmem:[%s5897 + $0x1298] sm:$0xff]
        %v6498 = vld [vmem:[%s5897 + $0x12a0] sm:$0xff]
        %v6499 = vld [vmem:[%s5897 + $0x12a8] sm:$0xff]
        %v6500 = vld [vmem:[%s5897 + $0x12b0] sm:$0xff]
        %v6501 = vld [vmem:[%s5897 + $0x12b8] sm:$0xff]
        %v6502 = vld [vmem:[%s5897 + $0x12c0] sm:$0xff]
        %v6503 = vld [vmem:[%s5897 + $0x12c8] sm:$0xff]
        %v6504 = vld [vmem:[%s5897 + $0x12d0] sm:$0xff]
        %v6505 = vld [vmem:[%s5897 + $0x12d8] sm:$0xff]
        %v6506 = vld [vmem:[%s5897 + $0x12e0] sm:$0xff]
        %v6507 = vld [vmem:[%s5897 + $0x12e8] sm:$0xff]
        %v6508 = vld [vmem:[%s5897 + $0x12f0] sm:$0xff]
        %v6509 = vld [vmem:[%s5897 + $0x12f8] sm:$0xff]
        %v6510 = vld [vmem:[%s5897 + $0x1300] sm:$0xff]
        %v6511 = vld [vmem:[%s5897 + $0x1308] sm:$0xff]
        %v6512 = vld [vmem:[%s5897 + $0x1310] sm:$0xff]
        %v6513 = vld [vmem:[%s5897 + $0x1318] sm:$0xff]
        %v6514 = vld [vmem:[%s5897 + $0x1320] sm:$0xff]
        %v6515 = vld [vmem:[%s5897 + $0x1328] sm:$0xff]
        %v6516 = vld [vmem:[%s5897 + $0x1330] sm:$0xff]
        %v6517 = vld [vmem:[%s5897 + $0x1338] sm:$0xff]
        %v6518 = vld [vmem:[%s5897 + $0x1340] sm:$0xff]
        %v6519 = vld [vmem:[%s5897 + $0x1348] sm:$0xff]
        %v6520 = vld [vmem:[%s5897 + $0x1350] sm:$0xff]
        %v6521 = vld [vmem:[%s5897 + $0x1358] sm:$0xff]
        %v6522 = vld [vmem:[%s5897 + $0x1360] sm:$0xff]
        %v6523 = vld [vmem:[%s5897 + $0x1368] sm:$0xff]
        %v6524 = vld [vmem:[%s5897 + $0x1370] sm:$0xff]
        %v6525 = vld [vmem:[%s5897 + $0x1378] sm:$0xff]
        %v6526 = vld [vmem:[%s5897 + $0x1380] sm:$0xff]
        %v6527 = vld [vmem:[%s5897 + $0x1388] sm:$0xff]
        %v6528 = vld [vmem:[%s5897 + $0x1390] sm:$0xff]
        %v6529 = vld [vmem:[%s5897 + $0x1398] sm:$0xff]
        %v6530 = vld [vmem:[%s5897 + $0x13a0] sm:$0xff]
        %v6531 = vld [vmem:[%s5897 + $0x13a8] sm:$0xff]
        %v6532 = vld [vmem:[%s5897 + $0x13b0] sm:$0xff]
        %v6533 = vld [vmem:[%s5897 + $0x13b8] sm:$0xff]
        %v6534 = vld [vmem:[%s5897 + $0x13c0] sm:$0xff]
        %v6535 = vld [vmem:[%s5897 + $0x13c8] sm:$0xff]
        %v6536 = vld [vmem:[%s5897 + $0x13d0] sm:$0xff]
        %v6537 = vld [vmem:[%s5897 + $0x13d8] sm:$0xff]
        %v6538 = vld [vmem:[%s5897 + $0x13e0] sm:$0xff]
        %v6539 = vld [vmem:[%s5897 + $0x13e8] sm:$0xff]
        %v6540 = vld [vmem:[%s5897 + $0x13f0] sm:$0xff]
        %v6541 = vld [vmem:[%s5897 + $0x13f8] sm:$0xff]
        %v7054 = vunpack.c.l.b16 %v6030
        %v7055 = vunpack.c.h.b16 %v6030
        %v7056 = vunpack.c.l.b16 %v6031
        %v7057 = vunpack.c.h.b16 %v6031
        %v7058 = vunpack.c.l.b16 %v6032
        %v7059 = vunpack.c.h.b16 %v6032
        %v7060 = vunpack.c.l.b16 %v6033
        %v7061 = vunpack.c.h.b16 %v6033
        %v7062 = vunpack.c.l.b16 %v6034
        %v7063 = vunpack.c.h.b16 %v6034
        %v7064 = vunpack.c.l.b16 %v6035
        %v7065 = vunpack.c.h.b16 %v6035
        %v7066 = vunpack.c.l.b16 %v6036
        %v7067 = vunpack.c.h.b16 %v6036
        %v7068 = vunpack.c.l.b16 %v6037
        %v7069 = vunpack.c.h.b16 %v6037
        %v7070 = vunpack.c.l.b16 %v6038
        %v7071 = vunpack.c.h.b16 %v6038
        %v7072 = vunpack.c.l.b16 %v6039
        %v7073 = vunpack.c.h.b16 %v6039
        %v7074 = vunpack.c.l.b16 %v6040
        %v7075 = vunpack.c.h.b16 %v6040
        %v7076 = vunpack.c.l.b16 %v6041
        %v7077 = vunpack.c.h.b16 %v6041
        %v7078 = vunpack.c.l.b16 %v6042
        %v7079 = vunpack.c.h.b16 %v6042
        %v7080 = vunpack.c.l.b16 %v6043
        %v7081 = vunpack.c.h.b16 %v6043
        %v7082 = vunpack.c.l.b16 %v6044
        %v7083 = vunpack.c.h.b16 %v6044
        %v7084 = vunpack.c.l.b16 %v6045
        %v7085 = vunpack.c.h.b16 %v6045
        %v7086 = vunpack.c.l.b16 %v6046
        %v7087 = vunpack.c.h.b16 %v6046
        %v7088 = vunpack.c.l.b16 %v6047
        %v7089 = vunpack.c.h.b16 %v6047
        %v7090 = vunpack.c.l.b16 %v6048
        %v7091 = vunpack.c.h.b16 %v6048
        %v7092 = vunpack.c.l.b16 %v6049
        %v7093 = vunpack.c.h.b16 %v6049
        %v7094 = vunpack.c.l.b16 %v6050
        %v7095 = vunpack.c.h.b16 %v6050
        %v7096 = vunpack.c.l.b16 %v6051
        %v7097 = vunpack.c.h.b16 %v6051
        %v7098 = vunpack.c.l.b16 %v6052
        %v7099 = vunpack.c.h.b16 %v6052
        %v7100 = vunpack.c.l.b16 %v6053
        %v7101 = vunpack.c.h.b16 %v6053
        %v7102 = vunpack.c.l.b16 %v6054
        %v7103 = vunpack.c.h.b16 %v6054
        %v7104 = vunpack.c.l.b16 %v6055
        %v7105 = vunpack.c.h.b16 %v6055
        %v7106 = vunpack.c.l.b16 %v6056
        %v7107 = vunpack.c.h.b16 %v6056
        %v7108 = vunpack.c.l.b16 %v6057
        %v7109 = vunpack.c.h.b16 %v6057
        %v7110 = vunpack.c.l.b16 %v6058
        %v7111 = vunpack.c.h.b16 %v6058
        %v7112 = vunpack.c.l.b16 %v6059
        %v7113 = vunpack.c.h.b16 %v6059
        %v7114 = vunpack.c.l.b16 %v6060
        %v7115 = vunpack.c.h.b16 %v6060
        %v7116 = vunpack.c.l.b16 %v6061
        %v7117 = vunpack.c.h.b16 %v6061
        %v7118 = vunpack.c.l.b16 %v6062
        %v7119 = vunpack.c.h.b16 %v6062
        %v7120 = vunpack.c.l.b16 %v6063
        %v7121 = vunpack.c.h.b16 %v6063
        %v7122 = vunpack.c.l.b16 %v6064
        %v7123 = vunpack.c.h.b16 %v6064
        %v7124 = vunpack.c.l.b16 %v6065
        %v7125 = vunpack.c.h.b16 %v6065
        %v7126 = vunpack.c.l.b16 %v6066
        %v7127 = vunpack.c.h.b16 %v6066
        %v7128 = vunpack.c.l.b16 %v6067
        %v7129 = vunpack.c.h.b16 %v6067
        %v7130 = vunpack.c.l.b16 %v6068
        %v7131 = vunpack.c.h.b16 %v6068
        %v7132 = vunpack.c.l.b16 %v6069
        %v7133 = vunpack.c.h.b16 %v6069
        %v7134 = vunpack.c.l.b16 %v6070
        %v7135 = vunpack.c.h.b16 %v6070
        %v7136 = vunpack.c.l.b16 %v6071
        %v7137 = vunpack.c.h.b16 %v6071
        %v7138 = vunpack.c.l.b16 %v6072
        %v7139 = vunpack.c.h.b16 %v6072
        %v7140 = vunpack.c.l.b16 %v6073
        %v7141 = vunpack.c.h.b16 %v6073
        %v7142 = vunpack.c.l.b16 %v6074
        %v7143 = vunpack.c.h.b16 %v6074
        %v7144 = vunpack.c.l.b16 %v6075
        %v7145 = vunpack.c.h.b16 %v6075
        %v7146 = vunpack.c.l.b16 %v6076
        %v7147 = vunpack.c.h.b16 %v6076
        %v7148 = vunpack.c.l.b16 %v6077
        %v7149 = vunpack.c.h.b16 %v6077
        %v7150 = vunpack.c.l.b16 %v6078
        %v7151 = vunpack.c.h.b16 %v6078
        %v7152 = vunpack.c.l.b16 %v6079
        %v7153 = vunpack.c.h.b16 %v6079
        %v7154 = vunpack.c.l.b16 %v6080
        %v7155 = vunpack.c.h.b16 %v6080
        %v7156 = vunpack.c.l.b16 %v6081
        %v7157 = vunpack.c.h.b16 %v6081
        %v7158 = vunpack.c.l.b16 %v6082
        %v7159 = vunpack.c.h.b16 %v6082
        %v7160 = vunpack.c.l.b16 %v6083
        %v7161 = vunpack.c.h.b16 %v6083
        %v7162 = vunpack.c.l.b16 %v6084
        %v7163 = vunpack.c.h.b16 %v6084
        %v7164 = vunpack.c.l.b16 %v6085
        %v7165 = vunpack.c.h.b16 %v6085
        %v7166 = vunpack.c.l.b16 %v6086
        %v7167 = vunpack.c.h.b16 %v6086
        %v7168 = vunpack.c.l.b16 %v6087
        %v7169 = vunpack.c.h.b16 %v6087
        %v7170 = vunpack.c.l.b16 %v6088
        %v7171 = vunpack.c.h.b16 %v6088
        %v7172 = vunpack.c.l.b16 %v6089
        %v7173 = vunpack.c.h.b16 %v6089
        %v7174 = vunpack.c.l.b16 %v6090
        %v7175 = vunpack.c.h.b16 %v6090
        %v7176 = vunpack.c.l.b16 %v6091
        %v7177 = vunpack.c.h.b16 %v6091
        %v7178 = vunpack.c.l.b16 %v6092
        %v7179 = vunpack.c.h.b16 %v6092
        %v7180 = vunpack.c.l.b16 %v6093
        %v7181 = vunpack.c.h.b16 %v6093
        %v7182 = vunpack.c.l.b16 %v6094
        %v7183 = vunpack.c.h.b16 %v6094
        %v7184 = vunpack.c.l.b16 %v6095
        %v7185 = vunpack.c.h.b16 %v6095
        %v7186 = vunpack.c.l.b16 %v6096
        %v7187 = vunpack.c.h.b16 %v6096
        %v7188 = vunpack.c.l.b16 %v6097
        %v7189 = vunpack.c.h.b16 %v6097
        %v7190 = vunpack.c.l.b16 %v6098
        %v7191 = vunpack.c.h.b16 %v6098
        %v7192 = vunpack.c.l.b16 %v6099
        %v7193 = vunpack.c.h.b16 %v6099
        %v7194 = vunpack.c.l.b16 %v6100
        %v7195 = vunpack.c.h.b16 %v6100
        %v7196 = vunpack.c.l.b16 %v6101
        %v7197 = vunpack.c.h.b16 %v6101
        %v7198 = vunpack.c.l.b16 %v6102
        %v7199 = vunpack.c.h.b16 %v6102
        %v7200 = vunpack.c.l.b16 %v6103
        %v7201 = vunpack.c.h.b16 %v6103
        %v7202 = vunpack.c.l.b16 %v6104
        %v7203 = vunpack.c.h.b16 %v6104
        %v7204 = vunpack.c.l.b16 %v6105
        %v7205 = vunpack.c.h.b16 %v6105
        %v7206 = vunpack.c.l.b16 %v6106
        %v7207 = vunpack.c.h.b16 %v6106
        %v7208 = vunpack.c.l.b16 %v6107
        %v7209 = vunpack.c.h.b16 %v6107
        %v7210 = vunpack.c.l.b16 %v6108
        %v7211 = vunpack.c.h.b16 %v6108
        %v7212 = vunpack.c.l.b16 %v6109
        %v7213 = vunpack.c.h.b16 %v6109
        %v7214 = vunpack.c.l.b16 %v6110
        %v7215 = vunpack.c.h.b16 %v6110
        %v7216 = vunpack.c.l.b16 %v6111
        %v7217 = vunpack.c.h.b16 %v6111
        %v7218 = vunpack.c.l.b16 %v6112
        %v7219 = vunpack.c.h.b16 %v6112
        %v7220 = vunpack.c.l.b16 %v6113
        %v7221 = vunpack.c.h.b16 %v6113
        %v7222 = vunpack.c.l.b16 %v6114
        %v7223 = vunpack.c.h.b16 %v6114
        %v7224 = vunpack.c.l.b16 %v6115
        %v7225 = vunpack.c.h.b16 %v6115
        %v7226 = vunpack.c.l.b16 %v6116
        %v7227 = vunpack.c.h.b16 %v6116
        %v7228 = vunpack.c.l.b16 %v6117
        %v7229 = vunpack.c.h.b16 %v6117
        %v7230 = vunpack.c.l.b16 %v6118
        %v7231 = vunpack.c.h.b16 %v6118
        %v7232 = vunpack.c.l.b16 %v6119
        %v7233 = vunpack.c.h.b16 %v6119
        %v7234 = vunpack.c.l.b16 %v6120
        %v7235 = vunpack.c.h.b16 %v6120
        %v7236 = vunpack.c.l.b16 %v6121
        %v7237 = vunpack.c.h.b16 %v6121
        %v7238 = vunpack.c.l.b16 %v6122
        %v7239 = vunpack.c.h.b16 %v6122
        %v7240 = vunpack.c.l.b16 %v6123
        %v7241 = vunpack.c.h.b16 %v6123
        %v7242 = vunpack.c.l.b16 %v6124
        %v7243 = vunpack.c.h.b16 %v6124
        %v7244 = vunpack.c.l.b16 %v6125
        %v7245 = vunpack.c.h.b16 %v6125
        %v7246 = vunpack.c.l.b16 %v6126
        %v7247 = vunpack.c.h.b16 %v6126
        %v7248 = vunpack.c.l.b16 %v6127
        %v7249 = vunpack.c.h.b16 %v6127
        %v7250 = vunpack.c.l.b16 %v6128
        %v7251 = vunpack.c.h.b16 %v6128
        %v7252 = vunpack.c.l.b16 %v6129
        %v7253 = vunpack.c.h.b16 %v6129
        %v7254 = vunpack.c.l.b16 %v6130
        %v7255 = vunpack.c.h.b16 %v6130
        %v7256 = vunpack.c.l.b16 %v6131
        %v7257 = vunpack.c.h.b16 %v6131
        %v7258 = vunpack.c.l.b16 %v6132
        %v7259 = vunpack.c.h.b16 %v6132
        %v7260 = vunpack.c.l.b16 %v6133
        %v7261 = vunpack.c.h.b16 %v6133
        %v7262 = vunpack.c.l.b16 %v6134
        %v7263 = vunpack.c.h.b16 %v6134
        %v7264 = vunpack.c.l.b16 %v6135
        %v7265 = vunpack.c.h.b16 %v6135
        %v7266 = vunpack.c.l.b16 %v6136
        %v7267 = vunpack.c.h.b16 %v6136
        %v7268 = vunpack.c.l.b16 %v6137
        %v7269 = vunpack.c.h.b16 %v6137
        %v7270 = vunpack.c.l.b16 %v6138
        %v7271 = vunpack.c.h.b16 %v6138
        %v7272 = vunpack.c.l.b16 %v6139
        %v7273 = vunpack.c.h.b16 %v6139
        %v7274 = vunpack.c.l.b16 %v6140
        %v7275 = vunpack.c.h.b16 %v6140
        %v7276 = vunpack.c.l.b16 %v6141
        %v7277 = vunpack.c.h.b16 %v6141
        %v7278 = vunpack.c.l.b16 %v6142
        %v7279 = vunpack.c.h.b16 %v6142
        %v7280 = vunpack.c.l.b16 %v6143
        %v7281 = vunpack.c.h.b16 %v6143
        %v7282 = vunpack.c.l.b16 %v6144
        %v7283 = vunpack.c.h.b16 %v6144
        %v7284 = vunpack.c.l.b16 %v6145
        %v7285 = vunpack.c.h.b16 %v6145
        %v7286 = vunpack.c.l.b16 %v6146
        %v7287 = vunpack.c.h.b16 %v6146
        %v7288 = vunpack.c.l.b16 %v6147
        %v7289 = vunpack.c.h.b16 %v6147
        %v7290 = vunpack.c.l.b16 %v6148
        %v7291 = vunpack.c.h.b16 %v6148
        %v7292 = vunpack.c.l.b16 %v6149
        %v7293 = vunpack.c.h.b16 %v6149
        %v7294 = vunpack.c.l.b16 %v6150
        %v7295 = vunpack.c.h.b16 %v6150
        %v7296 = vunpack.c.l.b16 %v6151
        %v7297 = vunpack.c.h.b16 %v6151
        %v7298 = vunpack.c.l.b16 %v6152
        %v7299 = vunpack.c.h.b16 %v6152
        %v7300 = vunpack.c.l.b16 %v6153
        %v7301 = vunpack.c.h.b16 %v6153
        %v7302 = vunpack.c.l.b16 %v6154
        %v7303 = vunpack.c.h.b16 %v6154
        %v7304 = vunpack.c.l.b16 %v6155
        %v7305 = vunpack.c.h.b16 %v6155
        %v7306 = vunpack.c.l.b16 %v6156
        %v7307 = vunpack.c.h.b16 %v6156
        %v7308 = vunpack.c.l.b16 %v6157
        %v7309 = vunpack.c.h.b16 %v6157
        %v7310 = vunpack.c.l.b16 %v6158
        %v7311 = vunpack.c.h.b16 %v6158
        %v7312 = vunpack.c.l.b16 %v6159
        %v7313 = vunpack.c.h.b16 %v6159
        %v7314 = vunpack.c.l.b16 %v6160
        %v7315 = vunpack.c.h.b16 %v6160
        %v7316 = vunpack.c.l.b16 %v6161
        %v7317 = vunpack.c.h.b16 %v6161
        %v7318 = vunpack.c.l.b16 %v6162
        %v7319 = vunpack.c.h.b16 %v6162
        %v7320 = vunpack.c.l.b16 %v6163
        %v7321 = vunpack.c.h.b16 %v6163
        %v7322 = vunpack.c.l.b16 %v6164
        %v7323 = vunpack.c.h.b16 %v6164
        %v7324 = vunpack.c.l.b16 %v6165
        %v7325 = vunpack.c.h.b16 %v6165
        %v7326 = vunpack.c.l.b16 %v6166
        %v7327 = vunpack.c.h.b16 %v6166
        %v7328 = vunpack.c.l.b16 %v6167
        %v7329 = vunpack.c.h.b16 %v6167
        %v7330 = vunpack.c.l.b16 %v6168
        %v7331 = vunpack.c.h.b16 %v6168
        %v7332 = vunpack.c.l.b16 %v6169
        %v7333 = vunpack.c.h.b16 %v6169
        %v7334 = vunpack.c.l.b16 %v6170
        %v7335 = vunpack.c.h.b16 %v6170
        %v7336 = vunpack.c.l.b16 %v6171
        %v7337 = vunpack.c.h.b16 %v6171
        %v7338 = vunpack.c.l.b16 %v6172
        %v7339 = vunpack.c.h.b16 %v6172
        %v7340 = vunpack.c.l.b16 %v6173
        %v7341 = vunpack.c.h.b16 %v6173
        %v7342 = vunpack.c.l.b16 %v6174
        %v7343 = vunpack.c.h.b16 %v6174
        %v7344 = vunpack.c.l.b16 %v6175
        %v7345 = vunpack.c.h.b16 %v6175
        %v7346 = vunpack.c.l.b16 %v6176
        %v7347 = vunpack.c.h.b16 %v6176
        %v7348 = vunpack.c.l.b16 %v6177
        %v7349 = vunpack.c.h.b16 %v6177
        %v7350 = vunpack.c.l.b16 %v6178
        %v7351 = vunpack.c.h.b16 %v6178
        %v7352 = vunpack.c.l.b16 %v6179
        %v7353 = vunpack.c.h.b16 %v6179
        %v7354 = vunpack.c.l.b16 %v6180
        %v7355 = vunpack.c.h.b16 %v6180
        %v7356 = vunpack.c.l.b16 %v6181
        %v7357 = vunpack.c.h.b16 %v6181
        %v7358 = vunpack.c.l.b16 %v6182
        %v7359 = vunpack.c.h.b16 %v6182
        %v7360 = vunpack.c.l.b16 %v6183
        %v7361 = vunpack.c.h.b16 %v6183
        %v7362 = vunpack.c.l.b16 %v6184
        %v7363 = vunpack.c.h.b16 %v6184
        %v7364 = vunpack.c.l.b16 %v6185
        %v7365 = vunpack.c.h.b16 %v6185
        %v7366 = vunpack.c.l.b16 %v6186
        %v7367 = vunpack.c.h.b16 %v6186
        %v7368 = vunpack.c.l.b16 %v6187
        %v7369 = vunpack.c.h.b16 %v6187
        %v7370 = vunpack.c.l.b16 %v6188
        %v7371 = vunpack.c.h.b16 %v6188
        %v7372 = vunpack.c.l.b16 %v6189
        %v7373 = vunpack.c.h.b16 %v6189
        %v7374 = vunpack.c.l.b16 %v6190
        %v7375 = vunpack.c.h.b16 %v6190
        %v7376 = vunpack.c.l.b16 %v6191
        %v7377 = vunpack.c.h.b16 %v6191
        %v7378 = vunpack.c.l.b16 %v6192
        %v7379 = vunpack.c.h.b16 %v6192
        %v7380 = vunpack.c.l.b16 %v6193
        %v7381 = vunpack.c.h.b16 %v6193
        %v7382 = vunpack.c.l.b16 %v6194
        %v7383 = vunpack.c.h.b16 %v6194
        %v7384 = vunpack.c.l.b16 %v6195
        %v7385 = vunpack.c.h.b16 %v6195
        %v7386 = vunpack.c.l.b16 %v6196
        %v7387 = vunpack.c.h.b16 %v6196
        %v7388 = vunpack.c.l.b16 %v6197
        %v7389 = vunpack.c.h.b16 %v6197
        %v7390 = vunpack.c.l.b16 %v6198
        %v7391 = vunpack.c.h.b16 %v6198
        %v7392 = vunpack.c.l.b16 %v6199
        %v7393 = vunpack.c.h.b16 %v6199
        %v7394 = vunpack.c.l.b16 %v6200
        %v7395 = vunpack.c.h.b16 %v6200
        %v7396 = vunpack.c.l.b16 %v6201
        %v7397 = vunpack.c.h.b16 %v6201
        %v7398 = vunpack.c.l.b16 %v6202
        %v7399 = vunpack.c.h.b16 %v6202
        %v7400 = vunpack.c.l.b16 %v6203
        %v7401 = vunpack.c.h.b16 %v6203
        %v7402 = vunpack.c.l.b16 %v6204
        %v7403 = vunpack.c.h.b16 %v6204
        %v7404 = vunpack.c.l.b16 %v6205
        %v7405 = vunpack.c.h.b16 %v6205
        %v7406 = vunpack.c.l.b16 %v6206
        %v7407 = vunpack.c.h.b16 %v6206
        %v7408 = vunpack.c.l.b16 %v6207
        %v7409 = vunpack.c.h.b16 %v6207
        %v7410 = vunpack.c.l.b16 %v6208
        %v7411 = vunpack.c.h.b16 %v6208
        %v7412 = vunpack.c.l.b16 %v6209
        %v7413 = vunpack.c.h.b16 %v6209
        %v7414 = vunpack.c.l.b16 %v6210
        %v7415 = vunpack.c.h.b16 %v6210
        %v7416 = vunpack.c.l.b16 %v6211
        %v7417 = vunpack.c.h.b16 %v6211
        %v7418 = vunpack.c.l.b16 %v6212
        %v7419 = vunpack.c.h.b16 %v6212
        %v7420 = vunpack.c.l.b16 %v6213
        %v7421 = vunpack.c.h.b16 %v6213
        %v7422 = vunpack.c.l.b16 %v6214
        %v7423 = vunpack.c.h.b16 %v6214
        %v7424 = vunpack.c.l.b16 %v6215
        %v7425 = vunpack.c.h.b16 %v6215
        %v7426 = vunpack.c.l.b16 %v6216
        %v7427 = vunpack.c.h.b16 %v6216
        %v7428 = vunpack.c.l.b16 %v6217
        %v7429 = vunpack.c.h.b16 %v6217
        %v7430 = vunpack.c.l.b16 %v6218
        %v7431 = vunpack.c.h.b16 %v6218
        %v7432 = vunpack.c.l.b16 %v6219
        %v7433 = vunpack.c.h.b16 %v6219
        %v7434 = vunpack.c.l.b16 %v6220
        %v7435 = vunpack.c.h.b16 %v6220
        %v7436 = vunpack.c.l.b16 %v6221
        %v7437 = vunpack.c.h.b16 %v6221
        %v7438 = vunpack.c.l.b16 %v6222
        %v7439 = vunpack.c.h.b16 %v6222
        %v7440 = vunpack.c.l.b16 %v6223
        %v7441 = vunpack.c.h.b16 %v6223
        %v7442 = vunpack.c.l.b16 %v6224
        %v7443 = vunpack.c.h.b16 %v6224
        %v7444 = vunpack.c.l.b16 %v6225
        %v7445 = vunpack.c.h.b16 %v6225
        %v7446 = vunpack.c.l.b16 %v6226
        %v7447 = vunpack.c.h.b16 %v6226
        %v7448 = vunpack.c.l.b16 %v6227
        %v7449 = vunpack.c.h.b16 %v6227
        %v7450 = vunpack.c.l.b16 %v6228
        %v7451 = vunpack.c.h.b16 %v6228
        %v7452 = vunpack.c.l.b16 %v6229
        %v7453 = vunpack.c.h.b16 %v6229
        %v7454 = vunpack.c.l.b16 %v6230
        %v7455 = vunpack.c.h.b16 %v6230
        %v7456 = vunpack.c.l.b16 %v6231
        %v7457 = vunpack.c.h.b16 %v6231
        %v7458 = vunpack.c.l.b16 %v6232
        %v7459 = vunpack.c.h.b16 %v6232
        %v7460 = vunpack.c.l.b16 %v6233
        %v7461 = vunpack.c.h.b16 %v6233
        %v7462 = vunpack.c.l.b16 %v6234
        %v7463 = vunpack.c.h.b16 %v6234
        %v7464 = vunpack.c.l.b16 %v6235
        %v7465 = vunpack.c.h.b16 %v6235
        %v7466 = vunpack.c.l.b16 %v6236
        %v7467 = vunpack.c.h.b16 %v6236
        %v7468 = vunpack.c.l.b16 %v6237
        %v7469 = vunpack.c.h.b16 %v6237
        %v7470 = vunpack.c.l.b16 %v6238
        %v7471 = vunpack.c.h.b16 %v6238
        %v7472 = vunpack.c.l.b16 %v6239
        %v7473 = vunpack.c.h.b16 %v6239
        %v7474 = vunpack.c.l.b16 %v6240
        %v7475 = vunpack.c.h.b16 %v6240
        %v7476 = vunpack.c.l.b16 %v6241
        %v7477 = vunpack.c.h.b16 %v6241
        %v7478 = vunpack.c.l.b16 %v6242
        %v7479 = vunpack.c.h.b16 %v6242
        %v7480 = vunpack.c.l.b16 %v6243
        %v7481 = vunpack.c.h.b16 %v6243
        %v7482 = vunpack.c.l.b16 %v6244
        %v7483 = vunpack.c.h.b16 %v6244
        %v7484 = vunpack.c.l.b16 %v6245
        %v7485 = vunpack.c.h.b16 %v6245
        %v7486 = vunpack.c.l.b16 %v6246
        %v7487 = vunpack.c.h.b16 %v6246
        %v7488 = vunpack.c.l.b16 %v6247
        %v7489 = vunpack.c.h.b16 %v6247
        %v7490 = vunpack.c.l.b16 %v6248
        %v7491 = vunpack.c.h.b16 %v6248
        %v7492 = vunpack.c.l.b16 %v6249
        %v7493 = vunpack.c.h.b16 %v6249
        %v7494 = vunpack.c.l.b16 %v6250
        %v7495 = vunpack.c.h.b16 %v6250
        %v7496 = vunpack.c.l.b16 %v6251
        %v7497 = vunpack.c.h.b16 %v6251
        %v7498 = vunpack.c.l.b16 %v6252
        %v7499 = vunpack.c.h.b16 %v6252
        %v7500 = vunpack.c.l.b16 %v6253
        %v7501 = vunpack.c.h.b16 %v6253
        %v7502 = vunpack.c.l.b16 %v6254
        %v7503 = vunpack.c.h.b16 %v6254
        %v7504 = vunpack.c.l.b16 %v6255
        %v7505 = vunpack.c.h.b16 %v6255
        %v7506 = vunpack.c.l.b16 %v6256
        %v7507 = vunpack.c.h.b16 %v6256
        %v7508 = vunpack.c.l.b16 %v6257
        %v7509 = vunpack.c.h.b16 %v6257
        %v7510 = vunpack.c.l.b16 %v6258
        %v7511 = vunpack.c.h.b16 %v6258
        %v7512 = vunpack.c.l.b16 %v6259
        %v7513 = vunpack.c.h.b16 %v6259
        %v7514 = vunpack.c.l.b16 %v6260
        %v7515 = vunpack.c.h.b16 %v6260
        %v7516 = vunpack.c.l.b16 %v6261
        %v7517 = vunpack.c.h.b16 %v6261
        %v7518 = vunpack.c.l.b16 %v6262
        %v7519 = vunpack.c.h.b16 %v6262
        %v7520 = vunpack.c.l.b16 %v6263
        %v7521 = vunpack.c.h.b16 %v6263
        %v7522 = vunpack.c.l.b16 %v6264
        %v7523 = vunpack.c.h.b16 %v6264
        %v7524 = vunpack.c.l.b16 %v6265
        %v7525 = vunpack.c.h.b16 %v6265
        %v7526 = vunpack.c.l.b16 %v6266
        %v7527 = vunpack.c.h.b16 %v6266
        %v7528 = vunpack.c.l.b16 %v6267
        %v7529 = vunpack.c.h.b16 %v6267
        %v7530 = vunpack.c.l.b16 %v6268
        %v7531 = vunpack.c.h.b16 %v6268
        %v7532 = vunpack.c.l.b16 %v6269
        %v7533 = vunpack.c.h.b16 %v6269
        %v7534 = vunpack.c.l.b16 %v6270
        %v7535 = vunpack.c.h.b16 %v6270
        %v7536 = vunpack.c.l.b16 %v6271
        %v7537 = vunpack.c.h.b16 %v6271
        %v7538 = vunpack.c.l.b16 %v6272
        %v7539 = vunpack.c.h.b16 %v6272
        %v7540 = vunpack.c.l.b16 %v6273
        %v7541 = vunpack.c.h.b16 %v6273
        %v7542 = vunpack.c.l.b16 %v6274
        %v7543 = vunpack.c.h.b16 %v6274
        %v7544 = vunpack.c.l.b16 %v6275
        %v7545 = vunpack.c.h.b16 %v6275
        %v7546 = vunpack.c.l.b16 %v6276
        %v7547 = vunpack.c.h.b16 %v6276
        %v7548 = vunpack.c.l.b16 %v6277
        %v7549 = vunpack.c.h.b16 %v6277
        %v7550 = vunpack.c.l.b16 %v6278
        %v7551 = vunpack.c.h.b16 %v6278
        %v7552 = vunpack.c.l.b16 %v6279
        %v7553 = vunpack.c.h.b16 %v6279
        %v7554 = vunpack.c.l.b16 %v6280
        %v7555 = vunpack.c.h.b16 %v6280
        %v7556 = vunpack.c.l.b16 %v6281
        %v7557 = vunpack.c.h.b16 %v6281
        %v7558 = vunpack.c.l.b16 %v6282
        %v7559 = vunpack.c.h.b16 %v6282
        %v7560 = vunpack.c.l.b16 %v6283
        %v7561 = vunpack.c.h.b16 %v6283
        %v7562 = vunpack.c.l.b16 %v6284
        %v7563 = vunpack.c.h.b16 %v6284
        %v7564 = vunpack.c.l.b16 %v6285
        %v7565 = vunpack.c.h.b16 %v6285
        %v7566 = vunpack.c.l.b16 %v6286
        %v7567 = vunpack.c.h.b16 %v6286
        %v7568 = vunpack.c.l.b16 %v6287
        %v7569 = vunpack.c.h.b16 %v6287
        %v7570 = vunpack.c.l.b16 %v6288
        %v7571 = vunpack.c.h.b16 %v6288
        %v7572 = vunpack.c.l.b16 %v6289
        %v7573 = vunpack.c.h.b16 %v6289
        %v7574 = vunpack.c.l.b16 %v6290
        %v7575 = vunpack.c.h.b16 %v6290
        %v7576 = vunpack.c.l.b16 %v6291
        %v7577 = vunpack.c.h.b16 %v6291
        %v7578 = vunpack.c.l.b16 %v6292
        %v7579 = vunpack.c.h.b16 %v6292
        %v7580 = vunpack.c.l.b16 %v6293
        %v7581 = vunpack.c.h.b16 %v6293
        %v7582 = vunpack.c.l.b16 %v6294
        %v7583 = vunpack.c.h.b16 %v6294
        %v7584 = vunpack.c.l.b16 %v6295
        %v7585 = vunpack.c.h.b16 %v6295
        %v7586 = vunpack.c.l.b16 %v6296
        %v7587 = vunpack.c.h.b16 %v6296
        %v7588 = vunpack.c.l.b16 %v6297
        %v7589 = vunpack.c.h.b16 %v6297
        %v7590 = vunpack.c.l.b16 %v6298
        %v7591 = vunpack.c.h.b16 %v6298
        %v7592 = vunpack.c.l.b16 %v6299
        %v7593 = vunpack.c.h.b16 %v6299
        %v7594 = vunpack.c.l.b16 %v6300
        %v7595 = vunpack.c.h.b16 %v6300
        %v7596 = vunpack.c.l.b16 %v6301
        %v7597 = vunpack.c.h.b16 %v6301
        %v7598 = vunpack.c.l.b16 %v6302
        %v7599 = vunpack.c.h.b16 %v6302
        %v7600 = vunpack.c.l.b16 %v6303
        %v7601 = vunpack.c.h.b16 %v6303
        %v7602 = vunpack.c.l.b16 %v6304
        %v7603 = vunpack.c.h.b16 %v6304
        %v7604 = vunpack.c.l.b16 %v6305
        %v7605 = vunpack.c.h.b16 %v6305
        %v7606 = vunpack.c.l.b16 %v6306
        %v7607 = vunpack.c.h.b16 %v6306
        %v7608 = vunpack.c.l.b16 %v6307
        %v7609 = vunpack.c.h.b16 %v6307
        %v7610 = vunpack.c.l.b16 %v6308
        %v7611 = vunpack.c.h.b16 %v6308
        %v7612 = vunpack.c.l.b16 %v6309
        %v7613 = vunpack.c.h.b16 %v6309
        %v7614 = vunpack.c.l.b16 %v6310
        %v7615 = vunpack.c.h.b16 %v6310
        %v7616 = vunpack.c.l.b16 %v6311
        %v7617 = vunpack.c.h.b16 %v6311
        %v7618 = vunpack.c.l.b16 %v6312
        %v7619 = vunpack.c.h.b16 %v6312
        %v7620 = vunpack.c.l.b16 %v6313
        %v7621 = vunpack.c.h.b16 %v6313
        %v7622 = vunpack.c.l.b16 %v6314
        %v7623 = vunpack.c.h.b16 %v6314
        %v7624 = vunpack.c.l.b16 %v6315
        %v7625 = vunpack.c.h.b16 %v6315
        %v7626 = vunpack.c.l.b16 %v6316
        %v7627 = vunpack.c.h.b16 %v6316
        %v7628 = vunpack.c.l.b16 %v6317
        %v7629 = vunpack.c.h.b16 %v6317
        %v7630 = vunpack.c.l.b16 %v6318
        %v7631 = vunpack.c.h.b16 %v6318
        %v7632 = vunpack.c.l.b16 %v6319
        %v7633 = vunpack.c.h.b16 %v6319
        %v7634 = vunpack.c.l.b16 %v6320
        %v7635 = vunpack.c.h.b16 %v6320
        %v7636 = vunpack.c.l.b16 %v6321
        %v7637 = vunpack.c.h.b16 %v6321
        %v7638 = vunpack.c.l.b16 %v6322
        %v7639 = vunpack.c.h.b16 %v6322
        %v7640 = vunpack.c.l.b16 %v6323
        %v7641 = vunpack.c.h.b16 %v6323
        %v7642 = vunpack.c.l.b16 %v6324
        %v7643 = vunpack.c.h.b16 %v6324
        %v7644 = vunpack.c.l.b16 %v6325
        %v7645 = vunpack.c.h.b16 %v6325
        %v7646 = vunpack.c.l.b16 %v6326
        %v7647 = vunpack.c.h.b16 %v6326
        %v7648 = vunpack.c.l.b16 %v6327
        %v7649 = vunpack.c.h.b16 %v6327
        %v7650 = vunpack.c.l.b16 %v6328
        %v7651 = vunpack.c.h.b16 %v6328
        %v7652 = vunpack.c.l.b16 %v6329
        %v7653 = vunpack.c.h.b16 %v6329
        %v7654 = vunpack.c.l.b16 %v6330
        %v7655 = vunpack.c.h.b16 %v6330
        %v7656 = vunpack.c.l.b16 %v6331
        %v7657 = vunpack.c.h.b16 %v6331
        %v7658 = vunpack.c.l.b16 %v6332
        %v7659 = vunpack.c.h.b16 %v6332
        %v7660 = vunpack.c.l.b16 %v6333
        %v7661 = vunpack.c.h.b16 %v6333
        %v7662 = vunpack.c.l.b16 %v6334
        %v7663 = vunpack.c.h.b16 %v6334
        %v7664 = vunpack.c.l.b16 %v6335
        %v7665 = vunpack.c.h.b16 %v6335
        %v7666 = vunpack.c.l.b16 %v6336
        %v7667 = vunpack.c.h.b16 %v6336
        %v7668 = vunpack.c.l.b16 %v6337
        %v7669 = vunpack.c.h.b16 %v6337
        %v7670 = vunpack.c.l.b16 %v6338
        %v7671 = vunpack.c.h.b16 %v6338
        %v7672 = vunpack.c.l.b16 %v6339
        %v7673 = vunpack.c.h.b16 %v6339
        %v7674 = vunpack.c.l.b16 %v6340
        %v7675 = vunpack.c.h.b16 %v6340
        %v7676 = vunpack.c.l.b16 %v6341
        %v7677 = vunpack.c.h.b16 %v6341
        %v7678 = vunpack.c.l.b16 %v6342
        %v7679 = vunpack.c.h.b16 %v6342
        %v7680 = vunpack.c.l.b16 %v6343
        %v7681 = vunpack.c.h.b16 %v6343
        %v7682 = vunpack.c.l.b16 %v6344
        %v7683 = vunpack.c.h.b16 %v6344
        %v7684 = vunpack.c.l.b16 %v6345
        %v7685 = vunpack.c.h.b16 %v6345
        %v7686 = vunpack.c.l.b16 %v6346
        %v7687 = vunpack.c.h.b16 %v6346
        %v7688 = vunpack.c.l.b16 %v6347
        %v7689 = vunpack.c.h.b16 %v6347
        %v7690 = vunpack.c.l.b16 %v6348
        %v7691 = vunpack.c.h.b16 %v6348
        %v7692 = vunpack.c.l.b16 %v6349
        %v7693 = vunpack.c.h.b16 %v6349
        %v7694 = vunpack.c.l.b16 %v6350
        %v7695 = vunpack.c.h.b16 %v6350
        %v7696 = vunpack.c.l.b16 %v6351
        %v7697 = vunpack.c.h.b16 %v6351
        %v7698 = vunpack.c.l.b16 %v6352
        %v7699 = vunpack.c.h.b16 %v6352
        %v7700 = vunpack.c.l.b16 %v6353
        %v7701 = vunpack.c.h.b16 %v6353
        %v7702 = vunpack.c.l.b16 %v6354
        %v7703 = vunpack.c.h.b16 %v6354
        %v7704 = vunpack.c.l.b16 %v6355
        %v7705 = vunpack.c.h.b16 %v6355
        %v7706 = vunpack.c.l.b16 %v6356
        %v7707 = vunpack.c.h.b16 %v6356
        %v7708 = vunpack.c.l.b16 %v6357
        %v7709 = vunpack.c.h.b16 %v6357
        %v7710 = vunpack.c.l.b16 %v6358
        %v7711 = vunpack.c.h.b16 %v6358
        %v7712 = vunpack.c.l.b16 %v6359
        %v7713 = vunpack.c.h.b16 %v6359
        %v7714 = vunpack.c.l.b16 %v6360
        %v7715 = vunpack.c.h.b16 %v6360
        %v7716 = vunpack.c.l.b16 %v6361
        %v7717 = vunpack.c.h.b16 %v6361
        %v7718 = vunpack.c.l.b16 %v6362
        %v7719 = vunpack.c.h.b16 %v6362
        %v7720 = vunpack.c.l.b16 %v6363
        %v7721 = vunpack.c.h.b16 %v6363
        %v7722 = vunpack.c.l.b16 %v6364
        %v7723 = vunpack.c.h.b16 %v6364
        %v7724 = vunpack.c.l.b16 %v6365
        %v7725 = vunpack.c.h.b16 %v6365
        %v7726 = vunpack.c.l.b16 %v6366
        %v7727 = vunpack.c.h.b16 %v6366
        %v7728 = vunpack.c.l.b16 %v6367
        %v7729 = vunpack.c.h.b16 %v6367
        %v7730 = vunpack.c.l.b16 %v6368
        %v7731 = vunpack.c.h.b16 %v6368
        %v7732 = vunpack.c.l.b16 %v6369
        %v7733 = vunpack.c.h.b16 %v6369
        %v7734 = vunpack.c.l.b16 %v6370
        %v7735 = vunpack.c.h.b16 %v6370
        %v7736 = vunpack.c.l.b16 %v6371
        %v7737 = vunpack.c.h.b16 %v6371
        %v7738 = vunpack.c.l.b16 %v6372
        %v7739 = vunpack.c.h.b16 %v6372
        %v7740 = vunpack.c.l.b16 %v6373
        %v7741 = vunpack.c.h.b16 %v6373
        %v7742 = vunpack.c.l.b16 %v6374
        %v7743 = vunpack.c.h.b16 %v6374
        %v7744 = vunpack.c.l.b16 %v6375
        %v7745 = vunpack.c.h.b16 %v6375
        %v7746 = vunpack.c.l.b16 %v6376
        %v7747 = vunpack.c.h.b16 %v6376
        %v7748 = vunpack.c.l.b16 %v6377
        %v7749 = vunpack.c.h.b16 %v6377
        %v7750 = vunpack.c.l.b16 %v6378
        %v7751 = vunpack.c.h.b16 %v6378
        %v7752 = vunpack.c.l.b16 %v6379
        %v7753 = vunpack.c.h.b16 %v6379
        %v7754 = vunpack.c.l.b16 %v6380
        %v7755 = vunpack.c.h.b16 %v6380
        %v7756 = vunpack.c.l.b16 %v6381
        %v7757 = vunpack.c.h.b16 %v6381
        %v7758 = vunpack.c.l.b16 %v6382
        %v7759 = vunpack.c.h.b16 %v6382
        %v7760 = vunpack.c.l.b16 %v6383
        %v7761 = vunpack.c.h.b16 %v6383
        %v7762 = vunpack.c.l.b16 %v6384
        %v7763 = vunpack.c.h.b16 %v6384
        %v7764 = vunpack.c.l.b16 %v6385
        %v7765 = vunpack.c.h.b16 %v6385
        %v7766 = vunpack.c.l.b16 %v6386
        %v7767 = vunpack.c.h.b16 %v6386
        %v7768 = vunpack.c.l.b16 %v6387
        %v7769 = vunpack.c.h.b16 %v6387
        %v7770 = vunpack.c.l.b16 %v6388
        %v7771 = vunpack.c.h.b16 %v6388
        %v7772 = vunpack.c.l.b16 %v6389
        %v7773 = vunpack.c.h.b16 %v6389
        %v7774 = vunpack.c.l.b16 %v6390
        %v7775 = vunpack.c.h.b16 %v6390
        %v7776 = vunpack.c.l.b16 %v6391
        %v7777 = vunpack.c.h.b16 %v6391
        %v7778 = vunpack.c.l.b16 %v6392
        %v7779 = vunpack.c.h.b16 %v6392
        %v7780 = vunpack.c.l.b16 %v6393
        %v7781 = vunpack.c.h.b16 %v6393
        %v7782 = vunpack.c.l.b16 %v6394
        %v7783 = vunpack.c.h.b16 %v6394
        %v7784 = vunpack.c.l.b16 %v6395
        %v7785 = vunpack.c.h.b16 %v6395
        %v7786 = vunpack.c.l.b16 %v6396
        %v7787 = vunpack.c.h.b16 %v6396
        %v7788 = vunpack.c.l.b16 %v6397
        %v7789 = vunpack.c.h.b16 %v6397
        %v7790 = vunpack.c.l.b16 %v6398
        %v7791 = vunpack.c.h.b16 %v6398
        %v7792 = vunpack.c.l.b16 %v6399
        %v7793 = vunpack.c.h.b16 %v6399
        %v7794 = vunpack.c.l.b16 %v6400
        %v7795 = vunpack.c.h.b16 %v6400
        %v7796 = vunpack.c.l.b16 %v6401
        %v7797 = vunpack.c.h.b16 %v6401
        %v7798 = vunpack.c.l.b16 %v6402
        %v7799 = vunpack.c.h.b16 %v6402
        %v7800 = vunpack.c.l.b16 %v6403
        %v7801 = vunpack.c.h.b16 %v6403
        %v7802 = vunpack.c.l.b16 %v6404
        %v7803 = vunpack.c.h.b16 %v6404
        %v7804 = vunpack.c.l.b16 %v6405
        %v7805 = vunpack.c.h.b16 %v6405
        %v7806 = vunpack.c.l.b16 %v6406
        %v7807 = vunpack.c.h.b16 %v6406
        %v7808 = vunpack.c.l.b16 %v6407
        %v7809 = vunpack.c.h.b16 %v6407
        %v7810 = vunpack.c.l.b16 %v6408
        %v7811 = vunpack.c.h.b16 %v6408
        %v7812 = vunpack.c.l.b16 %v6409
        %v7813 = vunpack.c.h.b16 %v6409
        %v7814 = vunpack.c.l.b16 %v6410
        %v7815 = vunpack.c.h.b16 %v6410
        %v7816 = vunpack.c.l.b16 %v6411
        %v7817 = vunpack.c.h.b16 %v6411
        %v7818 = vunpack.c.l.b16 %v6412
        %v7819 = vunpack.c.h.b16 %v6412
        %v7820 = vunpack.c.l.b16 %v6413
        %v7821 = vunpack.c.h.b16 %v6413
        %v7822 = vunpack.c.l.b16 %v6414
        %v7823 = vunpack.c.h.b16 %v6414
        %v7824 = vunpack.c.l.b16 %v6415
        %v7825 = vunpack.c.h.b16 %v6415
        %v7826 = vunpack.c.l.b16 %v6416
        %v7827 = vunpack.c.h.b16 %v6416
        %v7828 = vunpack.c.l.b16 %v6417
        %v7829 = vunpack.c.h.b16 %v6417
        %v7830 = vunpack.c.l.b16 %v6418
        %v7831 = vunpack.c.h.b16 %v6418
        %v7832 = vunpack.c.l.b16 %v6419
        %v7833 = vunpack.c.h.b16 %v6419
        %v7834 = vunpack.c.l.b16 %v6420
        %v7835 = vunpack.c.h.b16 %v6420
        %v7836 = vunpack.c.l.b16 %v6421
        %v7837 = vunpack.c.h.b16 %v6421
        %v7838 = vunpack.c.l.b16 %v6422
        %v7839 = vunpack.c.h.b16 %v6422
        %v7840 = vunpack.c.l.b16 %v6423
        %v7841 = vunpack.c.h.b16 %v6423
        %v7842 = vunpack.c.l.b16 %v6424
        %v7843 = vunpack.c.h.b16 %v6424
        %v7844 = vunpack.c.l.b16 %v6425
        %v7845 = vunpack.c.h.b16 %v6425
        %v7846 = vunpack.c.l.b16 %v6426
        %v7847 = vunpack.c.h.b16 %v6426
        %v7848 = vunpack.c.l.b16 %v6427
        %v7849 = vunpack.c.h.b16 %v6427
        %v7850 = vunpack.c.l.b16 %v6428
        %v7851 = vunpack.c.h.b16 %v6428
        %v7852 = vunpack.c.l.b16 %v6429
        %v7853 = vunpack.c.h.b16 %v6429
        %v7854 = vunpack.c.l.b16 %v6430
        %v7855 = vunpack.c.h.b16 %v6430
        %v7856 = vunpack.c.l.b16 %v6431
        %v7857 = vunpack.c.h.b16 %v6431
        %v7858 = vunpack.c.l.b16 %v6432
        %v7859 = vunpack.c.h.b16 %v6432
        %v7860 = vunpack.c.l.b16 %v6433
        %v7861 = vunpack.c.h.b16 %v6433
        %v7862 = vunpack.c.l.b16 %v6434
        %v7863 = vunpack.c.h.b16 %v6434
        %v7864 = vunpack.c.l.b16 %v6435
        %v7865 = vunpack.c.h.b16 %v6435
        %v7866 = vunpack.c.l.b16 %v6436
        %v7867 = vunpack.c.h.b16 %v6436
        %v7868 = vunpack.c.l.b16 %v6437
        %v7869 = vunpack.c.h.b16 %v6437
        %v7870 = vunpack.c.l.b16 %v6438
        %v7871 = vunpack.c.h.b16 %v6438
        %v7872 = vunpack.c.l.b16 %v6439
        %v7873 = vunpack.c.h.b16 %v6439
        %v7874 = vunpack.c.l.b16 %v6440
        %v7875 = vunpack.c.h.b16 %v6440
        %v7876 = vunpack.c.l.b16 %v6441
        %v7877 = vunpack.c.h.b16 %v6441
        %v7878 = vunpack.c.l.b16 %v6442
        %v7879 = vunpack.c.h.b16 %v6442
        %v7880 = vunpack.c.l.b16 %v6443
        %v7881 = vunpack.c.h.b16 %v6443
        %v7882 = vunpack.c.l.b16 %v6444
        %v7883 = vunpack.c.h.b16 %v6444
        %v7884 = vunpack.c.l.b16 %v6445
        %v7885 = vunpack.c.h.b16 %v6445
        %v7886 = vunpack.c.l.b16 %v6446
        %v7887 = vunpack.c.h.b16 %v6446
        %v7888 = vunpack.c.l.b16 %v6447
        %v7889 = vunpack.c.h.b16 %v6447
        %v7890 = vunpack.c.l.b16 %v6448
        %v7891 = vunpack.c.h.b16 %v6448
        %v7892 = vunpack.c.l.b16 %v6449
        %v7893 = vunpack.c.h.b16 %v6449
        %v7894 = vunpack.c.l.b16 %v6450
        %v7895 = vunpack.c.h.b16 %v6450
        %v7896 = vunpack.c.l.b16 %v6451
        %v7897 = vunpack.c.h.b16 %v6451
        %v7898 = vunpack.c.l.b16 %v6452
        %v7899 = vunpack.c.h.b16 %v6452
        %v7900 = vunpack.c.l.b16 %v6453
        %v7901 = vunpack.c.h.b16 %v6453
        %v7902 = vunpack.c.l.b16 %v6454
        %v7903 = vunpack.c.h.b16 %v6454
        %v7904 = vunpack.c.l.b16 %v6455
        %v7905 = vunpack.c.h.b16 %v6455
        %v7906 = vunpack.c.l.b16 %v6456
        %v7907 = vunpack.c.h.b16 %v6456
        %v7908 = vunpack.c.l.b16 %v6457
        %v7909 = vunpack.c.h.b16 %v6457
        %v7910 = vunpack.c.l.b16 %v6458
        %v7911 = vunpack.c.h.b16 %v6458
        %v7912 = vunpack.c.l.b16 %v6459
        %v7913 = vunpack.c.h.b16 %v6459
        %v7914 = vunpack.c.l.b16 %v6460
        %v7915 = vunpack.c.h.b16 %v6460
        %v7916 = vunpack.c.l.b16 %v6461
        %v7917 = vunpack.c.h.b16 %v6461
        %v7918 = vunpack.c.l.b16 %v6462
        %v7919 = vunpack.c.h.b16 %v6462
        %v7920 = vunpack.c.l.b16 %v6463
        %v7921 = vunpack.c.h.b16 %v6463
        %v7922 = vunpack.c.l.b16 %v6464
        %v7923 = vunpack.c.h.b16 %v6464
        %v7924 = vunpack.c.l.b16 %v6465
        %v7925 = vunpack.c.h.b16 %v6465
        %v7926 = vunpack.c.l.b16 %v6466
        %v7927 = vunpack.c.h.b16 %v6466
        %v7928 = vunpack.c.l.b16 %v6467
        %v7929 = vunpack.c.h.b16 %v6467
        %v7930 = vunpack.c.l.b16 %v6468
        %v7931 = vunpack.c.h.b16 %v6468
        %v7932 = vunpack.c.l.b16 %v6469
        %v7933 = vunpack.c.h.b16 %v6469
        %v7934 = vunpack.c.l.b16 %v6470
        %v7935 = vunpack.c.h.b16 %v6470
        %v7936 = vunpack.c.l.b16 %v6471
        %v7937 = vunpack.c.h.b16 %v6471
        %v7938 = vunpack.c.l.b16 %v6472
        %v7939 = vunpack.c.h.b16 %v6472
        %v7940 = vunpack.c.l.b16 %v6473
        %v7941 = vunpack.c.h.b16 %v6473
        %v7942 = vunpack.c.l.b16 %v6474
        %v7943 = vunpack.c.h.b16 %v6474
        %v7944 = vunpack.c.l.b16 %v6475
        %v7945 = vunpack.c.h.b16 %v6475
        %v7946 = vunpack.c.l.b16 %v6476
        %v7947 = vunpack.c.h.b16 %v6476
        %v7948 = vunpack.c.l.b16 %v6477
        %v7949 = vunpack.c.h.b16 %v6477
        %v7950 = vunpack.c.l.b16 %v6478
        %v7951 = vunpack.c.h.b16 %v6478
        %v7952 = vunpack.c.l.b16 %v6479
        %v7953 = vunpack.c.h.b16 %v6479
        %v7954 = vunpack.c.l.b16 %v6480
        %v7955 = vunpack.c.h.b16 %v6480
        %v7956 = vunpack.c.l.b16 %v6481
        %v7957 = vunpack.c.h.b16 %v6481
        %v7958 = vunpack.c.l.b16 %v6482
        %v7959 = vunpack.c.h.b16 %v6482
        %v7960 = vunpack.c.l.b16 %v6483
        %v7961 = vunpack.c.h.b16 %v6483
        %v7962 = vunpack.c.l.b16 %v6484
        %v7963 = vunpack.c.h.b16 %v6484
        %v7964 = vunpack.c.l.b16 %v6485
        %v7965 = vunpack.c.h.b16 %v6485
        %v7966 = vunpack.c.l.b16 %v6486
        %v7967 = vunpack.c.h.b16 %v6486
        %v7968 = vunpack.c.l.b16 %v6487
        %v7969 = vunpack.c.h.b16 %v6487
        %v7970 = vunpack.c.l.b16 %v6488
        %v7971 = vunpack.c.h.b16 %v6488
        %v7972 = vunpack.c.l.b16 %v6489
        %v7973 = vunpack.c.h.b16 %v6489
        %v7974 = vunpack.c.l.b16 %v6490
        %v7975 = vunpack.c.h.b16 %v6490
        %v7976 = vunpack.c.l.b16 %v6491
        %v7977 = vunpack.c.h.b16 %v6491
        %v7978 = vunpack.c.l.b16 %v6492
        %v7979 = vunpack.c.h.b16 %v6492
        %v7980 = vunpack.c.l.b16 %v6493
        %v7981 = vunpack.c.h.b16 %v6493
        %v7982 = vunpack.c.l.b16 %v6494
        %v7983 = vunpack.c.h.b16 %v6494
        %v7984 = vunpack.c.l.b16 %v6495
        %v7985 = vunpack.c.h.b16 %v6495
        %v7986 = vunpack.c.l.b16 %v6496
        %v7987 = vunpack.c.h.b16 %v6496
        %v7988 = vunpack.c.l.b16 %v6497
        %v7989 = vunpack.c.h.b16 %v6497
        %v7990 = vunpack.c.l.b16 %v6498
        %v7991 = vunpack.c.h.b16 %v6498
        %v7992 = vunpack.c.l.b16 %v6499
        %v7993 = vunpack.c.h.b16 %v6499
        %v7994 = vunpack.c.l.b16 %v6500
        %v7995 = vunpack.c.h.b16 %v6500
        %v7996 = vunpack.c.l.b16 %v6501
        %v7997 = vunpack.c.h.b16 %v6501
        %v7998 = vunpack.c.l.b16 %v6502
        %v7999 = vunpack.c.h.b16 %v6502
        %v8000 = vunpack.c.l.b16 %v6503
        %v8001 = vunpack.c.h.b16 %v6503
        %v8002 = vunpack.c.l.b16 %v6504
        %v8003 = vunpack.c.h.b16 %v6504
        %v8004 = vunpack.c.l.b16 %v6505
        %v8005 = vunpack.c.h.b16 %v6505
        %v8006 = vunpack.c.l.b16 %v6506
        %v8007 = vunpack.c.h.b16 %v6506
        %v8008 = vunpack.c.l.b16 %v6507
        %v8009 = vunpack.c.h.b16 %v6507
        %v8010 = vunpack.c.l.b16 %v6508
        %v8011 = vunpack.c.h.b16 %v6508
        %v8012 = vunpack.c.l.b16 %v6509
        %v8013 = vunpack.c.h.b16 %v6509
        %v8014 = vunpack.c.l.b16 %v6510
        %v8015 = vunpack.c.h.b16 %v6510
        %v8016 = vunpack.c.l.b16 %v6511
        %v8017 = vunpack.c.h.b16 %v6511
        %v8018 = vunpack.c.l.b16 %v6512
        %v8019 = vunpack.c.h.b16 %v6512
        %v8020 = vunpack.c.l.b16 %v6513
        %v8021 = vunpack.c.h.b16 %v6513
        %v8022 = vunpack.c.l.b16 %v6514
        %v8023 = vunpack.c.h.b16 %v6514
        %v8024 = vunpack.c.l.b16 %v6515
        %v8025 = vunpack.c.h.b16 %v6515
        %v8026 = vunpack.c.l.b16 %v6516
        %v8027 = vunpack.c.h.b16 %v6516
        %v8028 = vunpack.c.l.b16 %v6517
        %v8029 = vunpack.c.h.b16 %v6517
        %v8030 = vunpack.c.l.b16 %v6518
        %v8031 = vunpack.c.h.b16 %v6518
        %v8032 = vunpack.c.l.b16 %v6519
        %v8033 = vunpack.c.h.b16 %v6519
        %v8034 = vunpack.c.l.b16 %v6520
        %v8035 = vunpack.c.h.b16 %v6520
        %v8036 = vunpack.c.l.b16 %v6521
        %v8037 = vunpack.c.h.b16 %v6521
        %v8038 = vunpack.c.l.b16 %v6522
        %v8039 = vunpack.c.h.b16 %v6522
        %v8040 = vunpack.c.l.b16 %v6523
        %v8041 = vunpack.c.h.b16 %v6523
        %v8042 = vunpack.c.l.b16 %v6524
        %v8043 = vunpack.c.h.b16 %v6524
        %v8044 = vunpack.c.l.b16 %v6525
        %v8045 = vunpack.c.h.b16 %v6525
        %v8046 = vunpack.c.l.b16 %v6526
        %v8047 = vunpack.c.h.b16 %v6526
        %v8048 = vunpack.c.l.b16 %v6527
        %v8049 = vunpack.c.h.b16 %v6527
        %v8050 = vunpack.c.l.b16 %v6528
        %v8051 = vunpack.c.h.b16 %v6528
        %v8052 = vunpack.c.l.b16 %v6529
        %v8053 = vunpack.c.h.b16 %v6529
        %v8054 = vunpack.c.l.b16 %v6530
        %v8055 = vunpack.c.h.b16 %v6530
        %v8056 = vunpack.c.l.b16 %v6531
        %v8057 = vunpack.c.h.b16 %v6531
        %v8058 = vunpack.c.l.b16 %v6532
        %v8059 = vunpack.c.h.b16 %v6532
        %v8060 = vunpack.c.l.b16 %v6533
        %v8061 = vunpack.c.h.b16 %v6533
        %v8062 = vunpack.c.l.b16 %v6534
        %v8063 = vunpack.c.h.b16 %v6534
        %v8064 = vunpack.c.l.b16 %v6535
        %v8065 = vunpack.c.h.b16 %v6535
        %v8066 = vunpack.c.l.b16 %v6536
        %v8067 = vunpack.c.h.b16 %v6536
        %v8068 = vunpack.c.l.b16 %v6537
        %v8069 = vunpack.c.h.b16 %v6537
        %v8070 = vunpack.c.l.b16 %v6538
        %v8071 = vunpack.c.h.b16 %v6538
        %v8072 = vunpack.c.l.b16 %v6539
        %v8073 = vunpack.c.h.b16 %v6539
        %v8074 = vunpack.c.l.b16 %v6540
        %v8075 = vunpack.c.h.b16 %v6540
        %v8076 = vunpack.c.l.b16 %v6541
        %v8077 = vunpack.c.h.b16 %v6541
        %v8078 = vpack.c.b16 %v7070, %v7054
        %v8079 = vpack.c.b16 %v7071, %v7055
        %v8080 = vpack.c.b16 %v7072, %v7056
        %v8081 = vpack.c.b16 %v7073, %v7057
        %v8082 = vpack.c.b16 %v7074, %v7058
        %v8083 = vpack.c.b16 %v7075, %v7059
        %v8084 = vpack.c.b16 %v7076, %v7060
        %v8085 = vpack.c.b16 %v7077, %v7061
        %v8086 = vpack.c.b16 %v7078, %v7062
        %v8087 = vpack.c.b16 %v7079, %v7063
        %v8088 = vpack.c.b16 %v7080, %v7064
        %v8089 = vpack.c.b16 %v7081, %v7065
        %v8090 = vpack.c.b16 %v7082, %v7066
        %v8091 = vpack.c.b16 %v7083, %v7067
        %v8092 = vpack.c.b16 %v7084, %v7068
        %v8093 = vpack.c.b16 %v7085, %v7069
        %v8094 = vpack.c.b16 %v7102, %v7086
        %v8095 = vpack.c.b16 %v7103, %v7087
        %v8096 = vpack.c.b16 %v7104, %v7088
        %v8097 = vpack.c.b16 %v7105, %v7089
        %v8098 = vpack.c.b16 %v7106, %v7090
        %v8099 = vpack.c.b16 %v7107, %v7091
        %v8100 = vpack.c.b16 %v7108, %v7092
        %v8101 = vpack.c.b16 %v7109, %v7093
        %v8102 = vpack.c.b16 %v7110, %v7094
        %v8103 = vpack.c.b16 %v7111, %v7095
        %v8104 = vpack.c.b16 %v7112, %v7096
        %v8105 = vpack.c.b16 %v7113, %v7097
        %v8106 = vpack.c.b16 %v7114, %v7098
        %v8107 = vpack.c.b16 %v7115, %v7099
        %v8108 = vpack.c.b16 %v7116, %v7100
        %v8109 = vpack.c.b16 %v7117, %v7101
        %v8110 = vpack.c.b16 %v7134, %v7118
        %v8111 = vpack.c.b16 %v7135, %v7119
        %v8112 = vpack.c.b16 %v7136, %v7120
        %v8113 = vpack.c.b16 %v7137, %v7121
        %v8114 = vpack.c.b16 %v7138, %v7122
        %v8115 = vpack.c.b16 %v7139, %v7123
        %v8116 = vpack.c.b16 %v7140, %v7124
        %v8117 = vpack.c.b16 %v7141, %v7125
        %v8118 = vpack.c.b16 %v7142, %v7126
        %v8119 = vpack.c.b16 %v7143, %v7127
        %v8120 = vpack.c.b16 %v7144, %v7128
        %v8121 = vpack.c.b16 %v7145, %v7129
        %v8122 = vpack.c.b16 %v7146, %v7130
        %v8123 = vpack.c.b16 %v7147, %v7131
        %v8124 = vpack.c.b16 %v7148, %v7132
        %v8125 = vpack.c.b16 %v7149, %v7133
        %v8126 = vpack.c.b16 %v7166, %v7150
        %v8127 = vpack.c.b16 %v7167, %v7151
        %v8128 = vpack.c.b16 %v7168, %v7152
        %v8129 = vpack.c.b16 %v7169, %v7153
        %v8130 = vpack.c.b16 %v7170, %v7154
        %v8131 = vpack.c.b16 %v7171, %v7155
        %v8132 = vpack.c.b16 %v7172, %v7156
        %v8133 = vpack.c.b16 %v7173, %v7157
        %v8134 = vpack.c.b16 %v7174, %v7158
        %v8135 = vpack.c.b16 %v7175, %v7159
        %v8136 = vpack.c.b16 %v7176, %v7160
        %v8137 = vpack.c.b16 %v7177, %v7161
        %v8138 = vpack.c.b16 %v7178, %v7162
        %v8139 = vpack.c.b16 %v7179, %v7163
        %v8140 = vpack.c.b16 %v7180, %v7164
        %v8141 = vpack.c.b16 %v7181, %v7165
        %v8142 = vpack.c.b16 %v7198, %v7182
        %v8143 = vpack.c.b16 %v7199, %v7183
        %v8144 = vpack.c.b16 %v7200, %v7184
        %v8145 = vpack.c.b16 %v7201, %v7185
        %v8146 = vpack.c.b16 %v7202, %v7186
        %v8147 = vpack.c.b16 %v7203, %v7187
        %v8148 = vpack.c.b16 %v7204, %v7188
        %v8149 = vpack.c.b16 %v7205, %v7189
        %v8150 = vpack.c.b16 %v7206, %v7190
        %v8151 = vpack.c.b16 %v7207, %v7191
        %v8152 = vpack.c.b16 %v7208, %v7192
        %v8153 = vpack.c.b16 %v7209, %v7193
        %v8154 = vpack.c.b16 %v7210, %v7194
        %v8155 = vpack.c.b16 %v7211, %v7195
        %v8156 = vpack.c.b16 %v7212, %v7196
        %v8157 = vpack.c.b16 %v7213, %v7197
        %v8158 = vpack.c.b16 %v7230, %v7214
        %v8159 = vpack.c.b16 %v7231, %v7215
        %v8160 = vpack.c.b16 %v7232, %v7216
        %v8161 = vpack.c.b16 %v7233, %v7217
        %v8162 = vpack.c.b16 %v7234, %v7218
        %v8163 = vpack.c.b16 %v7235, %v7219
        %v8164 = vpack.c.b16 %v7236, %v7220
        %v8165 = vpack.c.b16 %v7237, %v7221
        %v8166 = vpack.c.b16 %v7238, %v7222
        %v8167 = vpack.c.b16 %v7239, %v7223
        %v8168 = vpack.c.b16 %v7240, %v7224
        %v8169 = vpack.c.b16 %v7241, %v7225
        %v8170 = vpack.c.b16 %v7242, %v7226
        %v8171 = vpack.c.b16 %v7243, %v7227
        %v8172 = vpack.c.b16 %v7244, %v7228
        %v8173 = vpack.c.b16 %v7245, %v7229
        %v8174 = vpack.c.b16 %v7262, %v7246
        %v8175 = vpack.c.b16 %v7263, %v7247
        %v8176 = vpack.c.b16 %v7264, %v7248
        %v8177 = vpack.c.b16 %v7265, %v7249
        %v8178 = vpack.c.b16 %v7266, %v7250
        %v8179 = vpack.c.b16 %v7267, %v7251
        %v8180 = vpack.c.b16 %v7268, %v7252
        %v8181 = vpack.c.b16 %v7269, %v7253
        %v8182 = vpack.c.b16 %v7270, %v7254
        %v8183 = vpack.c.b16 %v7271, %v7255
        %v8184 = vpack.c.b16 %v7272, %v7256
        %v8185 = vpack.c.b16 %v7273, %v7257
        %v8186 = vpack.c.b16 %v7274, %v7258
        %v8187 = vpack.c.b16 %v7275, %v7259
        %v8188 = vpack.c.b16 %v7276, %v7260
        %v8189 = vpack.c.b16 %v7277, %v7261
        %v8190 = vpack.c.b16 %v7294, %v7278
        %v8191 = vpack.c.b16 %v7295, %v7279
        %v8192 = vpack.c.b16 %v7296, %v7280
        %v8193 = vpack.c.b16 %v7297, %v7281
        %v8194 = vpack.c.b16 %v7298, %v7282
        %v8195 = vpack.c.b16 %v7299, %v7283
        %v8196 = vpack.c.b16 %v7300, %v7284
        %v8197 = vpack.c.b16 %v7301, %v7285
        %v8198 = vpack.c.b16 %v7302, %v7286
        %v8199 = vpack.c.b16 %v7303, %v7287
        %v8200 = vpack.c.b16 %v7304, %v7288
        %v8201 = vpack.c.b16 %v7305, %v7289
        %v8202 = vpack.c.b16 %v7306, %v7290
        %v8203 = vpack.c.b16 %v7307, %v7291
        %v8204 = vpack.c.b16 %v7308, %v7292
        %v8205 = vpack.c.b16 %v7309, %v7293
        %v8206 = vpack.c.b16 %v7326, %v7310
        %v8207 = vpack.c.b16 %v7327, %v7311
        %v8208 = vpack.c.b16 %v7328, %v7312
        %v8209 = vpack.c.b16 %v7329, %v7313
        %v8210 = vpack.c.b16 %v7330, %v7314
        %v8211 = vpack.c.b16 %v7331, %v7315
        %v8212 = vpack.c.b16 %v7332, %v7316
        %v8213 = vpack.c.b16 %v7333, %v7317
        %v8214 = vpack.c.b16 %v7334, %v7318
        %v8215 = vpack.c.b16 %v7335, %v7319
        %v8216 = vpack.c.b16 %v7336, %v7320
        %v8217 = vpack.c.b16 %v7337, %v7321
        %v8218 = vpack.c.b16 %v7338, %v7322
        %v8219 = vpack.c.b16 %v7339, %v7323
        %v8220 = vpack.c.b16 %v7340, %v7324
        %v8221 = vpack.c.b16 %v7341, %v7325
        %v8222 = vpack.c.b16 %v7358, %v7342
        %v8223 = vpack.c.b16 %v7359, %v7343
        %v8224 = vpack.c.b16 %v7360, %v7344
        %v8225 = vpack.c.b16 %v7361, %v7345
        %v8226 = vpack.c.b16 %v7362, %v7346
        %v8227 = vpack.c.b16 %v7363, %v7347
        %v8228 = vpack.c.b16 %v7364, %v7348
        %v8229 = vpack.c.b16 %v7365, %v7349
        %v8230 = vpack.c.b16 %v7366, %v7350
        %v8231 = vpack.c.b16 %v7367, %v7351
        %v8232 = vpack.c.b16 %v7368, %v7352
        %v8233 = vpack.c.b16 %v7369, %v7353
        %v8234 = vpack.c.b16 %v7370, %v7354
        %v8235 = vpack.c.b16 %v7371, %v7355
        %v8236 = vpack.c.b16 %v7372, %v7356
        %v8237 = vpack.c.b16 %v7373, %v7357
        %v8238 = vpack.c.b16 %v7390, %v7374
        %v8239 = vpack.c.b16 %v7391, %v7375
        %v8240 = vpack.c.b16 %v7392, %v7376
        %v8241 = vpack.c.b16 %v7393, %v7377
        %v8242 = vpack.c.b16 %v7394, %v7378
        %v8243 = vpack.c.b16 %v7395, %v7379
        %v8244 = vpack.c.b16 %v7396, %v7380
        %v8245 = vpack.c.b16 %v7397, %v7381
        %v8246 = vpack.c.b16 %v7398, %v7382
        %v8247 = vpack.c.b16 %v7399, %v7383
        %v8248 = vpack.c.b16 %v7400, %v7384
        %v8249 = vpack.c.b16 %v7401, %v7385
        %v8250 = vpack.c.b16 %v7402, %v7386
        %v8251 = vpack.c.b16 %v7403, %v7387
        %v8252 = vpack.c.b16 %v7404, %v7388
        %v8253 = vpack.c.b16 %v7405, %v7389
        %v8254 = vpack.c.b16 %v7422, %v7406
        %v8255 = vpack.c.b16 %v7423, %v7407
        %v8256 = vpack.c.b16 %v7424, %v7408
        %v8257 = vpack.c.b16 %v7425, %v7409
        %v8258 = vpack.c.b16 %v7426, %v7410
        %v8259 = vpack.c.b16 %v7427, %v7411
        %v8260 = vpack.c.b16 %v7428, %v7412
        %v8261 = vpack.c.b16 %v7429, %v7413
        %v8262 = vpack.c.b16 %v7430, %v7414
        %v8263 = vpack.c.b16 %v7431, %v7415
        %v8264 = vpack.c.b16 %v7432, %v7416
        %v8265 = vpack.c.b16 %v7433, %v7417
        %v8266 = vpack.c.b16 %v7434, %v7418
        %v8267 = vpack.c.b16 %v7435, %v7419
        %v8268 = vpack.c.b16 %v7436, %v7420
        %v8269 = vpack.c.b16 %v7437, %v7421
        %v8270 = vpack.c.b16 %v7454, %v7438
        %v8271 = vpack.c.b16 %v7455, %v7439
        %v8272 = vpack.c.b16 %v7456, %v7440
        %v8273 = vpack.c.b16 %v7457, %v7441
        %v8274 = vpack.c.b16 %v7458, %v7442
        %v8275 = vpack.c.b16 %v7459, %v7443
        %v8276 = vpack.c.b16 %v7460, %v7444
        %v8277 = vpack.c.b16 %v7461, %v7445
        %v8278 = vpack.c.b16 %v7462, %v7446
        %v8279 = vpack.c.b16 %v7463, %v7447
        %v8280 = vpack.c.b16 %v7464, %v7448
        %v8281 = vpack.c.b16 %v7465, %v7449
        %v8282 = vpack.c.b16 %v7466, %v7450
        %v8283 = vpack.c.b16 %v7467, %v7451
        %v8284 = vpack.c.b16 %v7468, %v7452
        %v8285 = vpack.c.b16 %v7469, %v7453
        %v8286 = vpack.c.b16 %v7486, %v7470
        %v8287 = vpack.c.b16 %v7487, %v7471
        %v8288 = vpack.c.b16 %v7488, %v7472
        %v8289 = vpack.c.b16 %v7489, %v7473
        %v8290 = vpack.c.b16 %v7490, %v7474
        %v8291 = vpack.c.b16 %v7491, %v7475
        %v8292 = vpack.c.b16 %v7492, %v7476
        %v8293 = vpack.c.b16 %v7493, %v7477
        %v8294 = vpack.c.b16 %v7494, %v7478
        %v8295 = vpack.c.b16 %v7495, %v7479
        %v8296 = vpack.c.b16 %v7496, %v7480
        %v8297 = vpack.c.b16 %v7497, %v7481
        %v8298 = vpack.c.b16 %v7498, %v7482
        %v8299 = vpack.c.b16 %v7499, %v7483
        %v8300 = vpack.c.b16 %v7500, %v7484
        %v8301 = vpack.c.b16 %v7501, %v7485
        %v8302 = vpack.c.b16 %v7518, %v7502
        %v8303 = vpack.c.b16 %v7519, %v7503
        %v8304 = vpack.c.b16 %v7520, %v7504
        %v8305 = vpack.c.b16 %v7521, %v7505
        %v8306 = vpack.c.b16 %v7522, %v7506
        %v8307 = vpack.c.b16 %v7523, %v7507
        %v8308 = vpack.c.b16 %v7524, %v7508
        %v8309 = vpack.c.b16 %v7525, %v7509
        %v8310 = vpack.c.b16 %v7526, %v7510
        %v8311 = vpack.c.b16 %v7527, %v7511
        %v8312 = vpack.c.b16 %v7528, %v7512
        %v8313 = vpack.c.b16 %v7529, %v7513
        %v8314 = vpack.c.b16 %v7530, %v7514
        %v8315 = vpack.c.b16 %v7531, %v7515
        %v8316 = vpack.c.b16 %v7532, %v7516
        %v8317 = vpack.c.b16 %v7533, %v7517
        %v8318 = vpack.c.b16 %v7550, %v7534
        %v8319 = vpack.c.b16 %v7551, %v7535
        %v8320 = vpack.c.b16 %v7552, %v7536
        %v8321 = vpack.c.b16 %v7553, %v7537
        %v8322 = vpack.c.b16 %v7554, %v7538
        %v8323 = vpack.c.b16 %v7555, %v7539
        %v8324 = vpack.c.b16 %v7556, %v7540
        %v8325 = vpack.c.b16 %v7557, %v7541
        %v8326 = vpack.c.b16 %v7558, %v7542
        %v8327 = vpack.c.b16 %v7559, %v7543
        %v8328 = vpack.c.b16 %v7560, %v7544
        %v8329 = vpack.c.b16 %v7561, %v7545
        %v8330 = vpack.c.b16 %v7562, %v7546
        %v8331 = vpack.c.b16 %v7563, %v7547
        %v8332 = vpack.c.b16 %v7564, %v7548
        %v8333 = vpack.c.b16 %v7565, %v7549
        %v8334 = vpack.c.b16 %v7582, %v7566
        %v8335 = vpack.c.b16 %v7583, %v7567
        %v8336 = vpack.c.b16 %v7584, %v7568
        %v8337 = vpack.c.b16 %v7585, %v7569
        %v8338 = vpack.c.b16 %v7586, %v7570
        %v8339 = vpack.c.b16 %v7587, %v7571
        %v8340 = vpack.c.b16 %v7588, %v7572
        %v8341 = vpack.c.b16 %v7589, %v7573
        %v8342 = vpack.c.b16 %v7590, %v7574
        %v8343 = vpack.c.b16 %v7591, %v7575
        %v8344 = vpack.c.b16 %v7592, %v7576
        %v8345 = vpack.c.b16 %v7593, %v7577
        %v8346 = vpack.c.b16 %v7594, %v7578
        %v8347 = vpack.c.b16 %v7595, %v7579
        %v8348 = vpack.c.b16 %v7596, %v7580
        %v8349 = vpack.c.b16 %v7597, %v7581
        %v8350 = vpack.c.b16 %v7614, %v7598
        %v8351 = vpack.c.b16 %v7615, %v7599
        %v8352 = vpack.c.b16 %v7616, %v7600
        %v8353 = vpack.c.b16 %v7617, %v7601
        %v8354 = vpack.c.b16 %v7618, %v7602
        %v8355 = vpack.c.b16 %v7619, %v7603
        %v8356 = vpack.c.b16 %v7620, %v7604
        %v8357 = vpack.c.b16 %v7621, %v7605
        %v8358 = vpack.c.b16 %v7622, %v7606
        %v8359 = vpack.c.b16 %v7623, %v7607
        %v8360 = vpack.c.b16 %v7624, %v7608
        %v8361 = vpack.c.b16 %v7625, %v7609
        %v8362 = vpack.c.b16 %v7626, %v7610
        %v8363 = vpack.c.b16 %v7627, %v7611
        %v8364 = vpack.c.b16 %v7628, %v7612
        %v8365 = vpack.c.b16 %v7629, %v7613
        %v8366 = vpack.c.b16 %v7646, %v7630
        %v8367 = vpack.c.b16 %v7647, %v7631
        %v8368 = vpack.c.b16 %v7648, %v7632
        %v8369 = vpack.c.b16 %v7649, %v7633
        %v8370 = vpack.c.b16 %v7650, %v7634
        %v8371 = vpack.c.b16 %v7651, %v7635
        %v8372 = vpack.c.b16 %v7652, %v7636
        %v8373 = vpack.c.b16 %v7653, %v7637
        %v8374 = vpack.c.b16 %v7654, %v7638
        %v8375 = vpack.c.b16 %v7655, %v7639
        %v8376 = vpack.c.b16 %v7656, %v7640
        %v8377 = vpack.c.b16 %v7657, %v7641
        %v8378 = vpack.c.b16 %v7658, %v7642
        %v8379 = vpack.c.b16 %v7659, %v7643
        %v8380 = vpack.c.b16 %v7660, %v7644
        %v8381 = vpack.c.b16 %v7661, %v7645
        %v8382 = vpack.c.b16 %v7678, %v7662
        %v8383 = vpack.c.b16 %v7679, %v7663
        %v8384 = vpack.c.b16 %v7680, %v7664
        %v8385 = vpack.c.b16 %v7681, %v7665
        %v8386 = vpack.c.b16 %v7682, %v7666
        %v8387 = vpack.c.b16 %v7683, %v7667
        %v8388 = vpack.c.b16 %v7684, %v7668
        %v8389 = vpack.c.b16 %v7685, %v7669
        %v8390 = vpack.c.b16 %v7686, %v7670
        %v8391 = vpack.c.b16 %v7687, %v7671
        %v8392 = vpack.c.b16 %v7688, %v7672
        %v8393 = vpack.c.b16 %v7689, %v7673
        %v8394 = vpack.c.b16 %v7690, %v7674
        %v8395 = vpack.c.b16 %v7691, %v7675
        %v8396 = vpack.c.b16 %v7692, %v7676
        %v8397 = vpack.c.b16 %v7693, %v7677
        %v8398 = vpack.c.b16 %v7710, %v7694
        %v8399 = vpack.c.b16 %v7711, %v7695
        %v8400 = vpack.c.b16 %v7712, %v7696
        %v8401 = vpack.c.b16 %v7713, %v7697
        %v8402 = vpack.c.b16 %v7714, %v7698
        %v8403 = vpack.c.b16 %v7715, %v7699
        %v8404 = vpack.c.b16 %v7716, %v7700
        %v8405 = vpack.c.b16 %v7717, %v7701
        %v8406 = vpack.c.b16 %v7718, %v7702
        %v8407 = vpack.c.b16 %v7719, %v7703
        %v8408 = vpack.c.b16 %v7720, %v7704
        %v8409 = vpack.c.b16 %v7721, %v7705
        %v8410 = vpack.c.b16 %v7722, %v7706
        %v8411 = vpack.c.b16 %v7723, %v7707
        %v8412 = vpack.c.b16 %v7724, %v7708
        %v8413 = vpack.c.b16 %v7725, %v7709
        %v8414 = vpack.c.b16 %v7742, %v7726
        %v8415 = vpack.c.b16 %v7743, %v7727
        %v8416 = vpack.c.b16 %v7744, %v7728
        %v8417 = vpack.c.b16 %v7745, %v7729
        %v8418 = vpack.c.b16 %v7746, %v7730
        %v8419 = vpack.c.b16 %v7747, %v7731
        %v8420 = vpack.c.b16 %v7748, %v7732
        %v8421 = vpack.c.b16 %v7749, %v7733
        %v8422 = vpack.c.b16 %v7750, %v7734
        %v8423 = vpack.c.b16 %v7751, %v7735
        %v8424 = vpack.c.b16 %v7752, %v7736
        %v8425 = vpack.c.b16 %v7753, %v7737
        %v8426 = vpack.c.b16 %v7754, %v7738
        %v8427 = vpack.c.b16 %v7755, %v7739
        %v8428 = vpack.c.b16 %v7756, %v7740
        %v8429 = vpack.c.b16 %v7757, %v7741
        %v8430 = vpack.c.b16 %v7774, %v7758
        %v8431 = vpack.c.b16 %v7775, %v7759
        %v8432 = vpack.c.b16 %v7776, %v7760
        %v8433 = vpack.c.b16 %v7777, %v7761
        %v8434 = vpack.c.b16 %v7778, %v7762
        %v8435 = vpack.c.b16 %v7779, %v7763
        %v8436 = vpack.c.b16 %v7780, %v7764
        %v8437 = vpack.c.b16 %v7781, %v7765
        %v8438 = vpack.c.b16 %v7782, %v7766
        %v8439 = vpack.c.b16 %v7783, %v7767
        %v8440 = vpack.c.b16 %v7784, %v7768
        %v8441 = vpack.c.b16 %v7785, %v7769
        %v8442 = vpack.c.b16 %v7786, %v7770
        %v8443 = vpack.c.b16 %v7787, %v7771
        %v8444 = vpack.c.b16 %v7788, %v7772
        %v8445 = vpack.c.b16 %v7789, %v7773
        %v8446 = vpack.c.b16 %v7806, %v7790
        %v8447 = vpack.c.b16 %v7807, %v7791
        %v8448 = vpack.c.b16 %v7808, %v7792
        %v8449 = vpack.c.b16 %v7809, %v7793
        %v8450 = vpack.c.b16 %v7810, %v7794
        %v8451 = vpack.c.b16 %v7811, %v7795
        %v8452 = vpack.c.b16 %v7812, %v7796
        %v8453 = vpack.c.b16 %v7813, %v7797
        %v8454 = vpack.c.b16 %v7814, %v7798
        %v8455 = vpack.c.b16 %v7815, %v7799
        %v8456 = vpack.c.b16 %v7816, %v7800
        %v8457 = vpack.c.b16 %v7817, %v7801
        %v8458 = vpack.c.b16 %v7818, %v7802
        %v8459 = vpack.c.b16 %v7819, %v7803
        %v8460 = vpack.c.b16 %v7820, %v7804
        %v8461 = vpack.c.b16 %v7821, %v7805
        %v8462 = vpack.c.b16 %v7838, %v7822
        %v8463 = vpack.c.b16 %v7839, %v7823
        %v8464 = vpack.c.b16 %v7840, %v7824
        %v8465 = vpack.c.b16 %v7841, %v7825
        %v8466 = vpack.c.b16 %v7842, %v7826
        %v8467 = vpack.c.b16 %v7843, %v7827
        %v8468 = vpack.c.b16 %v7844, %v7828
        %v8469 = vpack.c.b16 %v7845, %v7829
        %v8470 = vpack.c.b16 %v7846, %v7830
        %v8471 = vpack.c.b16 %v7847, %v7831
        %v8472 = vpack.c.b16 %v7848, %v7832
        %v8473 = vpack.c.b16 %v7849, %v7833
        %v8474 = vpack.c.b16 %v7850, %v7834
        %v8475 = vpack.c.b16 %v7851, %v7835
        %v8476 = vpack.c.b16 %v7852, %v7836
        %v8477 = vpack.c.b16 %v7853, %v7837
        %v8478 = vpack.c.b16 %v7870, %v7854
        %v8479 = vpack.c.b16 %v7871, %v7855
        %v8480 = vpack.c.b16 %v7872, %v7856
        %v8481 = vpack.c.b16 %v7873, %v7857
        %v8482 = vpack.c.b16 %v7874, %v7858
        %v8483 = vpack.c.b16 %v7875, %v7859
        %v8484 = vpack.c.b16 %v7876, %v7860
        %v8485 = vpack.c.b16 %v7877, %v7861
        %v8486 = vpack.c.b16 %v7878, %v7862
        %v8487 = vpack.c.b16 %v7879, %v7863
        %v8488 = vpack.c.b16 %v7880, %v7864
        %v8489 = vpack.c.b16 %v7881, %v7865
        %v8490 = vpack.c.b16 %v7882, %v7866
        %v8491 = vpack.c.b16 %v7883, %v7867
        %v8492 = vpack.c.b16 %v7884, %v7868
        %v8493 = vpack.c.b16 %v7885, %v7869
        %v8494 = vpack.c.b16 %v7902, %v7886
        %v8495 = vpack.c.b16 %v7903, %v7887
        %v8496 = vpack.c.b16 %v7904, %v7888
        %v8497 = vpack.c.b16 %v7905, %v7889
        %v8498 = vpack.c.b16 %v7906, %v7890
        %v8499 = vpack.c.b16 %v7907, %v7891
        %v8500 = vpack.c.b16 %v7908, %v7892
        %v8501 = vpack.c.b16 %v7909, %v7893
        %v8502 = vpack.c.b16 %v7910, %v7894
        %v8503 = vpack.c.b16 %v7911, %v7895
        %v8504 = vpack.c.b16 %v7912, %v7896
        %v8505 = vpack.c.b16 %v7913, %v7897
        %v8506 = vpack.c.b16 %v7914, %v7898
        %v8507 = vpack.c.b16 %v7915, %v7899
        %v8508 = vpack.c.b16 %v7916, %v7900
        %v8509 = vpack.c.b16 %v7917, %v7901
        %v8510 = vpack.c.b16 %v7934, %v7918
        %v8511 = vpack.c.b16 %v7935, %v7919
        %v8512 = vpack.c.b16 %v7936, %v7920
        %v8513 = vpack.c.b16 %v7937, %v7921
        %v8514 = vpack.c.b16 %v7938, %v7922
        %v8515 = vpack.c.b16 %v7939, %v7923
        %v8516 = vpack.c.b16 %v7940, %v7924
        %v8517 = vpack.c.b16 %v7941, %v7925
        %v8518 = vpack.c.b16 %v7942, %v7926
        %v8519 = vpack.c.b16 %v7943, %v7927
        %v8520 = vpack.c.b16 %v7944, %v7928
        %v8521 = vpack.c.b16 %v7945, %v7929
        %v8522 = vpack.c.b16 %v7946, %v7930
        %v8523 = vpack.c.b16 %v7947, %v7931
        %v8524 = vpack.c.b16 %v7948, %v7932
        %v8525 = vpack.c.b16 %v7949, %v7933
        %v8526 = vpack.c.b16 %v7966, %v7950
        %v8527 = vpack.c.b16 %v7967, %v7951
        %v8528 = vpack.c.b16 %v7968, %v7952
        %v8529 = vpack.c.b16 %v7969, %v7953
        %v8530 = vpack.c.b16 %v7970, %v7954
        %v8531 = vpack.c.b16 %v7971, %v7955
        %v8532 = vpack.c.b16 %v7972, %v7956
        %v8533 = vpack.c.b16 %v7973, %v7957
        %v8534 = vpack.c.b16 %v7974, %v7958
        %v8535 = vpack.c.b16 %v7975, %v7959
        %v8536 = vpack.c.b16 %v7976, %v7960
        %v8537 = vpack.c.b16 %v7977, %v7961
        %v8538 = vpack.c.b16 %v7978, %v7962
        %v8539 = vpack.c.b16 %v7979, %v7963
        %v8540 = vpack.c.b16 %v7980, %v7964
        %v8541 = vpack.c.b16 %v7981, %v7965
        %v8542 = vpack.c.b16 %v7998, %v7982
        %v8543 = vpack.c.b16 %v7999, %v7983
        %v8544 = vpack.c.b16 %v8000, %v7984
        %v8545 = vpack.c.b16 %v8001, %v7985
        %v8546 = vpack.c.b16 %v8002, %v7986
        %v8547 = vpack.c.b16 %v8003, %v7987
        %v8548 = vpack.c.b16 %v8004, %v7988
        %v8549 = vpack.c.b16 %v8005, %v7989
        %v8550 = vpack.c.b16 %v8006, %v7990
        %v8551 = vpack.c.b16 %v8007, %v7991
        %v8552 = vpack.c.b16 %v8008, %v7992
        %v8553 = vpack.c.b16 %v8009, %v7993
        %v8554 = vpack.c.b16 %v8010, %v7994
        %v8555 = vpack.c.b16 %v8011, %v7995
        %v8556 = vpack.c.b16 %v8012, %v7996
        %v8557 = vpack.c.b16 %v8013, %v7997
        %v8558 = vpack.c.b16 %v8030, %v8014
        %v8559 = vpack.c.b16 %v8031, %v8015
        %v8560 = vpack.c.b16 %v8032, %v8016
        %v8561 = vpack.c.b16 %v8033, %v8017
        %v8562 = vpack.c.b16 %v8034, %v8018
        %v8563 = vpack.c.b16 %v8035, %v8019
        %v8564 = vpack.c.b16 %v8036, %v8020
        %v8565 = vpack.c.b16 %v8037, %v8021
        %v8566 = vpack.c.b16 %v8038, %v8022
        %v8567 = vpack.c.b16 %v8039, %v8023
        %v8568 = vpack.c.b16 %v8040, %v8024
        %v8569 = vpack.c.b16 %v8041, %v8025
        %v8570 = vpack.c.b16 %v8042, %v8026
        %v8571 = vpack.c.b16 %v8043, %v8027
        %v8572 = vpack.c.b16 %v8044, %v8028
        %v8573 = vpack.c.b16 %v8045, %v8029
        %v8574 = vpack.c.b16 %v8062, %v8046
        %v8575 = vpack.c.b16 %v8063, %v8047
        %v8576 = vpack.c.b16 %v8064, %v8048
        %v8577 = vpack.c.b16 %v8065, %v8049
        %v8578 = vpack.c.b16 %v8066, %v8050
        %v8579 = vpack.c.b16 %v8067, %v8051
        %v8580 = vpack.c.b16 %v8068, %v8052
        %v8581 = vpack.c.b16 %v8069, %v8053
        %v8582 = vpack.c.b16 %v8070, %v8054
        %v8583 = vpack.c.b16 %v8071, %v8055
        %v8584 = vpack.c.b16 %v8072, %v8056
        %v8585 = vpack.c.b16 %v8073, %v8057
        %v8586 = vpack.c.b16 %v8074, %v8058
        %v8587 = vpack.c.b16 %v8075, %v8059
        %v8588 = vpack.c.b16 %v8076, %v8060
        %v8589 = vpack.c.b16 %v8077, %v8061
        %9102 = vmatprep.subr.bf16.mxu0 %v8079
        %9103 = vmatpush1.bf16.msra.mxu0 %v8078
        %9104 = vmatprep.subr.bf16.mxu0 %v8095
        %9105 = vmatpush1.bf16.msra.mxu0 %v8094
        %9106 = vmatprep.subr.bf16.mxu0 %v8111
        %9107 = vmatpush1.bf16.msra.mxu0 %v8110
        %9108 = vmatprep.subr.bf16.mxu0 %v8127
        %9109 = vmatpush1.bf16.msra.mxu0 %v8126
        %9110 = vmatprep.subr.bf16.mxu0 %v8143
        %9111 = vmatpush1.bf16.msra.mxu0 %v8142
        %9112 = vmatprep.subr.bf16.mxu0 %v8159
        %9113 = vmatpush1.bf16.msra.mxu0 %v8158
        %9114 = vmatprep.subr.bf16.mxu0 %v8175
        %9115 = vmatpush1.bf16.msra.mxu0 %v8174
        %9116 = vmatprep.subr.bf16.mxu0 %v8191
        %9117 = vmatpush1.bf16.msra.mxu0 %v8190
        %9118 = vmatprep.subr.bf16.mxu0 %v8207
        %9119 = vmatpush1.bf16.msra.mxu0 %v8206
        %9120 = vmatprep.subr.bf16.mxu0 %v8223
        %9121 = vmatpush1.bf16.msra.mxu0 %v8222
        %9122 = vmatprep.subr.bf16.mxu0 %v8239
        %9123 = vmatpush1.bf16.msra.mxu0 %v8238
        %9124 = vmatprep.subr.bf16.mxu0 %v8255
        %9125 = vmatpush1.bf16.msra.mxu0 %v8254
        %9126 = vmatprep.subr.bf16.mxu0 %v8271
        %9127 = vmatpush1.bf16.msra.mxu0 %v8270
        %9128 = vmatprep.subr.bf16.mxu0 %v8287
        %9129 = vmatpush1.bf16.msra.mxu0 %v8286
        %9130 = vmatprep.subr.bf16.mxu0 %v8303
        %9131 = vmatpush1.bf16.msra.mxu0 %v8302
        %9132 = vmatprep.subr.bf16.mxu0 %v8319
        %9133 = vmatpush1.bf16.msra.mxu0 %v8318
        %9134 = vmatprep.mubr.bf16.mxu0 %v6027
        %9135 = vmatmul.mubr.bf16.gmra.mrb[0].mxu0 %v6026
        %v9136 = vpop.f32.mrb[0].mxu0
        %v9137 = vadd.f32 0.0, %v9136
        %v9138 = vpop.f32.mrb[0].mxu0
        %v9139 = vadd.f32 0.0, %v9138
        %v9140 = vpop.f32.mrb[0].mxu0
        %v9141 = vpop.f32.mrb[0].mxu0
        %9142 = vdwg.mxu0
        %9143 = vmatprep.subr.bf16.mxu0 %v8335
        %9144 = vmatpush1.bf16.msra.mxu0 %v8334
        %9145 = vmatprep.subr.bf16.mxu0 %v8351
        %9146 = vmatpush1.bf16.msra.mxu0 %v8350
        %9147 = vmatprep.subr.bf16.mxu0 %v8367
        %9148 = vmatpush1.bf16.msra.mxu0 %v8366
        %9149 = vmatprep.subr.bf16.mxu0 %v8383
        %9150 = vmatpush1.bf16.msra.mxu0 %v8382
        %9151 = vmatprep.subr.bf16.mxu0 %v8399
        %9152 = vmatpush1.bf16.msra.mxu0 %v8398
        %9153 = vmatprep.subr.bf16.mxu0 %v8415
        %9154 = vmatpush1.bf16.msra.mxu0 %v8414
        %9155 = vmatprep.subr.bf16.mxu0 %v8431
        %9156 = vmatpush1.bf16.msra.mxu0 %v8430
        %9157 = vmatprep.subr.bf16.mxu0 %v8447
        %9158 = vmatpush1.bf16.msra.mxu0 %v8446
        %9159 = vmatprep.subr.bf16.mxu0 %v8463
        %9160 = vmatpush1.bf16.msra.mxu0 %v8462
        %9161 = vmatprep.subr.bf16.mxu0 %v8479
        %9162 = vmatpush1.bf16.msra.mxu0 %v8478
        %9163 = vmatprep.subr.bf16.mxu0 %v8495
        %9164 = vmatpush1.bf16.msra.mxu0 %v8494
        %9165 = vmatprep.subr.bf16.mxu0 %v8511
        %9166 = vmatpush1.bf16.msra.mxu0 %v8510
        %9167 = vmatprep.subr.bf16.mxu0 %v8527
        %9168 = vmatpush1.bf16.msra.mxu0 %v8526
        %9169 = vmatprep.subr.bf16.mxu0 %v8543
        %9170 = vmatpush1.bf16.msra.mxu0 %v8542
        %9171 = vmatprep.subr.bf16.mxu0 %v8559
        %9172 = vmatpush1.bf16.msra.mxu0 %v8558
        %9173 = vmatprep.subr.bf16.mxu0 %v8575
        %9174 = vmatpush1.bf16.msra.mxu0 %v8574
        %9175 = vmatprep.mubr.bf16.mxu0 %v6029
        %9176 = vmatmul.mubr.bf16.gmra.mrb[0].mxu0 %v6028
        %v9177 = vpop.f32.mrb[0].mxu0
        %v9178 = vadd.f32 %v9137, %v9177
        %v9179 = vpop.f32.mrb[0].mxu0
        %v9180 = vadd.f32 %v9139, %v9179
        %v9181 = vpop.f32.mrb[0].mxu0
        %v9182 = vpop.f32.mrb[0].mxu0
        %9183 = vdwg.mxu0
        %9184 = vmatprep.subr.bf16.mxu0 %v8081
        %9185 = vmatpush1.bf16.msra.mxu0 %v8080
        %9186 = vmatprep.subr.bf16.mxu0 %v8097
        %9187 = vmatpush1.bf16.msra.mxu0 %v8096
        %9188 = vmatprep.subr.bf16.mxu0 %v8113
        %9189 = vmatpush1.bf16.msra.mxu0 %v8112
        %9190 = vmatprep.subr.bf16.mxu0 %v8129
        %9191 = vmatpush1.bf16.msra.mxu0 %v8128
        %9192 = vmatprep.subr.bf16.mxu0 %v8145
        %9193 = vmatpush1.bf16.msra.mxu0 %v8144
        %9194 = vmatprep.subr.bf16.mxu0 %v8161
        %9195 = vmatpush1.bf16.msra.mxu0 %v8160
        %9196 = vmatprep.subr.bf16.mxu0 %v8177
        %9197 = vmatpush1.bf16.msra.mxu0 %v8176
        %9198 = vmatprep.subr.bf16.mxu0 %v8193
        %9199 = vmatpush1.bf16.msra.mxu0 %v8192
        %9200 = vmatprep.subr.bf16.mxu0 %v8209
        %9201 = vmatpush1.bf16.msra.mxu0 %v8208
        %9202 = vmatprep.subr.bf16.mxu0 %v8225
        %9203 = vmatpush1.bf16.msra.mxu0 %v8224
        %9204 = vmatprep.subr.bf16.mxu0 %v8241
        %9205 = vmatpush1.bf16.msra.mxu0 %v8240
        %9206 = vmatprep.subr.bf16.mxu0 %v8257
        %9207 = vmatpush1.bf16.msra.mxu0 %v8256
        %9208 = vmatprep.subr.bf16.mxu0 %v8273
        %9209 = vmatpush1.bf16.msra.mxu0 %v8272
        %9210 = vmatprep.subr.bf16.mxu0 %v8289
        %9211 = vmatpush1.bf16.msra.mxu0 %v8288
        %9212 = vmatprep.subr.bf16.mxu0 %v8305
        %9213 = vmatpush1.bf16.msra.mxu0 %v8304
        %9214 = vmatprep.subr.bf16.mxu0 %v8321
        %9215 = vmatpush1.bf16.msra.mxu0 %v8320
        %9216 = vmatprep.mubr.bf16.mxu0 %v6027
        %9217 = vmatmul.mubr.bf16.gmra.mrb[0].mxu0 %v6026
        %v9218 = vpop.f32.mrb[0].mxu0
        %v9219 = vadd.f32 0.0, %v9218
        %v9220 = vpop.f32.mrb[0].mxu0
        %v9221 = vadd.f32 0.0, %v9220
        %v9222 = vpop.f32.mrb[0].mxu0
        %v9223 = vpop.f32.mrb[0].mxu0
        %9224 = vdwg.mxu0
        %9225 = vmatprep.subr.bf16.mxu0 %v8337
        %9226 = vmatpush1.bf16.msra.mxu0 %v8336
        %9227 = vmatprep.subr.bf16.mxu0 %v8353
        %9228 = vmatpush1.bf16.msra.mxu0 %v8352
        %9229 = vmatprep.subr.bf16.mxu0 %v8369
        %9230 = vmatpush1.bf16.msra.mxu0 %v8368
        %9231 = vmatprep.subr.bf16.mxu0 %v8385
        %9232 = vmatpush1.bf16.msra.mxu0 %v8384
        %9233 = vmatprep.subr.bf16.mxu0 %v8401
        %9234 = vmatpush1.bf16.msra.mxu0 %v8400
        %9235 = vmatprep.subr.bf16.mxu0 %v8417
        %9236 = vmatpush1.bf16.msra.mxu0 %v8416
        %9237 = vmatprep.subr.bf16.mxu0 %v8433
        %9238 = vmatpush1.bf16.msra.mxu0 %v8432
        %9239 = vmatprep.subr.bf16.mxu0 %v8449
        %9240 = vmatpush1.bf16.msra.mxu0 %v8448
        %9241 = vmatprep.subr.bf16.mxu0 %v8465
        %9242 = vmatpush1.bf16.msra.mxu0 %v8464
        %9243 = vmatprep.subr.bf16.mxu0 %v8481
        %9244 = vmatpush1.bf16.msra.mxu0 %v8480
        %9245 = vmatprep.subr.bf16.mxu0 %v8497
        %9246 = vmatpush1.bf16.msra.mxu0 %v8496
        %9247 = vmatprep.subr.bf16.mxu0 %v8513
        %9248 = vmatpush1.bf16.msra.mxu0 %v8512
        %9249 = vmatprep.subr.bf16.mxu0 %v8529
        %9250 = vmatpush1.bf16.msra.mxu0 %v8528
        %9251 = vmatprep.subr.bf16.mxu0 %v8545
        %9252 = vmatpush1.bf16.msra.mxu0 %v8544
        %9253 = vmatprep.subr.bf16.mxu0 %v8561
        %9254 = vmatpush1.bf16.msra.mxu0 %v8560
        %9255 = vmatprep.subr.bf16.mxu0 %v8577
        %9256 = vmatpush1.bf16.msra.mxu0 %v8576
        %9257 = vmatprep.mubr.bf16.mxu0 %v6029
        %9258 = vmatmul.mubr.bf16.gmra.mrb[0].mxu0 %v6028
        %v9259 = vpop.f32.mrb[0].mxu0
        %v9260 = vadd.f32 %v9219, %v9259
        %v9261 = vpop.f32.mrb[0].mxu0
        %v9262 = vadd.f32 %v9221, %v9261
        %v9263 = vpop.f32.mrb[0].mxu0
        %v9264 = vpop.f32.mrb[0].mxu0
        %9265 = vdwg.mxu0
        %9266 = vmatprep.subr.bf16.mxu0 %v8083
        %9267 = vmatpush1.bf16.msra.mxu0 %v8082
        %9268 = vmatprep.subr.bf16.mxu0 %v8099
        %9269 = vmatpush1.bf16.msra.mxu0 %v8098
        %9270 = vmatprep.subr.bf16.mxu0 %v8115
        %9271 = vmatpush1.bf16.msra.mxu0 %v8114
        %9272 = vmatprep.subr.bf16.mxu0 %v8131
        %9273 = vmatpush1.bf16.msra.mxu0 %v8130
        %9274 = vmatprep.subr.bf16.mxu0 %v8147
        %9275 = vmatpush1.bf16.msra.mxu0 %v8146
        %9276 = vmatprep.subr.bf16.mxu0 %v8163
        %9277 = vmatpush1.bf16.msra.mxu0 %v8162
        %9278 = vmatprep.subr.bf16.mxu0 %v8179
        %9279 = vmatpush1.bf16.msra.mxu0 %v8178
        %9280 = vmatprep.subr.bf16.mxu0 %v8195
        %9281 = vmatpush1.bf16.msra.mxu0 %v8194
        %9282 = vmatprep.subr.bf16.mxu0 %v8211
        %9283 = vmatpush1.bf16.msra.mxu0 %v8210
        %9284 = vmatprep.subr.bf16.mxu0 %v8227
        %9285 = vmatpush1.bf16.msra.mxu0 %v8226
        %9286 = vmatprep.subr.bf16.mxu0 %v8243
        %9287 = vmatpush1.bf16.msra.mxu0 %v8242
        %9288 = vmatprep.subr.bf16.mxu0 %v8259
        %9289 = vmatpush1.bf16.msra.mxu0 %v8258
        %9290 = vmatprep.subr.bf16.mxu0 %v8275
        %9291 = vmatpush1.bf16.msra.mxu0 %v8274
        %9292 = vmatprep.subr.bf16.mxu0 %v8291
        %9293 = vmatpush1.bf16.msra.mxu0 %v8290
        %9294 = vmatprep.subr.bf16.mxu0 %v8307
        %9295 = vmatpush1.bf16.msra.mxu0 %v8306
        %9296 = vmatprep.subr.bf16.mxu0 %v8323
        %9297 = vmatpush1.bf16.msra.mxu0 %v8322
        %9298 = vmatprep.mubr.bf16.mxu0 %v6027
        %9299 = vmatmul.mubr.bf16.gmra.mrb[0].mxu0 %v6026
        %v9300 = vpop.f32.mrb[0].mxu0
        %v9301 = vadd.f32 0.0, %v9300
        %v9302 = vpop.f32.mrb[0].mxu0
        %v9303 = vadd.f32 0.0, %v9302
        %v9304 = vpop.f32.mrb[0].mxu0
        %v9305 = vpop.f32.mrb[0].mxu0
        %9306 = vdwg.mxu0
        %9307 = vmatprep.subr.bf16.mxu0 %v8339
        %9308 = vmatpush1.bf16.msra.mxu0 %v8338
        %9309 = vmatprep.subr.bf16.mxu0 %v8355
        %9310 = vmatpush1.bf16.msra.mxu0 %v8354
        %9311 = vmatprep.subr.bf16.mxu0 %v8371
        %9312 = vmatpush1.bf16.msra.mxu0 %v8370
        %9313 = vmatprep.subr.bf16.mxu0 %v8387
        %9314 = vmatpush1.bf16.msra.mxu0 %v8386
        %9315 = vmatprep.subr.bf16.mxu0 %v8403
        %9316 = vmatpush1.bf16.msra.mxu0 %v8402
        %9317 = vmatprep.subr.bf16.mxu0 %v8419
        %9318 = vmatpush1.bf16.msra.mxu0 %v8418
        %9319 = vmatprep.subr.bf16.mxu0 %v8435
        %9320 = vmatpush1.bf16.msra.mxu0 %v8434
        %9321 = vmatprep.subr.bf16.mxu0 %v8451
        %9322 = vmatpush1.bf16.msra.mxu0 %v8450
        %9323 = vmatprep.subr.bf16.mxu0 %v8467
        %9324 = vmatpush1.bf16.msra.mxu0 %v8466
        %9325 = vmatprep.subr.bf16.mxu0 %v8483
        %9326 = vmatpush1.bf16.msra.mxu0 %v8482
        %9327 = vmatprep.subr.bf16.mxu0 %v8499
        %9328 = vmatpush1.bf16.msra.mxu0 %v8498
        %9329 = vmatprep.subr.bf16.mxu0 %v8515
        %9330 = vmatpush1.bf16.msra.mxu0 %v8514
        %9331 = vmatprep.subr.bf16.mxu0 %v8531
        %9332 = vmatpush1.bf16.msra.mxu0 %v8530
        %9333 = vmatprep.subr.bf16.mxu0 %v8547
        %9334 = vmatpush1.bf16.msra.mxu0 %v8546
        %9335 = vmatprep.subr.bf16.mxu0 %v8563
        %9336 = vmatpush1.bf16.msra.mxu0 %v8562
        %9337 = vmatprep.subr.bf16.mxu0 %v8579
        %9338 = vmatpush1.bf16.msra.mxu0 %v8578
        %9339 = vmatprep.mubr.bf16.mxu0 %v6029
        %9340 = vmatmul.mubr.bf16.gmra.mrb[0].mxu0 %v6028
        %v9341 = vpop.f32.mrb[0].mxu0
        %v9342 = vadd.f32 %v9301, %v9341
        %v9343 = vpop.f32.mrb[0].mxu0
        %v9344 = vadd.f32 %v9303, %v9343
        %v9345 = vpop.f32.mrb[0].mxu0
        %v9346 = vpop.f32.mrb[0].mxu0
        %9347 = vdwg.mxu0
        %9348 = vmatprep.subr.bf16.mxu0 %v8085
        %9349 = vmatpush1.bf16.msra.mxu0 %v8084
        %9350 = vmatprep.subr.bf16.mxu0 %v8101
        %9351 = vmatpush1.bf16.msra.mxu0 %v8100
        %9352 = vmatprep.subr.bf16.mxu0 %v8117
        %9353 = vmatpush1.bf16.msra.mxu0 %v8116
        %9354 = vmatprep.subr.bf16.mxu0 %v8133
        %9355 = vmatpush1.bf16.msra.mxu0 %v8132
        %9356 = vmatprep.subr.bf16.mxu0 %v8149
        %9357 = vmatpush1.bf16.msra.mxu0 %v8148
        %9358 = vmatprep.subr.bf16.mxu0 %v8165
        %9359 = vmatpush1.bf16.msra.mxu0 %v8164
        %9360 = vmatprep.subr.bf16.mxu0 %v8181
        %9361 = vmatpush1.bf16.msra.mxu0 %v8180
        %9362 = vmatprep.subr.bf16.mxu0 %v8197
        %9363 = vmatpush1.bf16.msra.mxu0 %v8196
        %9364 = vmatprep.subr.bf16.mxu0 %v8213
        %9365 = vmatpush1.bf16.msra.mxu0 %v8212
        %9366 = vmatprep.subr.bf16.mxu0 %v8229
        %9367 = vmatpush1.bf16.msra.mxu0 %v8228
        %9368 = vmatprep.subr.bf16.mxu0 %v8245
        %9369 = vmatpush1.bf16.msra.mxu0 %v8244
        %9370 = vmatprep.subr.bf16.mxu0 %v8261
        %9371 = vmatpush1.bf16.msra.mxu0 %v8260
        %9372 = vmatprep.subr.bf16.mxu0 %v8277
        %9373 = vmatpush1.bf16.msra.mxu0 %v8276
        %9374 = vmatprep.subr.bf16.mxu0 %v8293
        %9375 = vmatpush1.bf16.msra.mxu0 %v8292
        %9376 = vmatprep.subr.bf16.mxu0 %v8309
        %9377 = vmatpush1.bf16.msra.mxu0 %v8308
        %9378 = vmatprep.subr.bf16.mxu0 %v8325
        %9379 = vmatpush1.bf16.msra.mxu0 %v8324
        %9380 = vmatprep.mubr.bf16.mxu0 %v6027
        %9381 = vmatmul.mubr.bf16.gmra.mrb[0].mxu0 %v6026
        %v9382 = vpop.f32.mrb[0].mxu0
        %v9383 = vadd.f32 0.0, %v9382
        %v9384 = vpop.f32.mrb[0].mxu0
        %v9385 = vadd.f32 0.0, %v9384
        %v9386 = vpop.f32.mrb[0].mxu0
        %v9387 = vpop.f32.mrb[0].mxu0
        %9388 = vdwg.mxu0
        %9389 = vmatprep.subr.bf16.mxu0 %v8341
        %9390 = vmatpush1.bf16.msra.mxu0 %v8340
        %9391 = vmatprep.subr.bf16.mxu0 %v8357
        %9392 = vmatpush1.bf16.msra.mxu0 %v8356
        %9393 = vmatprep.subr.bf16.mxu0 %v8373
        %9394 = vmatpush1.bf16.msra.mxu0 %v8372
        %9395 = vmatprep.subr.bf16.mxu0 %v8389
        %9396 = vmatpush1.bf16.msra.mxu0 %v8388
        %9397 = vmatprep.subr.bf16.mxu0 %v8405
        %9398 = vmatpush1.bf16.msra.mxu0 %v8404
        %9399 = vmatprep.subr.bf16.mxu0 %v8421
        %9400 = vmatpush1.bf16.msra.mxu0 %v8420
        %9401 = vmatprep.subr.bf16.mxu0 %v8437
        %9402 = vmatpush1.bf16.msra.mxu0 %v8436
        %9403 = vmatprep.subr.bf16.mxu0 %v8453
        %9404 = vmatpush1.bf16.msra.mxu0 %v8452
        %9405 = vmatprep.subr.bf16.mxu0 %v8469
        %9406 = vmatpush1.bf16.msra.mxu0 %v8468
        %9407 = vmatprep.subr.bf16.mxu0 %v8485
        %9408 = vmatpush1.bf16.msra.mxu0 %v8484
        %9409 = vmatprep.subr.bf16.mxu0 %v8501
        %9410 = vmatpush1.bf16.msra.mxu0 %v8500
        %9411 = vmatprep.subr.bf16.mxu0 %v8517
        %9412 = vmatpush1.bf16.msra.mxu0 %v8516
        %9413 = vmatprep.subr.bf16.mxu0 %v8533
        %9414 = vmatpush1.bf16.msra.mxu0 %v8532
        %9415 = vmatprep.subr.bf16.mxu0 %v8549
        %9416 = vmatpush1.bf16.msra.mxu0 %v8548
        %9417 = vmatprep.subr.bf16.mxu0 %v8565
        %9418 = vmatpush1.bf16.msra.mxu0 %v8564
        %9419 = vmatprep.subr.bf16.mxu0 %v8581
        %9420 = vmatpush1.bf16.msra.mxu0 %v8580
        %9421 = vmatprep.mubr.bf16.mxu0 %v6029
        %9422 = vmatmul.mubr.bf16.gmra.mrb[0].mxu0 %v6028
        %v9423 = vpop.f32.mrb[0].mxu0
        %v9424 = vadd.f32 %v9383, %v9423
        %v9425 = vpop.f32.mrb[0].mxu0
        %v9426 = vadd.f32 %v9385, %v9425
        %v9427 = vpop.f32.mrb[0].mxu0
        %v9428 = vpop.f32.mrb[0].mxu0
        %9429 = vdwg.mxu0
        %9430 = vmatprep.subr.bf16.mxu0 %v8087
        %9431 = vmatpush1.bf16.msra.mxu0 %v8086
        %9432 = vmatprep.subr.bf16.mxu0 %v8103
        %9433 = vmatpush1.bf16.msra.mxu0 %v8102
        %9434 = vmatprep.subr.bf16.mxu0 %v8119
        %9435 = vmatpush1.bf16.msra.mxu0 %v8118
        %9436 = vmatprep.subr.bf16.mxu0 %v8135
        %9437 = vmatpush1.bf16.msra.mxu0 %v8134
        %9438 = vmatprep.subr.bf16.mxu0 %v8151
        %9439 = vmatpush1.bf16.msra.mxu0 %v8150
        %9440 = vmatprep.subr.bf16.mxu0 %v8167
        %9441 = vmatpush1.bf16.msra.mxu0 %v8166
        %9442 = vmatprep.subr.bf16.mxu0 %v8183
        %9443 = vmatpush1.bf16.msra.mxu0 %v8182
        %9444 = vmatprep.subr.bf16.mxu0 %v8199
        %9445 = vmatpush1.bf16.msra.mxu0 %v8198
        %9446 = vmatprep.subr.bf16.mxu0 %v8215
        %9447 = vmatpush1.bf16.msra.mxu0 %v8214
        %9448 = vmatprep.subr.bf16.mxu0 %v8231
        %9449 = vmatpush1.bf16.msra.mxu0 %v8230
        %9450 = vmatprep.subr.bf16.mxu0 %v8247
        %9451 = vmatpush1.bf16.msra.mxu0 %v8246
        %9452 = vmatprep.subr.bf16.mxu0 %v8263
        %9453 = vmatpush1.bf16.msra.mxu0 %v8262
        %9454 = vmatprep.subr.bf16.mxu0 %v8279
        %9455 = vmatpush1.bf16.msra.mxu0 %v8278
        %9456 = vmatprep.subr.bf16.mxu0 %v8295
        %9457 = vmatpush1.bf16.msra.mxu0 %v8294
        %9458 = vmatprep.subr.bf16.mxu0 %v8311
        %9459 = vmatpush1.bf16.msra.mxu0 %v8310
        %9460 = vmatprep.subr.bf16.mxu0 %v8327
        %9461 = vmatpush1.bf16.msra.mxu0 %v8326
        %9462 = vmatprep.mubr.bf16.mxu0 %v6027
        %9463 = vmatmul.mubr.bf16.gmra.mrb[0].mxu0 %v6026
        %v9464 = vpop.f32.mrb[0].mxu0
        %v9465 = vadd.f32 0.0, %v9464
        %v9466 = vpop.f32.mrb[0].mxu0
        %v9467 = vadd.f32 0.0, %v9466
        %v9468 = vpop.f32.mrb[0].mxu0
        %v9469 = vpop.f32.mrb[0].mxu0
        %9470 = vdwg.mxu0
        %9471 = vmatprep.subr.bf16.mxu0 %v8343
        %9472 = vmatpush1.bf16.msra.mxu0 %v8342
        %9473 = vmatprep.subr.bf16.mxu0 %v8359
        %9474 = vmatpush1.bf16.msra.mxu0 %v8358
        %9475 = vmatprep.subr.bf16.mxu0 %v8375
        %9476 = vmatpush1.bf16.msra.mxu0 %v8374
        %9477 = vmatprep.subr.bf16.mxu0 %v8391
        %9478 = vmatpush1.bf16.msra.mxu0 %v8390
        %9479 = vmatprep.subr.bf16.mxu0 %v8407
        %9480 = vmatpush1.bf16.msra.mxu0 %v8406
        %9481 = vmatprep.subr.bf16.mxu0 %v8423
        %9482 = vmatpush1.bf16.msra.mxu0 %v8422
        %9483 = vmatprep.subr.bf16.mxu0 %v8439
        %9484 = vmatpush1.bf16.msra.mxu0 %v8438
        %9485 = vmatprep.subr.bf16.mxu0 %v8455
        %9486 = vmatpush1.bf16.msra.mxu0 %v8454
        %9487 = vmatprep.subr.bf16.mxu0 %v8471
        %9488 = vmatpush1.bf16.msra.mxu0 %v8470
        %9489 = vmatprep.subr.bf16.mxu0 %v8487
        %9490 = vmatpush1.bf16.msra.mxu0 %v8486
        %9491 = vmatprep.subr.bf16.mxu0 %v8503
        %9492 = vmatpush1.bf16.msra.mxu0 %v8502
        %9493 = vmatprep.subr.bf16.mxu0 %v8519
        %9494 = vmatpush1.bf16.msra.mxu0 %v8518
        %9495 = vmatprep.subr.bf16.mxu0 %v8535
        %9496 = vmatpush1.bf16.msra.mxu0 %v8534
        %9497 = vmatprep.subr.bf16.mxu0 %v8551
        %9498 = vmatpush1.bf16.msra.mxu0 %v8550
        %9499 = vmatprep.subr.bf16.mxu0 %v8567
        %9500 = vmatpush1.bf16.msra.mxu0 %v8566
        %9501 = vmatprep.subr.bf16.mxu0 %v8583
        %9502 = vmatpush1.bf16.msra.mxu0 %v8582
        %9503 = vmatprep.mubr.bf16.mxu0 %v6029
        %9504 = vmatmul.mubr.bf16.gmra.mrb[0].mxu0 %v6028
        %v9505 = vpop.f32.mrb[0].mxu0
        %v9506 = vadd.f32 %v9465, %v9505
        %v9507 = vpop.f32.mrb[0].mxu0
        %v9508 = vadd.f32 %v9467, %v9507
        %v9509 = vpop.f32.mrb[0].mxu0
        %v9510 = vpop.f32.mrb[0].mxu0
        %9511 = vdwg.mxu0
        %9512 = vmatprep.subr.bf16.mxu0 %v8089
        %9513 = vmatpush1.bf16.msra.mxu0 %v8088
        %9514 = vmatprep.subr.bf16.mxu0 %v8105
        %9515 = vmatpush1.bf16.msra.mxu0 %v8104
        %9516 = vmatprep.subr.bf16.mxu0 %v8121
        %9517 = vmatpush1.bf16.msra.mxu0 %v8120
        %9518 = vmatprep.subr.bf16.mxu0 %v8137
        %9519 = vmatpush1.bf16.msra.mxu0 %v8136
        %9520 = vmatprep.subr.bf16.mxu0 %v8153
        %9521 = vmatpush1.bf16.msra.mxu0 %v8152
        %9522 = vmatprep.subr.bf16.mxu0 %v8169
        %9523 = vmatpush1.bf16.msra.mxu0 %v8168
        %9524 = vmatprep.subr.bf16.mxu0 %v8185
        %9525 = vmatpush1.bf16.msra.mxu0 %v8184
        %9526 = vmatprep.subr.bf16.mxu0 %v8201
        %9527 = vmatpush1.bf16.msra.mxu0 %v8200
        %9528 = vmatprep.subr.bf16.mxu0 %v8217
        %9529 = vmatpush1.bf16.msra.mxu0 %v8216
        %9530 = vmatprep.subr.bf16.mxu0 %v8233
        %9531 = vmatpush1.bf16.msra.mxu0 %v8232
        %9532 = vmatprep.subr.bf16.mxu0 %v8249
        %9533 = vmatpush1.bf16.msra.mxu0 %v8248
        %9534 = vmatprep.subr.bf16.mxu0 %v8265
        %9535 = vmatpush1.bf16.msra.mxu0 %v8264
        %9536 = vmatprep.subr.bf16.mxu0 %v8281
        %9537 = vmatpush1.bf16.msra.mxu0 %v8280
        %9538 = vmatprep.subr.bf16.mxu0 %v8297
        %9539 = vmatpush1.bf16.msra.mxu0 %v8296
        %9540 = vmatprep.subr.bf16.mxu0 %v8313
        %9541 = vmatpush1.bf16.msra.mxu0 %v8312
        %9542 = vmatprep.subr.bf16.mxu0 %v8329
        %9543 = vmatpush1.bf16.msra.mxu0 %v8328
        %9544 = vmatprep.mubr.bf16.mxu0 %v6027
        %9545 = vmatmul.mubr.bf16.gmra.mrb[0].mxu0 %v6026
        %v9546 = vpop.f32.mrb[0].mxu0
        %v9547 = vadd.f32 0.0, %v9546
        %v9548 = vpop.f32.mrb[0].mxu0
        %v9549 = vadd.f32 0.0, %v9548
        %v9550 = vpop.f32.mrb[0].mxu0
        %v9551 = vpop.f32.mrb[0].mxu0
        %9552 = vdwg.mxu0
        %9553 = vmatprep.subr.bf16.mxu0 %v8345
        %9554 = vmatpush1.bf16.msra.mxu0 %v8344
        %9555 = vmatprep.subr.bf16.mxu0 %v8361
        %9556 = vmatpush1.bf16.msra.mxu0 %v8360
        %9557 = vmatprep.subr.bf16.mxu0 %v8377
        %9558 = vmatpush1.bf16.msra.mxu0 %v8376
        %9559 = vmatprep.subr.bf16.mxu0 %v8393
        %9560 = vmatpush1.bf16.msra.mxu0 %v8392
        %9561 = vmatprep.subr.bf16.mxu0 %v8409
        %9562 = vmatpush1.bf16.msra.mxu0 %v8408
        %9563 = vmatprep.subr.bf16.mxu0 %v8425
        %9564 = vmatpush1.bf16.msra.mxu0 %v8424
        %9565 = vmatprep.subr.bf16.mxu0 %v8441
        %9566 = vmatpush1.bf16.msra.mxu0 %v8440
        %9567 = vmatprep.subr.bf16.mxu0 %v8457
        %9568 = vmatpush1.bf16.msra.mxu0 %v8456
        %9569 = vmatprep.subr.bf16.mxu0 %v8473
        %9570 = vmatpush1.bf16.msra.mxu0 %v8472
        %9571 = vmatprep.subr.bf16.mxu0 %v8489
        %9572 = vmatpush1.bf16.msra.mxu0 %v8488
        %9573 = vmatprep.subr.bf16.mxu0 %v8505
        %9574 = vmatpush1.bf16.msra.mxu0 %v8504
        %9575 = vmatprep.subr.bf16.mxu0 %v8521
        %9576 = vmatpush1.bf16.msra.mxu0 %v8520
        %9577 = vmatprep.subr.bf16.mxu0 %v8537
        %9578 = vmatpush1.bf16.msra.mxu0 %v8536
        %9579 = vmatprep.subr.bf16.mxu0 %v8553
        %9580 = vmatpush1.bf16.msra.mxu0 %v8552
        %9581 = vmatprep.subr.bf16.mxu0 %v8569
        %9582 = vmatpush1.bf16.msra.mxu0 %v8568
        %9583 = vmatprep.subr.bf16.mxu0 %v8585
        %9584 = vmatpush1.bf16.msra.mxu0 %v8584
        %9585 = vmatprep.mubr.bf16.mxu0 %v6029
        %9586 = vmatmul.mubr.bf16.gmra.mrb[0].mxu0 %v6028
        %v9587 = vpop.f32.mrb[0].mxu0
        %v9588 = vadd.f32 %v9547, %v9587
        %v9589 = vpop.f32.mrb[0].mxu0
        %v9590 = vadd.f32 %v9549, %v9589
        %v9591 = vpop.f32.mrb[0].mxu0
        %v9592 = vpop.f32.mrb[0].mxu0
        %9593 = vdwg.mxu0
        %9594 = vmatprep.subr.bf16.mxu0 %v8091
        %9595 = vmatpush1.bf16.msra.mxu0 %v8090
        %9596 = vmatprep.subr.bf16.mxu0 %v8107
        %9597 = vmatpush1.bf16.msra.mxu0 %v8106
        %9598 = vmatprep.subr.bf16.mxu0 %v8123
        %9599 = vmatpush1.bf16.msra.mxu0 %v8122
        %9600 = vmatprep.subr.bf16.mxu0 %v8139
        %9601 = vmatpush1.bf16.msra.mxu0 %v8138
        %9602 = vmatprep.subr.bf16.mxu0 %v8155
        %9603 = vmatpush1.bf16.msra.mxu0 %v8154
        %9604 = vmatprep.subr.bf16.mxu0 %v8171
        %9605 = vmatpush1.bf16.msra.mxu0 %v8170
        %9606 = vmatprep.subr.bf16.mxu0 %v8187
        %9607 = vmatpush1.bf16.msra.mxu0 %v8186
        %9608 = vmatprep.subr.bf16.mxu0 %v8203
        %9609 = vmatpush1.bf16.msra.mxu0 %v8202
        %9610 = vmatprep.subr.bf16.mxu0 %v8219
        %9611 = vmatpush1.bf16.msra.mxu0 %v8218
        %9612 = vmatprep.subr.bf16.mxu0 %v8235
        %9613 = vmatpush1.bf16.msra.mxu0 %v8234
        %9614 = vmatprep.subr.bf16.mxu0 %v8251
        %9615 = vmatpush1.bf16.msra.mxu0 %v8250
        %9616 = vmatprep.subr.bf16.mxu0 %v8267
        %9617 = vmatpush1.bf16.msra.mxu0 %v8266
        %9618 = vmatprep.subr.bf16.mxu0 %v8283
        %9619 = vmatpush1.bf16.msra.mxu0 %v8282
        %9620 = vmatprep.subr.bf16.mxu0 %v8299
        %9621 = vmatpush1.bf16.msra.mxu0 %v8298
        %9622 = vmatprep.subr.bf16.mxu0 %v8315
        %9623 = vmatpush1.bf16.msra.mxu0 %v8314
        %9624 = vmatprep.subr.bf16.mxu0 %v8331
        %9625 = vmatpush1.bf16.msra.mxu0 %v8330
        %9626 = vmatprep.mubr.bf16.mxu0 %v6027
        %9627 = vmatmul.mubr.bf16.gmra.mrb[0].mxu0 %v6026
        %v9628 = vpop.f32.mrb[0].mxu0
        %v9629 = vadd.f32 0.0, %v9628
        %v9630 = vpop.f32.mrb[0].mxu0
        %v9631 = vadd.f32 0.0, %v9630
        %v9632 = vpop.f32.mrb[0].mxu0
        %v9633 = vpop.f32.mrb[0].mxu0
        %9634 = vdwg.mxu0
        %9635 = vmatprep.subr.bf16.mxu0 %v8347
        %9636 = vmatpush1.bf16.msra.mxu0 %v8346
        %9637 = vmatprep.subr.bf16.mxu0 %v8363
        %9638 = vmatpush1.bf16.msra.mxu0 %v8362
        %9639 = vmatprep.subr.bf16.mxu0 %v8379
        %9640 = vmatpush1.bf16.msra.mxu0 %v8378
        %9641 = vmatprep.subr.bf16.mxu0 %v8395
        %9642 = vmatpush1.bf16.msra.mxu0 %v8394
        %9643 = vmatprep.subr.bf16.mxu0 %v8411
        %9644 = vmatpush1.bf16.msra.mxu0 %v8410
        %9645 = vmatprep.subr.bf16.mxu0 %v8427
        %9646 = vmatpush1.bf16.msra.mxu0 %v8426
        %9647 = vmatprep.subr.bf16.mxu0 %v8443
        %9648 = vmatpush1.bf16.msra.mxu0 %v8442
        %9649 = vmatprep.subr.bf16.mxu0 %v8459
        %9650 = vmatpush1.bf16.msra.mxu0 %v8458
        %9651 = vmatprep.subr.bf16.mxu0 %v8475
        %9652 = vmatpush1.bf16.msra.mxu0 %v8474
        %9653 = vmatprep.subr.bf16.mxu0 %v8491
        %9654 = vmatpush1.bf16.msra.mxu0 %v8490
        %9655 = vmatprep.subr.bf16.mxu0 %v8507
        %9656 = vmatpush1.bf16.msra.mxu0 %v8506
        %9657 = vmatprep.subr.bf16.mxu0 %v8523
        %9658 = vmatpush1.bf16.msra.mxu0 %v8522
        %9659 = vmatprep.subr.bf16.mxu0 %v8539
        %9660 = vmatpush1.bf16.msra.mxu0 %v8538
        %9661 = vmatprep.subr.bf16.mxu0 %v8555
        %9662 = vmatpush1.bf16.msra.mxu0 %v8554
        %9663 = vmatprep.subr.bf16.mxu0 %v8571
        %9664 = vmatpush1.bf16.msra.mxu0 %v8570
        %9665 = vmatprep.subr.bf16.mxu0 %v8587
        %9666 = vmatpush1.bf16.msra.mxu0 %v8586
        %9667 = vmatprep.mubr.bf16.mxu0 %v6029
        %9668 = vmatmul.mubr.bf16.gmra.mrb[0].mxu0 %v6028
        %v9669 = vpop.f32.mrb[0].mxu0
        %v9670 = vadd.f32 %v9629, %v9669
        %v9671 = vpop.f32.mrb[0].mxu0
        %v9672 = vadd.f32 %v9631, %v9671
        %v9673 = vpop.f32.mrb[0].mxu0
        %v9674 = vpop.f32.mrb[0].mxu0
        %9675 = vdwg.mxu0
        %9676 = vmatprep.subr.bf16.mxu0 %v8093
        %9677 = vmatpush1.bf16.msra.mxu0 %v8092
        %9678 = vmatprep.subr.bf16.mxu0 %v8109
        %9679 = vmatpush1.bf16.msra.mxu0 %v8108
        %9680 = vmatprep.subr.bf16.mxu0 %v8125
        %9681 = vmatpush1.bf16.msra.mxu0 %v8124
        %9682 = vmatprep.subr.bf16.mxu0 %v8141
        %9683 = vmatpush1.bf16.msra.mxu0 %v8140
        %9684 = vmatprep.subr.bf16.mxu0 %v8157
        %9685 = vmatpush1.bf16.msra.mxu0 %v8156
        %9686 = vmatprep.subr.bf16.mxu0 %v8173
        %9687 = vmatpush1.bf16.msra.mxu0 %v8172
        %9688 = vmatprep.subr.bf16.mxu0 %v8189
        %9689 = vmatpush1.bf16.msra.mxu0 %v8188
        %9690 = vmatprep.subr.bf16.mxu0 %v8205
        %9691 = vmatpush1.bf16.msra.mxu0 %v8204
        %9692 = vmatprep.subr.bf16.mxu0 %v8221
        %9693 = vmatpush1.bf16.msra.mxu0 %v8220
        %9694 = vmatprep.subr.bf16.mxu0 %v8237
        %9695 = vmatpush1.bf16.msra.mxu0 %v8236
        %9696 = vmatprep.subr.bf16.mxu0 %v8253
        %9697 = vmatpush1.bf16.msra.mxu0 %v8252
        %9698 = vmatprep.subr.bf16.mxu0 %v8269
        %9699 = vmatpush1.bf16.msra.mxu0 %v8268
        %9700 = vmatprep.subr.bf16.mxu0 %v8285
        %9701 = vmatpush1.bf16.msra.mxu0 %v8284
        %9702 = vmatprep.subr.bf16.mxu0 %v8301
        %9703 = vmatpush1.bf16.msra.mxu0 %v8300
        %9704 = vmatprep.subr.bf16.mxu0 %v8317
        %9705 = vmatpush1.bf16.msra.mxu0 %v8316
        %9706 = vmatprep.subr.bf16.mxu0 %v8333
        %9707 = vmatpush1.bf16.msra.mxu0 %v8332
        %9708 = vmatprep.mubr.bf16.mxu0 %v6027
        %9709 = vmatmul.mubr.bf16.gmra.mrb[0].mxu0 %v6026
        %v9710 = vpop.f32.mrb[0].mxu0
        %v9711 = vadd.f32 0.0, %v9710
        %v9712 = vpop.f32.mrb[0].mxu0
        %v9713 = vadd.f32 0.0, %v9712
        %v9714 = vpop.f32.mrb[0].mxu0
        %v9715 = vpop.f32.mrb[0].mxu0
        %9716 = vdwg.mxu0
        %9717 = vmatprep.subr.bf16.mxu0 %v8349
        %9718 = vmatpush1.bf16.msra.mxu0 %v8348
        %9719 = vmatprep.subr.bf16.mxu0 %v8365
        %9720 = vmatpush1.bf16.msra.mxu0 %v8364
        %9721 = vmatprep.subr.bf16.mxu0 %v8381
        %9722 = vmatpush1.bf16.msra.mxu0 %v8380
        %9723 = vmatprep.subr.bf16.mxu0 %v8397
        %9724 = vmatpush1.bf16.msra.mxu0 %v8396
        %9725 = vmatprep.subr.bf16.mxu0 %v8413
        %9726 = vmatpush1.bf16.msra.mxu0 %v8412
        %9727 = vmatprep.subr.bf16.mxu0 %v8429
        %9728 = vmatpush1.bf16.msra.mxu0 %v8428
        %9729 = vmatprep.subr.bf16.mxu0 %v8445
        %9730 = vmatpush1.bf16.msra.mxu0 %v8444
        %9731 = vmatprep.subr.bf16.mxu0 %v8461
        %9732 = vmatpush1.bf16.msra.mxu0 %v8460
        %9733 = vmatprep.subr.bf16.mxu0 %v8477
        %9734 = vmatpush1.bf16.msra.mxu0 %v8476
        %9735 = vmatprep.subr.bf16.mxu0 %v8493
        %9736 = vmatpush1.bf16.msra.mxu0 %v8492
        %9737 = vmatprep.subr.bf16.mxu0 %v8509
        %9738 = vmatpush1.bf16.msra.mxu0 %v8508
        %9739 = vmatprep.subr.bf16.mxu0 %v8525
        %9740 = vmatpush1.bf16.msra.mxu0 %v8524
        %9741 = vmatprep.subr.bf16.mxu0 %v8541
        %9742 = vmatpush1.bf16.msra.mxu0 %v8540
        %9743 = vmatprep.subr.bf16.mxu0 %v8557
        %9744 = vmatpush1.bf16.msra.mxu0 %v8556
        %9745 = vmatprep.subr.bf16.mxu0 %v8573
        %9746 = vmatpush1.bf16.msra.mxu0 %v8572
        %9747 = vmatprep.subr.bf16.mxu0 %v8589
        %9748 = vmatpush1.bf16.msra.mxu0 %v8588
        %9749 = vmatprep.mubr.bf16.mxu0 %v6029
        %9750 = vmatmul.mubr.bf16.gmra.mrb[0].mxu0 %v6028
        %v9751 = vpop.f32.mrb[0].mxu0
        %v9752 = vadd.f32 %v9711, %v9751
        %v9753 = vpop.f32.mrb[0].mxu0
        %v9754 = vadd.f32 %v9713, %v9753
        %v9755 = vpop.f32.mrb[0].mxu0
        %v9756 = vpop.f32.mrb[0].mxu0
        %9757 = vdwg.mxu0
        %v9886 = vunpack.c.l.b16 %v5898
        %v9887 = vunpack.c.h.b16 %v5898
        %v9888 = vunpack.c.l.b16 %v5899
        %v9889 = vunpack.c.h.b16 %v5899
        %v9890 = vunpack.c.l.b16 %v5900
        %v9891 = vunpack.c.h.b16 %v5900
        %v9892 = vunpack.c.l.b16 %v5901
        %v9893 = vunpack.c.h.b16 %v5901
        %v9894 = vunpack.c.l.b16 %v5902
        %v9895 = vunpack.c.h.b16 %v5902
        %v9896 = vunpack.c.l.b16 %v5903
        %v9897 = vunpack.c.h.b16 %v5903
        %v9898 = vunpack.c.l.b16 %v5904
        %v9899 = vunpack.c.h.b16 %v5904
        %v9900 = vunpack.c.l.b16 %v5905
        %v9901 = vunpack.c.h.b16 %v5905
        %v9902 = vunpack.c.l.b16 %v5906
        %v9903 = vunpack.c.h.b16 %v5906
        %v9904 = vunpack.c.l.b16 %v5907
        %v9905 = vunpack.c.h.b16 %v5907
        %v9906 = vunpack.c.l.b16 %v5908
        %v9907 = vunpack.c.h.b16 %v5908
        %v9908 = vunpack.c.l.b16 %v5909
        %v9909 = vunpack.c.h.b16 %v5909
        %v9910 = vunpack.c.l.b16 %v5910
        %v9911 = vunpack.c.h.b16 %v5910
        %v9912 = vunpack.c.l.b16 %v5911
        %v9913 = vunpack.c.h.b16 %v5911
        %v9914 = vunpack.c.l.b16 %v5912
        %v9915 = vunpack.c.h.b16 %v5912
        %v9916 = vunpack.c.l.b16 %v5913
        %v9917 = vunpack.c.h.b16 %v5913
        %v9918 = vunpack.c.l.b16 %v5914
        %v9919 = vunpack.c.h.b16 %v5914
        %v9920 = vunpack.c.l.b16 %v5915
        %v9921 = vunpack.c.h.b16 %v5915
        %v9922 = vunpack.c.l.b16 %v5916
        %v9923 = vunpack.c.h.b16 %v5916
        %v9924 = vunpack.c.l.b16 %v5917
        %v9925 = vunpack.c.h.b16 %v5917
        %v9926 = vunpack.c.l.b16 %v5918
        %v9927 = vunpack.c.h.b16 %v5918
        %v9928 = vunpack.c.l.b16 %v5919
        %v9929 = vunpack.c.h.b16 %v5919
        %v9930 = vunpack.c.l.b16 %v5920
        %v9931 = vunpack.c.h.b16 %v5920
        %v9932 = vunpack.c.l.b16 %v5921
        %v9933 = vunpack.c.h.b16 %v5921
        %v9934 = vunpack.c.l.b16 %v5922
        %v9935 = vunpack.c.h.b16 %v5922
        %v9936 = vunpack.c.l.b16 %v5923
        %v9937 = vunpack.c.h.b16 %v5923
        %v9938 = vunpack.c.l.b16 %v5924
        %v9939 = vunpack.c.h.b16 %v5924
        %v9940 = vunpack.c.l.b16 %v5925
        %v9941 = vunpack.c.h.b16 %v5925
        %v9942 = vunpack.c.l.b16 %v5926
        %v9943 = vunpack.c.h.b16 %v5926
        %v9944 = vunpack.c.l.b16 %v5927
        %v9945 = vunpack.c.h.b16 %v5927
        %v9946 = vunpack.c.l.b16 %v5928
        %v9947 = vunpack.c.h.b16 %v5928
        %v9948 = vunpack.c.l.b16 %v5929
        %v9949 = vunpack.c.h.b16 %v5929
        %v9950 = vunpack.c.l.b16 %v5930
        %v9951 = vunpack.c.h.b16 %v5930
        %v9952 = vunpack.c.l.b16 %v5931
        %v9953 = vunpack.c.h.b16 %v5931
        %v9954 = vunpack.c.l.b16 %v5932
        %v9955 = vunpack.c.h.b16 %v5932
        %v9956 = vunpack.c.l.b16 %v5933
        %v9957 = vunpack.c.h.b16 %v5933
        %v9958 = vunpack.c.l.b16 %v5934
        %v9959 = vunpack.c.h.b16 %v5934
        %v9960 = vunpack.c.l.b16 %v5935
        %v9961 = vunpack.c.h.b16 %v5935
        %v9962 = vunpack.c.l.b16 %v5936
        %v9963 = vunpack.c.h.b16 %v5936
        %v9964 = vunpack.c.l.b16 %v5937
        %v9965 = vunpack.c.h.b16 %v5937
        %v9966 = vunpack.c.l.b16 %v5938
        %v9967 = vunpack.c.h.b16 %v5938
        %v9968 = vunpack.c.l.b16 %v5939
        %v9969 = vunpack.c.h.b16 %v5939
        %v9970 = vunpack.c.l.b16 %v5940
        %v9971 = vunpack.c.h.b16 %v5940
        %v9972 = vunpack.c.l.b16 %v5941
        %v9973 = vunpack.c.h.b16 %v5941
        %v9974 = vunpack.c.l.b16 %v5942
        %v9975 = vunpack.c.h.b16 %v5942
        %v9976 = vunpack.c.l.b16 %v5943
        %v9977 = vunpack.c.h.b16 %v5943
        %v9978 = vunpack.c.l.b16 %v5944
        %v9979 = vunpack.c.h.b16 %v5944
        %v9980 = vunpack.c.l.b16 %v5945
        %v9981 = vunpack.c.h.b16 %v5945
        %v9982 = vunpack.c.l.b16 %v5946
        %v9983 = vunpack.c.h.b16 %v5946
        %v9984 = vunpack.c.l.b16 %v5947
        %v9985 = vunpack.c.h.b16 %v5947
        %v9986 = vunpack.c.l.b16 %v5948
        %v9987 = vunpack.c.h.b16 %v5948
        %v9988 = vunpack.c.l.b16 %v5949
        %v9989 = vunpack.c.h.b16 %v5949
        %v9990 = vunpack.c.l.b16 %v5950
        %v9991 = vunpack.c.h.b16 %v5950
        %v9992 = vunpack.c.l.b16 %v5951
        %v9993 = vunpack.c.h.b16 %v5951
        %v9994 = vunpack.c.l.b16 %v5952
        %v9995 = vunpack.c.h.b16 %v5952
        %v9996 = vunpack.c.l.b16 %v5953
        %v9997 = vunpack.c.h.b16 %v5953
        %v9998 = vunpack.c.l.b16 %v5954
        %v9999 = vunpack.c.h.b16 %v5954
        %v10000 = vunpack.c.l.b16 %v5955
        %v10001 = vunpack.c.h.b16 %v5955
        %v10002 = vunpack.c.l.b16 %v5956
        %v10003 = vunpack.c.h.b16 %v5956
        %v10004 = vunpack.c.l.b16 %v5957
        %v10005 = vunpack.c.h.b16 %v5957
        %v10006 = vunpack.c.l.b16 %v5958
        %v10007 = vunpack.c.h.b16 %v5958
        %v10008 = vunpack.c.l.b16 %v5959
        %v10009 = vunpack.c.h.b16 %v5959
        %v10010 = vunpack.c.l.b16 %v5960
        %v10011 = vunpack.c.h.b16 %v5960
        %v10012 = vunpack.c.l.b16 %v5961
        %v10013 = vunpack.c.h.b16 %v5961
        %v10014 = vunpack.c.l.b16 %v5962
        %v10015 = vunpack.c.h.b16 %v5962
        %v10016 = vunpack.c.l.b16 %v5963
        %v10017 = vunpack.c.h.b16 %v5963
        %v10018 = vunpack.c.l.b16 %v5964
        %v10019 = vunpack.c.h.b16 %v5964
        %v10020 = vunpack.c.l.b16 %v5965
        %v10021 = vunpack.c.h.b16 %v5965
        %v10022 = vunpack.c.l.b16 %v5966
        %v10023 = vunpack.c.h.b16 %v5966
        %v10024 = vunpack.c.l.b16 %v5967
        %v10025 = vunpack.c.h.b16 %v5967
        %v10026 = vunpack.c.l.b16 %v5968
        %v10027 = vunpack.c.h.b16 %v5968
        %v10028 = vunpack.c.l.b16 %v5969
        %v10029 = vunpack.c.h.b16 %v5969
        %v10030 = vunpack.c.l.b16 %v5970
        %v10031 = vunpack.c.h.b16 %v5970
        %v10032 = vunpack.c.l.b16 %v5971
        %v10033 = vunpack.c.h.b16 %v5971
        %v10034 = vunpack.c.l.b16 %v5972
        %v10035 = vunpack.c.h.b16 %v5972
        %v10036 = vunpack.c.l.b16 %v5973
        %v10037 = vunpack.c.h.b16 %v5973
        %v10038 = vunpack.c.l.b16 %v5974
        %v10039 = vunpack.c.h.b16 %v5974
        %v10040 = vunpack.c.l.b16 %v5975
        %v10041 = vunpack.c.h.b16 %v5975
        %v10042 = vunpack.c.l.b16 %v5976
        %v10043 = vunpack.c.h.b16 %v5976
        %v10044 = vunpack.c.l.b16 %v5977
        %v10045 = vunpack.c.h.b16 %v5977
        %v10046 = vunpack.c.l.b16 %v5978
        %v10047 = vunpack.c.h.b16 %v5978
        %v10048 = vunpack.c.l.b16 %v5979
        %v10049 = vunpack.c.h.b16 %v5979
        %v10050 = vunpack.c.l.b16 %v5980
        %v10051 = vunpack.c.h.b16 %v5980
        %v10052 = vunpack.c.l.b16 %v5981
        %v10053 = vunpack.c.h.b16 %v5981
        %v10054 = vunpack.c.l.b16 %v5982
        %v10055 = vunpack.c.h.b16 %v5982
        %v10056 = vunpack.c.l.b16 %v5983
        %v10057 = vunpack.c.h.b16 %v5983
        %v10058 = vunpack.c.l.b16 %v5984
        %v10059 = vunpack.c.h.b16 %v5984
        %v10060 = vunpack.c.l.b16 %v5985
        %v10061 = vunpack.c.h.b16 %v5985
        %v10062 = vunpack.c.l.b16 %v5986
        %v10063 = vunpack.c.h.b16 %v5986
        %v10064 = vunpack.c.l.b16 %v5987
        %v10065 = vunpack.c.h.b16 %v5987
        %v10066 = vunpack.c.l.b16 %v5988
        %v10067 = vunpack.c.h.b16 %v5988
        %v10068 = vunpack.c.l.b16 %v5989
        %v10069 = vunpack.c.h.b16 %v5989
        %v10070 = vunpack.c.l.b16 %v5990
        %v10071 = vunpack.c.h.b16 %v5990
        %v10072 = vunpack.c.l.b16 %v5991
        %v10073 = vunpack.c.h.b16 %v5991
        %v10074 = vunpack.c.l.b16 %v5992
        %v10075 = vunpack.c.h.b16 %v5992
        %v10076 = vunpack.c.l.b16 %v5993
        %v10077 = vunpack.c.h.b16 %v5993
        %v10078 = vunpack.c.l.b16 %v5994
        %v10079 = vunpack.c.h.b16 %v5994
        %v10080 = vunpack.c.l.b16 %v5995
        %v10081 = vunpack.c.h.b16 %v5995
        %v10082 = vunpack.c.l.b16 %v5996
        %v10083 = vunpack.c.h.b16 %v5996
        %v10084 = vunpack.c.l.b16 %v5997
        %v10085 = vunpack.c.h.b16 %v5997
        %v10086 = vunpack.c.l.b16 %v5998
        %v10087 = vunpack.c.h.b16 %v5998
        %v10088 = vunpack.c.l.b16 %v5999
        %v10089 = vunpack.c.h.b16 %v5999
        %v10090 = vunpack.c.l.b16 %v6000
        %v10091 = vunpack.c.h.b16 %v6000
        %v10092 = vunpack.c.l.b16 %v6001
        %v10093 = vunpack.c.h.b16 %v6001
        %v10094 = vunpack.c.l.b16 %v6002
        %v10095 = vunpack.c.h.b16 %v6002
        %v10096 = vunpack.c.l.b16 %v6003
        %v10097 = vunpack.c.h.b16 %v6003
        %v10098 = vunpack.c.l.b16 %v6004
        %v10099 = vunpack.c.h.b16 %v6004
        %v10100 = vunpack.c.l.b16 %v6005
        %v10101 = vunpack.c.h.b16 %v6005
        %v10102 = vunpack.c.l.b16 %v6006
        %v10103 = vunpack.c.h.b16 %v6006
        %v10104 = vunpack.c.l.b16 %v6007
        %v10105 = vunpack.c.h.b16 %v6007
        %v10106 = vunpack.c.l.b16 %v6008
        %v10107 = vunpack.c.h.b16 %v6008
        %v10108 = vunpack.c.l.b16 %v6009
        %v10109 = vunpack.c.h.b16 %v6009
        %v10110 = vunpack.c.l.b16 %v6010
        %v10111 = vunpack.c.h.b16 %v6010
        %v10112 = vunpack.c.l.b16 %v6011
        %v10113 = vunpack.c.h.b16 %v6011
        %v10114 = vunpack.c.l.b16 %v6012
        %v10115 = vunpack.c.h.b16 %v6012
        %v10116 = vunpack.c.l.b16 %v6013
        %v10117 = vunpack.c.h.b16 %v6013
        %v10118 = vunpack.c.l.b16 %v6014
        %v10119 = vunpack.c.h.b16 %v6014
        %v10120 = vunpack.c.l.b16 %v6015
        %v10121 = vunpack.c.h.b16 %v6015
        %v10122 = vunpack.c.l.b16 %v6016
        %v10123 = vunpack.c.h.b16 %v6016
        %v10124 = vunpack.c.l.b16 %v6017
        %v10125 = vunpack.c.h.b16 %v6017
        %v10126 = vunpack.c.l.b16 %v6018
        %v10127 = vunpack.c.h.b16 %v6018
        %v10128 = vunpack.c.l.b16 %v6019
        %v10129 = vunpack.c.h.b16 %v6019
        %v10130 = vunpack.c.l.b16 %v6020
        %v10131 = vunpack.c.h.b16 %v6020
        %v10132 = vunpack.c.l.b16 %v6021
        %v10133 = vunpack.c.h.b16 %v6021
        %v10134 = vunpack.c.l.b16 %v6022
        %v10135 = vunpack.c.h.b16 %v6022
        %v10136 = vunpack.c.l.b16 %v6023
        %v10137 = vunpack.c.h.b16 %v6023
        %v10138 = vunpack.c.l.b16 %v6024
        %v10139 = vunpack.c.h.b16 %v6024
        %v10140 = vunpack.c.l.b16 %v6025
        %v10141 = vunpack.c.h.b16 %v6025
        %v10142 = vpack.c.b16 %v9902, %v9886
        %v10143 = vpack.c.b16 %v9903, %v9887
        %v10144 = vpack.c.b16 %v9904, %v9888
        %v10145 = vpack.c.b16 %v9905, %v9889
        %v10146 = vpack.c.b16 %v9906, %v9890
        %v10147 = vpack.c.b16 %v9907, %v9891
        %v10148 = vpack.c.b16 %v9908, %v9892
        %v10149 = vpack.c.b16 %v9909, %v9893
        %v10150 = vpack.c.b16 %v9910, %v9894
        %v10151 = vpack.c.b16 %v9911, %v9895
        %v10152 = vpack.c.b16 %v9912, %v9896
        %v10153 = vpack.c.b16 %v9913, %v9897
        %v10154 = vpack.c.b16 %v9914, %v9898
        %v10155 = vpack.c.b16 %v9915, %v9899
        %v10156 = vpack.c.b16 %v9916, %v9900
        %v10157 = vpack.c.b16 %v9917, %v9901
        %v10158 = vpack.c.b16 %v9934, %v9918
        %v10159 = vpack.c.b16 %v9935, %v9919
        %v10160 = vpack.c.b16 %v9936, %v9920
        %v10161 = vpack.c.b16 %v9937, %v9921
        %v10162 = vpack.c.b16 %v9938, %v9922
        %v10163 = vpack.c.b16 %v9939, %v9923
        %v10164 = vpack.c.b16 %v9940, %v9924
        %v10165 = vpack.c.b16 %v9941, %v9925
        %v10166 = vpack.c.b16 %v9942, %v9926
        %v10167 = vpack.c.b16 %v9943, %v9927
        %v10168 = vpack.c.b16 %v9944, %v9928
        %v10169 = vpack.c.b16 %v9945, %v9929
        %v10170 = vpack.c.b16 %v9946, %v9930
        %v10171 = vpack.c.b16 %v9947, %v9931
        %v10172 = vpack.c.b16 %v9948, %v9932
        %v10173 = vpack.c.b16 %v9949, %v9933
        %v10174 = vpack.c.b16 %v9966, %v9950
        %v10175 = vpack.c.b16 %v9967, %v9951
        %v10176 = vpack.c.b16 %v9968, %v9952
        %v10177 = vpack.c.b16 %v9969, %v9953
        %v10178 = vpack.c.b16 %v9970, %v9954
        %v10179 = vpack.c.b16 %v9971, %v9955
        %v10180 = vpack.c.b16 %v9972, %v9956
        %v10181 = vpack.c.b16 %v9973, %v9957
        %v10182 = vpack.c.b16 %v9974, %v9958
        %v10183 = vpack.c.b16 %v9975, %v9959
        %v10184 = vpack.c.b16 %v9976, %v9960
        %v10185 = vpack.c.b16 %v9977, %v9961
        %v10186 = vpack.c.b16 %v9978, %v9962
        %v10187 = vpack.c.b16 %v9979, %v9963
        %v10188 = vpack.c.b16 %v9980, %v9964
        %v10189 = vpack.c.b16 %v9981, %v9965
        %v10190 = vpack.c.b16 %v9998, %v9982
        %v10191 = vpack.c.b16 %v9999, %v9983
        %v10192 = vpack.c.b16 %v10000, %v9984
        %v10193 = vpack.c.b16 %v10001, %v9985
        %v10194 = vpack.c.b16 %v10002, %v9986
        %v10195 = vpack.c.b16 %v10003, %v9987
        %v10196 = vpack.c.b16 %v10004, %v9988
        %v10197 = vpack.c.b16 %v10005, %v9989
        %v10198 = vpack.c.b16 %v10006, %v9990
        %v10199 = vpack.c.b16 %v10007, %v9991
        %v10200 = vpack.c.b16 %v10008, %v9992
        %v10201 = vpack.c.b16 %v10009, %v9993
        %v10202 = vpack.c.b16 %v10010, %v9994
        %v10203 = vpack.c.b16 %v10011, %v9995
        %v10204 = vpack.c.b16 %v10012, %v9996
        %v10205 = vpack.c.b16 %v10013, %v9997
        %v10206 = vpack.c.b16 %v10030, %v10014
        %v10207 = vpack.c.b16 %v10031, %v10015
        %v10208 = vpack.c.b16 %v10032, %v10016
        %v10209 = vpack.c.b16 %v10033, %v10017
        %v10210 = vpack.c.b16 %v10034, %v10018
        %v10211 = vpack.c.b16 %v10035, %v10019
        %v10212 = vpack.c.b16 %v10036, %v10020
        %v10213 = vpack.c.b16 %v10037, %v10021
        %v10214 = vpack.c.b16 %v10038, %v10022
        %v10215 = vpack.c.b16 %v10039, %v10023
        %v10216 = vpack.c.b16 %v10040, %v10024
        %v10217 = vpack.c.b16 %v10041, %v10025
        %v10218 = vpack.c.b16 %v10042, %v10026
        %v10219 = vpack.c.b16 %v10043, %v10027
        %v10220 = vpack.c.b16 %v10044, %v10028
        %v10221 = vpack.c.b16 %v10045, %v10029
        %v10222 = vpack.c.b16 %v10062, %v10046
        %v10223 = vpack.c.b16 %v10063, %v10047
        %v10224 = vpack.c.b16 %v10064, %v10048
        %v10225 = vpack.c.b16 %v10065, %v10049
        %v10226 = vpack.c.b16 %v10066, %v10050
        %v10227 = vpack.c.b16 %v10067, %v10051
        %v10228 = vpack.c.b16 %v10068, %v10052
        %v10229 = vpack.c.b16 %v10069, %v10053
        %v10230 = vpack.c.b16 %v10070, %v10054
        %v10231 = vpack.c.b16 %v10071, %v10055
        %v10232 = vpack.c.b16 %v10072, %v10056
        %v10233 = vpack.c.b16 %v10073, %v10057
        %v10234 = vpack.c.b16 %v10074, %v10058
        %v10235 = vpack.c.b16 %v10075, %v10059
        %v10236 = vpack.c.b16 %v10076, %v10060
        %v10237 = vpack.c.b16 %v10077, %v10061
        %v10238 = vpack.c.b16 %v10094, %v10078
        %v10239 = vpack.c.b16 %v10095, %v10079
        %v10240 = vpack.c.b16 %v10096, %v10080
        %v10241 = vpack.c.b16 %v10097, %v10081
        %v10242 = vpack.c.b16 %v10098, %v10082
        %v10243 = vpack.c.b16 %v10099, %v10083
        %v10244 = vpack.c.b16 %v10100, %v10084
        %v10245 = vpack.c.b16 %v10101, %v10085
        %v10246 = vpack.c.b16 %v10102, %v10086
        %v10247 = vpack.c.b16 %v10103, %v10087
        %v10248 = vpack.c.b16 %v10104, %v10088
        %v10249 = vpack.c.b16 %v10105, %v10089
        %v10250 = vpack.c.b16 %v10106, %v10090
        %v10251 = vpack.c.b16 %v10107, %v10091
        %v10252 = vpack.c.b16 %v10108, %v10092
        %v10253 = vpack.c.b16 %v10109, %v10093
        %v10254 = vpack.c.b16 %v10126, %v10110
        %v10255 = vpack.c.b16 %v10127, %v10111
        %v10256 = vpack.c.b16 %v10128, %v10112
        %v10257 = vpack.c.b16 %v10129, %v10113
        %v10258 = vpack.c.b16 %v10130, %v10114
        %v10259 = vpack.c.b16 %v10131, %v10115
        %v10260 = vpack.c.b16 %v10132, %v10116
        %v10261 = vpack.c.b16 %v10133, %v10117
        %v10262 = vpack.c.b16 %v10134, %v10118
        %v10263 = vpack.c.b16 %v10135, %v10119
        %v10264 = vpack.c.b16 %v10136, %v10120
        %v10265 = vpack.c.b16 %v10137, %v10121
        %v10266 = vpack.c.b16 %v10138, %v10122
        %v10267 = vpack.c.b16 %v10139, %v10123
        %v10268 = vpack.c.b16 %v10140, %v10124
        %v10269 = vpack.c.b16 %v10141, %v10125
        %10398 = vmatprep.subr.bf16.mxu0 %v10143
        %10399 = vmatpush1.bf16.msra.mxu0 %v10142
        %10400 = vmatprep.subr.bf16.mxu0 %v10159
        %10401 = vmatpush1.bf16.msra.mxu0 %v10158
        %10402 = vmatprep.subr.bf16.mxu0 %v10175
        %10403 = vmatpush1.bf16.msra.mxu0 %v10174
        %10404 = vmatprep.subr.bf16.mxu0 %v10191
        %10405 = vmatpush1.bf16.msra.mxu0 %v10190
        %10406 = vmatprep.subr.bf16.mxu0 %v10207
        %10407 = vmatpush1.bf16.msra.mxu0 %v10206
        %10408 = vmatprep.subr.bf16.mxu0 %v10223
        %10409 = vmatpush1.bf16.msra.mxu0 %v10222
        %10410 = vmatprep.subr.bf16.mxu0 %v10239
        %10411 = vmatpush1.bf16.msra.mxu0 %v10238
        %10412 = vmatprep.subr.bf16.mxu0 %v10255
        %10413 = vmatpush1.bf16.msra.mxu0 %v10254
        %10414 = vmatprep.subr.bf16.mxu0 0
        %10415 = vmatpush1.bf16.msra.mxu0 0
        %10416 = vmatprep.subr.bf16.mxu0 0
        %10417 = vmatpush1.bf16.msra.mxu0 0
        %10418 = vmatprep.subr.bf16.mxu0 0
        %10419 = vmatpush1.bf16.msra.mxu0 0
        %10420 = vmatprep.subr.bf16.mxu0 0
        %10421 = vmatpush1.bf16.msra.mxu0 0
        %10422 = vmatprep.subr.bf16.mxu0 0
        %10423 = vmatpush1.bf16.msra.mxu0 0
        %10424 = vmatprep.subr.bf16.mxu0 0
        %10425 = vmatpush1.bf16.msra.mxu0 0
        %10426 = vmatprep.subr.bf16.mxu0 0
        %10427 = vmatpush1.bf16.msra.mxu0 0
        %10428 = vmatprep.subr.bf16.mxu0 0
        %10429 = vmatpush1.bf16.msra.mxu0 0
        %10430 = vmatprep.mubr.bf16.mxu0 0
        %10431 = vmatmul.mubr.bf16.gmra.mrb[0].mxu0 %v5896
        %v10432 = vpop.f32.mrb[0].mxu0
        %v10433 = vadd.f32 %v9178, %v10432
        %v10434 = vpop.f32.mrb[0].mxu0
        %v10435 = vadd.f32 %v9180, %v10434
        %v10436 = vpop.f32.mrb[0].mxu0
        %v10437 = vpop.f32.mrb[0].mxu0
        %10438 = vdwg.mxu0
        %10439 = vmatprep.subr.bf16.mxu0 %v10145
        %10440 = vmatpush1.bf16.msra.mxu0 %v10144
        %10441 = vmatprep.subr.bf16.mxu0 %v10161
        %10442 = vmatpush1.bf16.msra.mxu0 %v10160
        %10443 = vmatprep.subr.bf16.mxu0 %v10177
        %10444 = vmatpush1.bf16.msra.mxu0 %v10176
        %10445 = vmatprep.subr.bf16.mxu0 %v10193
        %10446 = vmatpush1.bf16.msra.mxu0 %v10192
        %10447 = vmatprep.subr.bf16.mxu0 %v10209
        %10448 = vmatpush1.bf16.msra.mxu0 %v10208
        %10449 = vmatprep.subr.bf16.mxu0 %v10225
        %10450 = vmatpush1.bf16.msra.mxu0 %v10224
        %10451 = vmatprep.subr.bf16.mxu0 %v10241
        %10452 = vmatpush1.bf16.msra.mxu0 %v10240
        %10453 = vmatprep.subr.bf16.mxu0 %v10257
        %10454 = vmatpush1.bf16.msra.mxu0 %v10256
        %10455 = vmatprep.subr.bf16.mxu0 0
        %10456 = vmatpush1.bf16.msra.mxu0 0
        %10457 = vmatprep.subr.bf16.mxu0 0
        %10458 = vmatpush1.bf16.msra.mxu0 0
        %10459 = vmatprep.subr.bf16.mxu0 0
        %10460 = vmatpush1.bf16.msra.mxu0 0
        %10461 = vmatprep.subr.bf16.mxu0 0
        %10462 = vmatpush1.bf16.msra.mxu0 0
        %10463 = vmatprep.subr.bf16.mxu0 0
        %10464 = vmatpush1.bf16.msra.mxu0 0
        %10465 = vmatprep.subr.bf16.mxu0 0
        %10466 = vmatpush1.bf16.msra.mxu0 0
        %10467 = vmatprep.subr.bf16.mxu0 0
        %10468 = vmatpush1.bf16.msra.mxu0 0
        %10469 = vmatprep.subr.bf16.mxu0 0
        %10470 = vmatpush1.bf16.msra.mxu0 0
        %10471 = vmatprep.mubr.bf16.mxu0 0
        %10472 = vmatmul.mubr.bf16.gmra.mrb[0].mxu0 %v5896
        %v10473 = vpop.f32.mrb[0].mxu0
        %v10474 = vadd.f32 %v9260, %v10473
        %v10475 = vpop.f32.mrb[0].mxu0
        %v10476 = vadd.f32 %v9262, %v10475
        %v10477 = vpop.f32.mrb[0].mxu0
        %v10478 = vpop.f32.mrb[0].mxu0
        %10479 = vdwg.mxu0
        %10480 = vmatprep.subr.bf16.mxu0 %v10147
        %10481 = vmatpush1.bf16.msra.mxu0 %v10146
        %10482 = vmatprep.subr.bf16.mxu0 %v10163
        %10483 = vmatpush1.bf16.msra.mxu0 %v10162
        %10484 = vmatprep.subr.bf16.mxu0 %v10179
        %10485 = vmatpush1.bf16.msra.mxu0 %v10178
        %10486 = vmatprep.subr.bf16.mxu0 %v10195
        %10487 = vmatpush1.bf16.msra.mxu0 %v10194
        %10488 = vmatprep.subr.bf16.mxu0 %v10211
        %10489 = vmatpush1.bf16.msra.mxu0 %v10210
        %10490 = vmatprep.subr.bf16.mxu0 %v10227
        %10491 = vmatpush1.bf16.msra.mxu0 %v10226
        %10492 = vmatprep.subr.bf16.mxu0 %v10243
        %10493 = vmatpush1.bf16.msra.mxu0 %v10242
        %10494 = vmatprep.subr.bf16.mxu0 %v10259
        %10495 = vmatpush1.bf16.msra.mxu0 %v10258
        %10496 = vmatprep.subr.bf16.mxu0 0
        %10497 = vmatpush1.bf16.msra.mxu0 0
        %10498 = vmatprep.subr.bf16.mxu0 0
        %10499 = vmatpush1.bf16.msra.mxu0 0
        %10500 = vmatprep.subr.bf16.mxu0 0
        %10501 = vmatpush1.bf16.msra.mxu0 0
        %10502 = vmatprep.subr.bf16.mxu0 0
        %10503 = vmatpush1.bf16.msra.mxu0 0
        %10504 = vmatprep.subr.bf16.mxu0 0
        %10505 = vmatpush1.bf16.msra.mxu0 0
        %10506 = vmatprep.subr.bf16.mxu0 0
        %10507 = vmatpush1.bf16.msra.mxu0 0
        %10508 = vmatprep.subr.bf16.mxu0 0
        %10509 = vmatpush1.bf16.msra.mxu0 0
        %10510 = vmatprep.subr.bf16.mxu0 0
        %10511 = vmatpush1.bf16.msra.mxu0 0
        %10512 = vmatprep.mubr.bf16.mxu0 0
        %10513 = vmatmul.mubr.bf16.gmra.mrb[0].mxu0 %v5896
        %v10514 = vpop.f32.mrb[0].mxu0
        %v10515 = vadd.f32 %v9342, %v10514
        %v10516 = vpop.f32.mrb[0].mxu0
        %v10517 = vadd.f32 %v9344, %v10516
        %v10518 = vpop.f32.mrb[0].mxu0
        %v10519 = vpop.f32.mrb[0].mxu0
        %10520 = vdwg.mxu0
        %10521 = vmatprep.subr.bf16.mxu0 %v10149
        %10522 = vmatpush1.bf16.msra.mxu0 %v10148
        %10523 = vmatprep.subr.bf16.mxu0 %v10165
        %10524 = vmatpush1.bf16.msra.mxu0 %v10164
        %10525 = vmatprep.subr.bf16.mxu0 %v10181
        %10526 = vmatpush1.bf16.msra.mxu0 %v10180
        %10527 = vmatprep.subr.bf16.mxu0 %v10197
        %10528 = vmatpush1.bf16.msra.mxu0 %v10196
        %10529 = vmatprep.subr.bf16.mxu0 %v10213
        %10530 = vmatpush1.bf16.msra.mxu0 %v10212
        %10531 = vmatprep.subr.bf16.mxu0 %v10229
        %10532 = vmatpush1.bf16.msra.mxu0 %v10228
        %10533 = vmatprep.subr.bf16.mxu0 %v10245
        %10534 = vmatpush1.bf16.msra.mxu0 %v10244
        %10535 = vmatprep.subr.bf16.mxu0 %v10261
        %10536 = vmatpush1.bf16.msra.mxu0 %v10260
        %10537 = vmatprep.subr.bf16.mxu0 0
        %10538 = vmatpush1.bf16.msra.mxu0 0
        %10539 = vmatprep.subr.bf16.mxu0 0
        %10540 = vmatpush1.bf16.msra.mxu0 0
        %10541 = vmatprep.subr.bf16.mxu0 0
        %10542 = vmatpush1.bf16.msra.mxu0 0
        %10543 = vmatprep.subr.bf16.mxu0 0
        %10544 = vmatpush1.bf16.msra.mxu0 0
        %10545 = vmatprep.subr.bf16.mxu0 0
        %10546 = vmatpush1.bf16.msra.mxu0 0
        %10547 = vmatprep.subr.bf16.mxu0 0
        %10548 = vmatpush1.bf16.msra.mxu0 0
        %10549 = vmatprep.subr.bf16.mxu0 0
        %10550 = vmatpush1.bf16.msra.mxu0 0
        %10551 = vmatprep.subr.bf16.mxu0 0
        %10552 = vmatpush1.bf16.msra.mxu0 0
        %10553 = vmatprep.mubr.bf16.mxu0 0
        %10554 = vmatmul.mubr.bf16.gmra.mrb[0].mxu0 %v5896
        %v10555 = vpop.f32.mrb[0].mxu0
        %v10556 = vadd.f32 %v9424, %v10555
        %v10557 = vpop.f32.mrb[0].mxu0
        %v10558 = vadd.f32 %v9426, %v10557
        %v10559 = vpop.f32.mrb[0].mxu0
        %v10560 = vpop.f32.mrb[0].mxu0
        %10561 = vdwg.mxu0
        %10562 = vmatprep.subr.bf16.mxu0 %v10151
        %10563 = vmatpush1.bf16.msra.mxu0 %v10150
        %10564 = vmatprep.subr.bf16.mxu0 %v10167
        %10565 = vmatpush1.bf16.msra.mxu0 %v10166
        %10566 = vmatprep.subr.bf16.mxu0 %v10183
        %10567 = vmatpush1.bf16.msra.mxu0 %v10182
        %10568 = vmatprep.subr.bf16.mxu0 %v10199
        %10569 = vmatpush1.bf16.msra.mxu0 %v10198
        %10570 = vmatprep.subr.bf16.mxu0 %v10215
        %10571 = vmatpush1.bf16.msra.mxu0 %v10214
        %10572 = vmatprep.subr.bf16.mxu0 %v10231
        %10573 = vmatpush1.bf16.msra.mxu0 %v10230
        %10574 = vmatprep.subr.bf16.mxu0 %v10247
        %10575 = vmatpush1.bf16.msra.mxu0 %v10246
        %10576 = vmatprep.subr.bf16.mxu0 %v10263
        %10577 = vmatpush1.bf16.msra.mxu0 %v10262
        %10578 = vmatprep.subr.bf16.mxu0 0
        %10579 = vmatpush1.bf16.msra.mxu0 0
        %10580 = vmatprep.subr.bf16.mxu0 0
        %10581 = vmatpush1.bf16.msra.mxu0 0
        %10582 = vmatprep.subr.bf16.mxu0 0
        %10583 = vmatpush1.bf16.msra.mxu0 0
        %10584 = vmatprep.subr.bf16.mxu0 0
        %10585 = vmatpush1.bf16.msra.mxu0 0
        %10586 = vmatprep.subr.bf16.mxu0 0
        %10587 = vmatpush1.bf16.msra.mxu0 0
        %10588 = vmatprep.subr.bf16.mxu0 0
        %10589 = vmatpush1.bf16.msra.mxu0 0
        %10590 = vmatprep.subr.bf16.mxu0 0
        %10591 = vmatpush1.bf16.msra.mxu0 0
        %10592 = vmatprep.subr.bf16.mxu0 0
        %10593 = vmatpush1.bf16.msra.mxu0 0
        %10594 = vmatprep.mubr.bf16.mxu0 0
        %10595 = vmatmul.mubr.bf16.gmra.mrb[0].mxu0 %v5896
        %v10596 = vpop.f32.mrb[0].mxu0
        %v10597 = vadd.f32 %v9506, %v10596
        %v10598 = vpop.f32.mrb[0].mxu0
        %v10599 = vadd.f32 %v9508, %v10598
        %v10600 = vpop.f32.mrb[0].mxu0
        %v10601 = vpop.f32.mrb[0].mxu0
        %10602 = vdwg.mxu0
        %10603 = vmatprep.subr.bf16.mxu0 %v10153
        %10604 = vmatpush1.bf16.msra.mxu0 %v10152
        %10605 = vmatprep.subr.bf16.mxu0 %v10169
        %10606 = vmatpush1.bf16.msra.mxu0 %v10168
        %10607 = vmatprep.subr.bf16.mxu0 %v10185
        %10608 = vmatpush1.bf16.msra.mxu0 %v10184
        %10609 = vmatprep.subr.bf16.mxu0 %v10201
        %10610 = vmatpush1.bf16.msra.mxu0 %v10200
        %10611 = vmatprep.subr.bf16.mxu0 %v10217
        %10612 = vmatpush1.bf16.msra.mxu0 %v10216
        %10613 = vmatprep.subr.bf16.mxu0 %v10233
        %10614 = vmatpush1.bf16.msra.mxu0 %v10232
        %10615 = vmatprep.subr.bf16.mxu0 %v10249
        %10616 = vmatpush1.bf16.msra.mxu0 %v10248
        %10617 = vmatprep.subr.bf16.mxu0 %v10265
        %10618 = vmatpush1.bf16.msra.mxu0 %v10264
        %10619 = vmatprep.subr.bf16.mxu0 0
        %10620 = vmatpush1.bf16.msra.mxu0 0
        %10621 = vmatprep.subr.bf16.mxu0 0
        %10622 = vmatpush1.bf16.msra.mxu0 0
        %10623 = vmatprep.subr.bf16.mxu0 0
        %10624 = vmatpush1.bf16.msra.mxu0 0
        %10625 = vmatprep.subr.bf16.mxu0 0
        %10626 = vmatpush1.bf16.msra.mxu0 0
        %10627 = vmatprep.subr.bf16.mxu0 0
        %10628 = vmatpush1.bf16.msra.mxu0 0
        %10629 = vmatprep.subr.bf16.mxu0 0
        %10630 = vmatpush1.bf16.msra.mxu0 0
        %10631 = vmatprep.subr.bf16.mxu0 0
        %10632 = vmatpush1.bf16.msra.mxu0 0
        %10633 = vmatprep.subr.bf16.mxu0 0
        %10634 = vmatpush1.bf16.msra.mxu0 0
        %10635 = vmatprep.mubr.bf16.mxu0 0
        %10636 = vmatmul.mubr.bf16.gmra.mrb[0].mxu0 %v5896
        %v10637 = vpop.f32.mrb[0].mxu0
        %v10638 = vadd.f32 %v9588, %v10637
        %v10639 = vpop.f32.mrb[0].mxu0
        %v10640 = vadd.f32 %v9590, %v10639
        %v10641 = vpop.f32.mrb[0].mxu0
        %v10642 = vpop.f32.mrb[0].mxu0
        %10643 = vdwg.mxu0
        %10644 = vmatprep.subr.bf16.mxu0 %v10155
        %10645 = vmatpush1.bf16.msra.mxu0 %v10154
        %10646 = vmatprep.subr.bf16.mxu0 %v10171
        %10647 = vmatpush1.bf16.msra.mxu0 %v10170
        %10648 = vmatprep.subr.bf16.mxu0 %v10187
        %10649 = vmatpush1.bf16.msra.mxu0 %v10186
        %10650 = vmatprep.subr.bf16.mxu0 %v10203
        %10651 = vmatpush1.bf16.msra.mxu0 %v10202
        %10652 = vmatprep.subr.bf16.mxu0 %v10219
        %10653 = vmatpush1.bf16.msra.mxu0 %v10218
        %10654 = vmatprep.subr.bf16.mxu0 %v10235
        %10655 = vmatpush1.bf16.msra.mxu0 %v10234
        %10656 = vmatprep.subr.bf16.mxu0 %v10251
        %10657 = vmatpush1.bf16.msra.mxu0 %v10250
        %10658 = vmatprep.subr.bf16.mxu0 %v10267
        %10659 = vmatpush1.bf16.msra.mxu0 %v10266
        %10660 = vmatprep.subr.bf16.mxu0 0
        %10661 = vmatpush1.bf16.msra.mxu0 0
        %10662 = vmatprep.subr.bf16.mxu0 0
        %10663 = vmatpush1.bf16.msra.mxu0 0
        %10664 = vmatprep.subr.bf16.mxu0 0
        %10665 = vmatpush1.bf16.msra.mxu0 0
        %10666 = vmatprep.subr.bf16.mxu0 0
        %10667 = vmatpush1.bf16.msra.mxu0 0
        %10668 = vmatprep.subr.bf16.mxu0 0
        %10669 = vmatpush1.bf16.msra.mxu0 0
        %10670 = vmatprep.subr.bf16.mxu0 0
        %10671 = vmatpush1.bf16.msra.mxu0 0
        %10672 = vmatprep.subr.bf16.mxu0 0
        %10673 = vmatpush1.bf16.msra.mxu0 0
        %10674 = vmatprep.subr.bf16.mxu0 0
        %10675 = vmatpush1.bf16.msra.mxu0 0
        %10676 = vmatprep.mubr.bf16.mxu0 0
        %10677 = vmatmul.mubr.bf16.gmra.mrb[0].mxu0 %v5896
        %v10678 = vpop.f32.mrb[0].mxu0
        %v10679 = vadd.f32 %v9670, %v10678
        %v10680 = vpop.f32.mrb[0].mxu0
        %v10681 = vadd.f32 %v9672, %v10680
        %v10682 = vpop.f32.mrb[0].mxu0
        %v10683 = vpop.f32.mrb[0].mxu0
        %10684 = vdwg.mxu0
        %10685 = vmatprep.subr.bf16.mxu0 %v10157
        %10686 = vmatpush1.bf16.msra.mxu0 %v10156
        %10687 = vmatprep.subr.bf16.mxu0 %v10173
        %10688 = vmatpush1.bf16.msra.mxu0 %v10172
        %10689 = vmatprep.subr.bf16.mxu0 %v10189
        %10690 = vmatpush1.bf16.msra.mxu0 %v10188
        %10691 = vmatprep.subr.bf16.mxu0 %v10205
        %10692 = vmatpush1.bf16.msra.mxu0 %v10204
        %10693 = vmatprep.subr.bf16.mxu0 %v10221
        %10694 = vmatpush1.bf16.msra.mxu0 %v10220
        %10695 = vmatprep.subr.bf16.mxu0 %v10237
        %10696 = vmatpush1.bf16.msra.mxu0 %v10236
        %10697 = vmatprep.subr.bf16.mxu0 %v10253
        %10698 = vmatpush1.bf16.msra.mxu0 %v10252
        %10699 = vmatprep.subr.bf16.mxu0 %v10269
        %10700 = vmatpush1.bf16.msra.mxu0 %v10268
        %10701 = vmatprep.subr.bf16.mxu0 0
        %10702 = vmatpush1.bf16.msra.mxu0 0
        %10703 = vmatprep.subr.bf16.mxu0 0
        %10704 = vmatpush1.bf16.msra.mxu0 0
        %10705 = vmatprep.subr.bf16.mxu0 0
        %10706 = vmatpush1.bf16.msra.mxu0 0
        %10707 = vmatprep.subr.bf16.mxu0 0
        %10708 = vmatpush1.bf16.msra.mxu0 0
        %10709 = vmatprep.subr.bf16.mxu0 0
        %10710 = vmatpush1.bf16.msra.mxu0 0
        %10711 = vmatprep.subr.bf16.mxu0 0
        %10712 = vmatpush1.bf16.msra.mxu0 0
        %10713 = vmatprep.subr.bf16.mxu0 0
        %10714 = vmatpush1.bf16.msra.mxu0 0
        %10715 = vmatprep.subr.bf16.mxu0 0
        %10716 = vmatpush1.bf16.msra.mxu0 0
        %10717 = vmatprep.mubr.bf16.mxu0 0
        %10718 = vmatmul.mubr.bf16.gmra.mrb[0].mxu0 %v5896
        %v10719 = vpop.f32.mrb[0].mxu0
        %v10720 = vadd.f32 %v9752, %v10719
        %v10721 = vpop.f32.mrb[0].mxu0
        %v10722 = vadd.f32 %v9754, %v10721
        %v10723 = vpop.f32.mrb[0].mxu0
        %v10724 = vpop.f32.mrb[0].mxu0
        %10725 = vdwg.mxu0
        %s10726 = scalar_lea.vmem %s405, 16 [#allocation13]
        %v10727 = vld [vmem:[%s10726] sm:$0xff]
        %v10728 = vld [vmem:[%s10726 + $0x8] sm:$0xff]
        %v10731 = vlaneseq
        %v10732 = vshrl.u32 %v10731, 7
        %v10733 = vsub.s32 0, %v10732
        %v10734 = vrot.slane %v10727, %v10733
        %v10735 = vlaneseq
        %v10736 = vshrl.u32 %v10735, 7
        %v10737 = vsub.s32 1, %v10736
        %v10738 = vrot.slane %v10727, %v10737
        %v10739 = vlaneseq
        %v10740 = vshrl.u32 %v10739, 7
        %v10741 = vsub.s32 2, %v10740
        %v10742 = vrot.slane %v10727, %v10741
        %v10743 = vlaneseq
        %v10744 = vshrl.u32 %v10743, 7
        %v10745 = vsub.s32 3, %v10744
        %v10746 = vrot.slane %v10727, %v10745
        %v10747 = vlaneseq
        %v10748 = vshrl.u32 %v10747, 7
        %v10749 = vsub.s32 4, %v10748
        %v10750 = vrot.slane %v10727, %v10749
        %v10751 = vlaneseq
        %v10752 = vshrl.u32 %v10751, 7
        %v10753 = vsub.s32 5, %v10752
        %v10754 = vrot.slane %v10727, %v10753
        %v10755 = vlaneseq
        %v10756 = vshrl.u32 %v10755, 7
        %v10757 = vsub.s32 6, %v10756
        %v10758 = vrot.slane %v10727, %v10757
        %v10759 = vlaneseq
        %v10760 = vshrl.u32 %v10759, 7
        %v10761 = vsub.s32 7, %v10760
        %v10762 = vrot.slane %v10727, %v10761
        %v10763 = vlaneseq
        %v10764 = vshrl.u32 %v10763, 7
        %v10765 = vsub.s32 0, %v10764
        %v10766 = vrot.slane %v10728, %v10765
        %v10767 = vlaneseq
        %v10768 = vshrl.u32 %v10767, 7
        %v10769 = vsub.s32 1, %v10768
        %v10770 = vrot.slane %v10728, %v10769
        %v10771 = vlaneseq
        %v10772 = vshrl.u32 %v10771, 7
        %v10773 = vsub.s32 2, %v10772
        %v10774 = vrot.slane %v10728, %v10773
        %v10775 = vlaneseq
        %v10776 = vshrl.u32 %v10775, 7
        %v10777 = vsub.s32 3, %v10776
        %v10778 = vrot.slane %v10728, %v10777
        %v10779 = vlaneseq
        %v10780 = vshrl.u32 %v10779, 7
        %v10781 = vsub.s32 4, %v10780
        %v10782 = vrot.slane %v10728, %v10781
        %v10783 = vlaneseq
        %v10784 = vshrl.u32 %v10783, 7
        %v10785 = vsub.s32 5, %v10784
        %v10786 = vrot.slane %v10728, %v10785
        %v10787 = vlaneseq
        %v10788 = vshrl.u32 %v10787, 7
        %v10789 = vsub.s32 6, %v10788
        %v10790 = vrot.slane %v10728, %v10789
        %v10791 = vlaneseq
        %v10792 = vshrl.u32 %v10791, 7
        %v10793 = vsub.s32 7, %v10792
        %v10794 = vrot.slane %v10728, %v10793
        %v10811 = vadd.f32 %v10433, %v10734
        %v10812 = vadd.f32 %v10435, %v10738
        %v10813 = vadd.f32 %v10474, %v10742
        %v10814 = vadd.f32 %v10476, %v10746
        %v10815 = vadd.f32 %v10515, %v10750
        %v10816 = vadd.f32 %v10517, %v10754
        %v10817 = vadd.f32 %v10556, %v10758
        %v10818 = vadd.f32 %v10558, %v10762
        %v10819 = vadd.f32 %v10597, %v10766
        %v10820 = vadd.f32 %v10599, %v10770
        %v10821 = vadd.f32 %v10638, %v10774
        %v10822 = vadd.f32 %v10640, %v10778
        %v10823 = vadd.f32 %v10679, %v10782
        %v10824 = vadd.f32 %v10681, %v10786
        %v10825 = vadd.f32 %v10720, %v10790
        %v10826 = vadd.f32 %v10722, %v10794
        %v10827 = vxor.u32 %v10811, 2147483648
        %v10828 = vxor.u32 %v10812, 2147483648
        %v10829 = vxor.u32 %v10813, 2147483648
        %v10830 = vxor.u32 %v10814, 2147483648
        %v10831 = vmul.f32 %v10827, 1.442695
        %v10832 = vpow.pop %v10831
        %v10833 = vmul.f32 %v10828, 1.442695
        %v10834 = vpow.pop %v10833
        %v10835 = vmul.f32 %v10829, 1.442695
        %v10836 = vpow.pop %v10835
        %v10837 = vmul.f32 %v10830, 1.442695
        %v10838 = vpow.pop %v10837
        %v10839 = vadd.f32 %v10832, 1.0
        %v10840 = vadd.f32 %v10834, 1.0
        %v10841 = vadd.f32 %v10836, 1.0
        %v10842 = vadd.f32 %v10838, 1.0
        %v10843 = vrcp.pop %v10839
        %v10844 = vmul.f32 1.0, %v10843
        %v10845 = vrcp.pop %v10840
        %v10846 = vmul.f32 1.0, %v10845
        %v10847 = vrcp.pop %v10841
        %v10848 = vmul.f32 1.0, %v10847
        %v10849 = vrcp.pop %v10842
        %v10850 = vmul.f32 1.0, %v10849
        %v10851 = vxor.u32 %v10815, 2147483648
        %v10852 = vxor.u32 %v10816, 2147483648
        %v10853 = vxor.u32 %v10817, 2147483648
        %v10854 = vxor.u32 %v10818, 2147483648
        %v10855 = vmul.f32 %v10851, 1.442695
        %v10856 = vpow.pop %v10855
        %v10857 = vmul.f32 %v10852, 1.442695
        %v10858 = vpow.pop %v10857
        %v10859 = vmul.f32 %v10853, 1.442695
        %v10860 = vpow.pop %v10859
        %v10861 = vmul.f32 %v10854, 1.442695
        %v10862 = vpow.pop %v10861
        %v10863 = vadd.f32 %v10856, 1.0
        %v10864 = vadd.f32 %v10858, 1.0
        %v10865 = vadd.f32 %v10860, 1.0
        %v10866 = vadd.f32 %v10862, 1.0
        %v10867 = vrcp.pop %v10863
        %v10868 = vmul.f32 1.0, %v10867
        %v10869 = vrcp.pop %v10864
        %v10870 = vmul.f32 1.0, %v10869
        %v10871 = vrcp.pop %v10865
        %v10872 = vmul.f32 1.0, %v10871
        %v10873 = vrcp.pop %v10866
        %v10874 = vmul.f32 1.0, %v10873
        %v10875 = vtanh.pop %v10819
        %v10876 = vtanh.pop %v10820
        %v10877 = vtanh.pop %v10821
        %v10878 = vtanh.pop %v10822
        %v10879 = vxor.u32 %v10823, 2147483648
        %v10880 = vxor.u32 %v10824, 2147483648
        %v10881 = vxor.u32 %v10825, 2147483648
        %v10882 = vxor.u32 %v10826, 2147483648
        %v10883 = vmul.f32 %v10879, 1.442695
        %v10884 = vpow.pop %v10883
        %v10885 = vmul.f32 %v10880, 1.442695
        %v10886 = vpow.pop %v10885
        %v10887 = vmul.f32 %v10881, 1.442695
        %v10888 = vpow.pop %v10887
        %v10889 = vmul.f32 %v10882, 1.442695
        %v10890 = vpow.pop %v10889
        %v10891 = vadd.f32 %v10884, 1.0
        %v10892 = vadd.f32 %v10886, 1.0
        %v10893 = vadd.f32 %v10888, 1.0
        %v10894 = vadd.f32 %v10890, 1.0
        %v10895 = vrcp.pop %v10891
        %v10896 = vmul.f32 1.0, %v10895
        %v10897 = vrcp.pop %v10892
        %v10898 = vmul.f32 1.0, %v10897
        %v10899 = vrcp.pop %v10893
        %v10900 = vmul.f32 1.0, %v10899
        %v10901 = vrcp.pop %v10894
        %v10902 = vmul.f32 1.0, %v10901
        %v10903 = vmul.f32 %v10868, %v5599
        %v10904 = vmul.f32 %v10870, %v5600
        %v10905 = vmul.f32 %v10872, %v5601
        %v10906 = vmul.f32 %v10874, %v5602
        %v10907 = vmul.f32 %v10844, %v10875
        %v10908 = vmul.f32 %v10846, %v10876
        %v10909 = vmul.f32 %v10848, %v10877
        %v10910 = vmul.f32 %v10850, %v10878
        %v10911 = vadd.f32 %v10903, %v10907
        %v10912 = vadd.f32 %v10904, %v10908
        %v10913 = vadd.f32 %v10905, %v10909
        %v10914 = vadd.f32 %v10906, %v10910
        %v10915 = vtanh.pop %v10911
        %v10916 = vtanh.pop %v10912
        %v10917 = vtanh.pop %v10913
        %v10918 = vtanh.pop %v10914
        %v10919 = vmul.f32 %v10896, %v10915
        %v10920 = vmul.f32 %v10898, %v10916
        %v10921 = vmul.f32 %v10900, %v10917
        %v10922 = vmul.f32 %v10902, %v10918
        %v10923 = vpack.c.bf16 %v10911, %v10911
        %v10924 = vpack.c.bf16 %v10912, %v10912
        %v10925 = vpack.c.bf16 %v10913, %v10913
        %v10926 = vpack.c.bf16 %v10914, %v10914
        %10927 = vmatprep.subr.bf16.mxu0 0
        %10928 = vmatpush1.bf16.msra.mxu0 %v5749
        %10929 = vmatprep.subr.bf16.mxu0 0
        %10930 = vmatpush1.bf16.msra.mxu0 %v5750
        %10931 = vmatprep.subr.bf16.mxu0 0
        %10932 = vmatpush1.bf16.msra.mxu0 %v5751
        %10933 = vmatprep.subr.bf16.mxu0 0
        %10934 = vmatpush1.bf16.msra.mxu0 %v5752
        %10935 = vmatprep.subr.bf16.mxu0 0
        %10936 = vmatpush1.bf16.msra.mxu0 %v5753
        %10937 = vmatprep.subr.bf16.mxu0 0
        %10938 = vmatpush1.bf16.msra.mxu0 %v5754
        %10939 = vmatprep.subr.bf16.mxu0 0
        %10940 = vmatpush1.bf16.msra.mxu0 %v5755
        %10941 = vmatprep.subr.bf16.mxu0 0
        %10942 = vmatpush1.bf16.msra.mxu0 %v5756
        %10943 = vmatprep.subr.bf16.mxu0 0
        %10944 = vmatpush1.bf16.msra.mxu0 %v5757
        %10945 = vmatprep.subr.bf16.mxu0 0
        %10946 = vmatpush1.bf16.msra.mxu0 %v5758
        %10947 = vmatprep.subr.bf16.mxu0 0
        %10948 = vmatpush1.bf16.msra.mxu0 %v5759
        %10949 = vmatprep.subr.bf16.mxu0 0
        %10950 = vmatpush1.bf16.msra.mxu0 %v5760
        %10951 = vmatprep.subr.bf16.mxu0 0
        %10952 = vmatpush1.bf16.msra.mxu0 %v5761
        %10953 = vmatprep.subr.bf16.mxu0 0
        %10954 = vmatpush1.bf16.msra.mxu0 %v5762
        %10955 = vmatprep.subr.bf16.mxu0 0
        %10956 = vmatpush1.bf16.msra.mxu0 %v5763
        %10957 = vmatprep.subr.bf16.mxu0 0
        %10958 = vmatpush1.bf16.msra.mxu0 %v5764
        %10959 = vmatprep.mubr.bf16.mxu0 %v10924
        %10960 = vmatmul.mubr.bf16.gmra.mrb[0].mxu0 %v10923
        %v10961 = vpop.f32.mrb[0].mxu0
        %v10962 = vadd.f32 %v5619, %v10961
        %v10963 = vpop.f32.mrb[0].mxu0
        %v10964 = vpop.f32.mrb[0].mxu0
        %v10965 = vpop.f32.mrb[0].mxu0
        %10966 = vdwg.mxu0
        %10967 = vmatprep.subr.bf16.mxu0 0
        %10968 = vmatpush1.bf16.msra.mxu0 %v5765
        %10969 = vmatprep.subr.bf16.mxu0 0
        %10970 = vmatpush1.bf16.msra.mxu0 %v5766
        %10971 = vmatprep.subr.bf16.mxu0 0
        %10972 = vmatpush1.bf16.msra.mxu0 %v5767
        %10973 = vmatprep.subr.bf16.mxu0 0
        %10974 = vmatpush1.bf16.msra.mxu0 %v5768
        %10975 = vmatprep.subr.bf16.mxu0 0
        %10976 = vmatpush1.bf16.msra.mxu0 %v5769
        %10977 = vmatprep.subr.bf16.mxu0 0
        %10978 = vmatpush1.bf16.msra.mxu0 %v5770
        %10979 = vmatprep.subr.bf16.mxu0 0
        %10980 = vmatpush1.bf16.msra.mxu0 %v5771
        %10981 = vmatprep.subr.bf16.mxu0 0
        %10982 = vmatpush1.bf16.msra.mxu0 %v5772
        %10983 = vmatprep.subr.bf16.mxu0 0
        %10984 = vmatpush1.bf16.msra.mxu0 %v5773
        %10985 = vmatprep.subr.bf16.mxu0 0
        %10986 = vmatpush1.bf16.msra.mxu0 %v5774
        %10987 = vmatprep.subr.bf16.mxu0 0
        %10988 = vmatpush1.bf16.msra.mxu0 %v5775
        %10989 = vmatprep.subr.bf16.mxu0 0
        %10990 = vmatpush1.bf16.msra.mxu0 %v5776
        %10991 = vmatprep.subr.bf16.mxu0 0
        %10992 = vmatpush1.bf16.msra.mxu0 %v5777
        %10993 = vmatprep.subr.bf16.mxu0 0
        %10994 = vmatpush1.bf16.msra.mxu0 %v5778
        %10995 = vmatprep.subr.bf16.mxu0 0
        %10996 = vmatpush1.bf16.msra.mxu0 %v5779
        %10997 = vmatprep.subr.bf16.mxu0 0
        %10998 = vmatpush1.bf16.msra.mxu0 %v5780
        %10999 = vmatprep.mubr.bf16.mxu0 %v10926
        %11000 = vmatmul.mubr.bf16.gmra.mrb[0].mxu0 %v10925
        %v11001 = vpop.f32.mrb[0].mxu0
        %v11002 = vadd.f32 %v10962, %v11001
        %v11003 = vpop.f32.mrb[0].mxu0
        %v11004 = vpop.f32.mrb[0].mxu0
        %v11005 = vpop.f32.mrb[0].mxu0
        %11006 = vdwg.mxu0
        %v11007 = vadd.f32 %v5893, %v11002
        %s11008 = scalar_lea.vmem %s460, 2
        %11009 = vst [vmem:[%s11008] sm:$0x3] %v11007
        %11010 = vst [vmem:[#allocation2] sm:$0x3] %v11007
        %v11015 = vcombine.low %v10919, %v10920
        %v11016 = vcombine.low %v10921, %v10922
        %v11018 = vunpack.c.l.s4 1983009808
        %v11019 = vunpack.c.0.s8 %v11018
        %v11020 = vlaneseq
        %v11021 = vshrl.u32 %v11020, 7
        %v11022 = vsub.s32 %v11019, %v11021
        %v11023 = vrot.slane %v11015, %v11022
        %v11025 = vunpack.c.l.s4 1983009808
        %v11026 = vunpack.c.0.s8 %v11025
        %v11027 = vlaneseq
        %v11028 = vshrl.u32 %v11027, 7
        %v11029 = vsub.s32 %v11026, %v11028
        %v11030 = vrot.slane %v11016, %v11029
        %v11031 = vcombine.low %v11023, %v11030
        %11033 = vst [vmem:[#allocation3] sm:$0xff] %v11031
        %v11038 = vcombine.low %v10911, %v10912
        %v11039 = vcombine.low %v10913, %v10914
        %v11041 = vunpack.c.l.s4 1983009808
        %v11042 = vunpack.c.0.s8 %v11041
        %v11043 = vlaneseq
        %v11044 = vshrl.u32 %v11043, 7
        %v11045 = vsub.s32 %v11042, %v11044
        %v11046 = vrot.slane %v11038, %v11045
        %v11048 = vunpack.c.l.s4 1983009808
        %v11049 = vunpack.c.0.s8 %v11048
        %v11050 = vlaneseq
        %v11051 = vshrl.u32 %v11050, 7
        %v11052 = vsub.s32 %v11049, %v11051
        %v11053 = vrot.slane %v11039, %v11052
        %v11054 = vcombine.low %v11046, %v11053
        %11056 = vst [vmem:[#allocation4] sm:$0xff] %v11054
        %p11057 = scmp.lt.s32.totalorder %s24, 1
        %s11058 = scalar_select %p11057, %s24, 1
        %s11059 = smul.addr %s11058, 2
        %s11060 = smul.addr %s11059, 2
        %s11061 = scalar_lea.vmem %s8, %s11060
        // Predicated region
        $region89: #{ml_metanet_forward.1} parent=51 // pred_check
          %p11062 = pneg %p225
        $region90: #{ml_metanet_forward.1} parent=51 // pred_check_branch
          %11064 = sbr.rel (%p11062) target = $region92
        $region91: #{ml_metanet_forward.1} parent=51 // pred_region
          _
        $region92: #{ml_metanet_forward.1} parent=51 // pred_fallthru
          _
      $region52: #{ml_metanet_forward.1} parent=5 // pred_fallthru
        _
      %p11065 = scmp.le.s32.totalorder 2, %s19
      // Predicated region
      $region93: #{ml_metanet_forward.1} parent=5 // pred_check
        %p11066 = pneg %p11065
      $region94: #{ml_metanet_forward.1} parent=5 // pred_check_branch
        %11068 = sbr.rel (%p11066) target = $region96
      $region95: #{ml_metanet_forward.1} parent=5 // pred_region
        %s11069 = ssub.s32 %s19, 2
        // Predicated region
        $region97: #{ml_metanet_forward.1} parent=95 // pred_check
          %p11070 = pneg %p231
        $region98: #{ml_metanet_forward.1} parent=95 // pred_check_branch
          %11072 = sbr.rel (%p11070) target = $region100
        $region99: #{ml_metanet_forward.1} parent=95 // pred_region
          %p11073 = scmp.lt.s32.totalorder %s25, 1
          %s11074 = scalar_select %p11073, %s25, 1
          %s11075 = smul.addr %s11074, 2
          %s11076 = smul.addr %s11075, 2
          %s11077 = scalar_lea.vmem %s8, %s11076
        $region100: #{ml_metanet_forward.1} parent=95 // pred_fallthru
          _
      $region96: #{ml_metanet_forward.1} parent=5 // pred_fallthru
        _
    $region6: #{ml_metanet_forward.1} parent=1 // loop_footer
      %s23 = sadd.s32 1, %s19
    $region7: #{ml_metanet_forward.1} parent=1 // loop_footer_branch
      %18 = sbr.rel target = $region3
    $region8: #{ml_metanet_forward.1} parent=1 // loop_exit
      _
    %11078 = vsyncpa [#allocation6], 1
    %s11079 = scalar_lea.sflag [#allocation6], 1
    %11080 = vsyncpa %s11079, 1
    %11081 = vsyncpa [#allocation8], 1
    %11082 = vsyncpa [#allocation11], 1

</llo_original>
